<compile_context>
chip_gen: v7x
topology: tpu7x:2x2x1
jax: 0.10.0
libtpu: 0.0.40
codegen_flags: <defaults>
</compile_context>

<pallas_src>
import functools
import numpy as np
import jax
import jax.numpy as jnp
from jax import lax
from jax.experimental import pallas as pl
from jax.experimental.pallas import tpu as pltpu

LANE = 128
BRANCH_CH = (8, 16, 32, 64)          # scaled-down stand-in for HRNet-W48's (48, 96, 192, 384)
VMEM_LIMIT = 64 * 1024 * 1024


def _round_up(v, m):
    return ((v + m - 1) // m) * m


def _interp_matrix(out_size, in_size):
    """Row-stochastic bilinear interpolation matrix (align_corners=True), f32."""
    m = np.zeros((out_size, in_size), dtype=np.float32)
    if out_size == 1:
        m[0, 0] = 1.0
        return jnp.asarray(m)
    scale = (in_size - 1) / (out_size - 1)
    for i in range(out_size):
        src = i * scale
        i0 = min(int(np.floor(src)), in_size - 1)
        i1 = min(i0 + 1, in_size - 1)
        w1 = src - i0
        m[i, i0] += 1.0 - w1
        m[i, i1] += w1
    return jnp.asarray(m)


# ----------------------------------------------------------------------------
# Kernel A: bilinear upsample + concat + channel pad + spatial halo -> bf16 slab
# ----------------------------------------------------------------------------
def _slab_kernel(f1_ref, f2_ref, f3_ref, f4_ref,
                 rh2_ref, rw2_ref, rh3_ref, rw3_ref, rh4_ref, rw4_ref, o_ref):
    """Writes (1, h+2, w+2, Cp=128) bf16: zero halo rows/cols, channels
    [0:120] = cat(feat1, up(feat2), up(feat3), up(feat4)), [120:128] = 0."""
    h = o_ref.shape[1] - 2
    w = o_ref.shape[2] - 2
    cp = o_ref.shape[3]

    def upsample(xf_ref, rh_ref, rw_ref):
        # xf_ref: (1, Hin, Win*C) bf16 (pre-flattened in the wrapper);
        # rh: (h, Hin), rw: (w, Win) f32 -> bit-close to PyTorch's f32 bilinear.
        win = rw_ref.shape[1]
        c = xf_ref.shape[2] // win
        x = xf_ref[0].astype(jnp.float32)                                   # (Hin, Win*C)
        t = jnp.dot(rh_ref[...], x, preferred_element_type=jnp.float32)     # (h, Win*C)  MXU
        t = t.reshape(h, win, c)
        # W-pass batched over output rows.
        # TODO(synk): at real HRNet-W48 shapes de-batch this into a single
        # (w, Win) x (Win, h*C) MXU matmul + pltpu.einshape sublane relayout so
        # the (h, w, Win) broadcast operand is never materialized.
        rw_b = jnp.broadcast_to(rw_ref[...][None, :, :], (h, w, win))
        return lax.dot_general(rw_b, t,
                               dimension_numbers=(((2,), (1,)), ((0,), (0,))),
                               preferred_element_type=jnp.float32)           # (h, w, C)

    f1 = f1_ref[0].astype(jnp.float32)                                       # (h, w, C1)
    f2 = upsample(f2_ref, rh2_ref, rw2_ref)
    f3 = upsample(f3_ref, rh3_ref, rw3_ref)
    f4 = upsample(f4_ref, rh4_ref, rw4_ref)

    pieces = [f1, f2, f3, f4]
    c0 = sum(p.shape[2] for p in pieces)
    if cp > c0:                                                              # zero-pad lanes
        pieces.append(jnp.zeros((h, w, cp - c0), jnp.float32))
    y = jnp.concatenate(pieces, axis=-1).astype(jnp.bfloat16)                # lane-dense (h,w,128)

    o_ref[...] = jnp.zeros(o_ref.shape, o_ref.dtype)                         # zero halo + pad lanes
    o_ref[0, 1:1 + h, 1:1 + w, :] = y


def build_feature_slab(branches):
    """branches: 4 NHWC bf16 feature maps at strides (1,2,4,8) rel. to branches[0].
    Returns the fused (N, h+2, w+2, 128) bf16 slab consumed by the heads."""
    f1 = branches[0]
    N, h, w, c1 = f1.shape

    flats, mats = [], []
    flops = 0
    for br in branches[1:]:
        _, hk, wk, ck = br.shape
        flats.append(br.reshape(N, hk, wk * ck))                 # pre-flatten for the H-pass matmul
        mats += [_interp_matrix(h, hk), _interp_matrix(w, wk)]
        flops += 2 * N * (h * hk * wk * ck + h * w * wk * ck)
    bytes_acc = sum(int(np.prod(b.shape)) * 2 for b in branches) \
        + N * (h + 2) * (w + 2) * LANE * 2

    in_specs = [pl.BlockSpec((1, h, w, c1), lambda n: (n, 0, 0, 0))]
    for fl in flats:
        in_specs.append(pl.BlockSpec((1, fl.shape[1], fl.shape[2]), lambda n: (n, 0, 0)))
    for m in mats:
        in_specs.append(pl.BlockSpec(m.shape, lambda n: (0, 0)))

    return pl.pallas_call(
        _slab_kernel,
        out_shape=jax.ShapeDtypeStruct((N, h + 2, w + 2, LANE), jnp.bfloat16),
        grid=(N,),
        in_specs=in_specs,
        out_specs=pl.BlockSpec((1, h + 2, w + 2, LANE), lambda n: (n, 0, 0, 0)),
        compiler_params=pltpu.CompilerParams(
            dimension_semantics=("parallel",), vmem_limit_bytes=VMEM_LIMIT),
        cost_estimate=pl.CostEstimate(flops=int(flops), transcendentals=0,
                                      bytes_accessed=int(bytes_acc)),
    )(f1, *flats, *mats)


# ----------------------------------------------------------------------------
# Kernel B: fused cls_head + proj_head (single read of the feats slab)
# ----------------------------------------------------------------------------
def _heads_kernel(xp_ref, cw1_ref, cs1_ref, ct1_ref, cw2_ref,
                  pw1_ref, ps1_ref, pt1_ref, pw2_ref, pb2_ref,
                  seg_ref, emb_ref):
    """xp_ref : (1, H+2, W+2, Cp) bf16 slab (zero spatial halo, zero channel pad)
    cls : cw1 (9,Cp,Cp) bf16, cs1/ct1 (1,Cp) f32 (bias+BN folded), cw2 (Cp,128) bf16
    proj: pw1 (Cp,Cp) bf16, ps1/pt1 (1,Cp) f32, pw2 (Cp,128) bf16, pb2 (1,128) f32
    out : seg (1,H,W,128) f32, emb (1,H,W,128) f32 (unit L2 over channels)."""
    H = seg_ref.shape[1]
    W = seg_ref.shape[2]
    cp = xp_ref.shape[3]
    x = xp_ref[0]                                                   # (H+2, W+2, Cp) bf16

    # --- cls_head: 3x3 conv as 3 W-shifted slabs (one copy each) + 9 free H slices.
    # TODO(synk): on real W48 shapes use pltpu.roll on the W/sublane axis (XLU) instead
    # of the slab copies, row-tile over H (halo=1) and K-tile over Cp with an f32 VMEM
    # scratch accumulator + pl.when init so v7x's 64 MiB VMEM is respected.
    xw = [x[:, kw:kw + W, :] for kw in range(3)]                    # each (H+2, W, Cp)
    acc = jnp.zeros((H * W, cp), jnp.float32)
    for kh in range(3):
        for kw in range(3):
            tap = xw[kw][kh:kh + H].reshape(H * W, cp)              # leading-dim slice: free
            acc = acc + jnp.dot(tap, cw1_ref[3 * kh + kw],
                                preferred_element_type=jnp.float32)
    y = jnp.maximum(acc * cs1_ref[...] + ct1_ref[...], 0.0)         # folded bias+BN, ReLU (f32)
    # TODO(synk): Dropout2d(0.1) treated as identity (inference semantics).
    seg = jnp.dot(y.astype(jnp.bfloat16), cw2_ref[...],
                  preferred_element_type=jnp.float32)                # (H*W, 128) lane-dense
    seg_ref[0] = seg.reshape(H, W, -1).astype(seg_ref.dtype)

    # --- proj_head ('convmlp') on the same resident slab (center window, no new copy)
    xc = xw[1][1:1 + H].reshape(H * W, cp)
    p = jnp.dot(xc, pw1_ref[...], preferred_element_type=jnp.float32)
    p = jnp.maximum(p * ps1_ref[...] + pt1_ref[...], 0.0)
    z = jnp.dot(p.astype(jnp.bfloat16), pw2_ref[...],
                preferred_element_type=jnp.float32) + pb2_ref[...]
    # rsqrt -> EUP slot; padded output lanes are exactly zero so the norm is unchanged.
    inv = lax.rsqrt(jnp.maximum(jnp.sum(z * z, axis=-1, keepdims=True), 1e-24))
    emb_ref[0] = (z * inv).reshape(H, W, -1).astype(emb_ref.dtype)


def fused_heads(slab, pk):
    N, hp2, wp2, cp = slab.shape
    H, W = hp2 - 2, wp2 - 2
    npix = N * H * W
    flops = npix * 2 * cp * (9 * cp + LANE + cp + LANE)
    bytes_acc = (slab.size * 2
                 + (pk['cls_w1'].size + pk['cls_w2'].size
                    + pk['proj_w1'].size + pk['proj_w2'].size) * 2
                 + 2 * npix * LANE * 4)

    seg, emb = pl.pallas_call(
        _heads_kernel,
        out_shape=(jax.ShapeDtypeStruct((N, H, W, LANE), jnp.float32),
                   jax.ShapeDtypeStruct((N, H, W, LANE), jnp.float32)),
        grid=(N,),
        in_specs=[
            pl.BlockSpec((1, hp2, wp2, cp), lambda n: (n, 0, 0, 0)),
            pl.BlockSpec((9, cp, cp), lambda n: (0, 0, 0)),
            pl.BlockSpec((1, cp), lambda n: (0, 0)),
            pl.BlockSpec((1, cp), lambda n: (0, 0)),
            pl.BlockSpec((cp, LANE), lambda n: (0, 0)),
            pl.BlockSpec((cp, cp), lambda n: (0, 0)),
            pl.BlockSpec((1, cp), lambda n: (0, 0)),
            pl.BlockSpec((1, cp), lambda n: (0, 0)),
            pl.BlockSpec((cp, LANE), lambda n: (0, 0)),
            pl.BlockSpec((1, LANE), lambda n: (0, 0)),
        ],
        out_specs=[pl.BlockSpec((1, H, W, LANE), lambda n: (n, 0, 0, 0)),
                   pl.BlockSpec((1, H, W, LANE), lambda n: (n, 0, 0, 0))],
        compiler_params=pltpu.CompilerParams(
            dimension_semantics=("parallel",), vmem_limit_bytes=VMEM_LIMIT),
        cost_estimate=pl.CostEstimate(flops=int(flops), transcendentals=int(npix),
                                      bytes_accessed=int(bytes_acc)),
    )(slab, pk['cls_w1'], pk['cls_s1'], pk['cls_t1'], pk['cls_w2'],
      pk['proj_w1'], pk['proj_s1'], pk['proj_t1'], pk['proj_w2'], pk['proj_b2'])
    return seg, emb


# ----------------------------------------------------------------------------
# Plain-JAX glue (parameter packing / backbone stub)
# ----------------------------------------------------------------------------
def avg_pool(x, s):
    N, H, W, C = x.shape
    return x.reshape(N, H // s, s, W // s, s, C).mean(axis=(2, 4))


def fold_bn(bias, bn, eps=1e-5):
    """Fold (conv bias + inference BatchNorm) into per-channel scale/shift."""
    gamma, beta, mean, var = bn
    s = gamma / jnp.sqrt(var + eps)
    return s, (bias - mean) * s + beta


def init_params(key, c_in=3, branch_ch=BRANCH_CH, num_classes=7, proj_dim=16):
    ks = jax.random.split(key, 16)
    C0 = sum(branch_ch)          # 120; scaled-down stand-in for HRNet-W48's in_channels=720
    p = {'stub': []}
    for i, ck in enumerate(branch_ch):
        w = jax.random.normal(ks[i], (c_in, ck), jnp.float32) * 0.1
        b = jax.random.normal(ks[4 + i], (ck,), jnp.float32) * 0.01
        p['stub'].append((w, b))
    p['cls_w1'] = jax.random.normal(ks[8], (9, C0, C0), jnp.float32) * 0.02
    p['cls_b1'] = jnp.zeros((C0,), jnp.float32)
    p['cls_bn'] = (jnp.ones((C0,)), jnp.zeros((C0,)),
                   jnp.full((C0,), 0.01), jnp.full((C0,), 0.9))     # gamma,beta,mean,var
    p['cls_w2'] = jax.random.normal(ks[9], (C0, num_classes), jnp.float32) * 0.05
    p['proj_w1'] = jax.random.normal(ks[10], (C0, C0), jnp.float32) * 0.05
    p['proj_b1'] = jax.random.normal(ks[11], (C0,), jnp.float32) * 0.01
    p['proj_bn'] = (jnp.full((C0,), 1.1), jnp.full((C0,), 0.02),
                    jnp.full((C0,), 0.01), jnp.full((C0,), 0.8))
    p['proj_w2'] = jax.random.normal(ks[12], (C0, proj_dim), jnp.float32) * 0.05
    p['proj_b2'] = jax.random.normal(ks[13], (proj_dim,), jnp.float32) * 0.01
    return p


def pack_params(p, num_classes, proj_dim):
    """Fold BN, zero-pad channels to Cp=128 / head outputs to 128 lanes, cast bf16.
    TODO(synk): real PyTorch checkpoints store conv weights as (Cout,Cin,3,3);
    importing them needs a permute to the (9, Cin, Cout) layout used here."""
    C0 = p['proj_w1'].shape[0]
    Cp = _round_up(C0, LANE)
    Np = LANE
    dc = Cp - C0
    pk = {}
    s1, t1 = fold_bn(p['cls_b1'], p['cls_bn'])
    pk['cls_w1'] = jnp.pad(p['cls_w1'], ((0, 0), (0, dc), (0, dc))).astype(jnp.bfloat16)
    pk['cls_s1'] = jnp.pad(s1, (0, dc), constant_values=1.0).reshape(1, Cp)
    pk['cls_t1'] = jnp.pad(t1, (0, dc)).reshape(1, Cp)
    pk['cls_w2'] = jnp.pad(p['cls_w2'], ((0, dc), (0, Np - num_classes))).astype(jnp.bfloat16)

    s2, t2 = fold_bn(p['proj_b1'], p['proj_bn'])
    pk['proj_w1'] = jnp.pad(p['proj_w1'], ((0, dc), (0, dc))).astype(jnp.bfloat16)
    pk['proj_s1'] = jnp.pad(s2, (0, dc), constant_values=1.0).reshape(1, Cp)
    pk['proj_t1'] = jnp.pad(t2, (0, dc)).reshape(1, Cp)
    pk['proj_w2'] = jnp.pad(p['proj_w2'], ((0, dc), (0, Np - proj_dim))).astype(jnp.bfloat16)
    pk['proj_b2'] = jnp.pad(p['proj_b2'], (0, Np - proj_dim)).reshape(1, Np)
    return pk


# ----------------------------------------------------------------------------
# Forward (mirrors HRNet_W48_CONTRAST.forward)
# ----------------------------------------------------------------------------
def hrnet_w48_contrast_forward(x_nchw, params, packed, num_classes=7, proj_dim=16):
    x = jnp.transpose(x_nchw, (0, 2, 3, 1))        # NCHW -> NHWC

    # TODO(synk): full HRNet-W48 backbone not implemented; replaced by a deterministic
    # multi-scale stub (avg-pool stride 4/8/16/32 + 1x1 conv + ReLU), kept in XLA since
    # it stands in for self.backbone(x_) which is outside this module's forward body.
    branches = []
    for (wgt, b), s in zip(params['stub'], (4, 8, 16, 32)):
        pooled = avg_pool(x, s)
        y = jnp.maximum(jnp.einsum('nhwc,cd->nhwd', pooled, wgt) + b, 0.0)
        branches.append(y.astype(jnp.bfloat16))    # bf16 features: halve HBM traffic

    # Kernel A: F.interpolate(bilinear, align_corners=True) of branches 2..4 +
    # torch.cat + channel pad to 128 + spatial halo, written once as a bf16 slab.
    slab = build_feature_slab(branches)            # (N, h+2, w+2, 128) bf16

    # Kernel B: cls_head + proj_head fused; single read of the slab per sample.
    seg_p, emb_p = fused_heads(slab, packed)
    seg = seg_p[..., :num_classes]
    emb = emb_p[..., :proj_dim]

    return {
        'seg': jnp.transpose(seg, (0, 3, 1, 2)),    # NCHW, like the PyTorch module
        'embed': jnp.transpose(emb, (0, 3, 1, 2)),  # NCHW, unit L2 norm over dim=1
    }


@functools.partial(jax.jit, static_argnames=('num_classes', 'proj_dim'))
def forward_jit(x, params, packed, *, num_classes, proj_dim):
    return hrnet_w48_contrast_forward(x, params, packed, num_classes, proj_dim)


if __name__ == "__main__":
    key = jax.random.PRNGKey(0)
    kx, kp = jax.random.split(key)
    num_classes, proj_dim = 7, 16
    x_ = jax.random.normal(kx, (2, 3, 64, 64), jnp.float32)   # NCHW input, like PyTorch
    params = init_params(kp, num_classes=num_classes, proj_dim=proj_dim)
    packed = pack_params(params, num_classes, proj_dim)

    out = forward_jit(x_, params, packed, num_classes=num_classes, proj_dim=proj_dim)
    out = jax.block_until_ready(out)

    assert out['seg'].shape == (2, num_classes, 16, 16)
    assert out['embed'].shape == (2, proj_dim, 16, 16)
    # embed rows must be unit L2-norm over the channel dim
    norms = jnp.sqrt(jnp.sum(out['embed'].astype(jnp.float32) ** 2, axis=1))
    assert bool(jnp.allclose(norms, 1.0, atol=1e-4))
    print("KERNEL_OK")
</pallas_src>

<mosaic_0001>
module attributes {stable_mosaic.version = 11 : i64} {
  func.func @_slab_kernel(%arg0: i32, %arg1: memref<1x16x16x8xbf16, #tpu.memory_space<vmem>>, %arg2: memref<1x8x128xbf16, #tpu.memory_space<vmem>>, %arg3: memref<1x4x128xbf16, #tpu.memory_space<vmem>>, %arg4: memref<1x2x128xbf16, #tpu.memory_space<vmem>>, %arg5: memref<16x8xf32, #tpu.memory_space<vmem>>, %arg6: memref<16x8xf32, #tpu.memory_space<vmem>>, %arg7: memref<16x4xf32, #tpu.memory_space<vmem>>, %arg8: memref<16x4xf32, #tpu.memory_space<vmem>>, %arg9: memref<16x2xf32, #tpu.memory_space<vmem>>, %arg10: memref<16x2xf32, #tpu.memory_space<vmem>>, %arg11: memref<1x18x18x128xbf16, #tpu.memory_space<vmem>>) attributes {dimension_semantics = [#tpu.dimension_semantics<parallel>], iteration_bounds = array<i64: 2>, scalar_prefetch = 0 : i64, scratch_operands = 0 : i64, tpu.core_type = #tpu.core_type<tc>, window_params = [{transform_indices = @transform_0, window_bounds = array<i64: 1, 16, 16, 8>}, {transform_indices = @transform_1, window_bounds = array<i64: 1, 8, 128>}, {transform_indices = @transform_2, window_bounds = array<i64: 1, 4, 128>}, {transform_indices = @transform_3, window_bounds = array<i64: 1, 2, 128>}, {pipeline_mode = #tpu.pipeline_mode<synchronous>, transform_indices = @transform_4, window_bounds = array<i64: 16, 8>}, {pipeline_mode = #tpu.pipeline_mode<synchronous>, transform_indices = @transform_5, window_bounds = array<i64: 16, 8>}, {pipeline_mode = #tpu.pipeline_mode<synchronous>, transform_indices = @transform_6, window_bounds = array<i64: 16, 4>}, {pipeline_mode = #tpu.pipeline_mode<synchronous>, transform_indices = @transform_7, window_bounds = array<i64: 16, 4>}, {pipeline_mode = #tpu.pipeline_mode<synchronous>, transform_indices = @transform_8, window_bounds = array<i64: 16, 2>}, {pipeline_mode = #tpu.pipeline_mode<synchronous>, transform_indices = @transform_9, window_bounds = array<i64: 16, 2>}, {transform_indices = @transform_10, window_bounds = array<i64: 1, 18, 18, 128>}]} {
    %c0 = arith.constant 0 : index
    %c0_0 = arith.constant 0 : index
    %c0_1 = arith.constant 0 : index
    %c0_2 = arith.constant 0 : index
    %0 = vector.load %arg1[%c0, %c0_0, %c0_1, %c0_2] : memref<1x16x16x8xbf16, #tpu.memory_space<vmem>>, vector<1x16x16x8xbf16>
    %1 = vector.shape_cast %0 : vector<1x16x16x8xbf16> to vector<16x16x8xbf16>
    %2 = arith.extf %1 : vector<16x16x8xbf16> to vector<16x16x8xf32>
    %c0_3 = arith.constant 0 : index
    %c0_4 = arith.constant 0 : index
    %c0_5 = arith.constant 0 : index
    %3 = vector.load %arg2[%c0_3, %c0_4, %c0_5] : memref<1x8x128xbf16, #tpu.memory_space<vmem>>, vector<1x8x128xbf16>
    %4 = vector.shape_cast %3 : vector<1x8x128xbf16> to vector<8x128xbf16>
    %5 = arith.extf %4 : vector<8x128xbf16> to vector<8x128xf32>
    %c0_6 = arith.constant 0 : index
    %c0_7 = arith.constant 0 : index
    %6 = vector.load %arg5[%c0_6, %c0_7] : memref<16x8xf32, #tpu.memory_space<vmem>>, vector<16x8xf32>
    %cst = arith.constant dense<0.000000e+00> : vector<16x128xf32>
    %7 = tpu.matmul %6, %5, %cst {dimension_numbers = #tpu.dot_dimension_numbers<[1], [0], [0], [1], [0, 0, 1, 1], [], []>} : vector<16x8xf32>, vector<8x128xf32>, vector<16x128xf32> -> vector<16x128xf32>
    %8 = vector.shape_cast %7 : vector<16x128xf32> to vector<16x8x16xf32>
    %c0_8 = arith.constant 0 : index
    %c0_9 = arith.constant 0 : index
    %9 = vector.load %arg6[%c0_8, %c0_9] : memref<16x8xf32, #tpu.memory_space<vmem>>, vector<16x8xf32>
    %10 = vector.shape_cast %9 : vector<16x8xf32> to vector<1x16x8xf32>
    %11 = vector.shape_cast %10 : vector<1x16x8xf32> to vector<1x16x8xf32>
    %12 = vector.broadcast %11 : vector<1x16x8xf32> to vector<16x16x8xf32>
    %cst_10 = arith.constant dense<0.000000e+00> : vector<16x16x16xf32>
    %13 = tpu.matmul %12, %8, %cst_10 {dimension_numbers = #tpu.dot_dimension_numbers<[2], [1], [1], [2], [0, 0, 0, 1, 1, 2], [0], [0]>} : vector<16x16x8xf32>, vector<16x8x16xf32>, vector<16x16x16xf32> -> vector<16x16x16xf32>
    %c0_11 = arith.constant 0 : index
    %c0_12 = arith.constant 0 : index
    %c0_13 = arith.constant 0 : index
    %14 = vector.load %arg3[%c0_11, %c0_12, %c0_13] : memref<1x4x128xbf16, #tpu.memory_space<vmem>>, vector<1x4x128xbf16>
    %15 = vector.shape_cast %14 : vector<1x4x128xbf16> to vector<4x128xbf16>
    %16 = arith.extf %15 : vector<4x128xbf16> to vector<4x128xf32>
    %c0_14 = arith.constant 0 : index
    %c0_15 = arith.constant 0 : index
    %17 = vector.load %arg7[%c0_14, %c0_15] : memref<16x4xf32, #tpu.memory_space<vmem>>, vector<16x4xf32>
    %cst_16 = arith.constant dense<0.000000e+00> : vector<16x128xf32>
    %18 = tpu.matmul %17, %16, %cst_16 {dimension_numbers = #tpu.dot_dimension_numbers<[1], [0], [0], [1], [0, 0, 1, 1], [], []>} : vector<16x4xf32>, vector<4x128xf32>, vector<16x128xf32> -> vector<16x128xf32>
    %19 = vector.shape_cast %18 : vector<16x128xf32> to vector<16x4x32xf32>
    %c0_17 = arith.constant 0 : index
    %c0_18 = arith.constant 0 : index
    %20 = vector.load %arg8[%c0_17, %c0_18] : memref<16x4xf32, #tpu.memory_space<vmem>>, vector<16x4xf32>
    %21 = vector.shape_cast %20 : vector<16x4xf32> to vector<1x16x4xf32>
    %22 = vector.shape_cast %21 : vector<1x16x4xf32> to vector<1x16x4xf32>
    %23 = vector.broadcast %22 : vector<1x16x4xf32> to vector<16x16x4xf32>
    %cst_19 = arith.constant dense<0.000000e+00> : vector<16x16x32xf32>
    %24 = tpu.matmul %23, %19, %cst_19 {dimension_numbers = #tpu.dot_dimension_numbers<[2], [1], [1], [2], [0, 0, 0, 1, 1, 2], [0], [0]>} : vector<16x16x4xf32>, vector<16x4x32xf32>, vector<16x16x32xf32> -> vector<16x16x32xf32>
    %c0_20 = arith.constant 0 : index
    %c0_21 = arith.constant 0 : index
    %c0_22 = arith.constant 0 : index
    %25 = vector.load %arg4[%c0_20, %c0_21, %c0_22] : memref<1x2x128xbf16, #tpu.memory_space<vmem>>, vector<1x2x128xbf16>
    %26 = vector.shape_cast %25 : vector<1x2x128xbf16> to vector<2x128xbf16>
    %27 = arith.extf %26 : vector<2x128xbf16> to vector<2x128xf32>
    %c0_23 = arith.constant 0 : index
    %c0_24 = arith.constant 0 : index
    %28 = vector.load %arg9[%c0_23, %c0_24] : memref<16x2xf32, #tpu.memory_space<vmem>>, vector<16x2xf32>
    %cst_25 = arith.constant dense<0.000000e+00> : vector<16x128xf32>
    %29 = tpu.matmul %28, %27, %cst_25 {dimension_numbers = #tpu.dot_dimension_numbers<[1], [0], [0], [1], [0, 0, 1, 1], [], []>} : vector<16x2xf32>, vector<2x128xf32>, vector<16x128xf32> -> vector<16x128xf32>
    %30 = vector.shape_cast %29 : vector<16x128xf32> to vector<16x2x64xf32>
    %c0_26 = arith.constant 0 : index
    %c0_27 = arith.constant 0 : index
    %31 = vector.load %arg10[%c0_26, %c0_27] : memref<16x2xf32, #tpu.memory_space<vmem>>, vector<16x2xf32>
    %32 = vector.shape_cast %31 : vector<16x2xf32> to vector<1x16x2xf32>
    %33 = vector.shape_cast %32 : vector<1x16x2xf32> to vector<1x16x2xf32>
    %34 = vector.broadcast %33 : vector<1x16x2xf32> to vector<16x16x2xf32>
    %cst_28 = arith.constant dense<0.000000e+00> : vector<16x16x64xf32>
    %35 = tpu.matmul %34, %30, %cst_28 {dimension_numbers = #tpu.dot_dimension_numbers<[2], [1], [1], [2], [0, 0, 0, 1, 1, 2], [0], [0]>} : vector<16x16x2xf32>, vector<16x2x64xf32>, vector<16x16x64xf32> -> vector<16x16x64xf32>
    %cst_29 = arith.constant 0.000000e+00 : f32
    %36 = vector.broadcast %cst_29 : f32 to vector<16x16x8xf32>
    %37 = tpu.concatenate %2, %13, %24, %35, %36 in 2 : vector<16x16x8xf32>, vector<16x16x16xf32>, vector<16x16x32xf32>, vector<16x16x64xf32>, vector<16x16x8xf32> -> vector<16x16x128xf32>
    %38 = arith.truncf %37 : vector<16x16x128xf32> to vector<16x16x128xbf16>
    %cst_30 = arith.constant 0.000000e+00 : bf16
    %39 = vector.broadcast %cst_30 : bf16 to vector<1x18x18x128xbf16>
    %c0_31 = arith.constant 0 : index
    %c0_32 = arith.constant 0 : index
    %c0_33 = arith.constant 0 : index
    %c0_34 = arith.constant 0 : index
    %40 = vector.load %arg11[%c0_31, %c0_32, %c0_33, %c0_34] : memref<1x18x18x128xbf16, #tpu.memory_space<vmem>>, vector<1x18x18x128xbf16>
    tpu.vector_store %arg11[%c0_31, %c0_32, %c0_33, %c0_34], %39 {strides = array<i32>} : memref<1x18x18x128xbf16, #tpu.memory_space<vmem>>, vector<1x18x18x128xbf16>,
    %c0_35 = arith.constant 0 : index
    %c1 = arith.constant 1 : index
    %c1_36 = arith.constant 1 : index
    %c0_37 = arith.constant 0 : index
    %41 = vector.load %arg11[%c0_35, %c1, %c1_36, %c0_37] : memref<1x18x18x128xbf16, #tpu.memory_space<vmem>>, vector<1x16x16x128xbf16>
    %42 = vector.shape_cast %41 : vector<1x16x16x128xbf16> to vector<16x16x128xbf16>
    %43 = vector.shape_cast %38 : vector<16x16x128xbf16> to vector<1x16x16x128xbf16>
    tpu.vector_store %arg11[%c0_35, %c1, %c1_36, %c0_37], %43 {strides = array<i32>} : memref<1x18x18x128xbf16, #tpu.memory_space<vmem>>, vector<1x16x16x128xbf16>,
    return
  }
  func.func @transform_0(%arg0: i32) -> (i32, i32, i32, i32) {
    %c0_i32 = arith.constant 0 : i32
    %c0_i32_0 = arith.constant 0 : i32
    %c0_i32_1 = arith.constant 0 : i32
    %c0_i32_2 = arith.constant 0 : i32
    return %arg0, %c0_i32, %c0_i32_0, %c0_i32_1 : i32, i32, i32, i32
  }
  func.func @transform_1(%arg0: i32) -> (i32, i32, i32) {
    %c0_i32 = arith.constant 0 : i32
    %c0_i32_0 = arith.constant 0 : i32
    %c0_i32_1 = arith.constant 0 : i32
    return %arg0, %c0_i32, %c0_i32_0 : i32, i32, i32
  }
  func.func @transform_2(%arg0: i32) -> (i32, i32, i32) {
    %c0_i32 = arith.constant 0 : i32
    %c0_i32_0 = arith.constant 0 : i32
    %c0_i32_1 = arith.constant 0 : i32
    return %arg0, %c0_i32, %c0_i32_0 : i32, i32, i32
  }
  func.func @transform_3(%arg0: i32) -> (i32, i32, i32) {
    %c0_i32 = arith.constant 0 : i32
    %c0_i32_0 = arith.constant 0 : i32
    %c0_i32_1 = arith.constant 0 : i32
    return %arg0, %c0_i32, %c0_i32_0 : i32, i32, i32
  }
  func.func @transform_4(%arg0: i32) -> (i32, i32) {
    %c0_i32 = arith.constant 0 : i32
    %c0_i32_0 = arith.constant 0 : i32
    %c0_i32_1 = arith.constant 0 : i32
    return %c0_i32, %c0_i32_0 : i32, i32
  }
  func.func @transform_5(%arg0: i32) -> (i32, i32) {
    %c0_i32 = arith.constant 0 : i32
    %c0_i32_0 = arith.constant 0 : i32
    %c0_i32_1 = arith.constant 0 : i32
    return %c0_i32, %c0_i32_0 : i32, i32
  }
  func.func @transform_6(%arg0: i32) -> (i32, i32) {
    %c0_i32 = arith.constant 0 : i32
    %c0_i32_0 = arith.constant 0 : i32
    %c0_i32_1 = arith.constant 0 : i32
    return %c0_i32, %c0_i32_0 : i32, i32
  }
  func.func @transform_7(%arg0: i32) -> (i32, i32) {
    %c0_i32 = arith.constant 0 : i32
    %c0_i32_0 = arith.constant 0 : i32
    %c0_i32_1 = arith.constant 0 : i32
    return %c0_i32, %c0_i32_0 : i32, i32
  }
  func.func @transform_8(%arg0: i32) -> (i32, i32) {
    %c0_i32 = arith.constant 0 : i32
    %c0_i32_0 = arith.constant 0 : i32
    %c0_i32_1 = arith.constant 0 : i32
    return %c0_i32, %c0_i32_0 : i32, i32
  }
  func.func @transform_9(%arg0: i32) -> (i32, i32) {
    %c0_i32 = arith.constant 0 : i32
    %c0_i32_0 = arith.constant 0 : i32
    %c0_i32_1 = arith.constant 0 : i32
    return %c0_i32, %c0_i32_0 : i32, i32
  }
  func.func @transform_10(%arg0: i32) -> (i32, i32, i32, i32) {
    %c0_i32 = arith.constant 0 : i32
    %c0_i32_0 = arith.constant 0 : i32
    %c0_i32_1 = arith.constant 0 : i32
    %c0_i32_2 = arith.constant 0 : i32
    return %arg0, %c0_i32, %c0_i32_0, %c0_i32_1 : i32, i32, i32, i32
  }
}

module attributes {stable_mosaic.version = 11 : i64} {
  func.func @_heads_kernel(%arg0: i32, %arg1: memref<1x18x18x128xbf16, #tpu.memory_space<vmem>>, %arg2: memref<9x128x128xbf16, #tpu.memory_space<vmem>>, %arg3: memref<1x128xf32, #tpu.memory_space<vmem>>, %arg4: memref<1x128xf32, #tpu.memory_space<vmem>>, %arg5: memref<128x128xbf16, #tpu.memory_space<vmem>>, %arg6: memref<128x128xbf16, #tpu.memory_space<vmem>>, %arg7: memref<1x128xf32, #tpu.memory_space<vmem>>, %arg8: memref<1x128xf32, #tpu.memory_space<vmem>>, %arg9: memref<128x128xbf16, #tpu.memory_space<vmem>>, %arg10: memref<1x128xf32, #tpu.memory_space<vmem>>, %arg11: memref<1x16x16x128xf32, #tpu.memory_space<vmem>>, %arg12: memref<1x16x16x128xf32, #tpu.memory_space<vmem>>) attributes {dimension_semantics = [#tpu.dimension_semantics<parallel>], iteration_bounds = array<i64: 2>, scalar_prefetch = 0 : i64, scratch_operands = 0 : i64, tpu.core_type = #tpu.core_type<tc>, window_params = [{transform_indices = @transform_0, window_bounds = array<i64: 1, 18, 18, 128>}, {pipeline_mode = #tpu.pipeline_mode<synchronous>, transform_indices = @transform_1, window_bounds = array<i64: 9, 128, 128>}, {pipeline_mode = #tpu.pipeline_mode<synchronous>, transform_indices = @transform_2, window_bounds = array<i64: 1, 128>}, {pipeline_mode = #tpu.pipeline_mode<synchronous>, transform_indices = @transform_3, window_bounds = array<i64: 1, 128>}, {pipeline_mode = #tpu.pipeline_mode<synchronous>, transform_indices = @transform_4, window_bounds = array<i64: 128, 128>}, {pipeline_mode = #tpu.pipeline_mode<synchronous>, transform_indices = @transform_5, window_bounds = array<i64: 128, 128>}, {pipeline_mode = #tpu.pipeline_mode<synchronous>, transform_indices = @transform_6, window_bounds = array<i64: 1, 128>}, {pipeline_mode = #tpu.pipeline_mode<synchronous>, transform_indices = @transform_7, window_bounds = array<i64: 1, 128>}, {pipeline_mode = #tpu.pipeline_mode<synchronous>, transform_indices = @transform_8, window_bounds = array<i64: 128, 128>}, {pipeline_mode = #tpu.pipeline_mode<synchronous>, transform_indices = @transform_9, window_bounds = array<i64: 1, 128>}, {transform_indices = @transform_10, window_bounds = array<i64: 1, 16, 16, 128>}, {transform_indices = @transform_11, window_bounds = array<i64: 1, 16, 16, 128>}]} {
    %c0 = arith.constant 0 : index
    %c0_0 = arith.constant 0 : index
    %c0_1 = arith.constant 0 : index
    %c0_2 = arith.constant 0 : index
    %0 = vector.load %arg1[%c0, %c0_0, %c0_1, %c0_2] : memref<1x18x18x128xbf16, #tpu.memory_space<vmem>>, vector<1x18x18x128xbf16>
    %1 = vector.shape_cast %0 : vector<1x18x18x128xbf16> to vector<18x18x128xbf16>
    %2 = vector.extract_strided_slice %1 {offsets = [0, 0, 0], sizes = [18, 16, 128], strides = [1, 1, 1]} : vector<18x18x128xbf16> to vector<18x16x128xbf16>
    %3 = vector.extract_strided_slice %1 {offsets = [0, 1, 0], sizes = [18, 16, 128], strides = [1, 1, 1]} : vector<18x18x128xbf16> to vector<18x16x128xbf16>
    %4 = vector.extract_strided_slice %1 {offsets = [0, 2, 0], sizes = [18, 16, 128], strides = [1, 1, 1]} : vector<18x18x128xbf16> to vector<18x16x128xbf16>
    %cst = arith.constant 0.000000e+00 : f32
    %5 = vector.broadcast %cst : f32 to vector<256x128xf32>
    %6 = vector.extract_strided_slice %2 {offsets = [0, 0, 0], sizes = [16, 16, 128], strides = [1, 1, 1]} : vector<18x16x128xbf16> to vector<16x16x128xbf16>
    %7 = vector.shape_cast %6 : vector<16x16x128xbf16> to vector<256x128xbf16>
    %c0_3 = arith.constant 0 : index
    %c0_4 = arith.constant 0 : index
    %c0_5 = arith.constant 0 : index
    %8 = vector.load %arg2[%c0_3, %c0_4, %c0_5] : memref<9x128x128xbf16, #tpu.memory_space<vmem>>, vector<1x128x128xbf16>
    %9 = vector.shape_cast %8 : vector<1x128x128xbf16> to vector<128x128xbf16>
    %cst_6 = arith.constant dense<0.000000e+00> : vector<256x128xf32>
    %10 = tpu.matmul %7, %9, %cst_6 {dimension_numbers = #tpu.dot_dimension_numbers<[1], [0], [0], [1], [0, 0, 1, 1], [], []>} : vector<256x128xbf16>, vector<128x128xbf16>, vector<256x128xf32> -> vector<256x128xf32>
    %11 = arith.addf %5, %10 : vector<256x128xf32>
    %12 = vector.extract_strided_slice %3 {offsets = [0, 0, 0], sizes = [16, 16, 128], strides = [1, 1, 1]} : vector<18x16x128xbf16> to vector<16x16x128xbf16>
    %13 = vector.shape_cast %12 : vector<16x16x128xbf16> to vector<256x128xbf16>
    %c1 = arith.constant 1 : index
    %c0_7 = arith.constant 0 : index
    %c0_8 = arith.constant 0 : index
    %14 = vector.load %arg2[%c1, %c0_7, %c0_8] : memref<9x128x128xbf16, #tpu.memory_space<vmem>>, vector<1x128x128xbf16>
    %15 = vector.shape_cast %14 : vector<1x128x128xbf16> to vector<128x128xbf16>
    %cst_9 = arith.constant dense<0.000000e+00> : vector<256x128xf32>
    %16 = tpu.matmul %13, %15, %cst_9 {dimension_numbers = #tpu.dot_dimension_numbers<[1], [0], [0], [1], [0, 0, 1, 1], [], []>} : vector<256x128xbf16>, vector<128x128xbf16>, vector<256x128xf32> -> vector<256x128xf32>
    %17 = arith.addf %11, %16 : vector<256x128xf32>
    %18 = vector.extract_strided_slice %4 {offsets = [0, 0, 0], sizes = [16, 16, 128], strides = [1, 1, 1]} : vector<18x16x128xbf16> to vector<16x16x128xbf16>
    %19 = vector.shape_cast %18 : vector<16x16x128xbf16> to vector<256x128xbf16>
    %c2 = arith.constant 2 : index
    %c0_10 = arith.constant 0 : index
    %c0_11 = arith.constant 0 : index
    %20 = vector.load %arg2[%c2, %c0_10, %c0_11] : memref<9x128x128xbf16, #tpu.memory_space<vmem>>, vector<1x128x128xbf16>
    %21 = vector.shape_cast %20 : vector<1x128x128xbf16> to vector<128x128xbf16>
    %cst_12 = arith.constant dense<0.000000e+00> : vector<256x128xf32>
    %22 = tpu.matmul %19, %21, %cst_12 {dimension_numbers = #tpu.dot_dimension_numbers<[1], [0], [0], [1], [0, 0, 1, 1], [], []>} : vector<256x128xbf16>, vector<128x128xbf16>, vector<256x128xf32> -> vector<256x128xf32>
    %23 = arith.addf %17, %22 : vector<256x128xf32>
    %24 = vector.extract_strided_slice %2 {offsets = [1, 0, 0], sizes = [16, 16, 128], strides = [1, 1, 1]} : vector<18x16x128xbf16> to vector<16x16x128xbf16>
    %25 = vector.shape_cast %24 : vector<16x16x128xbf16> to vector<256x128xbf16>
    %c3 = arith.constant 3 : index
    %c0_13 = arith.constant 0 : index
    %c0_14 = arith.constant 0 : index
    %26 = vector.load %arg2[%c3, %c0_13, %c0_14] : memref<9x128x128xbf16, #tpu.memory_space<vmem>>, vector<1x128x128xbf16>
    %27 = vector.shape_cast %26 : vector<1x128x128xbf16> to vector<128x128xbf16>
    %cst_15 = arith.constant dense<0.000000e+00> : vector<256x128xf32>
    %28 = tpu.matmul %25, %27, %cst_15 {dimension_numbers = #tpu.dot_dimension_numbers<[1], [0], [0], [1], [0, 0, 1, 1], [], []>} : vector<256x128xbf16>, vector<128x128xbf16>, vector<256x128xf32> -> vector<256x128xf32>
    %29 = arith.addf %23, %28 : vector<256x128xf32>
    %30 = vector.extract_strided_slice %3 {offsets = [1, 0, 0], sizes = [16, 16, 128], strides = [1, 1, 1]} : vector<18x16x128xbf16> to vector<16x16x128xbf16>
    %31 = vector.shape_cast %30 : vector<16x16x128xbf16> to vector<256x128xbf16>
    %c4 = arith.constant 4 : index
    %c0_16 = arith.constant 0 : index
    %c0_17 = arith.constant 0 : index
    %32 = vector.load %arg2[%c4, %c0_16, %c0_17] : memref<9x128x128xbf16, #tpu.memory_space<vmem>>, vector<1x128x128xbf16>
    %33 = vector.shape_cast %32 : vector<1x128x128xbf16> to vector<128x128xbf16>
    %cst_18 = arith.constant dense<0.000000e+00> : vector<256x128xf32>
    %34 = tpu.matmul %31, %33, %cst_18 {dimension_numbers = #tpu.dot_dimension_numbers<[1], [0], [0], [1], [0, 0, 1, 1], [], []>} : vector<256x128xbf16>, vector<128x128xbf16>, vector<256x128xf32> -> vector<256x128xf32>
    %35 = arith.addf %29, %34 : vector<256x128xf32>
    %36 = vector.extract_strided_slice %4 {offsets = [1, 0, 0], sizes = [16, 16, 128], strides = [1, 1, 1]} : vector<18x16x128xbf16> to vector<16x16x128xbf16>
    %37 = vector.shape_cast %36 : vector<16x16x128xbf16> to vector<256x128xbf16>
    %c5 = arith.constant 5 : index
    %c0_19 = arith.constant 0 : index
    %c0_20 = arith.constant 0 : index
    %38 = vector.load %arg2[%c5, %c0_19, %c0_20] : memref<9x128x128xbf16, #tpu.memory_space<vmem>>, vector<1x128x128xbf16>
    %39 = vector.shape_cast %38 : vector<1x128x128xbf16> to vector<128x128xbf16>
    %cst_21 = arith.constant dense<0.000000e+00> : vector<256x128xf32>
    %40 = tpu.matmul %37, %39, %cst_21 {dimension_numbers = #tpu.dot_dimension_numbers<[1], [0], [0], [1], [0, 0, 1, 1], [], []>} : vector<256x128xbf16>, vector<128x128xbf16>, vector<256x128xf32> -> vector<256x128xf32>
    %41 = arith.addf %35, %40 : vector<256x128xf32>
    %42 = vector.extract_strided_slice %2 {offsets = [2, 0, 0], sizes = [16, 16, 128], strides = [1, 1, 1]} : vector<18x16x128xbf16> to vector<16x16x128xbf16>
    %43 = vector.shape_cast %42 : vector<16x16x128xbf16> to vector<256x128xbf16>
    %c6 = arith.constant 6 : index
    %c0_22 = arith.constant 0 : index
    %c0_23 = arith.constant 0 : index
    %44 = vector.load %arg2[%c6, %c0_22, %c0_23] : memref<9x128x128xbf16, #tpu.memory_space<vmem>>, vector<1x128x128xbf16>
    %45 = vector.shape_cast %44 : vector<1x128x128xbf16> to vector<128x128xbf16>
    %cst_24 = arith.constant dense<0.000000e+00> : vector<256x128xf32>
    %46 = tpu.matmul %43, %45, %cst_24 {dimension_numbers = #tpu.dot_dimension_numbers<[1], [0], [0], [1], [0, 0, 1, 1], [], []>} : vector<256x128xbf16>, vector<128x128xbf16>, vector<256x128xf32> -> vector<256x128xf32>
    %47 = arith.addf %41, %46 : vector<256x128xf32>
    %48 = vector.extract_strided_slice %3 {offsets = [2, 0, 0], sizes = [16, 16, 128], strides = [1, 1, 1]} : vector<18x16x128xbf16> to vector<16x16x128xbf16>
    %49 = vector.shape_cast %48 : vector<16x16x128xbf16> to vector<256x128xbf16>
    %c7 = arith.constant 7 : index
    %c0_25 = arith.constant 0 : index
    %c0_26 = arith.constant 0 : index
    %50 = vector.load %arg2[%c7, %c0_25, %c0_26] : memref<9x128x128xbf16, #tpu.memory_space<vmem>>, vector<1x128x128xbf16>
    %51 = vector.shape_cast %50 : vector<1x128x128xbf16> to vector<128x128xbf16>
    %cst_27 = arith.constant dense<0.000000e+00> : vector<256x128xf32>
    %52 = tpu.matmul %49, %51, %cst_27 {dimension_numbers = #tpu.dot_dimension_numbers<[1], [0], [0], [1], [0, 0, 1, 1], [], []>} : vector<256x128xbf16>, vector<128x128xbf16>, vector<256x128xf32> -> vector<256x128xf32>
    %53 = arith.addf %47, %52 : vector<256x128xf32>
    %54 = vector.extract_strided_slice %4 {offsets = [2, 0, 0], sizes = [16, 16, 128], strides = [1, 1, 1]} : vector<18x16x128xbf16> to vector<16x16x128xbf16>
    %55 = vector.shape_cast %54 : vector<16x16x128xbf16> to vector<256x128xbf16>
    %c8 = arith.constant 8 : index
    %c0_28 = arith.constant 0 : index
    %c0_29 = arith.constant 0 : index
    %56 = vector.load %arg2[%c8, %c0_28, %c0_29] : memref<9x128x128xbf16, #tpu.memory_space<vmem>>, vector<1x128x128xbf16>
    %57 = vector.shape_cast %56 : vector<1x128x128xbf16> to vector<128x128xbf16>
    %cst_30 = arith.constant dense<0.000000e+00> : vector<256x128xf32>
    %58 = tpu.matmul %55, %57, %cst_30 {dimension_numbers = #tpu.dot_dimension_numbers<[1], [0], [0], [1], [0, 0, 1, 1], [], []>} : vector<256x128xbf16>, vector<128x128xbf16>, vector<256x128xf32> -> vector<256x128xf32>
    %59 = arith.addf %53, %58 : vector<256x128xf32>
    %c0_31 = arith.constant 0 : index
    %c0_32 = arith.constant 0 : index
    %60 = vector.load %arg3[%c0_31, %c0_32] : memref<1x128xf32, #tpu.memory_space<vmem>>, vector<1x128xf32>
    %61 = vector.broadcast %60 : vector<1x128xf32> to vector<256x128xf32>
    %62 = arith.mulf %59, %61 : vector<256x128xf32>
    %c0_33 = arith.constant 0 : index
    %c0_34 = arith.constant 0 : index
    %63 = vector.load %arg4[%c0_33, %c0_34] : memref<1x128xf32, #tpu.memory_space<vmem>>, vector<1x128xf32>
    %64 = vector.broadcast %63 : vector<1x128xf32> to vector<256x128xf32>
    %65 = arith.addf %62, %64 : vector<256x128xf32>
    %cst_35 = arith.constant 0.000000e+00 : f32
    %66 = vector.broadcast %cst_35 : f32 to vector<256x128xf32>
    %67 = arith.maximumf %65, %66 : vector<256x128xf32>
    %68 = arith.truncf %67 : vector<256x128xf32> to vector<256x128xbf16>
    %c0_36 = arith.constant 0 : index
    %c0_37 = arith.constant 0 : index
    %69 = vector.load %arg5[%c0_36, %c0_37] : memref<128x128xbf16, #tpu.memory_space<vmem>>, vector<128x128xbf16>
    %cst_38 = arith.constant dense<0.000000e+00> : vector<256x128xf32>
    %70 = tpu.matmul %68, %69, %cst_38 {dimension_numbers = #tpu.dot_dimension_numbers<[1], [0], [0], [1], [0, 0, 1, 1], [], []>} : vector<256x128xbf16>, vector<128x128xbf16>, vector<256x128xf32> -> vector<256x128xf32>
    %71 = vector.shape_cast %70 : vector<256x128xf32> to vector<16x16x128xf32>
    %c0_39 = arith.constant 0 : index
    %c0_40 = arith.constant 0 : index
    %c0_41 = arith.constant 0 : index
    %c0_42 = arith.constant 0 : index
    %72 = vector.load %arg11[%c0_39, %c0_40, %c0_41, %c0_42] : memref<1x16x16x128xf32, #tpu.memory_space<vmem>>, vector<1x16x16x128xf32>
    %73 = vector.shape_cast %72 : vector<1x16x16x128xf32> to vector<16x16x128xf32>
    %74 = vector.shape_cast %71 : vector<16x16x128xf32> to vector<1x16x16x128xf32>
    tpu.vector_store %arg11[%c0_39, %c0_40, %c0_41, %c0_42], %74 {strides = array<i32>} : memref<1x16x16x128xf32, #tpu.memory_space<vmem>>, vector<1x16x16x128xf32>,
    %75 = vector.extract_strided_slice %3 {offsets = [1, 0, 0], sizes = [16, 16, 128], strides = [1, 1, 1]} : vector<18x16x128xbf16> to vector<16x16x128xbf16>
    %76 = vector.shape_cast %75 : vector<16x16x128xbf16> to vector<256x128xbf16>
    %c0_43 = arith.constant 0 : index
    %c0_44 = arith.constant 0 : index
    %77 = vector.load %arg6[%c0_43, %c0_44] : memref<128x128xbf16, #tpu.memory_space<vmem>>, vector<128x128xbf16>
    %cst_45 = arith.constant dense<0.000000e+00> : vector<256x128xf32>
    %78 = tpu.matmul %76, %77, %cst_45 {dimension_numbers = #tpu.dot_dimension_numbers<[1], [0], [0], [1], [0, 0, 1, 1], [], []>} : vector<256x128xbf16>, vector<128x128xbf16>, vector<256x128xf32> -> vector<256x128xf32>
    %c0_46 = arith.constant 0 : index
    %c0_47 = arith.constant 0 : index
    %79 = vector.load %arg7[%c0_46, %c0_47] : memref<1x128xf32, #tpu.memory_space<vmem>>, vector<1x128xf32>
    %80 = vector.shape_cast %79 : vector<1x128xf32> to vector<1x128xf32>
    %81 = vector.broadcast %80 : vector<1x128xf32> to vector<256x128xf32>
    %82 = arith.mulf %78, %81 : vector<256x128xf32>
    %c0_48 = arith.constant 0 : index
    %c0_49 = arith.constant 0 : index
    %83 = vector.load %arg8[%c0_48, %c0_49] : memref<1x128xf32, #tpu.memory_space<vmem>>, vector<1x128xf32>
    %84 = vector.broadcast %83 : vector<1x128xf32> to vector<256x128xf32>
    %85 = arith.addf %82, %84 : vector<256x128xf32>
    %cst_50 = arith.constant 0.000000e+00 : f32
    %86 = vector.broadcast %cst_50 : f32 to vector<256x128xf32>
    %87 = arith.maximumf %85, %86 : vector<256x128xf32>
    %88 = arith.truncf %87 : vector<256x128xf32> to vector<256x128xbf16>
    %c0_51 = arith.constant 0 : index
    %c0_52 = arith.constant 0 : index
    %89 = vector.load %arg9[%c0_51, %c0_52] : memref<128x128xbf16, #tpu.memory_space<vmem>>, vector<128x128xbf16>
    %cst_53 = arith.constant dense<0.000000e+00> : vector<256x128xf32>
    %90 = tpu.matmul %88, %89, %cst_53 {dimension_numbers = #tpu.dot_dimension_numbers<[1], [0], [0], [1], [0, 0, 1, 1], [], []>} : vector<256x128xbf16>, vector<128x128xbf16>, vector<256x128xf32> -> vector<256x128xf32>
    %c0_54 = arith.constant 0 : index
    %c0_55 = arith.constant 0 : index
    %91 = vector.load %arg10[%c0_54, %c0_55] : memref<1x128xf32, #tpu.memory_space<vmem>>, vector<1x128xf32>
    %92 = vector.broadcast %91 : vector<1x128xf32> to vector<256x128xf32>
    %93 = arith.addf %90, %92 : vector<256x128xf32>
    %94 = arith.mulf %93, %93 : vector<256x128xf32>
    %cst_56 = arith.constant dense<0.000000e+00> : vector<256xf32>
    %95 = vector.multi_reduction <add>, %94, %cst_56 [1] : vector<256x128xf32> to vector<256xf32>
    %96 = vector.shape_cast %95 : vector<256xf32> to vector<256x1xf32>
    %cst_57 = arith.constant 1.000000e-24 : f32
    %97 = vector.broadcast %cst_57 : f32 to vector<256x1xf32>
    %98 = arith.maximumf %96, %97 : vector<256x1xf32>
    %99 = math.rsqrt %98 : vector<256x1xf32>
    %100 = vector.broadcast %99 : vector<256x1xf32> to vector<256x128xf32>
    %101 = arith.mulf %93, %100 : vector<256x128xf32>
    %102 = vector.shape_cast %101 : vector<256x128xf32> to vector<16x16x128xf32>
    %c0_58 = arith.constant 0 : index
    %c0_59 = arith.constant 0 : index
    %c0_60 = arith.constant 0 : index
    %c0_61 = arith.constant 0 : index
    %103 = vector.load %arg12[%c0_58, %c0_59, %c0_60, %c0_61] : memref<1x16x16x128xf32, #tpu.memory_space<vmem>>, vector<1x16x16x128xf32>
    %104 = vector.shape_cast %103 : vector<1x16x16x128xf32> to vector<16x16x128xf32>
    %105 = vector.shape_cast %102 : vector<16x16x128xf32> to vector<1x16x16x128xf32>
    tpu.vector_store %arg12[%c0_58, %c0_59, %c0_60, %c0_61], %105 {strides = array<i32>} : memref<1x16x16x128xf32, #tpu.memory_space<vmem>>, vector<1x16x16x128xf32>,
    return
  }
  func.func @transform_0(%arg0: i32) -> (i32, i32, i32, i32) {
    %c0_i32 = arith.constant 0 : i32
    %c0_i32_0 = arith.constant 0 : i32
    %c0_i32_1 = arith.constant 0 : i32
    %c0_i32_2 = arith.constant 0 : i32
    return %arg0, %c0_i32, %c0_i32_0, %c0_i32_1 : i32, i32, i32, i32
  }
  func.func @transform_1(%arg0: i32) -> (i32, i32, i32) {
    %c0_i32 = arith.constant 0 : i32
    %c0_i32_0 = arith.constant 0 : i32
    %c0_i32_1 = arith.constant 0 : i32
    %c0_i32_2 = arith.constant 0 : i32
    return %c0_i32, %c0_i32_0, %c0_i32_1 : i32, i32, i32
  }
  func.func @transform_2(%arg0: i32) -> (i32, i32) {
    %c0_i32 = arith.constant 0 : i32
    %c0_i32_0 = arith.constant 0 : i32
    %c0_i32_1 = arith.constant 0 : i32
    return %c0_i32, %c0_i32_0 : i32, i32
  }
  func.func @transform_3(%arg0: i32) -> (i32, i32) {
    %c0_i32 = arith.constant 0 : i32
    %c0_i32_0 = arith.constant 0 : i32
    %c0_i32_1 = arith.constant 0 : i32
    return %c0_i32, %c0_i32_0 : i32, i32
  }
  func.func @transform_4(%arg0: i32) -> (i32, i32) {
    %c0_i32 = arith.constant 0 : i32
    %c0_i32_0 = arith.constant 0 : i32
    %c0_i32_1 = arith.constant 0 : i32
    return %c0_i32, %c0_i32_0 : i32, i32
  }
  func.func @transform_5(%arg0: i32) -> (i32, i32) {
    %c0_i32 = arith.constant 0 : i32
    %c0_i32_0 = arith.constant 0 : i32
    %c0_i32_1 = arith.constant 0 : i32
    return %c0_i32, %c0_i32_0 : i32, i32
  }
  func.func @transform_6(%arg0: i32) -> (i32, i32) {
    %c0_i32 = arith.constant 0 : i32
    %c0_i32_0 = arith.constant 0 : i32
    %c0_i32_1 = arith.constant 0 : i32
    return %c0_i32, %c0_i32_0 : i32, i32
  }
  func.func @transform_7(%arg0: i32) -> (i32, i32) {
    %c0_i32 = arith.constant 0 : i32
    %c0_i32_0 = arith.constant 0 : i32
    %c0_i32_1 = arith.constant 0 : i32
    return %c0_i32, %c0_i32_0 : i32, i32
  }
  func.func @transform_8(%arg0: i32) -> (i32, i32) {
    %c0_i32 = arith.constant 0 : i32
    %c0_i32_0 = arith.constant 0 : i32
    %c0_i32_1 = arith.constant 0 : i32
    return %c0_i32, %c0_i32_0 : i32, i32
  }
  func.func @transform_9(%arg0: i32) -> (i32, i32) {
    %c0_i32 = arith.constant 0 : i32
    %c0_i32_0 = arith.constant 0 : i32
    %c0_i32_1 = arith.constant 0 : i32
    return %c0_i32, %c0_i32_0 : i32, i32
  }
  func.func @transform_10(%arg0: i32) -> (i32, i32, i32, i32) {
    %c0_i32 = arith.constant 0 : i32
    %c0_i32_0 = arith.constant 0 : i32
    %c0_i32_1 = arith.constant 0 : i32
    %c0_i32_2 = arith.constant 0 : i32
    return %arg0, %c0_i32, %c0_i32_0, %c0_i32_1 : i32, i32, i32, i32
  }
  func.func @transform_11(%arg0: i32) -> (i32, i32, i32, i32) {
    %c0_i32 = arith.constant 0 : i32
    %c0_i32_0 = arith.constant 0 : i32
    %c0_i32_1 = arith.constant 0 : i32
    %c0_i32_2 = arith.constant 0 : i32
    return %arg0, %c0_i32, %c0_i32_0, %c0_i32_1 : i32, i32, i32, i32
  }
}

</mosaic_0001>

<llo_original>
// kernel: forward_jit.3
$region0: #{forward_jit.3}
  #allocation0 [shape = 'u32[]', space=smem, size = 0x4, offset = 0x4, fixed_abs, tag = 'smem constant byte address 0x4 - core index']
  #allocation1 [shape = 'u32[144,128]{1,0:T(1,128)}', space=vmem, size = 0x12000, scoped, tag = 'internal scratch']
  %s0 = inlined_call_operand.hbm [shape: bf16[2,18,18,128], index: 0, kind: input, shape index: {}]
  %s1 = inlined_call_operand.hbm [shape: bf16[9,128,128], index: 1, kind: input, shape index: {}]
  %s2 = inlined_call_operand.hbm [shape: f32[1,128], index: 2, kind: input, shape index: {}]
  %s3 = inlined_call_operand.hbm [shape: f32[1,128], index: 3, kind: input, shape index: {}]
  %s4 = inlined_call_operand.hbm [shape: bf16[128,128], index: 4, kind: input, shape index: {}]
  %s5 = inlined_call_operand.hbm [shape: bf16[128,128], index: 5, kind: input, shape index: {}]
  %s6 = inlined_call_operand.hbm [shape: f32[1,128], index: 6, kind: input, shape index: {}]
  %s7 = inlined_call_operand.hbm [shape: f32[1,128], index: 7, kind: input, shape index: {}]
  %s8 = inlined_call_operand.hbm [shape: bf16[128,128], index: 8, kind: input, shape index: {}]
  %s9 = inlined_call_operand.hbm [shape: f32[1,128], index: 9, kind: input, shape index: {}]
  %s10 = inlined_call_operand.hbm [shape: f32[2,16,16,128], index: 10, kind: output, shape index: {0}]
  %s11 = inlined_call_operand.hbm [shape: f32[2,16,16,128], index: 11, kind: output, shape index: {1}]
  %12 = xla_tuple %s10, %s11
  %s13 = sld [smem:[#allocation0]]
  $region121: #{forward_jit.3} parent=0
    _
  %s15 = ssub.s32 1, %s13
  %s16 = scalar_select 0, %s15, %s13
  $region1: #{forward_jit.3} parent=0
    #allocation2 [shape = 'u8[221184]{0}', space=vmem, size = 0x36000, scoped, tag = 'input window, operand 0']
    #allocation3 [shape = 's32[2]{0}', space=sflag, size = 0x8, scoped, tag = 'scoped memory for forward_jit.3']
    #allocation4 [shape = 's32[2]{0}', space=sflag, size = 0x8, scoped, tag = 'scoped memory for forward_jit.3']
    #allocation5 [shape = 'u8[294912]{0}', space=vmem, size = 0x48000, scoped, tag = 'input window, operand 1, single buffered']
    #allocation6 [shape = 's32[1]{0}', space=sflag, size = 0x4, scoped, tag = 'scoped memory for forward_jit.3']
    #allocation7 [shape = 'u8[512]{0}', space=vmem, size = 0x400, scoped, tag = 'input window, operand 2, single buffered']
    #allocation8 [shape = 'u8[512]{0}', space=vmem, size = 0x400, scoped, tag = 'input window, operand 3, single buffered']
    #allocation9 [shape = 's32[1]{0}', space=sflag, size = 0x4, scoped, tag = 'scoped memory for forward_jit.3']
    #allocation10 [shape = 'u8[32768]{0}', space=vmem, size = 0x8000, scoped, tag = 'input window, operand 4, single buffered']
    #allocation11 [shape = 'u8[32768]{0}', space=vmem, size = 0x8000, scoped, tag = 'input window, operand 5, single buffered']
    #allocation12 [shape = 's32[1]{0}', space=sflag, size = 0x4, scoped, tag = 'scoped memory for forward_jit.3']
    #allocation13 [shape = 'u8[512]{0}', space=vmem, size = 0x400, scoped, tag = 'input window, operand 6, single buffered']
    #allocation14 [shape = 'u8[512]{0}', space=vmem, size = 0x400, scoped, tag = 'input window, operand 7, single buffered']
    #allocation15 [shape = 's32[1]{0}', space=sflag, size = 0x4, scoped, tag = 'scoped memory for forward_jit.3']
    #allocation16 [shape = 'u8[32768]{0}', space=vmem, size = 0x8000, scoped, tag = 'input window, operand 8, single buffered']
    #allocation17 [shape = 'u8[512]{0}', space=vmem, size = 0x400, scoped, tag = 'input window, operand 9, single buffered']
    #allocation18 [shape = 's32[1]{0}', space=sflag, size = 0x4, scoped, tag = 'scoped memory for forward_jit.3']
    #allocation19 [shape = 'u8[262144]{0}', space=vmem, size = 0x40000, scoped, tag = 'output window, operand 0']
    #allocation20 [shape = 'u8[262144]{0}', space=vmem, size = 0x40000, scoped, tag = 'output window, operand 1']
    #allocation21 [shape = 's32[2]{0}', space=sflag, size = 0x8, scoped, tag = 'scoped memory for forward_jit.3']
    %17 = vsyncpa [#allocation3], 0
    %s18 = scalar_lea.sflag [#allocation3], 1
    %19 = vsyncpa %s18, 0
    %20 = vsyncpa [#allocation6], 0
    %21 = vsyncpa [#allocation9], 0
    %22 = vsyncpa [#allocation12], 0
    %23 = vsyncpa [#allocation15], 0
    %24 = vsyncpa [#allocation18], 0
    %25 = vsyncpa [#allocation4], 0
    %s26 = scalar_lea.sflag [#allocation4], 1
    %27 = vsyncpa %s26, 0
    %28 = vsyncpa [#allocation21], 0
    %s29 = scalar_lea.sflag [#allocation21], 1
    %30 = vsyncpa %s29, 0
    loop: start=0, step=1, limit=4
    $region2: #{forward_jit.3} parent=1 // loop_pre_header
      _
    $region3: #{forward_jit.3} parent=1 // loop_header
      %s32 = sphi 0, %s36
      %p33 = scmp.ge.s32.totalorder %s32, 4
      %s42 = sphi 0, %s44
      %s45 = sphi 0, %s42
      %s46 = sphi 0, %s45
      %s62 = sphi 0, %s46
      %s66 = sphi 0, %s66
      %s68 = sphi 0, %s66
      %s69 = sphi 0, %s68
      %s83 = sphi 0, %s69
      %s87 = sphi 0, %s87
      %s89 = sphi 0, %s87
      %s90 = sphi 0, %s89
      %s104 = sphi 0, %s90
      %s108 = sphi 0, %s108
      %s110 = sphi 0, %s108
      %s111 = sphi 0, %s110
      %s125 = sphi 0, %s111
      %s129 = sphi 0, %s129
      %s131 = sphi 0, %s129
      %s132 = sphi 0, %s131
      %s146 = sphi 0, %s132
      %s150 = sphi 0, %s150
      %s152 = sphi 0, %s150
      %s153 = sphi 0, %s152
      %s167 = sphi 0, %s153
      %s171 = sphi 0, %s171
      %s173 = sphi 0, %s171
      %s174 = sphi 0, %s173
      %s188 = sphi 0, %s174
      %s192 = sphi 0, %s192
      %s194 = sphi 0, %s192
      %s195 = sphi 0, %s194
      %s209 = sphi 0, %s195
      %s213 = sphi 0, %s213
      %s215 = sphi 0, %s213
      %s216 = sphi 0, %s215
      %s230 = sphi 0, %s216
      %s234 = sphi 0, %s234
      %s236 = sphi 0, %s234
      %s237 = sphi 0, %s236
      %s251 = sphi 0, %s237
      %s257 = sphi 0, %s259
      %s260 = sphi 0, %s257
      %s261 = sphi 0, %s260
      %s277 = sphi 0, %s261
      %s283 = sphi 0, %s285
      %s286 = sphi 0, %s283
      %s287 = sphi 0, %s286
      %s303 = sphi 0, %s287
    $region4: #{forward_jit.3} parent=1 // loop_header_branch
      %35 = sbr.rel (%p33) target = $region8
    $region5: #{forward_jit.3} parent=1 // loop_body
      %s37 = ssub.s32 %s32, 1
      %s38 = ssub.s32 %s32, 2
      %s39 = sadd.s32 %s32, 1
      %s40 = ssub.s32 %s32, %s39
      %p41 = scmp.eq.s32.totalorder %s40, 0
      %s43 = sadd.s32 %s42, 1
      %s44 = scalar_select %p41, %s42, %s43
      %p47 = pneg %p41
      %p48 = scmp.eq.s32.totalorder %s32, 1
      %p49 = por %p47, %p48
      %p50 = scmp.ne.s32.totalorder %s42, %s45
      %p51 = scmp.eq.s32.totalorder %s32, 0
      %p52 = por %p50, %p51
      %p53 = scmp.ne.s32.totalorder %s42, %s45
      %p54 = scmp.eq.s32.totalorder %s37, 1
      %p55 = por %p53, %p54
      %p56 = scmp.ne.s32.totalorder %s45, %s46
      %p57 = scmp.eq.s32.totalorder %s37, 0
      %p58 = por %p56, %p57
      %p59 = scmp.ne.s32.totalorder %s45, %s46
      %p60 = scmp.eq.s32.totalorder %s38, 1
      %p61 = por %p59, %p60
      %p63 = scmp.ne.s32.totalorder %s46, %s62
      %p64 = scmp.eq.s32.totalorder %s38, 0
      %p65 = por %p63, %p64
      %s67 = sadd.s32 %s66, 1
      %p70 = scmp.eq.s32.totalorder %s32, 1
      %p71 = scmp.ne.s32.totalorder %s66, %s68
      %p72 = scmp.eq.s32.totalorder %s32, 0
      %p73 = por %p71, %p72
      %p74 = scmp.ne.s32.totalorder %s66, %s68
      %p75 = scmp.eq.s32.totalorder %s37, 1
      %p76 = por %p74, %p75
      %p77 = scmp.ne.s32.totalorder %s68, %s69
      %p78 = scmp.eq.s32.totalorder %s37, 0
      %p79 = por %p77, %p78
      %p80 = scmp.ne.s32.totalorder %s68, %s69
      %p81 = scmp.eq.s32.totalorder %s38, 1
      %p82 = por %p80, %p81
      %p84 = scmp.ne.s32.totalorder %s69, %s83
      %p85 = scmp.eq.s32.totalorder %s38, 0
      %p86 = por %p84, %p85
      %s88 = sadd.s32 %s87, 1
      %p91 = scmp.eq.s32.totalorder %s32, 1
      %p92 = scmp.ne.s32.totalorder %s87, %s89
      %p93 = scmp.eq.s32.totalorder %s32, 0
      %p94 = por %p92, %p93
      %p95 = scmp.ne.s32.totalorder %s87, %s89
      %p96 = scmp.eq.s32.totalorder %s37, 1
      %p97 = por %p95, %p96
      %p98 = scmp.ne.s32.totalorder %s89, %s90
      %p99 = scmp.eq.s32.totalorder %s37, 0
      %p100 = por %p98, %p99
      %p101 = scmp.ne.s32.totalorder %s89, %s90
      %p102 = scmp.eq.s32.totalorder %s38, 1
      %p103 = por %p101, %p102
      %p105 = scmp.ne.s32.totalorder %s90, %s104
      %p106 = scmp.eq.s32.totalorder %s38, 0
      %p107 = por %p105, %p106
      %s109 = sadd.s32 %s108, 1
      %p112 = scmp.eq.s32.totalorder %s32, 1
      %p113 = scmp.ne.s32.totalorder %s108, %s110
      %p114 = scmp.eq.s32.totalorder %s32, 0
      %p115 = por %p113, %p114
      %p116 = scmp.ne.s32.totalorder %s108, %s110
      %p117 = scmp.eq.s32.totalorder %s37, 1
      %p118 = por %p116, %p117
      %p119 = scmp.ne.s32.totalorder %s110, %s111
      %p120 = scmp.eq.s32.totalorder %s37, 0
      %p121 = por %p119, %p120
      %p122 = scmp.ne.s32.totalorder %s110, %s111
      %p123 = scmp.eq.s32.totalorder %s38, 1
      %p124 = por %p122, %p123
      %p126 = scmp.ne.s32.totalorder %s111, %s125
      %p127 = scmp.eq.s32.totalorder %s38, 0
      %p128 = por %p126, %p127
      %s130 = sadd.s32 %s129, 1
      %p133 = scmp.eq.s32.totalorder %s32, 1
      %p134 = scmp.ne.s32.totalorder %s129, %s131
      %p135 = scmp.eq.s32.totalorder %s32, 0
      %p136 = por %p134, %p135
      %p137 = scmp.ne.s32.totalorder %s129, %s131
      %p138 = scmp.eq.s32.totalorder %s37, 1
      %p139 = por %p137, %p138
      %p140 = scmp.ne.s32.totalorder %s131, %s132
      %p141 = scmp.eq.s32.totalorder %s37, 0
      %p142 = por %p140, %p141
      %p143 = scmp.ne.s32.totalorder %s131, %s132
      %p144 = scmp.eq.s32.totalorder %s38, 1
      %p145 = por %p143, %p144
      %p147 = scmp.ne.s32.totalorder %s132, %s146
      %p148 = scmp.eq.s32.totalorder %s38, 0
      %p149 = por %p147, %p148
      %s151 = sadd.s32 %s150, 1
      %p154 = scmp.eq.s32.totalorder %s32, 1
      %p155 = scmp.ne.s32.totalorder %s150, %s152
      %p156 = scmp.eq.s32.totalorder %s32, 0
      %p157 = por %p155, %p156
      %p158 = scmp.ne.s32.totalorder %s150, %s152
      %p159 = scmp.eq.s32.totalorder %s37, 1
      %p160 = por %p158, %p159
      %p161 = scmp.ne.s32.totalorder %s152, %s153
      %p162 = scmp.eq.s32.totalorder %s37, 0
      %p163 = por %p161, %p162
      %p164 = scmp.ne.s32.totalorder %s152, %s153
      %p165 = scmp.eq.s32.totalorder %s38, 1
      %p166 = por %p164, %p165
      %p168 = scmp.ne.s32.totalorder %s153, %s167
      %p169 = scmp.eq.s32.totalorder %s38, 0
      %p170 = por %p168, %p169
      %s172 = sadd.s32 %s171, 1
      %p175 = scmp.eq.s32.totalorder %s32, 1
      %p176 = scmp.ne.s32.totalorder %s171, %s173
      %p177 = scmp.eq.s32.totalorder %s32, 0
      %p178 = por %p176, %p177
      %p179 = scmp.ne.s32.totalorder %s171, %s173
      %p180 = scmp.eq.s32.totalorder %s37, 1
      %p181 = por %p179, %p180
      %p182 = scmp.ne.s32.totalorder %s173, %s174
      %p183 = scmp.eq.s32.totalorder %s37, 0
      %p184 = por %p182, %p183
      %p185 = scmp.ne.s32.totalorder %s173, %s174
      %p186 = scmp.eq.s32.totalorder %s38, 1
      %p187 = por %p185, %p186
      %p189 = scmp.ne.s32.totalorder %s174, %s188
      %p190 = scmp.eq.s32.totalorder %s38, 0
      %p191 = por %p189, %p190
      %s193 = sadd.s32 %s192, 1
      %p196 = scmp.eq.s32.totalorder %s32, 1
      %p197 = scmp.ne.s32.totalorder %s192, %s194
      %p198 = scmp.eq.s32.totalorder %s32, 0
      %p199 = por %p197, %p198
      %p200 = scmp.ne.s32.totalorder %s192, %s194
      %p201 = scmp.eq.s32.totalorder %s37, 1
      %p202 = por %p200, %p201
      %p203 = scmp.ne.s32.totalorder %s194, %s195
      %p204 = scmp.eq.s32.totalorder %s37, 0
      %p205 = por %p203, %p204
      %p206 = scmp.ne.s32.totalorder %s194, %s195
      %p207 = scmp.eq.s32.totalorder %s38, 1
      %p208 = por %p206, %p207
      %p210 = scmp.ne.s32.totalorder %s195, %s209
      %p211 = scmp.eq.s32.totalorder %s38, 0
      %p212 = por %p210, %p211
      %s214 = sadd.s32 %s213, 1
      %p217 = scmp.eq.s32.totalorder %s32, 1
      %p218 = scmp.ne.s32.totalorder %s213, %s215
      %p219 = scmp.eq.s32.totalorder %s32, 0
      %p220 = por %p218, %p219
      %p221 = scmp.ne.s32.totalorder %s213, %s215
      %p222 = scmp.eq.s32.totalorder %s37, 1
      %p223 = por %p221, %p222
      %p224 = scmp.ne.s32.totalorder %s215, %s216
      %p225 = scmp.eq.s32.totalorder %s37, 0
      %p226 = por %p224, %p225
      %p227 = scmp.ne.s32.totalorder %s215, %s216
      %p228 = scmp.eq.s32.totalorder %s38, 1
      %p229 = por %p227, %p228
      %p231 = scmp.ne.s32.totalorder %s216, %s230
      %p232 = scmp.eq.s32.totalorder %s38, 0
      %p233 = por %p231, %p232
      %s235 = sadd.s32 %s234, 1
      %p238 = scmp.eq.s32.totalorder %s32, 1
      %p239 = scmp.ne.s32.totalorder %s234, %s236
      %p240 = scmp.eq.s32.totalorder %s32, 0
      %p241 = por %p239, %p240
      %p242 = scmp.ne.s32.totalorder %s234, %s236
      %p243 = scmp.eq.s32.totalorder %s37, 1
      %p244 = por %p242, %p243
      %p245 = scmp.ne.s32.totalorder %s236, %s237
      %p246 = scmp.eq.s32.totalorder %s37, 0
      %p247 = por %p245, %p246
      %p248 = scmp.ne.s32.totalorder %s236, %s237
      %p249 = scmp.eq.s32.totalorder %s38, 1
      %p250 = por %p248, %p249
      %p252 = scmp.ne.s32.totalorder %s237, %s251
      %p253 = scmp.eq.s32.totalorder %s38, 0
      %p254 = por %p252, %p253
      %s255 = ssub.s32 %s32, %s39
      %p256 = scmp.eq.s32.totalorder %s255, 0
      %s258 = sadd.s32 %s257, 1
      %s259 = scalar_select %p256, %s257, %s258
      %p262 = pneg %p256
      %p263 = scmp.eq.s32.totalorder %s32, 1
      %p264 = por %p262, %p263
      %p265 = scmp.ne.s32.totalorder %s257, %s260
      %p266 = scmp.eq.s32.totalorder %s32, 0
      %p267 = por %p265, %p266
      %p268 = scmp.ne.s32.totalorder %s257, %s260
      %p269 = scmp.eq.s32.totalorder %s37, 1
      %p270 = por %p268, %p269
      %p271 = scmp.ne.s32.totalorder %s260, %s261
      %p272 = scmp.eq.s32.totalorder %s37, 0
      %p273 = por %p271, %p272
      %p274 = scmp.ne.s32.totalorder %s260, %s261
      %p275 = scmp.eq.s32.totalorder %s38, 1
      %p276 = por %p274, %p275
      %p278 = scmp.ne.s32.totalorder %s261, %s277
      %p279 = scmp.eq.s32.totalorder %s38, 0
      %p280 = por %p278, %p279
      %s281 = ssub.s32 %s32, %s39
      %p282 = scmp.eq.s32.totalorder %s281, 0
      %s284 = sadd.s32 %s283, 1
      %s285 = scalar_select %p282, %s283, %s284
      %p288 = pneg %p282
      %p289 = scmp.eq.s32.totalorder %s32, 1
      %p290 = por %p288, %p289
      %p291 = scmp.ne.s32.totalorder %s283, %s286
      %p292 = scmp.eq.s32.totalorder %s32, 0
      %p293 = por %p291, %p292
      %p294 = scmp.ne.s32.totalorder %s283, %s286
      %p295 = scmp.eq.s32.totalorder %s37, 1
      %p296 = por %p294, %p295
      %p297 = scmp.ne.s32.totalorder %s286, %s287
      %p298 = scmp.eq.s32.totalorder %s37, 0
      %p299 = por %p297, %p298
      %p300 = scmp.ne.s32.totalorder %s286, %s287
      %p301 = scmp.eq.s32.totalorder %s38, 1
      %p302 = por %p300, %p301
      %p304 = scmp.ne.s32.totalorder %s287, %s303
      %p305 = scmp.eq.s32.totalorder %s38, 0
      %p306 = por %p304, %p305
      %p307 = scmp.le.s32.totalorder 1, %s32
      %p308 = scmp.lt.s32.totalorder %s32, 3
      %p309 = pnand %p307, %p308
      %p310 = pneg %p309
      // Predicated region
      $region9: #{forward_jit.3} parent=5 // pred_check
        _
      $region10: #{forward_jit.3} parent=5 // pred_check_branch
        %312 = sbr.rel (%p309) target = $region12
      $region11: #{forward_jit.3} parent=5 // pred_region
        %s313 = ssub.s32 %s32, 1
        // Predicated region
        $region13: #{forward_jit.3} parent=11 // pred_check
          %p314 = pneg %p79
        $region14: #{forward_jit.3} parent=11 // pred_check_branch
          %316 = sbr.rel (%p314) target = $region16
        $region15: #{forward_jit.3} parent=11 // pred_region
          %s318 = ssub.s32 9216, 9216
          %319 = vsyncadd [#allocation6], %s318
          %s320 = sshll.u32 [#allocation5], 4
          %s321 = int_to_ptr.vmem [resolvable:$true] %s320
          %326 = dma.hbm_to_vmem [thread:$0]  %s1, 9216, %s321, [#allocation6], 64, 64, 4
        $region16: #{forward_jit.3} parent=11 // pred_fallthru
          _
        // Predicated region
        $region17: #{forward_jit.3} parent=11 // pred_check
          %p327 = pneg %p100
        $region18: #{forward_jit.3} parent=11 // pred_check_branch
          %329 = sbr.rel (%p327) target = $region20
        $region19: #{forward_jit.3} parent=11 // pred_region
          %s331 = ssub.s32 16, 16
          %332 = vsyncadd [#allocation6], %s331
          %s334 = sshll.u32 [#allocation7], 4
          %s335 = int_to_ptr.vmem [resolvable:$true] %s334
          %337 = dma.hbm_to_vmem [thread:$0]  %s2, 16, %s335, [#allocation6]
        $region20: #{forward_jit.3} parent=11 // pred_fallthru
          _
        // Predicated region
        $region21: #{forward_jit.3} parent=11 // pred_check
          %p338 = pneg %p121
        $region22: #{forward_jit.3} parent=11 // pred_check_branch
          %340 = sbr.rel (%p338) target = $region24
        $region23: #{forward_jit.3} parent=11 // pred_region
          %s342 = ssub.s32 16, 16
          %343 = vsyncadd [#allocation9], %s342
          %s345 = sshll.u32 [#allocation8], 4
          %s346 = int_to_ptr.vmem [resolvable:$true] %s345
          %348 = dma.hbm_to_vmem [thread:$0]  %s3, 16, %s346, [#allocation9]
        $region24: #{forward_jit.3} parent=11 // pred_fallthru
          _
        // Predicated region
        $region25: #{forward_jit.3} parent=11 // pred_check
          %p349 = pneg %p142
        $region26: #{forward_jit.3} parent=11 // pred_check_branch
          %351 = sbr.rel (%p349) target = $region28
        $region27: #{forward_jit.3} parent=11 // pred_region
          %s353 = ssub.s32 1024, 1024
          %354 = vsyncadd [#allocation9], %s353
          %s355 = sshll.u32 [#allocation10], 4
          %s356 = int_to_ptr.vmem [resolvable:$true] %s355
          %361 = dma.hbm_to_vmem [thread:$0]  %s4, 1024, %s356, [#allocation9], 64, 64, 4
        $region28: #{forward_jit.3} parent=11 // pred_fallthru
          _
        // Predicated region
        $region29: #{forward_jit.3} parent=11 // pred_check
          %p362 = pneg %p163
        $region30: #{forward_jit.3} parent=11 // pred_check_branch
          %364 = sbr.rel (%p362) target = $region32
        $region31: #{forward_jit.3} parent=11 // pred_region
          %s366 = ssub.s32 1024, 1024
          %367 = vsyncadd [#allocation12], %s366
          %s368 = sshll.u32 [#allocation11], 4
          %s369 = int_to_ptr.vmem [resolvable:$true] %s368
          %374 = dma.hbm_to_vmem [thread:$0]  %s5, 1024, %s369, [#allocation12], 64, 64, 4
        $region32: #{forward_jit.3} parent=11 // pred_fallthru
          _
        // Predicated region
        $region33: #{forward_jit.3} parent=11 // pred_check
          %p375 = pneg %p184
        $region34: #{forward_jit.3} parent=11 // pred_check_branch
          %377 = sbr.rel (%p375) target = $region36
        $region35: #{forward_jit.3} parent=11 // pred_region
          %s379 = ssub.s32 16, 16
          %380 = vsyncadd [#allocation12], %s379
          %s382 = sshll.u32 [#allocation13], 4
          %s383 = int_to_ptr.vmem [resolvable:$true] %s382
          %385 = dma.hbm_to_vmem [thread:$0]  %s6, 16, %s383, [#allocation12]
        $region36: #{forward_jit.3} parent=11 // pred_fallthru
          _
        // Predicated region
        $region37: #{forward_jit.3} parent=11 // pred_check
          %p386 = pneg %p205
        $region38: #{forward_jit.3} parent=11 // pred_check_branch
          %388 = sbr.rel (%p386) target = $region40
        $region39: #{forward_jit.3} parent=11 // pred_region
          %s390 = ssub.s32 16, 16
          %391 = vsyncadd [#allocation15], %s390
          %s393 = sshll.u32 [#allocation14], 4
          %s394 = int_to_ptr.vmem [resolvable:$true] %s393
          %396 = dma.hbm_to_vmem [thread:$0]  %s7, 16, %s394, [#allocation15]
        $region40: #{forward_jit.3} parent=11 // pred_fallthru
          _
        // Predicated region
        $region41: #{forward_jit.3} parent=11 // pred_check
          %p397 = pneg %p226
        $region42: #{forward_jit.3} parent=11 // pred_check_branch
          %399 = sbr.rel (%p397) target = $region44
        $region43: #{forward_jit.3} parent=11 // pred_region
          %s401 = ssub.s32 1024, 1024
          %402 = vsyncadd [#allocation15], %s401
          %s403 = sshll.u32 [#allocation16], 4
          %s404 = int_to_ptr.vmem [resolvable:$true] %s403
          %409 = dma.hbm_to_vmem [thread:$0]  %s8, 1024, %s404, [#allocation15], 64, 64, 4
        $region44: #{forward_jit.3} parent=11 // pred_fallthru
          _
        // Predicated region
        $region45: #{forward_jit.3} parent=11 // pred_check
          %p410 = pneg %p247
        $region46: #{forward_jit.3} parent=11 // pred_check_branch
          %412 = sbr.rel (%p410) target = $region48
        $region47: #{forward_jit.3} parent=11 // pred_region
          %s414 = ssub.s32 16, 16
          %415 = vsyncadd [#allocation18], %s414
          %s417 = sshll.u32 [#allocation17], 4
          %s418 = int_to_ptr.vmem [resolvable:$true] %s417
          %420 = dma.hbm_to_vmem [thread:$0]  %s9, 16, %s418, [#allocation18]
        $region48: #{forward_jit.3} parent=11 // pred_fallthru
          _
      $region12: #{forward_jit.3} parent=5 // pred_fallthru
        _
      %p421 = scmp.lt.s32.totalorder %s32, 2
      // Predicated region
      $region49: #{forward_jit.3} parent=5 // pred_check
        %p422 = pneg %p421
      $region50: #{forward_jit.3} parent=5 // pred_check_branch
        %424 = sbr.rel (%p422) target = $region52
      $region51: #{forward_jit.3} parent=5 // pred_region
        // Predicated region
        $region53: #{forward_jit.3} parent=51 // pred_check
          %p425 = pneg %p52
        $region54: #{forward_jit.3} parent=51 // pred_check_branch
          %427 = sbr.rel (%p425) target = $region56
        $region55: #{forward_jit.3} parent=51 // pred_region
          %s428 = sand.u32 %s42, 1
          %s429 = scalar_lea.sflag [#allocation3], %s428
          %s430 = sand.u32 %s42, 1
          %s431 = smul.addr %s430, 216
          %s432 = scalar_lea.vmem [#allocation2], %s431
          %s434 = ssub.s32 3456, 3456
          %435 = vsyncadd %s429, %s434
          %s436 = smul.addr %s32, 54
          %s437 = smul.addr %s436, 64
          %s438 = scalar_lea.hbm %s0, %s437
          %s439 = sshll.u32 %s432, 4
          %s440 = int_to_ptr.vmem [resolvable:$true] %s439
          %445 = dma.hbm_to_vmem [thread:$0]  %s438, 3456, %s440, %s429, 64, 64, 4
        $region56: #{forward_jit.3} parent=51 // pred_fallthru
          _
      $region52: #{forward_jit.3} parent=5 // pred_fallthru
        _
      %p446 = scmp.le.s32.totalorder 1, %s32
      %p447 = scmp.lt.s32.totalorder %s32, 3
      %p448 = pnand %p446, %p447
      %p449 = pneg %p448
      // Predicated region
      $region57: #{forward_jit.3} parent=5 // pred_check
        _
      $region58: #{forward_jit.3} parent=5 // pred_check_branch
        %451 = sbr.rel (%p448) target = $region60
      $region59: #{forward_jit.3} parent=5 // pred_region
        %s452 = ssub.s32 %s32, 1
        %s453 = sand.u32 %s45, 1
        %s454 = scalar_lea.sflag [#allocation3], %s453
        %s455 = sand.u32 %s45, 1
        %s456 = smul.addr %s455, 216
        %s457 = scalar_lea.vmem [#allocation2], %s456
        // Predicated region
        $region61: #{forward_jit.3} parent=59 // pred_check
          %p458 = pneg %p58
        $region62: #{forward_jit.3} parent=59 // pred_check_branch
          %460 = sbr.rel (%p458) target = $region64
        $region63: #{forward_jit.3} parent=59 // pred_region
          %461 = dma.done %s454, 3456
        $region64: #{forward_jit.3} parent=59 // pred_fallthru
          _
        // Predicated region
        $region65: #{forward_jit.3} parent=59 // pred_check
          %p462 = pneg %p79
        $region66: #{forward_jit.3} parent=59 // pred_check_branch
          %464 = sbr.rel (%p462) target = $region68
        $region67: #{forward_jit.3} parent=59 // pred_region
          %465 = dma.done [#allocation6], 9216
        $region68: #{forward_jit.3} parent=59 // pred_fallthru
          _
        // Predicated region
        $region69: #{forward_jit.3} parent=59 // pred_check
          %p466 = pneg %p100
        $region70: #{forward_jit.3} parent=59 // pred_check_branch
          %468 = sbr.rel (%p466) target = $region72
        $region71: #{forward_jit.3} parent=59 // pred_region
          %469 = dma.done [#allocation6], 16
        $region72: #{forward_jit.3} parent=59 // pred_fallthru
          _
        // Predicated region
        $region73: #{forward_jit.3} parent=59 // pred_check
          %p470 = pneg %p121
        $region74: #{forward_jit.3} parent=59 // pred_check_branch
          %472 = sbr.rel (%p470) target = $region76
        $region75: #{forward_jit.3} parent=59 // pred_region
          %473 = dma.done [#allocation9], 16
        $region76: #{forward_jit.3} parent=59 // pred_fallthru
          _
        // Predicated region
        $region77: #{forward_jit.3} parent=59 // pred_check
          %p474 = pneg %p142
        $region78: #{forward_jit.3} parent=59 // pred_check_branch
          %476 = sbr.rel (%p474) target = $region80
        $region79: #{forward_jit.3} parent=59 // pred_region
          %477 = dma.done [#allocation9], 1024
        $region80: #{forward_jit.3} parent=59 // pred_fallthru
          _
        // Predicated region
        $region81: #{forward_jit.3} parent=59 // pred_check
          %p478 = pneg %p163
        $region82: #{forward_jit.3} parent=59 // pred_check_branch
          %480 = sbr.rel (%p478) target = $region84
        $region83: #{forward_jit.3} parent=59 // pred_region
          %481 = dma.done [#allocation12], 1024
        $region84: #{forward_jit.3} parent=59 // pred_fallthru
          _
        // Predicated region
        $region85: #{forward_jit.3} parent=59 // pred_check
          %p482 = pneg %p184
        $region86: #{forward_jit.3} parent=59 // pred_check_branch
          %484 = sbr.rel (%p482) target = $region88
        $region87: #{forward_jit.3} parent=59 // pred_region
          %485 = dma.done [#allocation12], 16
        $region88: #{forward_jit.3} parent=59 // pred_fallthru
          _
        // Predicated region
        $region89: #{forward_jit.3} parent=59 // pred_check
          %p486 = pneg %p205
        $region90: #{forward_jit.3} parent=59 // pred_check_branch
          %488 = sbr.rel (%p486) target = $region92
        $region91: #{forward_jit.3} parent=59 // pred_region
          %489 = dma.done [#allocation15], 16
        $region92: #{forward_jit.3} parent=59 // pred_fallthru
          _
        // Predicated region
        $region93: #{forward_jit.3} parent=59 // pred_check
          %p490 = pneg %p226
        $region94: #{forward_jit.3} parent=59 // pred_check_branch
          %492 = sbr.rel (%p490) target = $region96
        $region95: #{forward_jit.3} parent=59 // pred_region
          %493 = dma.done [#allocation15], 1024
        $region96: #{forward_jit.3} parent=59 // pred_fallthru
          _
        // Predicated region
        $region97: #{forward_jit.3} parent=59 // pred_check
          %p494 = pneg %p247
        $region98: #{forward_jit.3} parent=59 // pred_check_branch
          %496 = sbr.rel (%p494) target = $region100
        $region99: #{forward_jit.3} parent=59 // pred_region
          %497 = dma.done [#allocation18], 16
        $region100: #{forward_jit.3} parent=59 // pred_fallthru
          _
        %s498 = sand.u32 %s45, 1
        %s499 = scalar_lea.sflag [#allocation3], %s498
        %s500 = sand.u32 %s45, 1
        %s501 = smul.addr %s500, 216
        %s502 = scalar_lea.vmem [#allocation2], %s501
        %p503 = pneg %p58
        %p504 = pneg %p55
        %p505 = pneg %p79
        %p506 = pneg %p76
        %p507 = pneg %p100
        %p508 = pneg %p97
        %p509 = pneg %p121
        %p510 = pneg %p118
        %p511 = pneg %p142
        %p512 = pneg %p139
        %p513 = pneg %p163
        %p514 = pneg %p160
        %p515 = pneg %p184
        %p516 = pneg %p181
        %p517 = pneg %p205
        %p518 = pneg %p202
        %p519 = pneg %p226
        %p520 = pneg %p223
        %p521 = pneg %p247
        %p522 = pneg %p244
        %p523 = pneg %p273
        %p524 = pneg %p270
        %s525 = sand.u32 %s260, 1
        %s526 = scalar_lea.sflag [#allocation4], %s525
        %s527 = sand.u32 %s260, 1
        %s528 = smul.addr %s527, 256
        %s529 = scalar_lea.vmem [#allocation19], %s528
        %p530 = pneg %p299
        %p531 = pneg %p296
        %s532 = sand.u32 %s286, 1
        %s533 = scalar_lea.sflag [#allocation21], %s532
        %s534 = sand.u32 %s286, 1
        %s535 = smul.addr %s534, 256
        %s536 = scalar_lea.vmem [#allocation20], %s535
        %v538 = vld [vmem:[%s457] sm:$0xf]
        %v539 = vld [vmem:[%s457 + $0x4] sm:$0xf]
        %v540 = vld [vmem:[%s457 + $0x8] sm:$0x1]
        %v541 = vld [vmem:[%s457 + $0xc] sm:$0xf]
        %v542 = vld [vmem:[%s457 + $0x10] sm:$0xf]
        %v543 = vld [vmem:[%s457 + $0x14] sm:$0x1]
        %v544 = vld [vmem:[%s457 + $0x18] sm:$0xf]
        %v545 = vld [vmem:[%s457 + $0x1c] sm:$0xf]
        %v546 = vld [vmem:[%s457 + $0x20] sm:$0x1]
        %v547 = vld [vmem:[%s457 + $0x24] sm:$0xf]
        %v548 = vld [vmem:[%s457 + $0x28] sm:$0xf]
        %v549 = vld [vmem:[%s457 + $0x2c] sm:$0x1]
        %v550 = vld [vmem:[%s457 + $0x30] sm:$0xf]
        %v551 = vld [vmem:[%s457 + $0x34] sm:$0xf]
        %v552 = vld [vmem:[%s457 + $0x38] sm:$0x1]
        %v553 = vld [vmem:[%s457 + $0x3c] sm:$0xf]
        %v554 = vld [vmem:[%s457 + $0x40] sm:$0xf]
        %v555 = vld [vmem:[%s457 + $0x44] sm:$0x1]
        %v556 = vld [vmem:[%s457 + $0x48] sm:$0xf]
        %v557 = vld [vmem:[%s457 + $0x4c] sm:$0xf]
        %v558 = vld [vmem:[%s457 + $0x50] sm:$0x1]
        %v559 = vld [vmem:[%s457 + $0x54] sm:$0xf]
        %v560 = vld [vmem:[%s457 + $0x58] sm:$0xf]
        %v561 = vld [vmem:[%s457 + $0x5c] sm:$0x1]
        %v562 = vld [vmem:[%s457 + $0x60] sm:$0xf]
        %v563 = vld [vmem:[%s457 + $0x64] sm:$0xf]
        %v564 = vld [vmem:[%s457 + $0x68] sm:$0x1]
        %v565 = vld [vmem:[%s457 + $0x6c] sm:$0xf]
        %v566 = vld [vmem:[%s457 + $0x70] sm:$0xf]
        %v567 = vld [vmem:[%s457 + $0x74] sm:$0x1]
        %v568 = vld [vmem:[%s457 + $0x78] sm:$0xf]
        %v569 = vld [vmem:[%s457 + $0x7c] sm:$0xf]
        %v570 = vld [vmem:[%s457 + $0x80] sm:$0x1]
        %v571 = vld [vmem:[%s457 + $0x84] sm:$0xf]
        %v572 = vld [vmem:[%s457 + $0x88] sm:$0xf]
        %v573 = vld [vmem:[%s457 + $0x8c] sm:$0x1]
        %v574 = vld [vmem:[%s457 + $0x90] sm:$0xf]
        %v575 = vld [vmem:[%s457 + $0x94] sm:$0xf]
        %v576 = vld [vmem:[%s457 + $0x98] sm:$0x1]
        %v577 = vld [vmem:[%s457 + $0x9c] sm:$0xf]
        %v578 = vld [vmem:[%s457 + $0xa0] sm:$0xf]
        %v579 = vld [vmem:[%s457 + $0xa4] sm:$0x1]
        %v580 = vld [vmem:[%s457 + $0xa8] sm:$0xf]
        %v581 = vld [vmem:[%s457 + $0xac] sm:$0xf]
        %v582 = vld [vmem:[%s457 + $0xb0] sm:$0x1]
        %v583 = vld [vmem:[%s457 + $0xb4] sm:$0xf]
        %v584 = vld [vmem:[%s457 + $0xb8] sm:$0xf]
        %v585 = vld [vmem:[%s457 + $0xbc] sm:$0x1]
        %v586 = vld [vmem:[%s457 + $0xc0] sm:$0xf]
        %v587 = vld [vmem:[%s457 + $0xc4] sm:$0xf]
        %v588 = vld [vmem:[%s457 + $0xc8] sm:$0x1]
        %v589 = vld [vmem:[%s457 + $0xcc] sm:$0xf]
        %v590 = vld [vmem:[%s457 + $0xd0] sm:$0xf]
        %v591 = vld [vmem:[%s457 + $0xd4] sm:$0x1]
        %v592 = vld [vmem:[#allocation5] sm:$0xf]
        %v593 = vld [vmem:[#allocation5 + $0x4] sm:$0xf]
        %v594 = vld [vmem:[#allocation5 + $0x8] sm:$0xf]
        %v595 = vld [vmem:[#allocation5 + $0xc] sm:$0xf]
        %v596 = vld [vmem:[#allocation5 + $0x10] sm:$0xf]
        %v597 = vld [vmem:[#allocation5 + $0x14] sm:$0xf]
        %v598 = vld [vmem:[#allocation5 + $0x18] sm:$0xf]
        %v599 = vld [vmem:[#allocation5 + $0x1c] sm:$0xf]
        %v600 = vld [vmem:[#allocation5 + $0x20] sm:$0xf]
        %v601 = vld [vmem:[#allocation5 + $0x24] sm:$0xf]
        %v602 = vld [vmem:[#allocation5 + $0x28] sm:$0xf]
        %v603 = vld [vmem:[#allocation5 + $0x2c] sm:$0xf]
        %v604 = vld [vmem:[#allocation5 + $0x30] sm:$0xf]
        %v605 = vld [vmem:[#allocation5 + $0x34] sm:$0xf]
        %v606 = vld [vmem:[#allocation5 + $0x38] sm:$0xf]
        %v607 = vld [vmem:[#allocation5 + $0x3c] sm:$0xf]
        %vm608 = vsmask.f32 3328
        %vm609 = vsmask.f32 7440
        %vm610 = vmor %vm608, %vm609
        %v612 = vshrl.u32 %v538, 16
        %v614 = vrot.slane %v612, 4
        %v615 = vshll.u32 %v538, 16
        %v617 = vrot.slane %v615, 5
        %v618 = vor.u32 %v614, %v617
        %v619 = vrot.slane %v618, 4
        %v621 = vshll.u32 %v539, 16
        %v623 = vrot.slane %v621, 5
        %v624 = vsel %vm610, %v619, %v623
        %v625 = vshrl.u32 %v539, 16
        %v627 = vrot.slane %v625, 4
        %v628 = vor.u32 %v627, %v623
        %v629 = vrot.slane %v628, 4
        %v631 = vshll.u32 %v540, 16
        %v633 = vrot.slane %v631, 5
        %v634 = vsel %vm610, %v629, %v633
        %v636 = vshrl.u32 %v541, 16
        %v638 = vrot.slane %v636, 4
        %v639 = vshll.u32 %v541, 16
        %v641 = vrot.slane %v639, 5
        %v642 = vor.u32 %v638, %v641
        %v643 = vrot.slane %v642, 4
        %v645 = vshll.u32 %v542, 16
        %v647 = vrot.slane %v645, 5
        %v648 = vsel %vm610, %v643, %v647
        %v649 = vshrl.u32 %v542, 16
        %v651 = vrot.slane %v649, 4
        %v652 = vor.u32 %v651, %v647
        %v653 = vrot.slane %v652, 4
        %v655 = vshll.u32 %v543, 16
        %v657 = vrot.slane %v655, 5
        %v658 = vsel %vm610, %v653, %v657
        %v660 = vshrl.u32 %v544, 16
        %v662 = vrot.slane %v660, 4
        %v663 = vshll.u32 %v544, 16
        %v665 = vrot.slane %v663, 5
        %v666 = vor.u32 %v662, %v665
        %v667 = vrot.slane %v666, 4
        %v669 = vshll.u32 %v545, 16
        %v671 = vrot.slane %v669, 5
        %v672 = vsel %vm610, %v667, %v671
        %v673 = vshrl.u32 %v545, 16
        %v675 = vrot.slane %v673, 4
        %v676 = vor.u32 %v675, %v671
        %v677 = vrot.slane %v676, 4
        %v679 = vshll.u32 %v546, 16
        %v681 = vrot.slane %v679, 5
        %v682 = vsel %vm610, %v677, %v681
        %v684 = vshrl.u32 %v547, 16
        %v686 = vrot.slane %v684, 4
        %v687 = vshll.u32 %v547, 16
        %v689 = vrot.slane %v687, 5
        %v690 = vor.u32 %v686, %v689
        %v691 = vrot.slane %v690, 4
        %v693 = vshll.u32 %v548, 16
        %v695 = vrot.slane %v693, 5
        %v696 = vsel %vm610, %v691, %v695
        %v697 = vshrl.u32 %v548, 16
        %v699 = vrot.slane %v697, 4
        %v700 = vor.u32 %v699, %v695
        %v701 = vrot.slane %v700, 4
        %v703 = vshll.u32 %v549, 16
        %v705 = vrot.slane %v703, 5
        %v706 = vsel %vm610, %v701, %v705
        %v708 = vshrl.u32 %v550, 16
        %v710 = vrot.slane %v708, 4
        %v711 = vshll.u32 %v550, 16
        %v713 = vrot.slane %v711, 5
        %v714 = vor.u32 %v710, %v713
        %v715 = vrot.slane %v714, 4
        %v717 = vshll.u32 %v551, 16
        %v719 = vrot.slane %v717, 5
        %v720 = vsel %vm610, %v715, %v719
        %v721 = vshrl.u32 %v551, 16
        %v723 = vrot.slane %v721, 4
        %v724 = vor.u32 %v723, %v719
        %v725 = vrot.slane %v724, 4
        %v727 = vshll.u32 %v552, 16
        %v729 = vrot.slane %v727, 5
        %v730 = vsel %vm610, %v725, %v729
        %v732 = vshrl.u32 %v553, 16
        %v734 = vrot.slane %v732, 4
        %v735 = vshll.u32 %v553, 16
        %v737 = vrot.slane %v735, 5
        %v738 = vor.u32 %v734, %v737
        %v739 = vrot.slane %v738, 4
        %v741 = vshll.u32 %v554, 16
        %v743 = vrot.slane %v741, 5
        %v744 = vsel %vm610, %v739, %v743
        %v745 = vshrl.u32 %v554, 16
        %v747 = vrot.slane %v745, 4
        %v748 = vor.u32 %v747, %v743
        %v749 = vrot.slane %v748, 4
        %v751 = vshll.u32 %v555, 16
        %v753 = vrot.slane %v751, 5
        %v754 = vsel %vm610, %v749, %v753
        %v756 = vshrl.u32 %v556, 16
        %v758 = vrot.slane %v756, 4
        %v759 = vshll.u32 %v556, 16
        %v761 = vrot.slane %v759, 5
        %v762 = vor.u32 %v758, %v761
        %v763 = vrot.slane %v762, 4
        %v765 = vshll.u32 %v557, 16
        %v767 = vrot.slane %v765, 5
        %v768 = vsel %vm610, %v763, %v767
        %v769 = vshrl.u32 %v557, 16
        %v771 = vrot.slane %v769, 4
        %v772 = vor.u32 %v771, %v767
        %v773 = vrot.slane %v772, 4
        %v775 = vshll.u32 %v558, 16
        %v777 = vrot.slane %v775, 5
        %v778 = vsel %vm610, %v773, %v777
        %v780 = vshrl.u32 %v559, 16
        %v782 = vrot.slane %v780, 4
        %v783 = vshll.u32 %v559, 16
        %v785 = vrot.slane %v783, 5
        %v786 = vor.u32 %v782, %v785
        %v787 = vrot.slane %v786, 4
        %v789 = vshll.u32 %v560, 16
        %v791 = vrot.slane %v789, 5
        %v792 = vsel %vm610, %v787, %v791
        %v793 = vshrl.u32 %v560, 16
        %v795 = vrot.slane %v793, 4
        %v796 = vor.u32 %v795, %v791
        %v797 = vrot.slane %v796, 4
        %v799 = vshll.u32 %v561, 16
        %v801 = vrot.slane %v799, 5
        %v802 = vsel %vm610, %v797, %v801
        %v804 = vshrl.u32 %v562, 16
        %v806 = vrot.slane %v804, 4
        %v807 = vshll.u32 %v562, 16
        %v809 = vrot.slane %v807, 5
        %v810 = vor.u32 %v806, %v809
        %v811 = vrot.slane %v810, 4
        %v813 = vshll.u32 %v563, 16
        %v815 = vrot.slane %v813, 5
        %v816 = vsel %vm610, %v811, %v815
        %v817 = vshrl.u32 %v563, 16
        %v819 = vrot.slane %v817, 4
        %v820 = vor.u32 %v819, %v815
        %v821 = vrot.slane %v820, 4
        %v823 = vshll.u32 %v564, 16
        %v825 = vrot.slane %v823, 5
        %v826 = vsel %vm610, %v821, %v825
        %v828 = vshrl.u32 %v565, 16
        %v830 = vrot.slane %v828, 4
        %v831 = vshll.u32 %v565, 16
        %v833 = vrot.slane %v831, 5
        %v834 = vor.u32 %v830, %v833
        %v835 = vrot.slane %v834, 4
        %v837 = vshll.u32 %v566, 16
        %v839 = vrot.slane %v837, 5
        %v840 = vsel %vm610, %v835, %v839
        %v841 = vshrl.u32 %v566, 16
        %v843 = vrot.slane %v841, 4
        %v844 = vor.u32 %v843, %v839
        %v845 = vrot.slane %v844, 4
        %v847 = vshll.u32 %v567, 16
        %v849 = vrot.slane %v847, 5
        %v850 = vsel %vm610, %v845, %v849
        %v852 = vshrl.u32 %v568, 16
        %v854 = vrot.slane %v852, 4
        %v855 = vshll.u32 %v568, 16
        %v857 = vrot.slane %v855, 5
        %v858 = vor.u32 %v854, %v857
        %v859 = vrot.slane %v858, 4
        %v861 = vshll.u32 %v569, 16
        %v863 = vrot.slane %v861, 5
        %v864 = vsel %vm610, %v859, %v863
        %v865 = vshrl.u32 %v569, 16
        %v867 = vrot.slane %v865, 4
        %v868 = vor.u32 %v867, %v863
        %v869 = vrot.slane %v868, 4
        %v871 = vshll.u32 %v570, 16
        %v873 = vrot.slane %v871, 5
        %v874 = vsel %vm610, %v869, %v873
        %v876 = vshrl.u32 %v571, 16
        %v878 = vrot.slane %v876, 4
        %v879 = vshll.u32 %v571, 16
        %v881 = vrot.slane %v879, 5
        %v882 = vor.u32 %v878, %v881
        %v883 = vrot.slane %v882, 4
        %v885 = vshll.u32 %v572, 16
        %v887 = vrot.slane %v885, 5
        %v888 = vsel %vm610, %v883, %v887
        %v889 = vshrl.u32 %v572, 16
        %v891 = vrot.slane %v889, 4
        %v892 = vor.u32 %v891, %v887
        %v893 = vrot.slane %v892, 4
        %v895 = vshll.u32 %v573, 16
        %v897 = vrot.slane %v895, 5
        %v898 = vsel %vm610, %v893, %v897
        %v900 = vshrl.u32 %v574, 16
        %v902 = vrot.slane %v900, 4
        %v903 = vshll.u32 %v574, 16
        %v905 = vrot.slane %v903, 5
        %v906 = vor.u32 %v902, %v905
        %v907 = vrot.slane %v906, 4
        %v909 = vshll.u32 %v575, 16
        %v911 = vrot.slane %v909, 5
        %v912 = vsel %vm610, %v907, %v911
        %v913 = vshrl.u32 %v575, 16
        %v915 = vrot.slane %v913, 4
        %v916 = vor.u32 %v915, %v911
        %v917 = vrot.slane %v916, 4
        %v919 = vshll.u32 %v576, 16
        %v921 = vrot.slane %v919, 5
        %v922 = vsel %vm610, %v917, %v921
        %v924 = vshrl.u32 %v577, 16
        %v926 = vrot.slane %v924, 4
        %v927 = vshll.u32 %v577, 16
        %v929 = vrot.slane %v927, 5
        %v930 = vor.u32 %v926, %v929
        %v931 = vrot.slane %v930, 4
        %v933 = vshll.u32 %v578, 16
        %v935 = vrot.slane %v933, 5
        %v936 = vsel %vm610, %v931, %v935
        %v937 = vshrl.u32 %v578, 16
        %v939 = vrot.slane %v937, 4
        %v940 = vor.u32 %v939, %v935
        %v941 = vrot.slane %v940, 4
        %v943 = vshll.u32 %v579, 16
        %v945 = vrot.slane %v943, 5
        %v946 = vsel %vm610, %v941, %v945
        %v948 = vshrl.u32 %v580, 16
        %v950 = vrot.slane %v948, 4
        %v951 = vshll.u32 %v580, 16
        %v953 = vrot.slane %v951, 5
        %v954 = vor.u32 %v950, %v953
        %v955 = vrot.slane %v954, 4
        %v957 = vshll.u32 %v581, 16
        %v959 = vrot.slane %v957, 5
        %v960 = vsel %vm610, %v955, %v959
        %v961 = vshrl.u32 %v581, 16
        %v963 = vrot.slane %v961, 4
        %v964 = vor.u32 %v963, %v959
        %v965 = vrot.slane %v964, 4
        %v967 = vshll.u32 %v582, 16
        %v969 = vrot.slane %v967, 5
        %v970 = vsel %vm610, %v965, %v969
        %v972 = vshrl.u32 %v583, 16
        %v974 = vrot.slane %v972, 4
        %v975 = vshll.u32 %v583, 16
        %v977 = vrot.slane %v975, 5
        %v978 = vor.u32 %v974, %v977
        %v979 = vrot.slane %v978, 4
        %v981 = vshll.u32 %v584, 16
        %v983 = vrot.slane %v981, 5
        %v984 = vsel %vm610, %v979, %v983
        %v985 = vshrl.u32 %v584, 16
        %v987 = vrot.slane %v985, 4
        %v988 = vor.u32 %v987, %v983
        %v989 = vrot.slane %v988, 4
        %v991 = vshll.u32 %v585, 16
        %v993 = vrot.slane %v991, 5
        %v994 = vsel %vm610, %v989, %v993
        %s995 = scalar_lea.vmem [#allocation5], 64
        %v996 = vld [vmem:[%s995] sm:$0xf]
        %v997 = vld [vmem:[%s995 + $0x4] sm:$0xf]
        %v998 = vld [vmem:[%s995 + $0x8] sm:$0xf]
        %v999 = vld [vmem:[%s995 + $0xc] sm:$0xf]
        %v1000 = vld [vmem:[%s995 + $0x10] sm:$0xf]
        %v1001 = vld [vmem:[%s995 + $0x14] sm:$0xf]
        %v1002 = vld [vmem:[%s995 + $0x18] sm:$0xf]
        %v1003 = vld [vmem:[%s995 + $0x1c] sm:$0xf]
        %v1004 = vld [vmem:[%s995 + $0x20] sm:$0xf]
        %v1005 = vld [vmem:[%s995 + $0x24] sm:$0xf]
        %v1006 = vld [vmem:[%s995 + $0x28] sm:$0xf]
        %v1007 = vld [vmem:[%s995 + $0x2c] sm:$0xf]
        %v1008 = vld [vmem:[%s995 + $0x30] sm:$0xf]
        %v1009 = vld [vmem:[%s995 + $0x34] sm:$0xf]
        %v1010 = vld [vmem:[%s995 + $0x38] sm:$0xf]
        %v1011 = vld [vmem:[%s995 + $0x3c] sm:$0xf]
        %v1012 = vunpack.c.l.b16 %v624
        %v1013 = vunpack.c.l.b16 %v634
        %v1014 = vunpack.c.l.b16 %v648
        %v1015 = vunpack.c.l.b16 %v658
        %v1016 = vunpack.c.l.b16 %v672
        %v1017 = vunpack.c.l.b16 %v682
        %v1018 = vunpack.c.l.b16 %v696
        %v1019 = vunpack.c.l.b16 %v706
        %v1020 = vunpack.c.l.b16 %v720
        %v1021 = vunpack.c.l.b16 %v730
        %v1022 = vunpack.c.l.b16 %v744
        %v1023 = vunpack.c.l.b16 %v754
        %v1024 = vunpack.c.l.b16 %v768
        %v1025 = vunpack.c.l.b16 %v778
        %v1026 = vunpack.c.l.b16 %v792
        %v1027 = vunpack.c.l.b16 %v802
        %v1028 = vunpack.c.l.b16 %v816
        %v1029 = vunpack.c.l.b16 %v826
        %v1030 = vunpack.c.l.b16 %v840
        %v1031 = vunpack.c.l.b16 %v850
        %v1032 = vunpack.c.l.b16 %v864
        %v1033 = vunpack.c.l.b16 %v874
        %v1034 = vunpack.c.l.b16 %v888
        %v1035 = vunpack.c.l.b16 %v898
        %v1036 = vunpack.c.l.b16 %v912
        %v1037 = vunpack.c.l.b16 %v922
        %v1038 = vunpack.c.l.b16 %v936
        %v1039 = vunpack.c.l.b16 %v946
        %v1040 = vunpack.c.l.b16 %v960
        %v1041 = vunpack.c.l.b16 %v970
        %v1042 = vunpack.c.l.b16 %v984
        %v1043 = vunpack.c.l.b16 %v994
        %v1044 = vpack.c.b16 %v1013, %v1012
        %v1045 = vpack.c.b16 %v1015, %v1014
        %v1046 = vpack.c.b16 %v1017, %v1016
        %v1047 = vpack.c.b16 %v1019, %v1018
        %v1048 = vpack.c.b16 %v1021, %v1020
        %v1049 = vpack.c.b16 %v1023, %v1022
        %v1050 = vpack.c.b16 %v1025, %v1024
        %v1051 = vpack.c.b16 %v1027, %v1026
        %v1052 = vpack.c.b16 %v1029, %v1028
        %v1053 = vpack.c.b16 %v1031, %v1030
        %v1054 = vpack.c.b16 %v1033, %v1032
        %v1055 = vpack.c.b16 %v1035, %v1034
        %v1056 = vpack.c.b16 %v1037, %v1036
        %v1057 = vpack.c.b16 %v1039, %v1038
        %v1058 = vpack.c.b16 %v1041, %v1040
        %v1059 = vpack.c.b16 %v1043, %v1042
        %v1092 = vunpack.c.l.b16 %v996
        %v1093 = vunpack.c.l.b16 %v997
        %v1094 = vunpack.c.l.b16 %v998
        %v1095 = vunpack.c.l.b16 %v999
        %v1096 = vunpack.c.l.b16 %v1000
        %v1097 = vunpack.c.l.b16 %v1001
        %v1098 = vunpack.c.l.b16 %v1002
        %v1099 = vunpack.c.l.b16 %v1003
        %v1100 = vunpack.c.l.b16 %v1004
        %v1101 = vunpack.c.l.b16 %v1005
        %v1102 = vunpack.c.l.b16 %v1006
        %v1103 = vunpack.c.l.b16 %v1007
        %v1104 = vunpack.c.l.b16 %v1008
        %v1105 = vunpack.c.l.b16 %v1009
        %v1106 = vunpack.c.l.b16 %v1010
        %v1107 = vunpack.c.l.b16 %v1011
        %v1108 = vpack.c.b16 %v1093, %v1092
        %v1109 = vpack.c.b16 %v1095, %v1094
        %v1110 = vpack.c.b16 %v1097, %v1096
        %v1111 = vpack.c.b16 %v1099, %v1098
        %v1112 = vpack.c.b16 %v1101, %v1100
        %v1113 = vpack.c.b16 %v1103, %v1102
        %v1114 = vpack.c.b16 %v1105, %v1104
        %v1115 = vpack.c.b16 %v1107, %v1106
        %1124 = vmatprep.subr.bf16.mxu0 0
        %1125 = vmatpush1.bf16.msra.mxu0 %v1108
        %1126 = vmatprep.subr.bf16.mxu0 0
        %1127 = vmatpush1.bf16.msra.mxu0 %v1109
        %1128 = vmatprep.subr.bf16.mxu0 0
        %1129 = vmatpush1.bf16.msra.mxu0 %v1110
        %1130 = vmatprep.subr.bf16.mxu0 0
        %1131 = vmatpush1.bf16.msra.mxu0 %v1111
        %1132 = vmatprep.subr.bf16.mxu0 0
        %1133 = vmatpush1.bf16.msra.mxu0 %v1112
        %1134 = vmatprep.subr.bf16.mxu0 0
        %1135 = vmatpush1.bf16.msra.mxu0 %v1113
        %1136 = vmatprep.subr.bf16.mxu0 0
        %1137 = vmatpush1.bf16.msra.mxu0 %v1114
        %1138 = vmatprep.subr.bf16.mxu0 0
        %1139 = vmatpush1.bf16.msra.mxu0 %v1115
        %1140 = vmatprep.subr.bf16.mxu0 0
        %1141 = vmatpush1.bf16.msra.mxu0 0
        %1142 = vmatprep.subr.bf16.mxu0 0
        %1143 = vmatpush1.bf16.msra.mxu0 0
        %1144 = vmatprep.subr.bf16.mxu0 0
        %1145 = vmatpush1.bf16.msra.mxu0 0
        %1146 = vmatprep.subr.bf16.mxu0 0
        %1147 = vmatpush1.bf16.msra.mxu0 0
        %1148 = vmatprep.subr.bf16.mxu0 0
        %1149 = vmatpush1.bf16.msra.mxu0 0
        %1150 = vmatprep.subr.bf16.mxu0 0
        %1151 = vmatpush1.bf16.msra.mxu0 0
        %1152 = vmatprep.subr.bf16.mxu0 0
        %1153 = vmatpush1.bf16.msra.mxu0 0
        %1154 = vmatprep.subr.bf16.mxu0 0
        %1155 = vmatpush1.bf16.msra.mxu0 0
        %1156 = vmatprep.mubr.bf16.mxu0 0
        %1157 = vmatmul.mubr.bf16.gmra.mrb[0].mxu0 %v1044
        %v1158 = vpop.f32.mrb[0].mxu0
        %v1159 = vadd.f32 0.0, %v1158
        %v1160 = vpop.f32.mrb[0].mxu0
        %v1161 = vpop.f32.mrb[0].mxu0
        %v1162 = vadd.f32 0.0, %v1161
        %v1163 = vpop.f32.mrb[0].mxu0
        %1164 = vmatprep.mubr.bf16.mxu0 0
        %1165 = vmatmul.mubr.bf16.gmra.mrb[0].mxu0 %v1045
        %v1166 = vpop.f32.mrb[0].mxu0
        %v1167 = vadd.f32 0.0, %v1166
        %v1168 = vpop.f32.mrb[0].mxu0
        %v1169 = vpop.f32.mrb[0].mxu0
        %v1170 = vadd.f32 0.0, %v1169
        %v1171 = vpop.f32.mrb[0].mxu0
        %1172 = vmatprep.mubr.bf16.mxu0 0
        %1173 = vmatmul.mubr.bf16.gmra.mrb[0].mxu0 %v1046
        %v1174 = vpop.f32.mrb[0].mxu0
        %v1175 = vadd.f32 0.0, %v1174
        %v1176 = vpop.f32.mrb[0].mxu0
        %v1177 = vpop.f32.mrb[0].mxu0
        %v1178 = vadd.f32 0.0, %v1177
        %v1179 = vpop.f32.mrb[0].mxu0
        %1180 = vmatprep.mubr.bf16.mxu0 0
        %1181 = vmatmul.mubr.bf16.gmra.mrb[0].mxu0 %v1047
        %v1182 = vpop.f32.mrb[0].mxu0
        %v1183 = vadd.f32 0.0, %v1182
        %v1184 = vpop.f32.mrb[0].mxu0
        %v1185 = vpop.f32.mrb[0].mxu0
        %v1186 = vadd.f32 0.0, %v1185
        %v1187 = vpop.f32.mrb[0].mxu0
        %1188 = vmatprep.mubr.bf16.mxu0 0
        %1189 = vmatmul.mubr.bf16.gmra.mrb[0].mxu0 %v1048
        %v1190 = vpop.f32.mrb[0].mxu0
        %v1191 = vadd.f32 0.0, %v1190
        %v1192 = vpop.f32.mrb[0].mxu0
        %v1193 = vpop.f32.mrb[0].mxu0
        %v1194 = vadd.f32 0.0, %v1193
        %v1195 = vpop.f32.mrb[0].mxu0
        %1196 = vmatprep.mubr.bf16.mxu0 0
        %1197 = vmatmul.mubr.bf16.gmra.mrb[0].mxu0 %v1049
        %v1198 = vpop.f32.mrb[0].mxu0
        %v1199 = vadd.f32 0.0, %v1198
        %v1200 = vpop.f32.mrb[0].mxu0
        %v1201 = vpop.f32.mrb[0].mxu0
        %v1202 = vadd.f32 0.0, %v1201
        %v1203 = vpop.f32.mrb[0].mxu0
        %1204 = vmatprep.mubr.bf16.mxu0 0
        %1205 = vmatmul.mubr.bf16.gmra.mrb[0].mxu0 %v1050
        %v1206 = vpop.f32.mrb[0].mxu0
        %v1207 = vadd.f32 0.0, %v1206
        %v1208 = vpop.f32.mrb[0].mxu0
        %v1209 = vpop.f32.mrb[0].mxu0
        %v1210 = vadd.f32 0.0, %v1209
        %v1211 = vpop.f32.mrb[0].mxu0
        %1212 = vmatprep.mubr.bf16.mxu0 0
        %1213 = vmatmul.mubr.bf16.gmra.mrb[0].mxu0 %v1051
        %v1214 = vpop.f32.mrb[0].mxu0
        %v1215 = vadd.f32 0.0, %v1214
        %v1216 = vpop.f32.mrb[0].mxu0
        %v1217 = vpop.f32.mrb[0].mxu0
        %v1218 = vadd.f32 0.0, %v1217
        %v1219 = vpop.f32.mrb[0].mxu0
        %1220 = vmatprep.mubr.bf16.mxu0 0
        %1221 = vmatmul.mubr.bf16.gmra.mrb[0].mxu0 %v1052
        %v1222 = vpop.f32.mrb[0].mxu0
        %v1223 = vadd.f32 0.0, %v1222
        %v1224 = vpop.f32.mrb[0].mxu0
        %v1225 = vpop.f32.mrb[0].mxu0
        %v1226 = vadd.f32 0.0, %v1225
        %v1227 = vpop.f32.mrb[0].mxu0
        %1228 = vmatprep.mubr.bf16.mxu0 0
        %1229 = vmatmul.mubr.bf16.gmra.mrb[0].mxu0 %v1053
        %v1230 = vpop.f32.mrb[0].mxu0
        %v1231 = vadd.f32 0.0, %v1230
        %v1232 = vpop.f32.mrb[0].mxu0
        %v1233 = vpop.f32.mrb[0].mxu0
        %v1234 = vadd.f32 0.0, %v1233
        %v1235 = vpop.f32.mrb[0].mxu0
        %1236 = vmatprep.mubr.bf16.mxu0 0
        %1237 = vmatmul.mubr.bf16.gmra.mrb[0].mxu0 %v1054
        %v1238 = vpop.f32.mrb[0].mxu0
        %v1239 = vadd.f32 0.0, %v1238
        %v1240 = vpop.f32.mrb[0].mxu0
        %v1241 = vpop.f32.mrb[0].mxu0
        %v1242 = vadd.f32 0.0, %v1241
        %v1243 = vpop.f32.mrb[0].mxu0
        %1244 = vmatprep.mubr.bf16.mxu0 0
        %1245 = vmatmul.mubr.bf16.gmra.mrb[0].mxu0 %v1055
        %v1246 = vpop.f32.mrb[0].mxu0
        %v1247 = vadd.f32 0.0, %v1246
        %v1248 = vpop.f32.mrb[0].mxu0
        %v1249 = vpop.f32.mrb[0].mxu0
        %v1250 = vadd.f32 0.0, %v1249
        %v1251 = vpop.f32.mrb[0].mxu0
        %1252 = vmatprep.mubr.bf16.mxu0 0
        %1253 = vmatmul.mubr.bf16.gmra.mrb[0].mxu0 %v1056
        %v1254 = vpop.f32.mrb[0].mxu0
        %v1255 = vadd.f32 0.0, %v1254
        %v1256 = vpop.f32.mrb[0].mxu0
        %v1257 = vpop.f32.mrb[0].mxu0
        %v1258 = vadd.f32 0.0, %v1257
        %v1259 = vpop.f32.mrb[0].mxu0
        %1260 = vmatprep.mubr.bf16.mxu0 0
        %1261 = vmatmul.mubr.bf16.gmra.mrb[0].mxu0 %v1057
        %v1262 = vpop.f32.mrb[0].mxu0
        %v1263 = vadd.f32 0.0, %v1262
        %v1264 = vpop.f32.mrb[0].mxu0
        %v1265 = vpop.f32.mrb[0].mxu0
        %v1266 = vadd.f32 0.0, %v1265
        %v1267 = vpop.f32.mrb[0].mxu0
        %1268 = vmatprep.mubr.bf16.mxu0 0
        %1269 = vmatmul.mubr.bf16.gmra.mrb[0].mxu0 %v1058
        %v1270 = vpop.f32.mrb[0].mxu0
        %v1271 = vadd.f32 0.0, %v1270
        %v1272 = vpop.f32.mrb[0].mxu0
        %v1273 = vpop.f32.mrb[0].mxu0
        %v1274 = vadd.f32 0.0, %v1273
        %v1275 = vpop.f32.mrb[0].mxu0
        %1276 = vmatprep.mubr.bf16.mxu0 0
        %1277 = vmatmul.mubr.bf16.gmra.mrb[0].mxu0 %v1059
        %v1278 = vpop.f32.mrb[0].mxu0
        %v1279 = vadd.f32 0.0, %v1278
        %v1280 = vpop.f32.mrb[0].mxu0
        %v1281 = vpop.f32.mrb[0].mxu0
        %v1282 = vadd.f32 0.0, %v1281
        %v1283 = vpop.f32.mrb[0].mxu0
        %1284 = vdwg.mxu0
        %v1317 = vunpack.c.l.b16 %v538
        %v1318 = vunpack.c.l.b16 %v539
        %v1319 = vunpack.c.l.b16 %v541
        %v1320 = vunpack.c.l.b16 %v542
        %v1321 = vunpack.c.l.b16 %v544
        %v1322 = vunpack.c.l.b16 %v545
        %v1323 = vunpack.c.l.b16 %v547
        %v1324 = vunpack.c.l.b16 %v548
        %v1325 = vunpack.c.l.b16 %v550
        %v1326 = vunpack.c.l.b16 %v551
        %v1327 = vunpack.c.l.b16 %v553
        %v1328 = vunpack.c.l.b16 %v554
        %v1329 = vunpack.c.l.b16 %v556
        %v1330 = vunpack.c.l.b16 %v557
        %v1331 = vunpack.c.l.b16 %v559
        %v1332 = vunpack.c.l.b16 %v560
        %v1333 = vunpack.c.l.b16 %v562
        %v1334 = vunpack.c.l.b16 %v563
        %v1335 = vunpack.c.l.b16 %v565
        %v1336 = vunpack.c.l.b16 %v566
        %v1337 = vunpack.c.l.b16 %v568
        %v1338 = vunpack.c.l.b16 %v569
        %v1339 = vunpack.c.l.b16 %v571
        %v1340 = vunpack.c.l.b16 %v572
        %v1341 = vunpack.c.l.b16 %v574
        %v1342 = vunpack.c.l.b16 %v575
        %v1343 = vunpack.c.l.b16 %v577
        %v1344 = vunpack.c.l.b16 %v578
        %v1345 = vunpack.c.l.b16 %v580
        %v1346 = vunpack.c.l.b16 %v581
        %v1347 = vunpack.c.l.b16 %v583
        %v1348 = vunpack.c.l.b16 %v584
        %v1349 = vpack.c.b16 %v1318, %v1317
        %v1350 = vpack.c.b16 %v1320, %v1319
        %v1351 = vpack.c.b16 %v1322, %v1321
        %v1352 = vpack.c.b16 %v1324, %v1323
        %v1353 = vpack.c.b16 %v1326, %v1325
        %v1354 = vpack.c.b16 %v1328, %v1327
        %v1355 = vpack.c.b16 %v1330, %v1329
        %v1356 = vpack.c.b16 %v1332, %v1331
        %v1357 = vpack.c.b16 %v1334, %v1333
        %v1358 = vpack.c.b16 %v1336, %v1335
        %v1359 = vpack.c.b16 %v1338, %v1337
        %v1360 = vpack.c.b16 %v1340, %v1339
        %v1361 = vpack.c.b16 %v1342, %v1341
        %v1362 = vpack.c.b16 %v1344, %v1343
        %v1363 = vpack.c.b16 %v1346, %v1345
        %v1364 = vpack.c.b16 %v1348, %v1347
        %v1397 = vunpack.c.l.b16 %v592
        %v1398 = vunpack.c.l.b16 %v593
        %v1399 = vunpack.c.l.b16 %v594
        %v1400 = vunpack.c.l.b16 %v595
        %v1401 = vunpack.c.l.b16 %v596
        %v1402 = vunpack.c.l.b16 %v597
        %v1403 = vunpack.c.l.b16 %v598
        %v1404 = vunpack.c.l.b16 %v599
        %v1405 = vunpack.c.l.b16 %v600
        %v1406 = vunpack.c.l.b16 %v601
        %v1407 = vunpack.c.l.b16 %v602
        %v1408 = vunpack.c.l.b16 %v603
        %v1409 = vunpack.c.l.b16 %v604
        %v1410 = vunpack.c.l.b16 %v605
        %v1411 = vunpack.c.l.b16 %v606
        %v1412 = vunpack.c.l.b16 %v607
        %v1413 = vpack.c.b16 %v1398, %v1397
        %v1414 = vpack.c.b16 %v1400, %v1399
        %v1415 = vpack.c.b16 %v1402, %v1401
        %v1416 = vpack.c.b16 %v1404, %v1403
        %v1417 = vpack.c.b16 %v1406, %v1405
        %v1418 = vpack.c.b16 %v1408, %v1407
        %v1419 = vpack.c.b16 %v1410, %v1409
        %v1420 = vpack.c.b16 %v1412, %v1411
        %1429 = vmatprep.subr.bf16.mxu0 0
        %1430 = vmatpush1.bf16.msra.mxu0 %v1413
        %1431 = vmatprep.subr.bf16.mxu0 0
        %1432 = vmatpush1.bf16.msra.mxu0 %v1414
        %1433 = vmatprep.subr.bf16.mxu0 0
        %1434 = vmatpush1.bf16.msra.mxu0 %v1415
        %1435 = vmatprep.subr.bf16.mxu0 0
        %1436 = vmatpush1.bf16.msra.mxu0 %v1416
        %1437 = vmatprep.subr.bf16.mxu0 0
        %1438 = vmatpush1.bf16.msra.mxu0 %v1417
        %1439 = vmatprep.subr.bf16.mxu0 0
        %1440 = vmatpush1.bf16.msra.mxu0 %v1418
        %1441 = vmatprep.subr.bf16.mxu0 0
        %1442 = vmatpush1.bf16.msra.mxu0 %v1419
        %1443 = vmatprep.subr.bf16.mxu0 0
        %1444 = vmatpush1.bf16.msra.mxu0 %v1420
        %1445 = vmatprep.subr.bf16.mxu0 0
        %1446 = vmatpush1.bf16.msra.mxu0 0
        %1447 = vmatprep.subr.bf16.mxu0 0
        %1448 = vmatpush1.bf16.msra.mxu0 0
        %1449 = vmatprep.subr.bf16.mxu0 0
        %1450 = vmatpush1.bf16.msra.mxu0 0
        %1451 = vmatprep.subr.bf16.mxu0 0
        %1452 = vmatpush1.bf16.msra.mxu0 0
        %1453 = vmatprep.subr.bf16.mxu0 0
        %1454 = vmatpush1.bf16.msra.mxu0 0
        %1455 = vmatprep.subr.bf16.mxu0 0
        %1456 = vmatpush1.bf16.msra.mxu0 0
        %1457 = vmatprep.subr.bf16.mxu0 0
        %1458 = vmatpush1.bf16.msra.mxu0 0
        %1459 = vmatprep.subr.bf16.mxu0 0
        %1460 = vmatpush1.bf16.msra.mxu0 0
        %1461 = vmatprep.mubr.bf16.mxu0 0
        %1462 = vmatmul.mubr.bf16.gmra.mrb[0].mxu0 %v1349
        %v1463 = vpop.f32.mrb[0].mxu0
        %v1464 = vadd.f32 %v1159, %v1463
        %v1465 = vpop.f32.mrb[0].mxu0
        %v1466 = vpop.f32.mrb[0].mxu0
        %v1467 = vadd.f32 %v1162, %v1466
        %v1468 = vpop.f32.mrb[0].mxu0
        %1469 = vmatprep.mubr.bf16.mxu0 0
        %1470 = vmatmul.mubr.bf16.gmra.mrb[0].mxu0 %v1350
        %v1471 = vpop.f32.mrb[0].mxu0
        %v1472 = vadd.f32 %v1167, %v1471
        %v1473 = vpop.f32.mrb[0].mxu0
        %v1474 = vpop.f32.mrb[0].mxu0
        %v1475 = vadd.f32 %v1170, %v1474
        %v1476 = vpop.f32.mrb[0].mxu0
        %1477 = vmatprep.mubr.bf16.mxu0 0
        %1478 = vmatmul.mubr.bf16.gmra.mrb[0].mxu0 %v1351
        %v1479 = vpop.f32.mrb[0].mxu0
        %v1480 = vadd.f32 %v1175, %v1479
        %v1481 = vpop.f32.mrb[0].mxu0
        %v1482 = vpop.f32.mrb[0].mxu0
        %v1483 = vadd.f32 %v1178, %v1482
        %v1484 = vpop.f32.mrb[0].mxu0
        %1485 = vmatprep.mubr.bf16.mxu0 0
        %1486 = vmatmul.mubr.bf16.gmra.mrb[0].mxu0 %v1352
        %v1487 = vpop.f32.mrb[0].mxu0
        %v1488 = vadd.f32 %v1183, %v1487
        %v1489 = vpop.f32.mrb[0].mxu0
        %v1490 = vpop.f32.mrb[0].mxu0
        %v1491 = vadd.f32 %v1186, %v1490
        %v1492 = vpop.f32.mrb[0].mxu0
        %1493 = vmatprep.mubr.bf16.mxu0 0
        %1494 = vmatmul.mubr.bf16.gmra.mrb[0].mxu0 %v1353
        %v1495 = vpop.f32.mrb[0].mxu0
        %v1496 = vadd.f32 %v1191, %v1495
        %v1497 = vpop.f32.mrb[0].mxu0
        %v1498 = vpop.f32.mrb[0].mxu0
        %v1499 = vadd.f32 %v1194, %v1498
        %v1500 = vpop.f32.mrb[0].mxu0
        %1501 = vmatprep.mubr.bf16.mxu0 0
        %1502 = vmatmul.mubr.bf16.gmra.mrb[0].mxu0 %v1354
        %v1503 = vpop.f32.mrb[0].mxu0
        %v1504 = vadd.f32 %v1199, %v1503
        %v1505 = vpop.f32.mrb[0].mxu0
        %v1506 = vpop.f32.mrb[0].mxu0
        %v1507 = vadd.f32 %v1202, %v1506
        %v1508 = vpop.f32.mrb[0].mxu0
        %1509 = vmatprep.mubr.bf16.mxu0 0
        %1510 = vmatmul.mubr.bf16.gmra.mrb[0].mxu0 %v1355
        %v1511 = vpop.f32.mrb[0].mxu0
        %v1512 = vadd.f32 %v1207, %v1511
        %v1513 = vpop.f32.mrb[0].mxu0
        %v1514 = vpop.f32.mrb[0].mxu0
        %v1515 = vadd.f32 %v1210, %v1514
        %v1516 = vpop.f32.mrb[0].mxu0
        %1517 = vmatprep.mubr.bf16.mxu0 0
        %1518 = vmatmul.mubr.bf16.gmra.mrb[0].mxu0 %v1356
        %v1519 = vpop.f32.mrb[0].mxu0
        %v1520 = vadd.f32 %v1215, %v1519
        %v1521 = vpop.f32.mrb[0].mxu0
        %v1522 = vpop.f32.mrb[0].mxu0
        %v1523 = vadd.f32 %v1218, %v1522
        %v1524 = vpop.f32.mrb[0].mxu0
        %1525 = vmatprep.mubr.bf16.mxu0 0
        %1526 = vmatmul.mubr.bf16.gmra.mrb[0].mxu0 %v1357
        %v1527 = vpop.f32.mrb[0].mxu0
        %v1528 = vadd.f32 %v1223, %v1527
        %v1529 = vpop.f32.mrb[0].mxu0
        %v1530 = vpop.f32.mrb[0].mxu0
        %v1531 = vadd.f32 %v1226, %v1530
        %v1532 = vpop.f32.mrb[0].mxu0
        %1533 = vmatprep.mubr.bf16.mxu0 0
        %1534 = vmatmul.mubr.bf16.gmra.mrb[0].mxu0 %v1358
        %v1535 = vpop.f32.mrb[0].mxu0
        %v1536 = vadd.f32 %v1231, %v1535
        %v1537 = vpop.f32.mrb[0].mxu0
        %v1538 = vpop.f32.mrb[0].mxu0
        %v1539 = vadd.f32 %v1234, %v1538
        %v1540 = vpop.f32.mrb[0].mxu0
        %1541 = vmatprep.mubr.bf16.mxu0 0
        %1542 = vmatmul.mubr.bf16.gmra.mrb[0].mxu0 %v1359
        %v1543 = vpop.f32.mrb[0].mxu0
        %v1544 = vadd.f32 %v1239, %v1543
        %v1545 = vpop.f32.mrb[0].mxu0
        %v1546 = vpop.f32.mrb[0].mxu0
        %v1547 = vadd.f32 %v1242, %v1546
        %v1548 = vpop.f32.mrb[0].mxu0
        %1549 = vmatprep.mubr.bf16.mxu0 0
        %1550 = vmatmul.mubr.bf16.gmra.mrb[0].mxu0 %v1360
        %v1551 = vpop.f32.mrb[0].mxu0
        %v1552 = vadd.f32 %v1247, %v1551
        %v1553 = vpop.f32.mrb[0].mxu0
        %v1554 = vpop.f32.mrb[0].mxu0
        %v1555 = vadd.f32 %v1250, %v1554
        %v1556 = vpop.f32.mrb[0].mxu0
        %1557 = vmatprep.mubr.bf16.mxu0 0
        %1558 = vmatmul.mubr.bf16.gmra.mrb[0].mxu0 %v1361
        %v1559 = vpop.f32.mrb[0].mxu0
        %v1560 = vadd.f32 %v1255, %v1559
        %v1561 = vpop.f32.mrb[0].mxu0
        %v1562 = vpop.f32.mrb[0].mxu0
        %v1563 = vadd.f32 %v1258, %v1562
        %v1564 = vpop.f32.mrb[0].mxu0
        %1565 = vmatprep.mubr.bf16.mxu0 0
        %1566 = vmatmul.mubr.bf16.gmra.mrb[0].mxu0 %v1362
        %v1567 = vpop.f32.mrb[0].mxu0
        %v1568 = vadd.f32 %v1263, %v1567
        %v1569 = vpop.f32.mrb[0].mxu0
        %v1570 = vpop.f32.mrb[0].mxu0
        %v1571 = vadd.f32 %v1266, %v1570
        %v1572 = vpop.f32.mrb[0].mxu0
        %1573 = vmatprep.mubr.bf16.mxu0 0
        %1574 = vmatmul.mubr.bf16.gmra.mrb[0].mxu0 %v1363
        %v1575 = vpop.f32.mrb[0].mxu0
        %v1576 = vadd.f32 %v1271, %v1575
        %v1577 = vpop.f32.mrb[0].mxu0
        %v1578 = vpop.f32.mrb[0].mxu0
        %v1579 = vadd.f32 %v1274, %v1578
        %v1580 = vpop.f32.mrb[0].mxu0
        %1581 = vmatprep.mubr.bf16.mxu0 0
        %1582 = vmatmul.mubr.bf16.gmra.mrb[0].mxu0 %v1364
        %v1583 = vpop.f32.mrb[0].mxu0
        %v1584 = vadd.f32 %v1279, %v1583
        %v1585 = vpop.f32.mrb[0].mxu0
        %v1586 = vpop.f32.mrb[0].mxu0
        %v1587 = vadd.f32 %v1282, %v1586
        %v1588 = vpop.f32.mrb[0].mxu0
        %1589 = vdwg.mxu0
        %vm1606 = vcmask 1042432
        %vm1607 = vcmask 1046532
        %vm1608 = vmor %vm1606, %vm1607
        %v1609 = vrot.slane %v538, 5
        %v1610 = vrot.slane %v1609, 4
        %v1611 = vrot.slane %v539, 5
        %v1612 = vsel %vm1608, %v1610, %v1611
        %v1613 = vrot.slane %v1611, 4
        %v1614 = vrot.slane %v540, 5
        %v1615 = vsel %vm1608, %v1613, %v1614
        %v1616 = vrot.slane %v541, 5
        %v1617 = vrot.slane %v1616, 4
        %v1618 = vrot.slane %v542, 5
        %v1619 = vsel %vm1608, %v1617, %v1618
        %v1620 = vrot.slane %v1618, 4
        %v1621 = vrot.slane %v543, 5
        %v1622 = vsel %vm1608, %v1620, %v1621
        %v1623 = vrot.slane %v544, 5
        %v1624 = vrot.slane %v1623, 4
        %v1625 = vrot.slane %v545, 5
        %v1626 = vsel %vm1608, %v1624, %v1625
        %v1627 = vrot.slane %v1625, 4
        %v1628 = vrot.slane %v546, 5
        %v1629 = vsel %vm1608, %v1627, %v1628
        %v1630 = vrot.slane %v547, 5
        %v1631 = vrot.slane %v1630, 4
        %v1632 = vrot.slane %v548, 5
        %v1633 = vsel %vm1608, %v1631, %v1632
        %v1634 = vrot.slane %v1632, 4
        %v1635 = vrot.slane %v549, 5
        %v1636 = vsel %vm1608, %v1634, %v1635
        %v1637 = vrot.slane %v550, 5
        %v1638 = vrot.slane %v1637, 4
        %v1639 = vrot.slane %v551, 5
        %v1640 = vsel %vm1608, %v1638, %v1639
        %v1641 = vrot.slane %v1639, 4
        %v1642 = vrot.slane %v552, 5
        %v1643 = vsel %vm1608, %v1641, %v1642
        %v1644 = vrot.slane %v553, 5
        %v1645 = vrot.slane %v1644, 4
        %v1646 = vrot.slane %v554, 5
        %v1647 = vsel %vm1608, %v1645, %v1646
        %v1648 = vrot.slane %v1646, 4
        %v1649 = vrot.slane %v555, 5
        %v1650 = vsel %vm1608, %v1648, %v1649
        %v1651 = vrot.slane %v556, 5
        %v1652 = vrot.slane %v1651, 4
        %v1653 = vrot.slane %v557, 5
        %v1654 = vsel %vm1608, %v1652, %v1653
        %v1655 = vrot.slane %v1653, 4
        %v1656 = vrot.slane %v558, 5
        %v1657 = vsel %vm1608, %v1655, %v1656
        %v1658 = vrot.slane %v559, 5
        %v1659 = vrot.slane %v1658, 4
        %v1660 = vrot.slane %v560, 5
        %v1661 = vsel %vm1608, %v1659, %v1660
        %v1662 = vrot.slane %v1660, 4
        %v1663 = vrot.slane %v561, 5
        %v1664 = vsel %vm1608, %v1662, %v1663
        %v1665 = vrot.slane %v562, 5
        %v1666 = vrot.slane %v1665, 4
        %v1667 = vrot.slane %v563, 5
        %v1668 = vsel %vm1608, %v1666, %v1667
        %v1669 = vrot.slane %v1667, 4
        %v1670 = vrot.slane %v564, 5
        %v1671 = vsel %vm1608, %v1669, %v1670
        %v1672 = vrot.slane %v565, 5
        %v1673 = vrot.slane %v1672, 4
        %v1674 = vrot.slane %v566, 5
        %v1675 = vsel %vm1608, %v1673, %v1674
        %v1676 = vrot.slane %v1674, 4
        %v1677 = vrot.slane %v567, 5
        %v1678 = vsel %vm1608, %v1676, %v1677
        %v1679 = vrot.slane %v568, 5
        %v1680 = vrot.slane %v1679, 4
        %v1681 = vrot.slane %v569, 5
        %v1682 = vsel %vm1608, %v1680, %v1681
        %v1683 = vrot.slane %v1681, 4
        %v1684 = vrot.slane %v570, 5
        %v1685 = vsel %vm1608, %v1683, %v1684
        %v1686 = vrot.slane %v571, 5
        %v1687 = vrot.slane %v1686, 4
        %v1688 = vrot.slane %v572, 5
        %v1689 = vsel %vm1608, %v1687, %v1688
        %v1690 = vrot.slane %v1688, 4
        %v1691 = vrot.slane %v573, 5
        %v1692 = vsel %vm1608, %v1690, %v1691
        %v1693 = vrot.slane %v574, 5
        %v1694 = vrot.slane %v1693, 4
        %v1695 = vrot.slane %v575, 5
        %v1696 = vsel %vm1608, %v1694, %v1695
        %v1697 = vrot.slane %v1695, 4
        %v1698 = vrot.slane %v576, 5
        %v1699 = vsel %vm1608, %v1697, %v1698
        %v1700 = vrot.slane %v577, 5
        %v1701 = vrot.slane %v1700, 4
        %v1702 = vrot.slane %v578, 5
        %v1703 = vsel %vm1608, %v1701, %v1702
        %v1704 = vrot.slane %v1702, 4
        %v1705 = vrot.slane %v579, 5
        %v1706 = vsel %vm1608, %v1704, %v1705
        %v1707 = vrot.slane %v580, 5
        %v1708 = vrot.slane %v1707, 4
        %v1709 = vrot.slane %v581, 5
        %v1710 = vsel %vm1608, %v1708, %v1709
        %v1711 = vrot.slane %v1709, 4
        %v1712 = vrot.slane %v582, 5
        %v1713 = vsel %vm1608, %v1711, %v1712
        %v1714 = vrot.slane %v583, 5
        %v1715 = vrot.slane %v1714, 4
        %v1716 = vrot.slane %v584, 5
        %v1717 = vsel %vm1608, %v1715, %v1716
        %v1718 = vrot.slane %v1716, 4
        %v1719 = vrot.slane %v585, 5
        %v1720 = vsel %vm1608, %v1718, %v1719
        %s1721 = scalar_lea.vmem [#allocation5], 128
        %v1722 = vld [vmem:[%s1721] sm:$0xf]
        %v1723 = vld [vmem:[%s1721 + $0x4] sm:$0xf]
        %v1724 = vld [vmem:[%s1721 + $0x8] sm:$0xf]
        %v1725 = vld [vmem:[%s1721 + $0xc] sm:$0xf]
        %v1726 = vld [vmem:[%s1721 + $0x10] sm:$0xf]
        %v1727 = vld [vmem:[%s1721 + $0x14] sm:$0xf]
        %v1728 = vld [vmem:[%s1721 + $0x18] sm:$0xf]
        %v1729 = vld [vmem:[%s1721 + $0x1c] sm:$0xf]
        %v1730 = vld [vmem:[%s1721 + $0x20] sm:$0xf]
        %v1731 = vld [vmem:[%s1721 + $0x24] sm:$0xf]
        %v1732 = vld [vmem:[%s1721 + $0x28] sm:$0xf]
        %v1733 = vld [vmem:[%s1721 + $0x2c] sm:$0xf]
        %v1734 = vld [vmem:[%s1721 + $0x30] sm:$0xf]
        %v1735 = vld [vmem:[%s1721 + $0x34] sm:$0xf]
        %v1736 = vld [vmem:[%s1721 + $0x38] sm:$0xf]
        %v1737 = vld [vmem:[%s1721 + $0x3c] sm:$0xf]
        %v1738 = vunpack.c.l.b16 %v1612
        %v1739 = vunpack.c.l.b16 %v1615
        %v1740 = vunpack.c.l.b16 %v1619
        %v1741 = vunpack.c.l.b16 %v1622
        %v1742 = vunpack.c.l.b16 %v1626
        %v1743 = vunpack.c.l.b16 %v1629
        %v1744 = vunpack.c.l.b16 %v1633
        %v1745 = vunpack.c.l.b16 %v1636
        %v1746 = vunpack.c.l.b16 %v1640
        %v1747 = vunpack.c.l.b16 %v1643
        %v1748 = vunpack.c.l.b16 %v1647
        %v1749 = vunpack.c.l.b16 %v1650
        %v1750 = vunpack.c.l.b16 %v1654
        %v1751 = vunpack.c.l.b16 %v1657
        %v1752 = vunpack.c.l.b16 %v1661
        %v1753 = vunpack.c.l.b16 %v1664
        %v1754 = vunpack.c.l.b16 %v1668
        %v1755 = vunpack.c.l.b16 %v1671
        %v1756 = vunpack.c.l.b16 %v1675
        %v1757 = vunpack.c.l.b16 %v1678
        %v1758 = vunpack.c.l.b16 %v1682
        %v1759 = vunpack.c.l.b16 %v1685
        %v1760 = vunpack.c.l.b16 %v1689
        %v1761 = vunpack.c.l.b16 %v1692
        %v1762 = vunpack.c.l.b16 %v1696
        %v1763 = vunpack.c.l.b16 %v1699
        %v1764 = vunpack.c.l.b16 %v1703
        %v1765 = vunpack.c.l.b16 %v1706
        %v1766 = vunpack.c.l.b16 %v1710
        %v1767 = vunpack.c.l.b16 %v1713
        %v1768 = vunpack.c.l.b16 %v1717
        %v1769 = vunpack.c.l.b16 %v1720
        %v1770 = vpack.c.b16 %v1739, %v1738
        %v1771 = vpack.c.b16 %v1741, %v1740
        %v1772 = vpack.c.b16 %v1743, %v1742
        %v1773 = vpack.c.b16 %v1745, %v1744
        %v1774 = vpack.c.b16 %v1747, %v1746
        %v1775 = vpack.c.b16 %v1749, %v1748
        %v1776 = vpack.c.b16 %v1751, %v1750
        %v1777 = vpack.c.b16 %v1753, %v1752
        %v1778 = vpack.c.b16 %v1755, %v1754
        %v1779 = vpack.c.b16 %v1757, %v1756
        %v1780 = vpack.c.b16 %v1759, %v1758
        %v1781 = vpack.c.b16 %v1761, %v1760
        %v1782 = vpack.c.b16 %v1763, %v1762
        %v1783 = vpack.c.b16 %v1765, %v1764
        %v1784 = vpack.c.b16 %v1767, %v1766
        %v1785 = vpack.c.b16 %v1769, %v1768
        %v1818 = vunpack.c.l.b16 %v1722
        %v1819 = vunpack.c.l.b16 %v1723
        %v1820 = vunpack.c.l.b16 %v1724
        %v1821 = vunpack.c.l.b16 %v1725
        %v1822 = vunpack.c.l.b16 %v1726
        %v1823 = vunpack.c.l.b16 %v1727
        %v1824 = vunpack.c.l.b16 %v1728
        %v1825 = vunpack.c.l.b16 %v1729
        %v1826 = vunpack.c.l.b16 %v1730
        %v1827 = vunpack.c.l.b16 %v1731
        %v1828 = vunpack.c.l.b16 %v1732
        %v1829 = vunpack.c.l.b16 %v1733
        %v1830 = vunpack.c.l.b16 %v1734
        %v1831 = vunpack.c.l.b16 %v1735
        %v1832 = vunpack.c.l.b16 %v1736
        %v1833 = vunpack.c.l.b16 %v1737
        %v1834 = vpack.c.b16 %v1819, %v1818
        %v1835 = vpack.c.b16 %v1821, %v1820
        %v1836 = vpack.c.b16 %v1823, %v1822
        %v1837 = vpack.c.b16 %v1825, %v1824
        %v1838 = vpack.c.b16 %v1827, %v1826
        %v1839 = vpack.c.b16 %v1829, %v1828
        %v1840 = vpack.c.b16 %v1831, %v1830
        %v1841 = vpack.c.b16 %v1833, %v1832
        %1850 = vmatprep.subr.bf16.mxu0 0
        %1851 = vmatpush1.bf16.msra.mxu0 %v1834
        %1852 = vmatprep.subr.bf16.mxu0 0
        %1853 = vmatpush1.bf16.msra.mxu0 %v1835
        %1854 = vmatprep.subr.bf16.mxu0 0
        %1855 = vmatpush1.bf16.msra.mxu0 %v1836
        %1856 = vmatprep.subr.bf16.mxu0 0
        %1857 = vmatpush1.bf16.msra.mxu0 %v1837
        %1858 = vmatprep.subr.bf16.mxu0 0
        %1859 = vmatpush1.bf16.msra.mxu0 %v1838
        %1860 = vmatprep.subr.bf16.mxu0 0
        %1861 = vmatpush1.bf16.msra.mxu0 %v1839
        %1862 = vmatprep.subr.bf16.mxu0 0
        %1863 = vmatpush1.bf16.msra.mxu0 %v1840
        %1864 = vmatprep.subr.bf16.mxu0 0
        %1865 = vmatpush1.bf16.msra.mxu0 %v1841
        %1866 = vmatprep.subr.bf16.mxu0 0
        %1867 = vmatpush1.bf16.msra.mxu0 0
        %1868 = vmatprep.subr.bf16.mxu0 0
        %1869 = vmatpush1.bf16.msra.mxu0 0
        %1870 = vmatprep.subr.bf16.mxu0 0
        %1871 = vmatpush1.bf16.msra.mxu0 0
        %1872 = vmatprep.subr.bf16.mxu0 0
        %1873 = vmatpush1.bf16.msra.mxu0 0
        %1874 = vmatprep.subr.bf16.mxu0 0
        %1875 = vmatpush1.bf16.msra.mxu0 0
        %1876 = vmatprep.subr.bf16.mxu0 0
        %1877 = vmatpush1.bf16.msra.mxu0 0
        %1878 = vmatprep.subr.bf16.mxu0 0
        %1879 = vmatpush1.bf16.msra.mxu0 0
        %1880 = vmatprep.subr.bf16.mxu0 0
        %1881 = vmatpush1.bf16.msra.mxu0 0
        %1882 = vmatprep.mubr.bf16.mxu0 0
        %1883 = vmatmul.mubr.bf16.gmra.mrb[0].mxu0 %v1770
        %v1884 = vpop.f32.mrb[0].mxu0
        %v1885 = vadd.f32 0.0, %v1884
        %v1886 = vpop.f32.mrb[0].mxu0
        %v1887 = vpop.f32.mrb[0].mxu0
        %v1888 = vadd.f32 0.0, %v1887
        %v1889 = vpop.f32.mrb[0].mxu0
        %1890 = vmatprep.mubr.bf16.mxu0 0
        %1891 = vmatmul.mubr.bf16.gmra.mrb[0].mxu0 %v1771
        %v1892 = vpop.f32.mrb[0].mxu0
        %v1893 = vadd.f32 0.0, %v1892
        %v1894 = vpop.f32.mrb[0].mxu0
        %v1895 = vpop.f32.mrb[0].mxu0
        %v1896 = vadd.f32 0.0, %v1895
        %v1897 = vpop.f32.mrb[0].mxu0
        %1898 = vmatprep.mubr.bf16.mxu0 0
        %1899 = vmatmul.mubr.bf16.gmra.mrb[0].mxu0 %v1772
        %v1900 = vpop.f32.mrb[0].mxu0
        %v1901 = vadd.f32 0.0, %v1900
        %v1902 = vpop.f32.mrb[0].mxu0
        %v1903 = vpop.f32.mrb[0].mxu0
        %v1904 = vadd.f32 0.0, %v1903
        %v1905 = vpop.f32.mrb[0].mxu0
        %1906 = vmatprep.mubr.bf16.mxu0 0
        %1907 = vmatmul.mubr.bf16.gmra.mrb[0].mxu0 %v1773
        %v1908 = vpop.f32.mrb[0].mxu0
        %v1909 = vadd.f32 0.0, %v1908
        %v1910 = vpop.f32.mrb[0].mxu0
        %v1911 = vpop.f32.mrb[0].mxu0
        %v1912 = vadd.f32 0.0, %v1911
        %v1913 = vpop.f32.mrb[0].mxu0
        %1914 = vmatprep.mubr.bf16.mxu0 0
        %1915 = vmatmul.mubr.bf16.gmra.mrb[0].mxu0 %v1774
        %v1916 = vpop.f32.mrb[0].mxu0
        %v1917 = vadd.f32 0.0, %v1916
        %v1918 = vpop.f32.mrb[0].mxu0
        %v1919 = vpop.f32.mrb[0].mxu0
        %v1920 = vadd.f32 0.0, %v1919
        %v1921 = vpop.f32.mrb[0].mxu0
        %1922 = vmatprep.mubr.bf16.mxu0 0
        %1923 = vmatmul.mubr.bf16.gmra.mrb[0].mxu0 %v1775
        %v1924 = vpop.f32.mrb[0].mxu0
        %v1925 = vadd.f32 0.0, %v1924
        %v1926 = vpop.f32.mrb[0].mxu0
        %v1927 = vpop.f32.mrb[0].mxu0
        %v1928 = vadd.f32 0.0, %v1927
        %v1929 = vpop.f32.mrb[0].mxu0
        %1930 = vmatprep.mubr.bf16.mxu0 0
        %1931 = vmatmul.mubr.bf16.gmra.mrb[0].mxu0 %v1776
        %v1932 = vpop.f32.mrb[0].mxu0
        %v1933 = vadd.f32 0.0, %v1932
        %v1934 = vpop.f32.mrb[0].mxu0
        %v1935 = vpop.f32.mrb[0].mxu0
        %v1936 = vadd.f32 0.0, %v1935
        %v1937 = vpop.f32.mrb[0].mxu0
        %1938 = vmatprep.mubr.bf16.mxu0 0
        %1939 = vmatmul.mubr.bf16.gmra.mrb[0].mxu0 %v1777
        %v1940 = vpop.f32.mrb[0].mxu0
        %v1941 = vadd.f32 0.0, %v1940
        %v1942 = vpop.f32.mrb[0].mxu0
        %v1943 = vpop.f32.mrb[0].mxu0
        %v1944 = vadd.f32 0.0, %v1943
        %v1945 = vpop.f32.mrb[0].mxu0
        %1946 = vmatprep.mubr.bf16.mxu0 0
        %1947 = vmatmul.mubr.bf16.gmra.mrb[0].mxu0 %v1778
        %v1948 = vpop.f32.mrb[0].mxu0
        %v1949 = vadd.f32 0.0, %v1948
        %v1950 = vpop.f32.mrb[0].mxu0
        %v1951 = vpop.f32.mrb[0].mxu0
        %v1952 = vadd.f32 0.0, %v1951
        %v1953 = vpop.f32.mrb[0].mxu0
        %1954 = vmatprep.mubr.bf16.mxu0 0
        %1955 = vmatmul.mubr.bf16.gmra.mrb[0].mxu0 %v1779
        %v1956 = vpop.f32.mrb[0].mxu0
        %v1957 = vadd.f32 0.0, %v1956
        %v1958 = vpop.f32.mrb[0].mxu0
        %v1959 = vpop.f32.mrb[0].mxu0
        %v1960 = vadd.f32 0.0, %v1959
        %v1961 = vpop.f32.mrb[0].mxu0
        %1962 = vmatprep.mubr.bf16.mxu0 0
        %1963 = vmatmul.mubr.bf16.gmra.mrb[0].mxu0 %v1780
        %v1964 = vpop.f32.mrb[0].mxu0
        %v1965 = vadd.f32 0.0, %v1964
        %v1966 = vpop.f32.mrb[0].mxu0
        %v1967 = vpop.f32.mrb[0].mxu0
        %v1968 = vadd.f32 0.0, %v1967
        %v1969 = vpop.f32.mrb[0].mxu0
        %1970 = vmatprep.mubr.bf16.mxu0 0
        %1971 = vmatmul.mubr.bf16.gmra.mrb[0].mxu0 %v1781
        %v1972 = vpop.f32.mrb[0].mxu0
        %v1973 = vadd.f32 0.0, %v1972
        %v1974 = vpop.f32.mrb[0].mxu0
        %v1975 = vpop.f32.mrb[0].mxu0
        %v1976 = vadd.f32 0.0, %v1975
        %v1977 = vpop.f32.mrb[0].mxu0
        %1978 = vmatprep.mubr.bf16.mxu0 0
        %1979 = vmatmul.mubr.bf16.gmra.mrb[0].mxu0 %v1782
        %v1980 = vpop.f32.mrb[0].mxu0
        %v1981 = vadd.f32 0.0, %v1980
        %v1982 = vpop.f32.mrb[0].mxu0
        %v1983 = vpop.f32.mrb[0].mxu0
        %v1984 = vadd.f32 0.0, %v1983
        %v1985 = vpop.f32.mrb[0].mxu0
        %1986 = vmatprep.mubr.bf16.mxu0 0
        %1987 = vmatmul.mubr.bf16.gmra.mrb[0].mxu0 %v1783
        %v1988 = vpop.f32.mrb[0].mxu0
        %v1989 = vadd.f32 0.0, %v1988
        %v1990 = vpop.f32.mrb[0].mxu0
        %v1991 = vpop.f32.mrb[0].mxu0
        %v1992 = vadd.f32 0.0, %v1991
        %v1993 = vpop.f32.mrb[0].mxu0
        %1994 = vmatprep.mubr.bf16.mxu0 0
        %1995 = vmatmul.mubr.bf16.gmra.mrb[0].mxu0 %v1784
        %v1996 = vpop.f32.mrb[0].mxu0
        %v1997 = vadd.f32 0.0, %v1996
        %v1998 = vpop.f32.mrb[0].mxu0
        %v1999 = vpop.f32.mrb[0].mxu0
        %v2000 = vadd.f32 0.0, %v1999
        %v2001 = vpop.f32.mrb[0].mxu0
        %2002 = vmatprep.mubr.bf16.mxu0 0
        %2003 = vmatmul.mubr.bf16.gmra.mrb[0].mxu0 %v1785
        %v2004 = vpop.f32.mrb[0].mxu0
        %v2005 = vadd.f32 0.0, %v2004
        %v2006 = vpop.f32.mrb[0].mxu0
        %v2007 = vpop.f32.mrb[0].mxu0
        %v2008 = vadd.f32 0.0, %v2007
        %v2009 = vpop.f32.mrb[0].mxu0
        %2010 = vdwg.mxu0
        %v2011 = vadd.f32 %v1464, %v1885
        %v2012 = vadd.f32 %v1467, %v1888
        %v2013 = vadd.f32 %v1472, %v1893
        %v2014 = vadd.f32 %v1475, %v1896
        %v2015 = vadd.f32 %v1480, %v1901
        %v2016 = vadd.f32 %v1483, %v1904
        %v2017 = vadd.f32 %v1488, %v1909
        %v2018 = vadd.f32 %v1491, %v1912
        %v2019 = vadd.f32 %v1496, %v1917
        %v2020 = vadd.f32 %v1499, %v1920
        %v2021 = vadd.f32 %v1504, %v1925
        %v2022 = vadd.f32 %v1507, %v1928
        %v2023 = vadd.f32 %v1512, %v1933
        %v2024 = vadd.f32 %v1515, %v1936
        %v2025 = vadd.f32 %v1520, %v1941
        %v2026 = vadd.f32 %v1523, %v1944
        %v2027 = vadd.f32 %v1528, %v1949
        %v2028 = vadd.f32 %v1531, %v1952
        %v2029 = vadd.f32 %v1536, %v1957
        %v2030 = vadd.f32 %v1539, %v1960
        %v2031 = vadd.f32 %v1544, %v1965
        %v2032 = vadd.f32 %v1547, %v1968
        %v2033 = vadd.f32 %v1552, %v1973
        %v2034 = vadd.f32 %v1555, %v1976
        %v2035 = vadd.f32 %v1560, %v1981
        %v2036 = vadd.f32 %v1563, %v1984
        %v2037 = vadd.f32 %v1568, %v1989
        %v2038 = vadd.f32 %v1571, %v1992
        %v2039 = vadd.f32 %v1576, %v1997
        %v2040 = vadd.f32 %v1579, %v2000
        %v2041 = vadd.f32 %v1584, %v2005
        %v2042 = vadd.f32 %v1587, %v2008
        %s2043 = scalar_lea.vmem [#allocation5], 192
        %v2044 = vld [vmem:[%s2043] sm:$0xf]
        %v2045 = vld [vmem:[%s2043 + $0x4] sm:$0xf]
        %v2046 = vld [vmem:[%s2043 + $0x8] sm:$0xf]
        %v2047 = vld [vmem:[%s2043 + $0xc] sm:$0xf]
        %v2048 = vld [vmem:[%s2043 + $0x10] sm:$0xf]
        %v2049 = vld [vmem:[%s2043 + $0x14] sm:$0xf]
        %v2050 = vld [vmem:[%s2043 + $0x18] sm:$0xf]
        %v2051 = vld [vmem:[%s2043 + $0x1c] sm:$0xf]
        %v2052 = vld [vmem:[%s2043 + $0x20] sm:$0xf]
        %v2053 = vld [vmem:[%s2043 + $0x24] sm:$0xf]
        %v2054 = vld [vmem:[%s2043 + $0x28] sm:$0xf]
        %v2055 = vld [vmem:[%s2043 + $0x2c] sm:$0xf]
        %v2056 = vld [vmem:[%s2043 + $0x30] sm:$0xf]
        %v2057 = vld [vmem:[%s2043 + $0x34] sm:$0xf]
        %v2058 = vld [vmem:[%s2043 + $0x38] sm:$0xf]
        %v2059 = vld [vmem:[%s2043 + $0x3c] sm:$0xf]
        %v2062 = vunpack.c.l.b16 %v586
        %v2063 = vunpack.c.l.b16 %v587
        %v2064 = vpack.c.b16 %v2063, %v2062
        %v2082 = vunpack.c.l.b16 %v2044
        %v2083 = vunpack.c.l.b16 %v2045
        %v2084 = vunpack.c.l.b16 %v2046
        %v2085 = vunpack.c.l.b16 %v2047
        %v2086 = vunpack.c.l.b16 %v2048
        %v2087 = vunpack.c.l.b16 %v2049
        %v2088 = vunpack.c.l.b16 %v2050
        %v2089 = vunpack.c.l.b16 %v2051
        %v2090 = vunpack.c.l.b16 %v2052
        %v2091 = vunpack.c.l.b16 %v2053
        %v2092 = vunpack.c.l.b16 %v2054
        %v2093 = vunpack.c.l.b16 %v2055
        %v2094 = vunpack.c.l.b16 %v2056
        %v2095 = vunpack.c.l.b16 %v2057
        %v2096 = vunpack.c.l.b16 %v2058
        %v2097 = vunpack.c.l.b16 %v2059
        %v2098 = vpack.c.b16 %v2083, %v2082
        %v2099 = vpack.c.b16 %v2085, %v2084
        %v2100 = vpack.c.b16 %v2087, %v2086
        %v2101 = vpack.c.b16 %v2089, %v2088
        %v2102 = vpack.c.b16 %v2091, %v2090
        %v2103 = vpack.c.b16 %v2093, %v2092
        %v2104 = vpack.c.b16 %v2095, %v2094
        %v2105 = vpack.c.b16 %v2097, %v2096
        %2114 = vmatprep.subr.bf16.mxu0 0
        %2115 = vmatpush1.bf16.msra.mxu0 %v2098
        %2116 = vmatprep.subr.bf16.mxu0 0
        %2117 = vmatpush1.bf16.msra.mxu0 %v2099
        %2118 = vmatprep.subr.bf16.mxu0 0
        %2119 = vmatpush1.bf16.msra.mxu0 %v2100
        %2120 = vmatprep.subr.bf16.mxu0 0
        %2121 = vmatpush1.bf16.msra.mxu0 %v2101
        %2122 = vmatprep.subr.bf16.mxu0 0
        %2123 = vmatpush1.bf16.msra.mxu0 %v2102
        %2124 = vmatprep.subr.bf16.mxu0 0
        %2125 = vmatpush1.bf16.msra.mxu0 %v2103
        %2126 = vmatprep.subr.bf16.mxu0 0
        %2127 = vmatpush1.bf16.msra.mxu0 %v2104
        %2128 = vmatprep.subr.bf16.mxu0 0
        %2129 = vmatpush1.bf16.msra.mxu0 %v2105
        %2130 = vmatprep.subr.bf16.mxu0 0
        %2131 = vmatpush1.bf16.msra.mxu0 0
        %2132 = vmatprep.subr.bf16.mxu0 0
        %2133 = vmatpush1.bf16.msra.mxu0 0
        %2134 = vmatprep.subr.bf16.mxu0 0
        %2135 = vmatpush1.bf16.msra.mxu0 0
        %2136 = vmatprep.subr.bf16.mxu0 0
        %2137 = vmatpush1.bf16.msra.mxu0 0
        %2138 = vmatprep.subr.bf16.mxu0 0
        %2139 = vmatpush1.bf16.msra.mxu0 0
        %2140 = vmatprep.subr.bf16.mxu0 0
        %2141 = vmatpush1.bf16.msra.mxu0 0
        %2142 = vmatprep.subr.bf16.mxu0 0
        %2143 = vmatpush1.bf16.msra.mxu0 0
        %2144 = vmatprep.subr.bf16.mxu0 0
        %2145 = vmatpush1.bf16.msra.mxu0 0
        %2146 = vmatprep.mubr.bf16.mxu0 0
        %2147 = vmatmul.mubr.bf16.gmra.mrb[0].mxu0 %v1350
        %v2148 = vpop.f32.mrb[0].mxu0
        %v2149 = vadd.f32 0.0, %v2148
        %v2150 = vpop.f32.mrb[0].mxu0
        %v2151 = vpop.f32.mrb[0].mxu0
        %v2152 = vadd.f32 0.0, %v2151
        %v2153 = vpop.f32.mrb[0].mxu0
        %2154 = vmatprep.mubr.bf16.mxu0 0
        %2155 = vmatmul.mubr.bf16.gmra.mrb[0].mxu0 %v1351
        %v2156 = vpop.f32.mrb[0].mxu0
        %v2157 = vadd.f32 0.0, %v2156
        %v2158 = vpop.f32.mrb[0].mxu0
        %v2159 = vpop.f32.mrb[0].mxu0
        %v2160 = vadd.f32 0.0, %v2159
        %v2161 = vpop.f32.mrb[0].mxu0
        %2162 = vmatprep.mubr.bf16.mxu0 0
        %2163 = vmatmul.mubr.bf16.gmra.mrb[0].mxu0 %v1352
        %v2164 = vpop.f32.mrb[0].mxu0
        %v2165 = vadd.f32 0.0, %v2164
        %v2166 = vpop.f32.mrb[0].mxu0
        %v2167 = vpop.f32.mrb[0].mxu0
        %v2168 = vadd.f32 0.0, %v2167
        %v2169 = vpop.f32.mrb[0].mxu0
        %2170 = vmatprep.mubr.bf16.mxu0 0
        %2171 = vmatmul.mubr.bf16.gmra.mrb[0].mxu0 %v1353
        %v2172 = vpop.f32.mrb[0].mxu0
        %v2173 = vadd.f32 0.0, %v2172
        %v2174 = vpop.f32.mrb[0].mxu0
        %v2175 = vpop.f32.mrb[0].mxu0
        %v2176 = vadd.f32 0.0, %v2175
        %v2177 = vpop.f32.mrb[0].mxu0
        %2178 = vmatprep.mubr.bf16.mxu0 0
        %2179 = vmatmul.mubr.bf16.gmra.mrb[0].mxu0 %v1354
        %v2180 = vpop.f32.mrb[0].mxu0
        %v2181 = vadd.f32 0.0, %v2180
        %v2182 = vpop.f32.mrb[0].mxu0
        %v2183 = vpop.f32.mrb[0].mxu0
        %v2184 = vadd.f32 0.0, %v2183
        %v2185 = vpop.f32.mrb[0].mxu0
        %2186 = vmatprep.mubr.bf16.mxu0 0
        %2187 = vmatmul.mubr.bf16.gmra.mrb[0].mxu0 %v1355
        %v2188 = vpop.f32.mrb[0].mxu0
        %v2189 = vadd.f32 0.0, %v2188
        %v2190 = vpop.f32.mrb[0].mxu0
        %v2191 = vpop.f32.mrb[0].mxu0
        %v2192 = vadd.f32 0.0, %v2191
        %v2193 = vpop.f32.mrb[0].mxu0
        %2194 = vmatprep.mubr.bf16.mxu0 0
        %2195 = vmatmul.mubr.bf16.gmra.mrb[0].mxu0 %v1356
        %v2196 = vpop.f32.mrb[0].mxu0
        %v2197 = vadd.f32 0.0, %v2196
        %v2198 = vpop.f32.mrb[0].mxu0
        %v2199 = vpop.f32.mrb[0].mxu0
        %v2200 = vadd.f32 0.0, %v2199
        %v2201 = vpop.f32.mrb[0].mxu0
        %2202 = vmatprep.mubr.bf16.mxu0 0
        %2203 = vmatmul.mubr.bf16.gmra.mrb[0].mxu0 %v1357
        %v2204 = vpop.f32.mrb[0].mxu0
        %v2205 = vadd.f32 0.0, %v2204
        %v2206 = vpop.f32.mrb[0].mxu0
        %v2207 = vpop.f32.mrb[0].mxu0
        %v2208 = vadd.f32 0.0, %v2207
        %v2209 = vpop.f32.mrb[0].mxu0
        %2210 = vmatprep.mubr.bf16.mxu0 0
        %2211 = vmatmul.mubr.bf16.gmra.mrb[0].mxu0 %v1358
        %v2212 = vpop.f32.mrb[0].mxu0
        %v2213 = vadd.f32 0.0, %v2212
        %v2214 = vpop.f32.mrb[0].mxu0
        %v2215 = vpop.f32.mrb[0].mxu0
        %v2216 = vadd.f32 0.0, %v2215
        %v2217 = vpop.f32.mrb[0].mxu0
        %2218 = vmatprep.mubr.bf16.mxu0 0
        %2219 = vmatmul.mubr.bf16.gmra.mrb[0].mxu0 %v1359
        %v2220 = vpop.f32.mrb[0].mxu0
        %v2221 = vadd.f32 0.0, %v2220
        %v2222 = vpop.f32.mrb[0].mxu0
        %v2223 = vpop.f32.mrb[0].mxu0
        %v2224 = vadd.f32 0.0, %v2223
        %v2225 = vpop.f32.mrb[0].mxu0
        %2226 = vmatprep.mubr.bf16.mxu0 0
        %2227 = vmatmul.mubr.bf16.gmra.mrb[0].mxu0 %v1360
        %v2228 = vpop.f32.mrb[0].mxu0
        %v2229 = vadd.f32 0.0, %v2228
        %v2230 = vpop.f32.mrb[0].mxu0
        %v2231 = vpop.f32.mrb[0].mxu0
        %v2232 = vadd.f32 0.0, %v2231
        %v2233 = vpop.f32.mrb[0].mxu0
        %2234 = vmatprep.mubr.bf16.mxu0 0
        %2235 = vmatmul.mubr.bf16.gmra.mrb[0].mxu0 %v1361
        %v2236 = vpop.f32.mrb[0].mxu0
        %v2237 = vadd.f32 0.0, %v2236
        %v2238 = vpop.f32.mrb[0].mxu0
        %v2239 = vpop.f32.mrb[0].mxu0
        %v2240 = vadd.f32 0.0, %v2239
        %v2241 = vpop.f32.mrb[0].mxu0
        %2242 = vmatprep.mubr.bf16.mxu0 0
        %2243 = vmatmul.mubr.bf16.gmra.mrb[0].mxu0 %v1362
        %v2244 = vpop.f32.mrb[0].mxu0
        %v2245 = vadd.f32 0.0, %v2244
        %v2246 = vpop.f32.mrb[0].mxu0
        %v2247 = vpop.f32.mrb[0].mxu0
        %v2248 = vadd.f32 0.0, %v2247
        %v2249 = vpop.f32.mrb[0].mxu0
        %2250 = vmatprep.mubr.bf16.mxu0 0
        %2251 = vmatmul.mubr.bf16.gmra.mrb[0].mxu0 %v1363
        %v2252 = vpop.f32.mrb[0].mxu0
        %v2253 = vadd.f32 0.0, %v2252
        %v2254 = vpop.f32.mrb[0].mxu0
        %v2255 = vpop.f32.mrb[0].mxu0
        %v2256 = vadd.f32 0.0, %v2255
        %v2257 = vpop.f32.mrb[0].mxu0
        %2258 = vmatprep.mubr.bf16.mxu0 0
        %2259 = vmatmul.mubr.bf16.gmra.mrb[0].mxu0 %v1364
        %v2260 = vpop.f32.mrb[0].mxu0
        %v2261 = vadd.f32 0.0, %v2260
        %v2262 = vpop.f32.mrb[0].mxu0
        %v2263 = vpop.f32.mrb[0].mxu0
        %v2264 = vadd.f32 0.0, %v2263
        %v2265 = vpop.f32.mrb[0].mxu0
        %2266 = vmatprep.mubr.bf16.mxu0 0
        %2267 = vmatmul.mubr.bf16.gmra.mrb[0].mxu0 %v2064
        %v2268 = vpop.f32.mrb[0].mxu0
        %v2269 = vadd.f32 0.0, %v2268
        %v2270 = vpop.f32.mrb[0].mxu0
        %v2271 = vpop.f32.mrb[0].mxu0
        %v2272 = vadd.f32 0.0, %v2271
        %v2273 = vpop.f32.mrb[0].mxu0
        %2274 = vdwg.mxu0
        %v2275 = vadd.f32 %v2011, %v2149
        %v2276 = vadd.f32 %v2012, %v2152
        %v2277 = vadd.f32 %v2013, %v2157
        %v2278 = vadd.f32 %v2014, %v2160
        %v2279 = vadd.f32 %v2015, %v2165
        %v2280 = vadd.f32 %v2016, %v2168
        %v2281 = vadd.f32 %v2017, %v2173
        %v2282 = vadd.f32 %v2018, %v2176
        %v2283 = vadd.f32 %v2019, %v2181
        %v2284 = vadd.f32 %v2020, %v2184
        %v2285 = vadd.f32 %v2021, %v2189
        %v2286 = vadd.f32 %v2022, %v2192
        %v2287 = vadd.f32 %v2023, %v2197
        %v2288 = vadd.f32 %v2024, %v2200
        %v2289 = vadd.f32 %v2025, %v2205
        %v2290 = vadd.f32 %v2026, %v2208
        %v2291 = vadd.f32 %v2027, %v2213
        %v2292 = vadd.f32 %v2028, %v2216
        %v2293 = vadd.f32 %v2029, %v2221
        %v2294 = vadd.f32 %v2030, %v2224
        %v2295 = vadd.f32 %v2031, %v2229
        %v2296 = vadd.f32 %v2032, %v2232
        %v2297 = vadd.f32 %v2033, %v2237
        %v2298 = vadd.f32 %v2034, %v2240
        %v2299 = vadd.f32 %v2035, %v2245
        %v2300 = vadd.f32 %v2036, %v2248
        %v2301 = vadd.f32 %v2037, %v2253
        %v2302 = vadd.f32 %v2038, %v2256
        %v2303 = vadd.f32 %v2039, %v2261
        %v2304 = vadd.f32 %v2040, %v2264
        %v2305 = vadd.f32 %v2041, %v2269
        %v2306 = vadd.f32 %v2042, %v2272
        %v2308 = vshrl.u32 %v586, 16
        %v2310 = vrot.slane %v2308, 4
        %v2311 = vshll.u32 %v586, 16
        %v2313 = vrot.slane %v2311, 5
        %v2314 = vor.u32 %v2310, %v2313
        %v2315 = vrot.slane %v2314, 4
        %v2317 = vshll.u32 %v587, 16
        %v2319 = vrot.slane %v2317, 5
        %v2320 = vsel %vm610, %v2315, %v2319
        %v2321 = vshrl.u32 %v587, 16
        %v2323 = vrot.slane %v2321, 4
        %v2324 = vor.u32 %v2323, %v2319
        %v2325 = vrot.slane %v2324, 4
        %v2327 = vshll.u32 %v588, 16
        %v2329 = vrot.slane %v2327, 5
        %v2330 = vsel %vm610, %v2325, %v2329
        %s2331 = scalar_lea.vmem [#allocation5], 256
        %v2332 = vld [vmem:[%s2331] sm:$0xf]
        %v2333 = vld [vmem:[%s2331 + $0x4] sm:$0xf]
        %v2334 = vld [vmem:[%s2331 + $0x8] sm:$0xf]
        %v2335 = vld [vmem:[%s2331 + $0xc] sm:$0xf]
        %v2336 = vld [vmem:[%s2331 + $0x10] sm:$0xf]
        %v2337 = vld [vmem:[%s2331 + $0x14] sm:$0xf]
        %v2338 = vld [vmem:[%s2331 + $0x18] sm:$0xf]
        %v2339 = vld [vmem:[%s2331 + $0x1c] sm:$0xf]
        %v2340 = vld [vmem:[%s2331 + $0x20] sm:$0xf]
        %v2341 = vld [vmem:[%s2331 + $0x24] sm:$0xf]
        %v2342 = vld [vmem:[%s2331 + $0x28] sm:$0xf]
        %v2343 = vld [vmem:[%s2331 + $0x2c] sm:$0xf]
        %v2344 = vld [vmem:[%s2331 + $0x30] sm:$0xf]
        %v2345 = vld [vmem:[%s2331 + $0x34] sm:$0xf]
        %v2346 = vld [vmem:[%s2331 + $0x38] sm:$0xf]
        %v2347 = vld [vmem:[%s2331 + $0x3c] sm:$0xf]
        %v2348 = vunpack.c.l.b16 %v2320
        %v2349 = vunpack.c.l.b16 %v2330
        %v2350 = vpack.c.b16 %v2349, %v2348
        %v2368 = vunpack.c.l.b16 %v2332
        %v2369 = vunpack.c.l.b16 %v2333
        %v2370 = vunpack.c.l.b16 %v2334
        %v2371 = vunpack.c.l.b16 %v2335
        %v2372 = vunpack.c.l.b16 %v2336
        %v2373 = vunpack.c.l.b16 %v2337
        %v2374 = vunpack.c.l.b16 %v2338
        %v2375 = vunpack.c.l.b16 %v2339
        %v2376 = vunpack.c.l.b16 %v2340
        %v2377 = vunpack.c.l.b16 %v2341
        %v2378 = vunpack.c.l.b16 %v2342
        %v2379 = vunpack.c.l.b16 %v2343
        %v2380 = vunpack.c.l.b16 %v2344
        %v2381 = vunpack.c.l.b16 %v2345
        %v2382 = vunpack.c.l.b16 %v2346
        %v2383 = vunpack.c.l.b16 %v2347
        %v2384 = vpack.c.b16 %v2369, %v2368
        %v2385 = vpack.c.b16 %v2371, %v2370
        %v2386 = vpack.c.b16 %v2373, %v2372
        %v2387 = vpack.c.b16 %v2375, %v2374
        %v2388 = vpack.c.b16 %v2377, %v2376
        %v2389 = vpack.c.b16 %v2379, %v2378
        %v2390 = vpack.c.b16 %v2381, %v2380
        %v2391 = vpack.c.b16 %v2383, %v2382
        %2400 = vmatprep.subr.bf16.mxu0 0
        %2401 = vmatpush1.bf16.msra.mxu0 %v2384
        %2402 = vmatprep.subr.bf16.mxu0 0
        %2403 = vmatpush1.bf16.msra.mxu0 %v2385
        %2404 = vmatprep.subr.bf16.mxu0 0
        %2405 = vmatpush1.bf16.msra.mxu0 %v2386
        %2406 = vmatprep.subr.bf16.mxu0 0
        %2407 = vmatpush1.bf16.msra.mxu0 %v2387
        %2408 = vmatprep.subr.bf16.mxu0 0
        %2409 = vmatpush1.bf16.msra.mxu0 %v2388
        %2410 = vmatprep.subr.bf16.mxu0 0
        %2411 = vmatpush1.bf16.msra.mxu0 %v2389
        %2412 = vmatprep.subr.bf16.mxu0 0
        %2413 = vmatpush1.bf16.msra.mxu0 %v2390
        %2414 = vmatprep.subr.bf16.mxu0 0
        %2415 = vmatpush1.bf16.msra.mxu0 %v2391
        %2416 = vmatprep.subr.bf16.mxu0 0
        %2417 = vmatpush1.bf16.msra.mxu0 0
        %2418 = vmatprep.subr.bf16.mxu0 0
        %2419 = vmatpush1.bf16.msra.mxu0 0
        %2420 = vmatprep.subr.bf16.mxu0 0
        %2421 = vmatpush1.bf16.msra.mxu0 0
        %2422 = vmatprep.subr.bf16.mxu0 0
        %2423 = vmatpush1.bf16.msra.mxu0 0
        %2424 = vmatprep.subr.bf16.mxu0 0
        %2425 = vmatpush1.bf16.msra.mxu0 0
        %2426 = vmatprep.subr.bf16.mxu0 0
        %2427 = vmatpush1.bf16.msra.mxu0 0
        %2428 = vmatprep.subr.bf16.mxu0 0
        %2429 = vmatpush1.bf16.msra.mxu0 0
        %2430 = vmatprep.subr.bf16.mxu0 0
        %2431 = vmatpush1.bf16.msra.mxu0 0
        %2432 = vmatprep.mubr.bf16.mxu0 0
        %2433 = vmatmul.mubr.bf16.gmra.mrb[0].mxu0 %v1045
        %v2434 = vpop.f32.mrb[0].mxu0
        %v2435 = vadd.f32 0.0, %v2434
        %v2436 = vpop.f32.mrb[0].mxu0
        %v2437 = vpop.f32.mrb[0].mxu0
        %v2438 = vadd.f32 0.0, %v2437
        %v2439 = vpop.f32.mrb[0].mxu0
        %2440 = vmatprep.mubr.bf16.mxu0 0
        %2441 = vmatmul.mubr.bf16.gmra.mrb[0].mxu0 %v1046
        %v2442 = vpop.f32.mrb[0].mxu0
        %v2443 = vadd.f32 0.0, %v2442
        %v2444 = vpop.f32.mrb[0].mxu0
        %v2445 = vpop.f32.mrb[0].mxu0
        %v2446 = vadd.f32 0.0, %v2445
        %v2447 = vpop.f32.mrb[0].mxu0
        %2448 = vmatprep.mubr.bf16.mxu0 0
        %2449 = vmatmul.mubr.bf16.gmra.mrb[0].mxu0 %v1047
        %v2450 = vpop.f32.mrb[0].mxu0
        %v2451 = vadd.f32 0.0, %v2450
        %v2452 = vpop.f32.mrb[0].mxu0
        %v2453 = vpop.f32.mrb[0].mxu0
        %v2454 = vadd.f32 0.0, %v2453
        %v2455 = vpop.f32.mrb[0].mxu0
        %2456 = vmatprep.mubr.bf16.mxu0 0
        %2457 = vmatmul.mubr.bf16.gmra.mrb[0].mxu0 %v1048
        %v2458 = vpop.f32.mrb[0].mxu0
        %v2459 = vadd.f32 0.0, %v2458
        %v2460 = vpop.f32.mrb[0].mxu0
        %v2461 = vpop.f32.mrb[0].mxu0
        %v2462 = vadd.f32 0.0, %v2461
        %v2463 = vpop.f32.mrb[0].mxu0
        %2464 = vmatprep.mubr.bf16.mxu0 0
        %2465 = vmatmul.mubr.bf16.gmra.mrb[0].mxu0 %v1049
        %v2466 = vpop.f32.mrb[0].mxu0
        %v2467 = vadd.f32 0.0, %v2466
        %v2468 = vpop.f32.mrb[0].mxu0
        %v2469 = vpop.f32.mrb[0].mxu0
        %v2470 = vadd.f32 0.0, %v2469
        %v2471 = vpop.f32.mrb[0].mxu0
        %2472 = vmatprep.mubr.bf16.mxu0 0
        %2473 = vmatmul.mubr.bf16.gmra.mrb[0].mxu0 %v1050
        %v2474 = vpop.f32.mrb[0].mxu0
        %v2475 = vadd.f32 0.0, %v2474
        %v2476 = vpop.f32.mrb[0].mxu0
        %v2477 = vpop.f32.mrb[0].mxu0
        %v2478 = vadd.f32 0.0, %v2477
        %v2479 = vpop.f32.mrb[0].mxu0
        %2480 = vmatprep.mubr.bf16.mxu0 0
        %2481 = vmatmul.mubr.bf16.gmra.mrb[0].mxu0 %v1051
        %v2482 = vpop.f32.mrb[0].mxu0
        %v2483 = vadd.f32 0.0, %v2482
        %v2484 = vpop.f32.mrb[0].mxu0
        %v2485 = vpop.f32.mrb[0].mxu0
        %v2486 = vadd.f32 0.0, %v2485
        %v2487 = vpop.f32.mrb[0].mxu0
        %2488 = vmatprep.mubr.bf16.mxu0 0
        %2489 = vmatmul.mubr.bf16.gmra.mrb[0].mxu0 %v1052
        %v2490 = vpop.f32.mrb[0].mxu0
        %v2491 = vadd.f32 0.0, %v2490
        %v2492 = vpop.f32.mrb[0].mxu0
        %v2493 = vpop.f32.mrb[0].mxu0
        %v2494 = vadd.f32 0.0, %v2493
        %v2495 = vpop.f32.mrb[0].mxu0
        %2496 = vmatprep.mubr.bf16.mxu0 0
        %2497 = vmatmul.mubr.bf16.gmra.mrb[0].mxu0 %v1053
        %v2498 = vpop.f32.mrb[0].mxu0
        %v2499 = vadd.f32 0.0, %v2498
        %v2500 = vpop.f32.mrb[0].mxu0
        %v2501 = vpop.f32.mrb[0].mxu0
        %v2502 = vadd.f32 0.0, %v2501
        %v2503 = vpop.f32.mrb[0].mxu0
        %2504 = vmatprep.mubr.bf16.mxu0 0
        %2505 = vmatmul.mubr.bf16.gmra.mrb[0].mxu0 %v1054
        %v2506 = vpop.f32.mrb[0].mxu0
        %v2507 = vadd.f32 0.0, %v2506
        %v2508 = vpop.f32.mrb[0].mxu0
        %v2509 = vpop.f32.mrb[0].mxu0
        %v2510 = vadd.f32 0.0, %v2509
        %v2511 = vpop.f32.mrb[0].mxu0
        %2512 = vmatprep.mubr.bf16.mxu0 0
        %2513 = vmatmul.mubr.bf16.gmra.mrb[0].mxu0 %v1055
        %v2514 = vpop.f32.mrb[0].mxu0
        %v2515 = vadd.f32 0.0, %v2514
        %v2516 = vpop.f32.mrb[0].mxu0
        %v2517 = vpop.f32.mrb[0].mxu0
        %v2518 = vadd.f32 0.0, %v2517
        %v2519 = vpop.f32.mrb[0].mxu0
        %2520 = vmatprep.mubr.bf16.mxu0 0
        %2521 = vmatmul.mubr.bf16.gmra.mrb[0].mxu0 %v1056
        %v2522 = vpop.f32.mrb[0].mxu0
        %v2523 = vadd.f32 0.0, %v2522
        %v2524 = vpop.f32.mrb[0].mxu0
        %v2525 = vpop.f32.mrb[0].mxu0
        %v2526 = vadd.f32 0.0, %v2525
        %v2527 = vpop.f32.mrb[0].mxu0
        %2528 = vmatprep.mubr.bf16.mxu0 0
        %2529 = vmatmul.mubr.bf16.gmra.mrb[0].mxu0 %v1057
        %v2530 = vpop.f32.mrb[0].mxu0
        %v2531 = vadd.f32 0.0, %v2530
        %v2532 = vpop.f32.mrb[0].mxu0
        %v2533 = vpop.f32.mrb[0].mxu0
        %v2534 = vadd.f32 0.0, %v2533
        %v2535 = vpop.f32.mrb[0].mxu0
        %2536 = vmatprep.mubr.bf16.mxu0 0
        %2537 = vmatmul.mubr.bf16.gmra.mrb[0].mxu0 %v1058
        %v2538 = vpop.f32.mrb[0].mxu0
        %v2539 = vadd.f32 0.0, %v2538
        %v2540 = vpop.f32.mrb[0].mxu0
        %v2541 = vpop.f32.mrb[0].mxu0
        %v2542 = vadd.f32 0.0, %v2541
        %v2543 = vpop.f32.mrb[0].mxu0
        %2544 = vmatprep.mubr.bf16.mxu0 0
        %2545 = vmatmul.mubr.bf16.gmra.mrb[0].mxu0 %v1059
        %v2546 = vpop.f32.mrb[0].mxu0
        %v2547 = vadd.f32 0.0, %v2546
        %v2548 = vpop.f32.mrb[0].mxu0
        %v2549 = vpop.f32.mrb[0].mxu0
        %v2550 = vadd.f32 0.0, %v2549
        %v2551 = vpop.f32.mrb[0].mxu0
        %2552 = vmatprep.mubr.bf16.mxu0 0
        %2553 = vmatmul.mubr.bf16.gmra.mrb[0].mxu0 %v2350
        %v2554 = vpop.f32.mrb[0].mxu0
        %v2555 = vadd.f32 0.0, %v2554
        %v2556 = vpop.f32.mrb[0].mxu0
        %v2557 = vpop.f32.mrb[0].mxu0
        %v2558 = vadd.f32 0.0, %v2557
        %v2559 = vpop.f32.mrb[0].mxu0
        %2560 = vdwg.mxu0
        %v2561 = vadd.f32 %v2275, %v2435
        %v2562 = vadd.f32 %v2276, %v2438
        %v2563 = vadd.f32 %v2277, %v2443
        %v2564 = vadd.f32 %v2278, %v2446
        %v2565 = vadd.f32 %v2279, %v2451
        %v2566 = vadd.f32 %v2280, %v2454
        %v2567 = vadd.f32 %v2281, %v2459
        %v2568 = vadd.f32 %v2282, %v2462
        %v2569 = vadd.f32 %v2283, %v2467
        %v2570 = vadd.f32 %v2284, %v2470
        %v2571 = vadd.f32 %v2285, %v2475
        %v2572 = vadd.f32 %v2286, %v2478
        %v2573 = vadd.f32 %v2287, %v2483
        %v2574 = vadd.f32 %v2288, %v2486
        %v2575 = vadd.f32 %v2289, %v2491
        %v2576 = vadd.f32 %v2290, %v2494
        %v2577 = vadd.f32 %v2291, %v2499
        %v2578 = vadd.f32 %v2292, %v2502
        %v2579 = vadd.f32 %v2293, %v2507
        %v2580 = vadd.f32 %v2294, %v2510
        %v2581 = vadd.f32 %v2295, %v2515
        %v2582 = vadd.f32 %v2296, %v2518
        %v2583 = vadd.f32 %v2297, %v2523
        %v2584 = vadd.f32 %v2298, %v2526
        %v2585 = vadd.f32 %v2299, %v2531
        %v2586 = vadd.f32 %v2300, %v2534
        %v2587 = vadd.f32 %v2301, %v2539
        %v2588 = vadd.f32 %v2302, %v2542
        %v2589 = vadd.f32 %v2303, %v2547
        %v2590 = vadd.f32 %v2304, %v2550
        %v2591 = vadd.f32 %v2305, %v2555
        %v2592 = vadd.f32 %v2306, %v2558
        %v2594 = vrot.slane %v586, 5
        %v2595 = vrot.slane %v2594, 4
        %v2596 = vrot.slane %v587, 5
        %v2597 = vsel %vm1608, %v2595, %v2596
        %v2598 = vrot.slane %v2596, 4
        %v2599 = vrot.slane %v588, 5
        %v2600 = vsel %vm1608, %v2598, %v2599
        %s2601 = scalar_lea.vmem [#allocation5], 320
        %v2602 = vld [vmem:[%s2601] sm:$0xf]
        %v2603 = vld [vmem:[%s2601 + $0x4] sm:$0xf]
        %v2604 = vld [vmem:[%s2601 + $0x8] sm:$0xf]
        %v2605 = vld [vmem:[%s2601 + $0xc] sm:$0xf]
        %v2606 = vld [vmem:[%s2601 + $0x10] sm:$0xf]
        %v2607 = vld [vmem:[%s2601 + $0x14] sm:$0xf]
        %v2608 = vld [vmem:[%s2601 + $0x18] sm:$0xf]
        %v2609 = vld [vmem:[%s2601 + $0x1c] sm:$0xf]
        %v2610 = vld [vmem:[%s2601 + $0x20] sm:$0xf]
        %v2611 = vld [vmem:[%s2601 + $0x24] sm:$0xf]
        %v2612 = vld [vmem:[%s2601 + $0x28] sm:$0xf]
        %v2613 = vld [vmem:[%s2601 + $0x2c] sm:$0xf]
        %v2614 = vld [vmem:[%s2601 + $0x30] sm:$0xf]
        %v2615 = vld [vmem:[%s2601 + $0x34] sm:$0xf]
        %v2616 = vld [vmem:[%s2601 + $0x38] sm:$0xf]
        %v2617 = vld [vmem:[%s2601 + $0x3c] sm:$0xf]
        %v2618 = vunpack.c.l.b16 %v2597
        %v2619 = vunpack.c.l.b16 %v2600
        %v2620 = vpack.c.b16 %v2619, %v2618
        %v2638 = vunpack.c.l.b16 %v2602
        %v2639 = vunpack.c.l.b16 %v2603
        %v2640 = vunpack.c.l.b16 %v2604
        %v2641 = vunpack.c.l.b16 %v2605
        %v2642 = vunpack.c.l.b16 %v2606
        %v2643 = vunpack.c.l.b16 %v2607
        %v2644 = vunpack.c.l.b16 %v2608
        %v2645 = vunpack.c.l.b16 %v2609
        %v2646 = vunpack.c.l.b16 %v2610
        %v2647 = vunpack.c.l.b16 %v2611
        %v2648 = vunpack.c.l.b16 %v2612
        %v2649 = vunpack.c.l.b16 %v2613
        %v2650 = vunpack.c.l.b16 %v2614
        %v2651 = vunpack.c.l.b16 %v2615
        %v2652 = vunpack.c.l.b16 %v2616
        %v2653 = vunpack.c.l.b16 %v2617
        %v2654 = vpack.c.b16 %v2639, %v2638
        %v2655 = vpack.c.b16 %v2641, %v2640
        %v2656 = vpack.c.b16 %v2643, %v2642
        %v2657 = vpack.c.b16 %v2645, %v2644
        %v2658 = vpack.c.b16 %v2647, %v2646
        %v2659 = vpack.c.b16 %v2649, %v2648
        %v2660 = vpack.c.b16 %v2651, %v2650
        %v2661 = vpack.c.b16 %v2653, %v2652
        %2670 = vmatprep.subr.bf16.mxu0 0
        %2671 = vmatpush1.bf16.msra.mxu0 %v2654
        %2672 = vmatprep.subr.bf16.mxu0 0
        %2673 = vmatpush1.bf16.msra.mxu0 %v2655
        %2674 = vmatprep.subr.bf16.mxu0 0
        %2675 = vmatpush1.bf16.msra.mxu0 %v2656
        %2676 = vmatprep.subr.bf16.mxu0 0
        %2677 = vmatpush1.bf16.msra.mxu0 %v2657
        %2678 = vmatprep.subr.bf16.mxu0 0
        %2679 = vmatpush1.bf16.msra.mxu0 %v2658
        %2680 = vmatprep.subr.bf16.mxu0 0
        %2681 = vmatpush1.bf16.msra.mxu0 %v2659
        %2682 = vmatprep.subr.bf16.mxu0 0
        %2683 = vmatpush1.bf16.msra.mxu0 %v2660
        %2684 = vmatprep.subr.bf16.mxu0 0
        %2685 = vmatpush1.bf16.msra.mxu0 %v2661
        %2686 = vmatprep.subr.bf16.mxu0 0
        %2687 = vmatpush1.bf16.msra.mxu0 0
        %2688 = vmatprep.subr.bf16.mxu0 0
        %2689 = vmatpush1.bf16.msra.mxu0 0
        %2690 = vmatprep.subr.bf16.mxu0 0
        %2691 = vmatpush1.bf16.msra.mxu0 0
        %2692 = vmatprep.subr.bf16.mxu0 0
        %2693 = vmatpush1.bf16.msra.mxu0 0
        %2694 = vmatprep.subr.bf16.mxu0 0
        %2695 = vmatpush1.bf16.msra.mxu0 0
        %2696 = vmatprep.subr.bf16.mxu0 0
        %2697 = vmatpush1.bf16.msra.mxu0 0
        %2698 = vmatprep.subr.bf16.mxu0 0
        %2699 = vmatpush1.bf16.msra.mxu0 0
        %2700 = vmatprep.subr.bf16.mxu0 0
        %2701 = vmatpush1.bf16.msra.mxu0 0
        %2702 = vmatprep.mubr.bf16.mxu0 0
        %2703 = vmatmul.mubr.bf16.gmra.mrb[0].mxu0 %v1771
        %v2704 = vpop.f32.mrb[0].mxu0
        %v2705 = vadd.f32 0.0, %v2704
        %v2706 = vpop.f32.mrb[0].mxu0
        %v2707 = vpop.f32.mrb[0].mxu0
        %v2708 = vadd.f32 0.0, %v2707
        %v2709 = vpop.f32.mrb[0].mxu0
        %2710 = vmatprep.mubr.bf16.mxu0 0
        %2711 = vmatmul.mubr.bf16.gmra.mrb[0].mxu0 %v1772
        %v2712 = vpop.f32.mrb[0].mxu0
        %v2713 = vadd.f32 0.0, %v2712
        %v2714 = vpop.f32.mrb[0].mxu0
        %v2715 = vpop.f32.mrb[0].mxu0
        %v2716 = vadd.f32 0.0, %v2715
        %v2717 = vpop.f32.mrb[0].mxu0
        %2718 = vmatprep.mubr.bf16.mxu0 0
        %2719 = vmatmul.mubr.bf16.gmra.mrb[0].mxu0 %v1773
        %v2720 = vpop.f32.mrb[0].mxu0
        %v2721 = vadd.f32 0.0, %v2720
        %v2722 = vpop.f32.mrb[0].mxu0
        %v2723 = vpop.f32.mrb[0].mxu0
        %v2724 = vadd.f32 0.0, %v2723
        %v2725 = vpop.f32.mrb[0].mxu0
        %2726 = vmatprep.mubr.bf16.mxu0 0
        %2727 = vmatmul.mubr.bf16.gmra.mrb[0].mxu0 %v1774
        %v2728 = vpop.f32.mrb[0].mxu0
        %v2729 = vadd.f32 0.0, %v2728
        %v2730 = vpop.f32.mrb[0].mxu0
        %v2731 = vpop.f32.mrb[0].mxu0
        %v2732 = vadd.f32 0.0, %v2731
        %v2733 = vpop.f32.mrb[0].mxu0
        %2734 = vmatprep.mubr.bf16.mxu0 0
        %2735 = vmatmul.mubr.bf16.gmra.mrb[0].mxu0 %v1775
        %v2736 = vpop.f32.mrb[0].mxu0
        %v2737 = vadd.f32 0.0, %v2736
        %v2738 = vpop.f32.mrb[0].mxu0
        %v2739 = vpop.f32.mrb[0].mxu0
        %v2740 = vadd.f32 0.0, %v2739
        %v2741 = vpop.f32.mrb[0].mxu0
        %2742 = vmatprep.mubr.bf16.mxu0 0
        %2743 = vmatmul.mubr.bf16.gmra.mrb[0].mxu0 %v1776
        %v2744 = vpop.f32.mrb[0].mxu0
        %v2745 = vadd.f32 0.0, %v2744
        %v2746 = vpop.f32.mrb[0].mxu0
        %v2747 = vpop.f32.mrb[0].mxu0
        %v2748 = vadd.f32 0.0, %v2747
        %v2749 = vpop.f32.mrb[0].mxu0
        %2750 = vmatprep.mubr.bf16.mxu0 0
        %2751 = vmatmul.mubr.bf16.gmra.mrb[0].mxu0 %v1777
        %v2752 = vpop.f32.mrb[0].mxu0
        %v2753 = vadd.f32 0.0, %v2752
        %v2754 = vpop.f32.mrb[0].mxu0
        %v2755 = vpop.f32.mrb[0].mxu0
        %v2756 = vadd.f32 0.0, %v2755
        %v2757 = vpop.f32.mrb[0].mxu0
        %2758 = vmatprep.mubr.bf16.mxu0 0
        %2759 = vmatmul.mubr.bf16.gmra.mrb[0].mxu0 %v1778
        %v2760 = vpop.f32.mrb[0].mxu0
        %v2761 = vadd.f32 0.0, %v2760
        %v2762 = vpop.f32.mrb[0].mxu0
        %v2763 = vpop.f32.mrb[0].mxu0
        %v2764 = vadd.f32 0.0, %v2763
        %v2765 = vpop.f32.mrb[0].mxu0
        %2766 = vmatprep.mubr.bf16.mxu0 0
        %2767 = vmatmul.mubr.bf16.gmra.mrb[0].mxu0 %v1779
        %v2768 = vpop.f32.mrb[0].mxu0
        %v2769 = vadd.f32 0.0, %v2768
        %v2770 = vpop.f32.mrb[0].mxu0
        %v2771 = vpop.f32.mrb[0].mxu0
        %v2772 = vadd.f32 0.0, %v2771
        %v2773 = vpop.f32.mrb[0].mxu0
        %2774 = vmatprep.mubr.bf16.mxu0 0
        %2775 = vmatmul.mubr.bf16.gmra.mrb[0].mxu0 %v1780
        %v2776 = vpop.f32.mrb[0].mxu0
        %v2777 = vadd.f32 0.0, %v2776
        %v2778 = vpop.f32.mrb[0].mxu0
        %v2779 = vpop.f32.mrb[0].mxu0
        %v2780 = vadd.f32 0.0, %v2779
        %v2781 = vpop.f32.mrb[0].mxu0
        %2782 = vmatprep.mubr.bf16.mxu0 0
        %2783 = vmatmul.mubr.bf16.gmra.mrb[0].mxu0 %v1781
        %v2784 = vpop.f32.mrb[0].mxu0
        %v2785 = vadd.f32 0.0, %v2784
        %v2786 = vpop.f32.mrb[0].mxu0
        %v2787 = vpop.f32.mrb[0].mxu0
        %v2788 = vadd.f32 0.0, %v2787
        %v2789 = vpop.f32.mrb[0].mxu0
        %2790 = vmatprep.mubr.bf16.mxu0 0
        %2791 = vmatmul.mubr.bf16.gmra.mrb[0].mxu0 %v1782
        %v2792 = vpop.f32.mrb[0].mxu0
        %v2793 = vadd.f32 0.0, %v2792
        %v2794 = vpop.f32.mrb[0].mxu0
        %v2795 = vpop.f32.mrb[0].mxu0
        %v2796 = vadd.f32 0.0, %v2795
        %v2797 = vpop.f32.mrb[0].mxu0
        %2798 = vmatprep.mubr.bf16.mxu0 0
        %2799 = vmatmul.mubr.bf16.gmra.mrb[0].mxu0 %v1783
        %v2800 = vpop.f32.mrb[0].mxu0
        %v2801 = vadd.f32 0.0, %v2800
        %v2802 = vpop.f32.mrb[0].mxu0
        %v2803 = vpop.f32.mrb[0].mxu0
        %v2804 = vadd.f32 0.0, %v2803
        %v2805 = vpop.f32.mrb[0].mxu0
        %2806 = vmatprep.mubr.bf16.mxu0 0
        %2807 = vmatmul.mubr.bf16.gmra.mrb[0].mxu0 %v1784
        %v2808 = vpop.f32.mrb[0].mxu0
        %v2809 = vadd.f32 0.0, %v2808
        %v2810 = vpop.f32.mrb[0].mxu0
        %v2811 = vpop.f32.mrb[0].mxu0
        %v2812 = vadd.f32 0.0, %v2811
        %v2813 = vpop.f32.mrb[0].mxu0
        %2814 = vmatprep.mubr.bf16.mxu0 0
        %2815 = vmatmul.mubr.bf16.gmra.mrb[0].mxu0 %v1785
        %v2816 = vpop.f32.mrb[0].mxu0
        %v2817 = vadd.f32 0.0, %v2816
        %v2818 = vpop.f32.mrb[0].mxu0
        %v2819 = vpop.f32.mrb[0].mxu0
        %v2820 = vadd.f32 0.0, %v2819
        %v2821 = vpop.f32.mrb[0].mxu0
        %2822 = vmatprep.mubr.bf16.mxu0 0
        %2823 = vmatmul.mubr.bf16.gmra.mrb[0].mxu0 %v2620
        %v2824 = vpop.f32.mrb[0].mxu0
        %v2825 = vadd.f32 0.0, %v2824
        %v2826 = vpop.f32.mrb[0].mxu0
        %v2827 = vpop.f32.mrb[0].mxu0
        %v2828 = vadd.f32 0.0, %v2827
        %v2829 = vpop.f32.mrb[0].mxu0
        %2830 = vdwg.mxu0
        %v2831 = vadd.f32 %v2561, %v2705
        %v2832 = vadd.f32 %v2562, %v2708
        %v2833 = vadd.f32 %v2563, %v2713
        %v2834 = vadd.f32 %v2564, %v2716
        %v2835 = vadd.f32 %v2565, %v2721
        %v2836 = vadd.f32 %v2566, %v2724
        %v2837 = vadd.f32 %v2567, %v2729
        %v2838 = vadd.f32 %v2568, %v2732
        %v2839 = vadd.f32 %v2569, %v2737
        %v2840 = vadd.f32 %v2570, %v2740
        %v2841 = vadd.f32 %v2571, %v2745
        %v2842 = vadd.f32 %v2572, %v2748
        %v2843 = vadd.f32 %v2573, %v2753
        %v2844 = vadd.f32 %v2574, %v2756
        %v2845 = vadd.f32 %v2575, %v2761
        %v2846 = vadd.f32 %v2576, %v2764
        %v2847 = vadd.f32 %v2577, %v2769
        %v2848 = vadd.f32 %v2578, %v2772
        %v2849 = vadd.f32 %v2579, %v2777
        %v2850 = vadd.f32 %v2580, %v2780
        %v2851 = vadd.f32 %v2581, %v2785
        %v2852 = vadd.f32 %v2582, %v2788
        %v2853 = vadd.f32 %v2583, %v2793
        %v2854 = vadd.f32 %v2584, %v2796
        %v2855 = vadd.f32 %v2585, %v2801
        %v2856 = vadd.f32 %v2586, %v2804
        %v2857 = vadd.f32 %v2587, %v2809
        %v2858 = vadd.f32 %v2588, %v2812
        %v2859 = vadd.f32 %v2589, %v2817
        %v2860 = vadd.f32 %v2590, %v2820
        %v2861 = vadd.f32 %v2591, %v2825
        %v2862 = vadd.f32 %v2592, %v2828
        %s2863 = scalar_lea.vmem [#allocation5], 384
        %v2864 = vld [vmem:[%s2863] sm:$0xf]
        %v2865 = vld [vmem:[%s2863 + $0x4] sm:$0xf]
        %v2866 = vld [vmem:[%s2863 + $0x8] sm:$0xf]
        %v2867 = vld [vmem:[%s2863 + $0xc] sm:$0xf]
        %v2868 = vld [vmem:[%s2863 + $0x10] sm:$0xf]
        %v2869 = vld [vmem:[%s2863 + $0x14] sm:$0xf]
        %v2870 = vld [vmem:[%s2863 + $0x18] sm:$0xf]
        %v2871 = vld [vmem:[%s2863 + $0x1c] sm:$0xf]
        %v2872 = vld [vmem:[%s2863 + $0x20] sm:$0xf]
        %v2873 = vld [vmem:[%s2863 + $0x24] sm:$0xf]
        %v2874 = vld [vmem:[%s2863 + $0x28] sm:$0xf]
        %v2875 = vld [vmem:[%s2863 + $0x2c] sm:$0xf]
        %v2876 = vld [vmem:[%s2863 + $0x30] sm:$0xf]
        %v2877 = vld [vmem:[%s2863 + $0x34] sm:$0xf]
        %v2878 = vld [vmem:[%s2863 + $0x38] sm:$0xf]
        %v2879 = vld [vmem:[%s2863 + $0x3c] sm:$0xf]
        %v2882 = vunpack.c.l.b16 %v589
        %v2883 = vunpack.c.l.b16 %v590
        %v2884 = vpack.c.b16 %v2883, %v2882
        %v2902 = vunpack.c.l.b16 %v2864
        %v2903 = vunpack.c.l.b16 %v2865
        %v2904 = vunpack.c.l.b16 %v2866
        %v2905 = vunpack.c.l.b16 %v2867
        %v2906 = vunpack.c.l.b16 %v2868
        %v2907 = vunpack.c.l.b16 %v2869
        %v2908 = vunpack.c.l.b16 %v2870
        %v2909 = vunpack.c.l.b16 %v2871
        %v2910 = vunpack.c.l.b16 %v2872
        %v2911 = vunpack.c.l.b16 %v2873
        %v2912 = vunpack.c.l.b16 %v2874
        %v2913 = vunpack.c.l.b16 %v2875
        %v2914 = vunpack.c.l.b16 %v2876
        %v2915 = vunpack.c.l.b16 %v2877
        %v2916 = vunpack.c.l.b16 %v2878
        %v2917 = vunpack.c.l.b16 %v2879
        %v2918 = vpack.c.b16 %v2903, %v2902
        %v2919 = vpack.c.b16 %v2905, %v2904
        %v2920 = vpack.c.b16 %v2907, %v2906
        %v2921 = vpack.c.b16 %v2909, %v2908
        %v2922 = vpack.c.b16 %v2911, %v2910
        %v2923 = vpack.c.b16 %v2913, %v2912
        %v2924 = vpack.c.b16 %v2915, %v2914
        %v2925 = vpack.c.b16 %v2917, %v2916
        %2934 = vmatprep.subr.bf16.mxu0 0
        %2935 = vmatpush1.bf16.msra.mxu0 %v2918
        %2936 = vmatprep.subr.bf16.mxu0 0
        %2937 = vmatpush1.bf16.msra.mxu0 %v2919
        %2938 = vmatprep.subr.bf16.mxu0 0
        %2939 = vmatpush1.bf16.msra.mxu0 %v2920
        %2940 = vmatprep.subr.bf16.mxu0 0
        %2941 = vmatpush1.bf16.msra.mxu0 %v2921
        %2942 = vmatprep.subr.bf16.mxu0 0
        %2943 = vmatpush1.bf16.msra.mxu0 %v2922
        %2944 = vmatprep.subr.bf16.mxu0 0
        %2945 = vmatpush1.bf16.msra.mxu0 %v2923
        %2946 = vmatprep.subr.bf16.mxu0 0
        %2947 = vmatpush1.bf16.msra.mxu0 %v2924
        %2948 = vmatprep.subr.bf16.mxu0 0
        %2949 = vmatpush1.bf16.msra.mxu0 %v2925
        %2950 = vmatprep.subr.bf16.mxu0 0
        %2951 = vmatpush1.bf16.msra.mxu0 0
        %2952 = vmatprep.subr.bf16.mxu0 0
        %2953 = vmatpush1.bf16.msra.mxu0 0
        %2954 = vmatprep.subr.bf16.mxu0 0
        %2955 = vmatpush1.bf16.msra.mxu0 0
        %2956 = vmatprep.subr.bf16.mxu0 0
        %2957 = vmatpush1.bf16.msra.mxu0 0
        %2958 = vmatprep.subr.bf16.mxu0 0
        %2959 = vmatpush1.bf16.msra.mxu0 0
        %2960 = vmatprep.subr.bf16.mxu0 0
        %2961 = vmatpush1.bf16.msra.mxu0 0
        %2962 = vmatprep.subr.bf16.mxu0 0
        %2963 = vmatpush1.bf16.msra.mxu0 0
        %2964 = vmatprep.subr.bf16.mxu0 0
        %2965 = vmatpush1.bf16.msra.mxu0 0
        %2966 = vmatprep.mubr.bf16.mxu0 0
        %2967 = vmatmul.mubr.bf16.gmra.mrb[0].mxu0 %v1351
        %v2968 = vpop.f32.mrb[0].mxu0
        %v2969 = vadd.f32 0.0, %v2968
        %v2970 = vpop.f32.mrb[0].mxu0
        %v2971 = vpop.f32.mrb[0].mxu0
        %v2972 = vadd.f32 0.0, %v2971
        %v2973 = vpop.f32.mrb[0].mxu0
        %2974 = vmatprep.mubr.bf16.mxu0 0
        %2975 = vmatmul.mubr.bf16.gmra.mrb[0].mxu0 %v1352
        %v2976 = vpop.f32.mrb[0].mxu0
        %v2977 = vadd.f32 0.0, %v2976
        %v2978 = vpop.f32.mrb[0].mxu0
        %v2979 = vpop.f32.mrb[0].mxu0
        %v2980 = vadd.f32 0.0, %v2979
        %v2981 = vpop.f32.mrb[0].mxu0
        %2982 = vmatprep.mubr.bf16.mxu0 0
        %2983 = vmatmul.mubr.bf16.gmra.mrb[0].mxu0 %v1353
        %v2984 = vpop.f32.mrb[0].mxu0
        %v2985 = vadd.f32 0.0, %v2984
        %v2986 = vpop.f32.mrb[0].mxu0
        %v2987 = vpop.f32.mrb[0].mxu0
        %v2988 = vadd.f32 0.0, %v2987
        %v2989 = vpop.f32.mrb[0].mxu0
        %2990 = vmatprep.mubr.bf16.mxu0 0
        %2991 = vmatmul.mubr.bf16.gmra.mrb[0].mxu0 %v1354
        %v2992 = vpop.f32.mrb[0].mxu0
        %v2993 = vadd.f32 0.0, %v2992
        %v2994 = vpop.f32.mrb[0].mxu0
        %v2995 = vpop.f32.mrb[0].mxu0
        %v2996 = vadd.f32 0.0, %v2995
        %v2997 = vpop.f32.mrb[0].mxu0
        %2998 = vmatprep.mubr.bf16.mxu0 0
        %2999 = vmatmul.mubr.bf16.gmra.mrb[0].mxu0 %v1355
        %v3000 = vpop.f32.mrb[0].mxu0
        %v3001 = vadd.f32 0.0, %v3000
        %v3002 = vpop.f32.mrb[0].mxu0
        %v3003 = vpop.f32.mrb[0].mxu0
        %v3004 = vadd.f32 0.0, %v3003
        %v3005 = vpop.f32.mrb[0].mxu0
        %3006 = vmatprep.mubr.bf16.mxu0 0
        %3007 = vmatmul.mubr.bf16.gmra.mrb[0].mxu0 %v1356
        %v3008 = vpop.f32.mrb[0].mxu0
        %v3009 = vadd.f32 0.0, %v3008
        %v3010 = vpop.f32.mrb[0].mxu0
        %v3011 = vpop.f32.mrb[0].mxu0
        %v3012 = vadd.f32 0.0, %v3011
        %v3013 = vpop.f32.mrb[0].mxu0
        %3014 = vmatprep.mubr.bf16.mxu0 0
        %3015 = vmatmul.mubr.bf16.gmra.mrb[0].mxu0 %v1357
        %v3016 = vpop.f32.mrb[0].mxu0
        %v3017 = vadd.f32 0.0, %v3016
        %v3018 = vpop.f32.mrb[0].mxu0
        %v3019 = vpop.f32.mrb[0].mxu0
        %v3020 = vadd.f32 0.0, %v3019
        %v3021 = vpop.f32.mrb[0].mxu0
        %3022 = vmatprep.mubr.bf16.mxu0 0
        %3023 = vmatmul.mubr.bf16.gmra.mrb[0].mxu0 %v1358
        %v3024 = vpop.f32.mrb[0].mxu0
        %v3025 = vadd.f32 0.0, %v3024
        %v3026 = vpop.f32.mrb[0].mxu0
        %v3027 = vpop.f32.mrb[0].mxu0
        %v3028 = vadd.f32 0.0, %v3027
        %v3029 = vpop.f32.mrb[0].mxu0
        %3030 = vmatprep.mubr.bf16.mxu0 0
        %3031 = vmatmul.mubr.bf16.gmra.mrb[0].mxu0 %v1359
        %v3032 = vpop.f32.mrb[0].mxu0
        %v3033 = vadd.f32 0.0, %v3032
        %v3034 = vpop.f32.mrb[0].mxu0
        %v3035 = vpop.f32.mrb[0].mxu0
        %v3036 = vadd.f32 0.0, %v3035
        %v3037 = vpop.f32.mrb[0].mxu0
        %3038 = vmatprep.mubr.bf16.mxu0 0
        %3039 = vmatmul.mubr.bf16.gmra.mrb[0].mxu0 %v1360
        %v3040 = vpop.f32.mrb[0].mxu0
        %v3041 = vadd.f32 0.0, %v3040
        %v3042 = vpop.f32.mrb[0].mxu0
        %v3043 = vpop.f32.mrb[0].mxu0
        %v3044 = vadd.f32 0.0, %v3043
        %v3045 = vpop.f32.mrb[0].mxu0
        %3046 = vmatprep.mubr.bf16.mxu0 0
        %3047 = vmatmul.mubr.bf16.gmra.mrb[0].mxu0 %v1361
        %v3048 = vpop.f32.mrb[0].mxu0
        %v3049 = vadd.f32 0.0, %v3048
        %v3050 = vpop.f32.mrb[0].mxu0
        %v3051 = vpop.f32.mrb[0].mxu0
        %v3052 = vadd.f32 0.0, %v3051
        %v3053 = vpop.f32.mrb[0].mxu0
        %3054 = vmatprep.mubr.bf16.mxu0 0
        %3055 = vmatmul.mubr.bf16.gmra.mrb[0].mxu0 %v1362
        %v3056 = vpop.f32.mrb[0].mxu0
        %v3057 = vadd.f32 0.0, %v3056
        %v3058 = vpop.f32.mrb[0].mxu0
        %v3059 = vpop.f32.mrb[0].mxu0
        %v3060 = vadd.f32 0.0, %v3059
        %v3061 = vpop.f32.mrb[0].mxu0
        %3062 = vmatprep.mubr.bf16.mxu0 0
        %3063 = vmatmul.mubr.bf16.gmra.mrb[0].mxu0 %v1363
        %v3064 = vpop.f32.mrb[0].mxu0
        %v3065 = vadd.f32 0.0, %v3064
        %v3066 = vpop.f32.mrb[0].mxu0
        %v3067 = vpop.f32.mrb[0].mxu0
        %v3068 = vadd.f32 0.0, %v3067
        %v3069 = vpop.f32.mrb[0].mxu0
        %3070 = vmatprep.mubr.bf16.mxu0 0
        %3071 = vmatmul.mubr.bf16.gmra.mrb[0].mxu0 %v1364
        %v3072 = vpop.f32.mrb[0].mxu0
        %v3073 = vadd.f32 0.0, %v3072
        %v3074 = vpop.f32.mrb[0].mxu0
        %v3075 = vpop.f32.mrb[0].mxu0
        %v3076 = vadd.f32 0.0, %v3075
        %v3077 = vpop.f32.mrb[0].mxu0
        %3078 = vmatprep.mubr.bf16.mxu0 0
        %3079 = vmatmul.mubr.bf16.gmra.mrb[0].mxu0 %v2064
        %v3080 = vpop.f32.mrb[0].mxu0
        %v3081 = vadd.f32 0.0, %v3080
        %v3082 = vpop.f32.mrb[0].mxu0
        %v3083 = vpop.f32.mrb[0].mxu0
        %v3084 = vadd.f32 0.0, %v3083
        %v3085 = vpop.f32.mrb[0].mxu0
        %3086 = vmatprep.mubr.bf16.mxu0 0
        %3087 = vmatmul.mubr.bf16.gmra.mrb[0].mxu0 %v2884
        %v3088 = vpop.f32.mrb[0].mxu0
        %v3089 = vadd.f32 0.0, %v3088
        %v3090 = vpop.f32.mrb[0].mxu0
        %v3091 = vpop.f32.mrb[0].mxu0
        %v3092 = vadd.f32 0.0, %v3091
        %v3093 = vpop.f32.mrb[0].mxu0
        %3094 = vdwg.mxu0
        %v3095 = vadd.f32 %v2831, %v2969
        %v3096 = vadd.f32 %v2832, %v2972
        %v3097 = vadd.f32 %v2833, %v2977
        %v3098 = vadd.f32 %v2834, %v2980
        %v3099 = vadd.f32 %v2835, %v2985
        %v3100 = vadd.f32 %v2836, %v2988
        %v3101 = vadd.f32 %v2837, %v2993
        %v3102 = vadd.f32 %v2838, %v2996
        %v3103 = vadd.f32 %v2839, %v3001
        %v3104 = vadd.f32 %v2840, %v3004
        %v3105 = vadd.f32 %v2841, %v3009
        %v3106 = vadd.f32 %v2842, %v3012
        %v3107 = vadd.f32 %v2843, %v3017
        %v3108 = vadd.f32 %v2844, %v3020
        %v3109 = vadd.f32 %v2845, %v3025
        %v3110 = vadd.f32 %v2846, %v3028
        %v3111 = vadd.f32 %v2847, %v3033
        %v3112 = vadd.f32 %v2848, %v3036
        %v3113 = vadd.f32 %v2849, %v3041
        %v3114 = vadd.f32 %v2850, %v3044
        %v3115 = vadd.f32 %v2851, %v3049
        %v3116 = vadd.f32 %v2852, %v3052
        %v3117 = vadd.f32 %v2853, %v3057
        %v3118 = vadd.f32 %v2854, %v3060
        %v3119 = vadd.f32 %v2855, %v3065
        %v3120 = vadd.f32 %v2856, %v3068
        %v3121 = vadd.f32 %v2857, %v3073
        %v3122 = vadd.f32 %v2858, %v3076
        %v3123 = vadd.f32 %v2859, %v3081
        %v3124 = vadd.f32 %v2860, %v3084
        %v3125 = vadd.f32 %v2861, %v3089
        %v3126 = vadd.f32 %v2862, %v3092
        %v3128 = vshrl.u32 %v589, 16
        %v3130 = vrot.slane %v3128, 4
        %v3131 = vshll.u32 %v589, 16
        %v3133 = vrot.slane %v3131, 5
        %v3134 = vor.u32 %v3130, %v3133
        %v3135 = vrot.slane %v3134, 4
        %v3137 = vshll.u32 %v590, 16
        %v3139 = vrot.slane %v3137, 5
        %v3140 = vsel %vm610, %v3135, %v3139
        %v3141 = vshrl.u32 %v590, 16
        %v3143 = vrot.slane %v3141, 4
        %v3144 = vor.u32 %v3143, %v3139
        %v3145 = vrot.slane %v3144, 4
        %v3147 = vshll.u32 %v591, 16
        %v3149 = vrot.slane %v3147, 5
        %v3150 = vsel %vm610, %v3145, %v3149
        %s3151 = scalar_lea.vmem [#allocation5], 448
        %v3152 = vld [vmem:[%s3151] sm:$0xf]
        %v3153 = vld [vmem:[%s3151 + $0x4] sm:$0xf]
        %v3154 = vld [vmem:[%s3151 + $0x8] sm:$0xf]
        %v3155 = vld [vmem:[%s3151 + $0xc] sm:$0xf]
        %v3156 = vld [vmem:[%s3151 + $0x10] sm:$0xf]
        %v3157 = vld [vmem:[%s3151 + $0x14] sm:$0xf]
        %v3158 = vld [vmem:[%s3151 + $0x18] sm:$0xf]
        %v3159 = vld [vmem:[%s3151 + $0x1c] sm:$0xf]
        %v3160 = vld [vmem:[%s3151 + $0x20] sm:$0xf]
        %v3161 = vld [vmem:[%s3151 + $0x24] sm:$0xf]
        %v3162 = vld [vmem:[%s3151 + $0x28] sm:$0xf]
        %v3163 = vld [vmem:[%s3151 + $0x2c] sm:$0xf]
        %v3164 = vld [vmem:[%s3151 + $0x30] sm:$0xf]
        %v3165 = vld [vmem:[%s3151 + $0x34] sm:$0xf]
        %v3166 = vld [vmem:[%s3151 + $0x38] sm:$0xf]
        %v3167 = vld [vmem:[%s3151 + $0x3c] sm:$0xf]
        %v3168 = vunpack.c.l.b16 %v3140
        %v3169 = vunpack.c.l.b16 %v3150
        %v3170 = vpack.c.b16 %v3169, %v3168
        %v3188 = vunpack.c.l.b16 %v3152
        %v3189 = vunpack.c.l.b16 %v3153
        %v3190 = vunpack.c.l.b16 %v3154
        %v3191 = vunpack.c.l.b16 %v3155
        %v3192 = vunpack.c.l.b16 %v3156
        %v3193 = vunpack.c.l.b16 %v3157
        %v3194 = vunpack.c.l.b16 %v3158
        %v3195 = vunpack.c.l.b16 %v3159
        %v3196 = vunpack.c.l.b16 %v3160
        %v3197 = vunpack.c.l.b16 %v3161
        %v3198 = vunpack.c.l.b16 %v3162
        %v3199 = vunpack.c.l.b16 %v3163
        %v3200 = vunpack.c.l.b16 %v3164
        %v3201 = vunpack.c.l.b16 %v3165
        %v3202 = vunpack.c.l.b16 %v3166
        %v3203 = vunpack.c.l.b16 %v3167
        %v3204 = vpack.c.b16 %v3189, %v3188
        %v3205 = vpack.c.b16 %v3191, %v3190
        %v3206 = vpack.c.b16 %v3193, %v3192
        %v3207 = vpack.c.b16 %v3195, %v3194
        %v3208 = vpack.c.b16 %v3197, %v3196
        %v3209 = vpack.c.b16 %v3199, %v3198
        %v3210 = vpack.c.b16 %v3201, %v3200
        %v3211 = vpack.c.b16 %v3203, %v3202
        %3220 = vmatprep.subr.bf16.mxu0 0
        %3221 = vmatpush1.bf16.msra.mxu0 %v3204
        %3222 = vmatprep.subr.bf16.mxu0 0
        %3223 = vmatpush1.bf16.msra.mxu0 %v3205
        %3224 = vmatprep.subr.bf16.mxu0 0
        %3225 = vmatpush1.bf16.msra.mxu0 %v3206
        %3226 = vmatprep.subr.bf16.mxu0 0
        %3227 = vmatpush1.bf16.msra.mxu0 %v3207
        %3228 = vmatprep.subr.bf16.mxu0 0
        %3229 = vmatpush1.bf16.msra.mxu0 %v3208
        %3230 = vmatprep.subr.bf16.mxu0 0
        %3231 = vmatpush1.bf16.msra.mxu0 %v3209
        %3232 = vmatprep.subr.bf16.mxu0 0
        %3233 = vmatpush1.bf16.msra.mxu0 %v3210
        %3234 = vmatprep.subr.bf16.mxu0 0
        %3235 = vmatpush1.bf16.msra.mxu0 %v3211
        %3236 = vmatprep.subr.bf16.mxu0 0
        %3237 = vmatpush1.bf16.msra.mxu0 0
        %3238 = vmatprep.subr.bf16.mxu0 0
        %3239 = vmatpush1.bf16.msra.mxu0 0
        %3240 = vmatprep.subr.bf16.mxu0 0
        %3241 = vmatpush1.bf16.msra.mxu0 0
        %3242 = vmatprep.subr.bf16.mxu0 0
        %3243 = vmatpush1.bf16.msra.mxu0 0
        %3244 = vmatprep.subr.bf16.mxu0 0
        %3245 = vmatpush1.bf16.msra.mxu0 0
        %3246 = vmatprep.subr.bf16.mxu0 0
        %3247 = vmatpush1.bf16.msra.mxu0 0
        %3248 = vmatprep.subr.bf16.mxu0 0
        %3249 = vmatpush1.bf16.msra.mxu0 0
        %3250 = vmatprep.subr.bf16.mxu0 0
        %3251 = vmatpush1.bf16.msra.mxu0 0
        %3252 = vmatprep.mubr.bf16.mxu0 0
        %3253 = vmatmul.mubr.bf16.gmra.mrb[0].mxu0 %v1046
        %v3254 = vpop.f32.mrb[0].mxu0
        %v3255 = vadd.f32 0.0, %v3254
        %v3256 = vpop.f32.mrb[0].mxu0
        %v3257 = vpop.f32.mrb[0].mxu0
        %v3258 = vadd.f32 0.0, %v3257
        %v3259 = vpop.f32.mrb[0].mxu0
        %3260 = vmatprep.mubr.bf16.mxu0 0
        %3261 = vmatmul.mubr.bf16.gmra.mrb[0].mxu0 %v1047
        %v3262 = vpop.f32.mrb[0].mxu0
        %v3263 = vadd.f32 0.0, %v3262
        %v3264 = vpop.f32.mrb[0].mxu0
        %v3265 = vpop.f32.mrb[0].mxu0
        %v3266 = vadd.f32 0.0, %v3265
        %v3267 = vpop.f32.mrb[0].mxu0
        %3268 = vmatprep.mubr.bf16.mxu0 0
        %3269 = vmatmul.mubr.bf16.gmra.mrb[0].mxu0 %v1048
        %v3270 = vpop.f32.mrb[0].mxu0
        %v3271 = vadd.f32 0.0, %v3270
        %v3272 = vpop.f32.mrb[0].mxu0
        %v3273 = vpop.f32.mrb[0].mxu0
        %v3274 = vadd.f32 0.0, %v3273
        %v3275 = vpop.f32.mrb[0].mxu0
        %3276 = vmatprep.mubr.bf16.mxu0 0
        %3277 = vmatmul.mubr.bf16.gmra.mrb[0].mxu0 %v1049
        %v3278 = vpop.f32.mrb[0].mxu0
        %v3279 = vadd.f32 0.0, %v3278
        %v3280 = vpop.f32.mrb[0].mxu0
        %v3281 = vpop.f32.mrb[0].mxu0
        %v3282 = vadd.f32 0.0, %v3281
        %v3283 = vpop.f32.mrb[0].mxu0
        %3284 = vmatprep.mubr.bf16.mxu0 0
        %3285 = vmatmul.mubr.bf16.gmra.mrb[0].mxu0 %v1050
        %v3286 = vpop.f32.mrb[0].mxu0
        %v3287 = vadd.f32 0.0, %v3286
        %v3288 = vpop.f32.mrb[0].mxu0
        %v3289 = vpop.f32.mrb[0].mxu0
        %v3290 = vadd.f32 0.0, %v3289
        %v3291 = vpop.f32.mrb[0].mxu0
        %3292 = vmatprep.mubr.bf16.mxu0 0
        %3293 = vmatmul.mubr.bf16.gmra.mrb[0].mxu0 %v1051
        %v3294 = vpop.f32.mrb[0].mxu0
        %v3295 = vadd.f32 0.0, %v3294
        %v3296 = vpop.f32.mrb[0].mxu0
        %v3297 = vpop.f32.mrb[0].mxu0
        %v3298 = vadd.f32 0.0, %v3297
        %v3299 = vpop.f32.mrb[0].mxu0
        %3300 = vmatprep.mubr.bf16.mxu0 0
        %3301 = vmatmul.mubr.bf16.gmra.mrb[0].mxu0 %v1052
        %v3302 = vpop.f32.mrb[0].mxu0
        %v3303 = vadd.f32 0.0, %v3302
        %v3304 = vpop.f32.mrb[0].mxu0
        %v3305 = vpop.f32.mrb[0].mxu0
        %v3306 = vadd.f32 0.0, %v3305
        %v3307 = vpop.f32.mrb[0].mxu0
        %3308 = vmatprep.mubr.bf16.mxu0 0
        %3309 = vmatmul.mubr.bf16.gmra.mrb[0].mxu0 %v1053
        %v3310 = vpop.f32.mrb[0].mxu0
        %v3311 = vadd.f32 0.0, %v3310
        %v3312 = vpop.f32.mrb[0].mxu0
        %v3313 = vpop.f32.mrb[0].mxu0
        %v3314 = vadd.f32 0.0, %v3313
        %v3315 = vpop.f32.mrb[0].mxu0
        %3316 = vmatprep.mubr.bf16.mxu0 0
        %3317 = vmatmul.mubr.bf16.gmra.mrb[0].mxu0 %v1054
        %v3318 = vpop.f32.mrb[0].mxu0
        %v3319 = vadd.f32 0.0, %v3318
        %v3320 = vpop.f32.mrb[0].mxu0
        %v3321 = vpop.f32.mrb[0].mxu0
        %v3322 = vadd.f32 0.0, %v3321
        %v3323 = vpop.f32.mrb[0].mxu0
        %3324 = vmatprep.mubr.bf16.mxu0 0
        %3325 = vmatmul.mubr.bf16.gmra.mrb[0].mxu0 %v1055
        %v3326 = vpop.f32.mrb[0].mxu0
        %v3327 = vadd.f32 0.0, %v3326
        %v3328 = vpop.f32.mrb[0].mxu0
        %v3329 = vpop.f32.mrb[0].mxu0
        %v3330 = vadd.f32 0.0, %v3329
        %v3331 = vpop.f32.mrb[0].mxu0
        %3332 = vmatprep.mubr.bf16.mxu0 0
        %3333 = vmatmul.mubr.bf16.gmra.mrb[0].mxu0 %v1056
        %v3334 = vpop.f32.mrb[0].mxu0
        %v3335 = vadd.f32 0.0, %v3334
        %v3336 = vpop.f32.mrb[0].mxu0
        %v3337 = vpop.f32.mrb[0].mxu0
        %v3338 = vadd.f32 0.0, %v3337
        %v3339 = vpop.f32.mrb[0].mxu0
        %3340 = vmatprep.mubr.bf16.mxu0 0
        %3341 = vmatmul.mubr.bf16.gmra.mrb[0].mxu0 %v1057
        %v3342 = vpop.f32.mrb[0].mxu0
        %v3343 = vadd.f32 0.0, %v3342
        %v3344 = vpop.f32.mrb[0].mxu0
        %v3345 = vpop.f32.mrb[0].mxu0
        %v3346 = vadd.f32 0.0, %v3345
        %v3347 = vpop.f32.mrb[0].mxu0
        %3348 = vmatprep.mubr.bf16.mxu0 0
        %3349 = vmatmul.mubr.bf16.gmra.mrb[0].mxu0 %v1058
        %v3350 = vpop.f32.mrb[0].mxu0
        %v3351 = vadd.f32 0.0, %v3350
        %v3352 = vpop.f32.mrb[0].mxu0
        %v3353 = vpop.f32.mrb[0].mxu0
        %v3354 = vadd.f32 0.0, %v3353
        %v3355 = vpop.f32.mrb[0].mxu0
        %3356 = vmatprep.mubr.bf16.mxu0 0
        %3357 = vmatmul.mubr.bf16.gmra.mrb[0].mxu0 %v1059
        %v3358 = vpop.f32.mrb[0].mxu0
        %v3359 = vadd.f32 0.0, %v3358
        %v3360 = vpop.f32.mrb[0].mxu0
        %v3361 = vpop.f32.mrb[0].mxu0
        %v3362 = vadd.f32 0.0, %v3361
        %v3363 = vpop.f32.mrb[0].mxu0
        %3364 = vmatprep.mubr.bf16.mxu0 0
        %3365 = vmatmul.mubr.bf16.gmra.mrb[0].mxu0 %v2350
        %v3366 = vpop.f32.mrb[0].mxu0
        %v3367 = vadd.f32 0.0, %v3366
        %v3368 = vpop.f32.mrb[0].mxu0
        %v3369 = vpop.f32.mrb[0].mxu0
        %v3370 = vadd.f32 0.0, %v3369
        %v3371 = vpop.f32.mrb[0].mxu0
        %3372 = vmatprep.mubr.bf16.mxu0 0
        %3373 = vmatmul.mubr.bf16.gmra.mrb[0].mxu0 %v3170
        %v3374 = vpop.f32.mrb[0].mxu0
        %v3375 = vadd.f32 0.0, %v3374
        %v3376 = vpop.f32.mrb[0].mxu0
        %v3377 = vpop.f32.mrb[0].mxu0
        %v3378 = vadd.f32 0.0, %v3377
        %v3379 = vpop.f32.mrb[0].mxu0
        %3380 = vdwg.mxu0
        %v3381 = vadd.f32 %v3095, %v3255
        %v3382 = vadd.f32 %v3096, %v3258
        %v3383 = vadd.f32 %v3097, %v3263
        %v3384 = vadd.f32 %v3098, %v3266
        %v3385 = vadd.f32 %v3099, %v3271
        %v3386 = vadd.f32 %v3100, %v3274
        %v3387 = vadd.f32 %v3101, %v3279
        %v3388 = vadd.f32 %v3102, %v3282
        %v3389 = vadd.f32 %v3103, %v3287
        %v3390 = vadd.f32 %v3104, %v3290
        %v3391 = vadd.f32 %v3105, %v3295
        %v3392 = vadd.f32 %v3106, %v3298
        %v3393 = vadd.f32 %v3107, %v3303
        %v3394 = vadd.f32 %v3108, %v3306
        %v3395 = vadd.f32 %v3109, %v3311
        %v3396 = vadd.f32 %v3110, %v3314
        %v3397 = vadd.f32 %v3111, %v3319
        %v3398 = vadd.f32 %v3112, %v3322
        %v3399 = vadd.f32 %v3113, %v3327
        %v3400 = vadd.f32 %v3114, %v3330
        %v3401 = vadd.f32 %v3115, %v3335
        %v3402 = vadd.f32 %v3116, %v3338
        %v3403 = vadd.f32 %v3117, %v3343
        %v3404 = vadd.f32 %v3118, %v3346
        %v3405 = vadd.f32 %v3119, %v3351
        %v3406 = vadd.f32 %v3120, %v3354
        %v3407 = vadd.f32 %v3121, %v3359
        %v3408 = vadd.f32 %v3122, %v3362
        %v3409 = vadd.f32 %v3123, %v3367
        %v3410 = vadd.f32 %v3124, %v3370
        %v3411 = vadd.f32 %v3125, %v3375
        %v3412 = vadd.f32 %v3126, %v3378
        %v3414 = vrot.slane %v589, 5
        %v3415 = vrot.slane %v3414, 4
        %v3416 = vrot.slane %v590, 5
        %v3417 = vsel %vm1608, %v3415, %v3416
        %v3418 = vrot.slane %v3416, 4
        %v3419 = vrot.slane %v591, 5
        %v3420 = vsel %vm1608, %v3418, %v3419
        %s3421 = scalar_lea.vmem [#allocation5], 512
        %v3422 = vld [vmem:[%s3421] sm:$0xf]
        %v3423 = vld [vmem:[%s3421 + $0x4] sm:$0xf]
        %v3424 = vld [vmem:[%s3421 + $0x8] sm:$0xf]
        %v3425 = vld [vmem:[%s3421 + $0xc] sm:$0xf]
        %v3426 = vld [vmem:[%s3421 + $0x10] sm:$0xf]
        %v3427 = vld [vmem:[%s3421 + $0x14] sm:$0xf]
        %v3428 = vld [vmem:[%s3421 + $0x18] sm:$0xf]
        %v3429 = vld [vmem:[%s3421 + $0x1c] sm:$0xf]
        %v3430 = vld [vmem:[%s3421 + $0x20] sm:$0xf]
        %v3431 = vld [vmem:[%s3421 + $0x24] sm:$0xf]
        %v3432 = vld [vmem:[%s3421 + $0x28] sm:$0xf]
        %v3433 = vld [vmem:[%s3421 + $0x2c] sm:$0xf]
        %v3434 = vld [vmem:[%s3421 + $0x30] sm:$0xf]
        %v3435 = vld [vmem:[%s3421 + $0x34] sm:$0xf]
        %v3436 = vld [vmem:[%s3421 + $0x38] sm:$0xf]
        %v3437 = vld [vmem:[%s3421 + $0x3c] sm:$0xf]
        %v3438 = vunpack.c.l.b16 %v3417
        %v3439 = vunpack.c.l.b16 %v3420
        %v3440 = vpack.c.b16 %v3439, %v3438
        %v3458 = vunpack.c.l.b16 %v3422
        %v3459 = vunpack.c.l.b16 %v3423
        %v3460 = vunpack.c.l.b16 %v3424
        %v3461 = vunpack.c.l.b16 %v3425
        %v3462 = vunpack.c.l.b16 %v3426
        %v3463 = vunpack.c.l.b16 %v3427
        %v3464 = vunpack.c.l.b16 %v3428
        %v3465 = vunpack.c.l.b16 %v3429
        %v3466 = vunpack.c.l.b16 %v3430
        %v3467 = vunpack.c.l.b16 %v3431
        %v3468 = vunpack.c.l.b16 %v3432
        %v3469 = vunpack.c.l.b16 %v3433
        %v3470 = vunpack.c.l.b16 %v3434
        %v3471 = vunpack.c.l.b16 %v3435
        %v3472 = vunpack.c.l.b16 %v3436
        %v3473 = vunpack.c.l.b16 %v3437
        %v3474 = vpack.c.b16 %v3459, %v3458
        %v3475 = vpack.c.b16 %v3461, %v3460
        %v3476 = vpack.c.b16 %v3463, %v3462
        %v3477 = vpack.c.b16 %v3465, %v3464
        %v3478 = vpack.c.b16 %v3467, %v3466
        %v3479 = vpack.c.b16 %v3469, %v3468
        %v3480 = vpack.c.b16 %v3471, %v3470
        %v3481 = vpack.c.b16 %v3473, %v3472
        %3490 = vmatprep.subr.bf16.mxu0 0
        %3491 = vmatpush1.bf16.msra.mxu0 %v3474
        %3492 = vmatprep.subr.bf16.mxu0 0
        %3493 = vmatpush1.bf16.msra.mxu0 %v3475
        %3494 = vmatprep.subr.bf16.mxu0 0
        %3495 = vmatpush1.bf16.msra.mxu0 %v3476
        %3496 = vmatprep.subr.bf16.mxu0 0
        %3497 = vmatpush1.bf16.msra.mxu0 %v3477
        %3498 = vmatprep.subr.bf16.mxu0 0
        %3499 = vmatpush1.bf16.msra.mxu0 %v3478
        %3500 = vmatprep.subr.bf16.mxu0 0
        %3501 = vmatpush1.bf16.msra.mxu0 %v3479
        %3502 = vmatprep.subr.bf16.mxu0 0
        %3503 = vmatpush1.bf16.msra.mxu0 %v3480
        %3504 = vmatprep.subr.bf16.mxu0 0
        %3505 = vmatpush1.bf16.msra.mxu0 %v3481
        %3506 = vmatprep.subr.bf16.mxu0 0
        %3507 = vmatpush1.bf16.msra.mxu0 0
        %3508 = vmatprep.subr.bf16.mxu0 0
        %3509 = vmatpush1.bf16.msra.mxu0 0
        %3510 = vmatprep.subr.bf16.mxu0 0
        %3511 = vmatpush1.bf16.msra.mxu0 0
        %3512 = vmatprep.subr.bf16.mxu0 0
        %3513 = vmatpush1.bf16.msra.mxu0 0
        %3514 = vmatprep.subr.bf16.mxu0 0
        %3515 = vmatpush1.bf16.msra.mxu0 0
        %3516 = vmatprep.subr.bf16.mxu0 0
        %3517 = vmatpush1.bf16.msra.mxu0 0
        %3518 = vmatprep.subr.bf16.mxu0 0
        %3519 = vmatpush1.bf16.msra.mxu0 0
        %3520 = vmatprep.subr.bf16.mxu0 0
        %3521 = vmatpush1.bf16.msra.mxu0 0
        %3522 = vmatprep.mubr.bf16.mxu0 0
        %3523 = vmatmul.mubr.bf16.gmra.mrb[0].mxu0 %v1772
        %v3524 = vpop.f32.mrb[0].mxu0
        %v3525 = vadd.f32 0.0, %v3524
        %v3526 = vpop.f32.mrb[0].mxu0
        %v3527 = vpop.f32.mrb[0].mxu0
        %v3528 = vadd.f32 0.0, %v3527
        %v3529 = vpop.f32.mrb[0].mxu0
        %3530 = vmatprep.mubr.bf16.mxu0 0
        %3531 = vmatmul.mubr.bf16.gmra.mrb[0].mxu0 %v1773
        %v3532 = vpop.f32.mrb[0].mxu0
        %v3533 = vadd.f32 0.0, %v3532
        %v3534 = vpop.f32.mrb[0].mxu0
        %v3535 = vpop.f32.mrb[0].mxu0
        %v3536 = vadd.f32 0.0, %v3535
        %v3537 = vpop.f32.mrb[0].mxu0
        %3538 = vmatprep.mubr.bf16.mxu0 0
        %3539 = vmatmul.mubr.bf16.gmra.mrb[0].mxu0 %v1774
        %v3540 = vpop.f32.mrb[0].mxu0
        %v3541 = vadd.f32 0.0, %v3540
        %v3542 = vpop.f32.mrb[0].mxu0
        %v3543 = vpop.f32.mrb[0].mxu0
        %v3544 = vadd.f32 0.0, %v3543
        %v3545 = vpop.f32.mrb[0].mxu0
        %3546 = vmatprep.mubr.bf16.mxu0 0
        %3547 = vmatmul.mubr.bf16.gmra.mrb[0].mxu0 %v1775
        %v3548 = vpop.f32.mrb[0].mxu0
        %v3549 = vadd.f32 0.0, %v3548
        %v3550 = vpop.f32.mrb[0].mxu0
        %v3551 = vpop.f32.mrb[0].mxu0
        %v3552 = vadd.f32 0.0, %v3551
        %v3553 = vpop.f32.mrb[0].mxu0
        %3554 = vmatprep.mubr.bf16.mxu0 0
        %3555 = vmatmul.mubr.bf16.gmra.mrb[0].mxu0 %v1776
        %v3556 = vpop.f32.mrb[0].mxu0
        %v3557 = vadd.f32 0.0, %v3556
        %v3558 = vpop.f32.mrb[0].mxu0
        %v3559 = vpop.f32.mrb[0].mxu0
        %v3560 = vadd.f32 0.0, %v3559
        %v3561 = vpop.f32.mrb[0].mxu0
        %3562 = vmatprep.mubr.bf16.mxu0 0
        %3563 = vmatmul.mubr.bf16.gmra.mrb[0].mxu0 %v1777
        %v3564 = vpop.f32.mrb[0].mxu0
        %v3565 = vadd.f32 0.0, %v3564
        %v3566 = vpop.f32.mrb[0].mxu0
        %v3567 = vpop.f32.mrb[0].mxu0
        %v3568 = vadd.f32 0.0, %v3567
        %v3569 = vpop.f32.mrb[0].mxu0
        %3570 = vmatprep.mubr.bf16.mxu0 0
        %3571 = vmatmul.mubr.bf16.gmra.mrb[0].mxu0 %v1778
        %v3572 = vpop.f32.mrb[0].mxu0
        %v3573 = vadd.f32 0.0, %v3572
        %v3574 = vpop.f32.mrb[0].mxu0
        %v3575 = vpop.f32.mrb[0].mxu0
        %v3576 = vadd.f32 0.0, %v3575
        %v3577 = vpop.f32.mrb[0].mxu0
        %3578 = vmatprep.mubr.bf16.mxu0 0
        %3579 = vmatmul.mubr.bf16.gmra.mrb[0].mxu0 %v1779
        %v3580 = vpop.f32.mrb[0].mxu0
        %v3581 = vadd.f32 0.0, %v3580
        %v3582 = vpop.f32.mrb[0].mxu0
        %v3583 = vpop.f32.mrb[0].mxu0
        %v3584 = vadd.f32 0.0, %v3583
        %v3585 = vpop.f32.mrb[0].mxu0
        %3586 = vmatprep.mubr.bf16.mxu0 0
        %3587 = vmatmul.mubr.bf16.gmra.mrb[0].mxu0 %v1780
        %v3588 = vpop.f32.mrb[0].mxu0
        %v3589 = vadd.f32 0.0, %v3588
        %v3590 = vpop.f32.mrb[0].mxu0
        %v3591 = vpop.f32.mrb[0].mxu0
        %v3592 = vadd.f32 0.0, %v3591
        %v3593 = vpop.f32.mrb[0].mxu0
        %3594 = vmatprep.mubr.bf16.mxu0 0
        %3595 = vmatmul.mubr.bf16.gmra.mrb[0].mxu0 %v1781
        %v3596 = vpop.f32.mrb[0].mxu0
        %v3597 = vadd.f32 0.0, %v3596
        %v3598 = vpop.f32.mrb[0].mxu0
        %v3599 = vpop.f32.mrb[0].mxu0
        %v3600 = vadd.f32 0.0, %v3599
        %v3601 = vpop.f32.mrb[0].mxu0
        %3602 = vmatprep.mubr.bf16.mxu0 0
        %3603 = vmatmul.mubr.bf16.gmra.mrb[0].mxu0 %v1782
        %v3604 = vpop.f32.mrb[0].mxu0
        %v3605 = vadd.f32 0.0, %v3604
        %v3606 = vpop.f32.mrb[0].mxu0
        %v3607 = vpop.f32.mrb[0].mxu0
        %v3608 = vadd.f32 0.0, %v3607
        %v3609 = vpop.f32.mrb[0].mxu0
        %3610 = vmatprep.mubr.bf16.mxu0 0
        %3611 = vmatmul.mubr.bf16.gmra.mrb[0].mxu0 %v1783
        %v3612 = vpop.f32.mrb[0].mxu0
        %v3613 = vadd.f32 0.0, %v3612
        %v3614 = vpop.f32.mrb[0].mxu0
        %v3615 = vpop.f32.mrb[0].mxu0
        %v3616 = vadd.f32 0.0, %v3615
        %v3617 = vpop.f32.mrb[0].mxu0
        %3618 = vmatprep.mubr.bf16.mxu0 0
        %3619 = vmatmul.mubr.bf16.gmra.mrb[0].mxu0 %v1784
        %v3620 = vpop.f32.mrb[0].mxu0
        %v3621 = vadd.f32 0.0, %v3620
        %v3622 = vpop.f32.mrb[0].mxu0
        %v3623 = vpop.f32.mrb[0].mxu0
        %v3624 = vadd.f32 0.0, %v3623
        %v3625 = vpop.f32.mrb[0].mxu0
        %3626 = vmatprep.mubr.bf16.mxu0 0
        %3627 = vmatmul.mubr.bf16.gmra.mrb[0].mxu0 %v1785
        %v3628 = vpop.f32.mrb[0].mxu0
        %v3629 = vadd.f32 0.0, %v3628
        %v3630 = vpop.f32.mrb[0].mxu0
        %v3631 = vpop.f32.mrb[0].mxu0
        %v3632 = vadd.f32 0.0, %v3631
        %v3633 = vpop.f32.mrb[0].mxu0
        %3634 = vmatprep.mubr.bf16.mxu0 0
        %3635 = vmatmul.mubr.bf16.gmra.mrb[0].mxu0 %v2620
        %v3636 = vpop.f32.mrb[0].mxu0
        %v3637 = vadd.f32 0.0, %v3636
        %v3638 = vpop.f32.mrb[0].mxu0
        %v3639 = vpop.f32.mrb[0].mxu0
        %v3640 = vadd.f32 0.0, %v3639
        %v3641 = vpop.f32.mrb[0].mxu0
        %3642 = vmatprep.mubr.bf16.mxu0 0
        %3643 = vmatmul.mubr.bf16.gmra.mrb[0].mxu0 %v3440
        %v3644 = vpop.f32.mrb[0].mxu0
        %v3645 = vadd.f32 0.0, %v3644
        %v3646 = vpop.f32.mrb[0].mxu0
        %v3647 = vpop.f32.mrb[0].mxu0
        %v3648 = vadd.f32 0.0, %v3647
        %v3649 = vpop.f32.mrb[0].mxu0
        %3650 = vdwg.mxu0
        %v3651 = vadd.f32 %v3381, %v3525
        %v3652 = vadd.f32 %v3382, %v3528
        %v3653 = vadd.f32 %v3383, %v3533
        %v3654 = vadd.f32 %v3384, %v3536
        %v3655 = vadd.f32 %v3385, %v3541
        %v3656 = vadd.f32 %v3386, %v3544
        %v3657 = vadd.f32 %v3387, %v3549
        %v3658 = vadd.f32 %v3388, %v3552
        %v3659 = vadd.f32 %v3389, %v3557
        %v3660 = vadd.f32 %v3390, %v3560
        %v3661 = vadd.f32 %v3391, %v3565
        %v3662 = vadd.f32 %v3392, %v3568
        %v3663 = vadd.f32 %v3393, %v3573
        %v3664 = vadd.f32 %v3394, %v3576
        %v3665 = vadd.f32 %v3395, %v3581
        %v3666 = vadd.f32 %v3396, %v3584
        %v3667 = vadd.f32 %v3397, %v3589
        %v3668 = vadd.f32 %v3398, %v3592
        %v3669 = vadd.f32 %v3399, %v3597
        %v3670 = vadd.f32 %v3400, %v3600
        %v3671 = vadd.f32 %v3401, %v3605
        %v3672 = vadd.f32 %v3402, %v3608
        %v3673 = vadd.f32 %v3403, %v3613
        %v3674 = vadd.f32 %v3404, %v3616
        %v3675 = vadd.f32 %v3405, %v3621
        %v3676 = vadd.f32 %v3406, %v3624
        %v3677 = vadd.f32 %v3407, %v3629
        %v3678 = vadd.f32 %v3408, %v3632
        %v3679 = vadd.f32 %v3409, %v3637
        %v3680 = vadd.f32 %v3410, %v3640
        %v3681 = vadd.f32 %v3411, %v3645
        %v3682 = vadd.f32 %v3412, %v3648
        %v3683 = vld [vmem:[#allocation7] sm:$0x1]
        %v3685 = vlaneseq
        %v3686 = vshrl.u32 %v3685, 7
        %v3687 = vsub.s32 0, %v3686
        %v3688 = vrot.slane %v3683, %v3687
        %v3690 = vmul.f32 %v3651, %v3688
        %v3691 = vmul.f32 %v3652, %v3688
        %v3692 = vmul.f32 %v3653, %v3688
        %v3693 = vmul.f32 %v3654, %v3688
        %v3694 = vmul.f32 %v3655, %v3688
        %v3695 = vmul.f32 %v3656, %v3688
        %v3696 = vmul.f32 %v3657, %v3688
        %v3697 = vmul.f32 %v3658, %v3688
        %v3698 = vmul.f32 %v3659, %v3688
        %v3699 = vmul.f32 %v3660, %v3688
        %v3700 = vmul.f32 %v3661, %v3688
        %v3701 = vmul.f32 %v3662, %v3688
        %v3702 = vmul.f32 %v3663, %v3688
        %v3703 = vmul.f32 %v3664, %v3688
        %v3704 = vmul.f32 %v3665, %v3688
        %v3705 = vmul.f32 %v3666, %v3688
        %v3706 = vmul.f32 %v3667, %v3688
        %v3707 = vmul.f32 %v3668, %v3688
        %v3708 = vmul.f32 %v3669, %v3688
        %v3709 = vmul.f32 %v3670, %v3688
        %v3710 = vmul.f32 %v3671, %v3688
        %v3711 = vmul.f32 %v3672, %v3688
        %v3712 = vmul.f32 %v3673, %v3688
        %v3713 = vmul.f32 %v3674, %v3688
        %v3714 = vmul.f32 %v3675, %v3688
        %v3715 = vmul.f32 %v3676, %v3688
        %v3716 = vmul.f32 %v3677, %v3688
        %v3717 = vmul.f32 %v3678, %v3688
        %v3718 = vmul.f32 %v3679, %v3688
        %v3719 = vmul.f32 %v3680, %v3688
        %v3720 = vmul.f32 %v3681, %v3688
        %v3721 = vmul.f32 %v3682, %v3688
        %v3722 = vld [vmem:[#allocation8] sm:$0x1]
        %v3724 = vlaneseq
        %v3725 = vshrl.u32 %v3724, 7
        %v3726 = vsub.s32 0, %v3725
        %v3727 = vrot.slane %v3722, %v3726
        %v3729 = vadd.f32 %v3690, %v3727
        %v3730 = vadd.f32 %v3691, %v3727
        %v3731 = vadd.f32 %v3692, %v3727
        %v3732 = vadd.f32 %v3693, %v3727
        %v3733 = vadd.f32 %v3694, %v3727
        %v3734 = vadd.f32 %v3695, %v3727
        %v3735 = vadd.f32 %v3696, %v3727
        %v3736 = vadd.f32 %v3697, %v3727
        %v3737 = vadd.f32 %v3698, %v3727
        %v3738 = vadd.f32 %v3699, %v3727
        %v3739 = vadd.f32 %v3700, %v3727
        %v3740 = vadd.f32 %v3701, %v3727
        %v3741 = vadd.f32 %v3702, %v3727
        %v3742 = vadd.f32 %v3703, %v3727
        %v3743 = vadd.f32 %v3704, %v3727
        %v3744 = vadd.f32 %v3705, %v3727
        %v3745 = vadd.f32 %v3706, %v3727
        %v3746 = vadd.f32 %v3707, %v3727
        %v3747 = vadd.f32 %v3708, %v3727
        %v3748 = vadd.f32 %v3709, %v3727
        %v3749 = vadd.f32 %v3710, %v3727
        %v3750 = vadd.f32 %v3711, %v3727
        %v3751 = vadd.f32 %v3712, %v3727
        %v3752 = vadd.f32 %v3713, %v3727
        %v3753 = vadd.f32 %v3714, %v3727
        %v3754 = vadd.f32 %v3715, %v3727
        %v3755 = vadd.f32 %v3716, %v3727
        %v3756 = vadd.f32 %v3717, %v3727
        %v3757 = vadd.f32 %v3718, %v3727
        %v3758 = vadd.f32 %v3719, %v3727
        %v3759 = vadd.f32 %v3720, %v3727
        %v3760 = vadd.f32 %v3721, %v3727
        %v3761 = vmax.f32 %v3729, 0.0
        %v3762 = vmax.f32 %v3730, 0.0
        %v3763 = vmax.f32 %v3731, 0.0
        %v3764 = vmax.f32 %v3732, 0.0
        %v3765 = vmax.f32 %v3733, 0.0
        %v3766 = vmax.f32 %v3734, 0.0
        %v3767 = vmax.f32 %v3735, 0.0
        %v3768 = vmax.f32 %v3736, 0.0
        %v3769 = vmax.f32 %v3737, 0.0
        %v3770 = vmax.f32 %v3738, 0.0
        %v3771 = vmax.f32 %v3739, 0.0
        %v3772 = vmax.f32 %v3740, 0.0
        %v3773 = vmax.f32 %v3741, 0.0
        %v3774 = vmax.f32 %v3742, 0.0
        %v3775 = vmax.f32 %v3743, 0.0
        %v3776 = vmax.f32 %v3744, 0.0
        %v3777 = vmax.f32 %v3745, 0.0
        %v3778 = vmax.f32 %v3746, 0.0
        %v3779 = vmax.f32 %v3747, 0.0
        %v3780 = vmax.f32 %v3748, 0.0
        %v3781 = vmax.f32 %v3749, 0.0
        %v3782 = vmax.f32 %v3750, 0.0
        %v3783 = vmax.f32 %v3751, 0.0
        %v3784 = vmax.f32 %v3752, 0.0
        %v3785 = vmax.f32 %v3753, 0.0
        %v3786 = vmax.f32 %v3754, 0.0
        %v3787 = vmax.f32 %v3755, 0.0
        %v3788 = vmax.f32 %v3756, 0.0
        %v3789 = vmax.f32 %v3757, 0.0
        %v3790 = vmax.f32 %v3758, 0.0
        %v3791 = vmax.f32 %v3759, 0.0
        %v3792 = vmax.f32 %v3760, 0.0
        %v3793 = vpack.c.bf16 %v3762, %v3761
        %v3794 = vpack.c.bf16 %v3764, %v3763
        %v3795 = vpack.c.bf16 %v3766, %v3765
        %v3796 = vpack.c.bf16 %v3768, %v3767
        %v3797 = vpack.c.bf16 %v3770, %v3769
        %v3798 = vpack.c.bf16 %v3772, %v3771
        %v3799 = vpack.c.bf16 %v3774, %v3773
        %v3800 = vpack.c.bf16 %v3776, %v3775
        %v3801 = vpack.c.bf16 %v3778, %v3777
        %v3802 = vpack.c.bf16 %v3780, %v3779
        %v3803 = vpack.c.bf16 %v3782, %v3781
        %v3804 = vpack.c.bf16 %v3784, %v3783
        %v3805 = vpack.c.bf16 %v3786, %v3785
        %v3806 = vpack.c.bf16 %v3788, %v3787
        %v3807 = vpack.c.bf16 %v3790, %v3789
        %v3808 = vpack.c.bf16 %v3792, %v3791
        %v3809 = vld [vmem:[#allocation10] sm:$0xf]
        %v3810 = vld [vmem:[#allocation10 + $0x4] sm:$0xf]
        %v3811 = vld [vmem:[#allocation10 + $0x8] sm:$0xf]
        %v3812 = vld [vmem:[#allocation10 + $0xc] sm:$0xf]
        %v3813 = vld [vmem:[#allocation10 + $0x10] sm:$0xf]
        %v3814 = vld [vmem:[#allocation10 + $0x14] sm:$0xf]
        %v3815 = vld [vmem:[#allocation10 + $0x18] sm:$0xf]
        %v3816 = vld [vmem:[#allocation10 + $0x1c] sm:$0xf]
        %v3817 = vld [vmem:[#allocation10 + $0x20] sm:$0xf]
        %v3818 = vld [vmem:[#allocation10 + $0x24] sm:$0xf]
        %v3819 = vld [vmem:[#allocation10 + $0x28] sm:$0xf]
        %v3820 = vld [vmem:[#allocation10 + $0x2c] sm:$0xf]
        %v3821 = vld [vmem:[#allocation10 + $0x30] sm:$0xf]
        %v3822 = vld [vmem:[#allocation10 + $0x34] sm:$0xf]
        %v3823 = vld [vmem:[#allocation10 + $0x38] sm:$0xf]
        %v3824 = vld [vmem:[#allocation10 + $0x3c] sm:$0xf]
        %v3841 = vunpack.c.l.b16 %v3809
        %v3842 = vunpack.c.l.b16 %v3810
        %v3843 = vunpack.c.l.b16 %v3811
        %v3844 = vunpack.c.l.b16 %v3812
        %v3845 = vunpack.c.l.b16 %v3813
        %v3846 = vunpack.c.l.b16 %v3814
        %v3847 = vunpack.c.l.b16 %v3815
        %v3848 = vunpack.c.l.b16 %v3816
        %v3849 = vunpack.c.l.b16 %v3817
        %v3850 = vunpack.c.l.b16 %v3818
        %v3851 = vunpack.c.l.b16 %v3819
        %v3852 = vunpack.c.l.b16 %v3820
        %v3853 = vunpack.c.l.b16 %v3821
        %v3854 = vunpack.c.l.b16 %v3822
        %v3855 = vunpack.c.l.b16 %v3823
        %v3856 = vunpack.c.l.b16 %v3824
        %v3857 = vpack.c.b16 %v3842, %v3841
        %v3858 = vpack.c.b16 %v3844, %v3843
        %v3859 = vpack.c.b16 %v3846, %v3845
        %v3860 = vpack.c.b16 %v3848, %v3847
        %v3861 = vpack.c.b16 %v3850, %v3849
        %v3862 = vpack.c.b16 %v3852, %v3851
        %v3863 = vpack.c.b16 %v3854, %v3853
        %v3864 = vpack.c.b16 %v3856, %v3855
        %3873 = vmatprep.subr.bf16.mxu0 0
        %3874 = vmatpush1.bf16.msra.mxu0 %v3857
        %3875 = vmatprep.subr.bf16.mxu0 0
        %3876 = vmatpush1.bf16.msra.mxu0 %v3858
        %3877 = vmatprep.subr.bf16.mxu0 0
        %3878 = vmatpush1.bf16.msra.mxu0 %v3859
        %3879 = vmatprep.subr.bf16.mxu0 0
        %3880 = vmatpush1.bf16.msra.mxu0 %v3860
        %3881 = vmatprep.subr.bf16.mxu0 0
        %3882 = vmatpush1.bf16.msra.mxu0 %v3861
        %3883 = vmatprep.subr.bf16.mxu0 0
        %3884 = vmatpush1.bf16.msra.mxu0 %v3862
        %3885 = vmatprep.subr.bf16.mxu0 0
        %3886 = vmatpush1.bf16.msra.mxu0 %v3863
        %3887 = vmatprep.subr.bf16.mxu0 0
        %3888 = vmatpush1.bf16.msra.mxu0 %v3864
        %3889 = vmatprep.subr.bf16.mxu0 0
        %3890 = vmatpush1.bf16.msra.mxu0 0
        %3891 = vmatprep.subr.bf16.mxu0 0
        %3892 = vmatpush1.bf16.msra.mxu0 0
        %3893 = vmatprep.subr.bf16.mxu0 0
        %3894 = vmatpush1.bf16.msra.mxu0 0
        %3895 = vmatprep.subr.bf16.mxu0 0
        %3896 = vmatpush1.bf16.msra.mxu0 0
        %3897 = vmatprep.subr.bf16.mxu0 0
        %3898 = vmatpush1.bf16.msra.mxu0 0
        %3899 = vmatprep.subr.bf16.mxu0 0
        %3900 = vmatpush1.bf16.msra.mxu0 0
        %3901 = vmatprep.subr.bf16.mxu0 0
        %3902 = vmatpush1.bf16.msra.mxu0 0
        %3903 = vmatprep.subr.bf16.mxu0 0
        %3904 = vmatpush1.bf16.msra.mxu0 0
        %3905 = vmatprep.mubr.bf16.mxu0 0
        %3906 = vmatmul.mubr.bf16.gmra.mrb[0].mxu0 %v3793
        %v3907 = vpop.f32.mrb[0].mxu0
        %v3908 = vadd.f32 0.0, %v3907
        %v3909 = vpop.f32.mrb[0].mxu0
        %v3910 = vpop.f32.mrb[0].mxu0
        %v3911 = vadd.f32 0.0, %v3910
        %v3912 = vpop.f32.mrb[0].mxu0
        %3913 = vmatprep.mubr.bf16.mxu0 0
        %3914 = vmatmul.mubr.bf16.gmra.mrb[0].mxu0 %v3794
        %v3915 = vpop.f32.mrb[0].mxu0
        %v3916 = vadd.f32 0.0, %v3915
        %v3917 = vpop.f32.mrb[0].mxu0
        %v3918 = vpop.f32.mrb[0].mxu0
        %v3919 = vadd.f32 0.0, %v3918
        %v3920 = vpop.f32.mrb[0].mxu0
        %3921 = vmatprep.mubr.bf16.mxu0 0
        %3922 = vmatmul.mubr.bf16.gmra.mrb[0].mxu0 %v3795
        %v3923 = vpop.f32.mrb[0].mxu0
        %v3924 = vadd.f32 0.0, %v3923
        %v3925 = vpop.f32.mrb[0].mxu0
        %v3926 = vpop.f32.mrb[0].mxu0
        %v3927 = vadd.f32 0.0, %v3926
        %v3928 = vpop.f32.mrb[0].mxu0
        %3929 = vmatprep.mubr.bf16.mxu0 0
        %3930 = vmatmul.mubr.bf16.gmra.mrb[0].mxu0 %v3796
        %v3931 = vpop.f32.mrb[0].mxu0
        %v3932 = vadd.f32 0.0, %v3931
        %v3933 = vpop.f32.mrb[0].mxu0
        %v3934 = vpop.f32.mrb[0].mxu0
        %v3935 = vadd.f32 0.0, %v3934
        %v3936 = vpop.f32.mrb[0].mxu0
        %3937 = vmatprep.mubr.bf16.mxu0 0
        %3938 = vmatmul.mubr.bf16.gmra.mrb[0].mxu0 %v3797
        %v3939 = vpop.f32.mrb[0].mxu0
        %v3940 = vadd.f32 0.0, %v3939
        %v3941 = vpop.f32.mrb[0].mxu0
        %v3942 = vpop.f32.mrb[0].mxu0
        %v3943 = vadd.f32 0.0, %v3942
        %v3944 = vpop.f32.mrb[0].mxu0
        %3945 = vmatprep.mubr.bf16.mxu0 0
        %3946 = vmatmul.mubr.bf16.gmra.mrb[0].mxu0 %v3798
        %v3947 = vpop.f32.mrb[0].mxu0
        %v3948 = vadd.f32 0.0, %v3947
        %v3949 = vpop.f32.mrb[0].mxu0
        %v3950 = vpop.f32.mrb[0].mxu0
        %v3951 = vadd.f32 0.0, %v3950
        %v3952 = vpop.f32.mrb[0].mxu0
        %3953 = vmatprep.mubr.bf16.mxu0 0
        %3954 = vmatmul.mubr.bf16.gmra.mrb[0].mxu0 %v3799
        %v3955 = vpop.f32.mrb[0].mxu0
        %v3956 = vadd.f32 0.0, %v3955
        %v3957 = vpop.f32.mrb[0].mxu0
        %v3958 = vpop.f32.mrb[0].mxu0
        %v3959 = vadd.f32 0.0, %v3958
        %v3960 = vpop.f32.mrb[0].mxu0
        %3961 = vmatprep.mubr.bf16.mxu0 0
        %3962 = vmatmul.mubr.bf16.gmra.mrb[0].mxu0 %v3800
        %v3963 = vpop.f32.mrb[0].mxu0
        %v3964 = vadd.f32 0.0, %v3963
        %v3965 = vpop.f32.mrb[0].mxu0
        %v3966 = vpop.f32.mrb[0].mxu0
        %v3967 = vadd.f32 0.0, %v3966
        %v3968 = vpop.f32.mrb[0].mxu0
        %3969 = vmatprep.mubr.bf16.mxu0 0
        %3970 = vmatmul.mubr.bf16.gmra.mrb[0].mxu0 %v3801
        %v3971 = vpop.f32.mrb[0].mxu0
        %v3972 = vadd.f32 0.0, %v3971
        %v3973 = vpop.f32.mrb[0].mxu0
        %v3974 = vpop.f32.mrb[0].mxu0
        %v3975 = vadd.f32 0.0, %v3974
        %v3976 = vpop.f32.mrb[0].mxu0
        %3977 = vmatprep.mubr.bf16.mxu0 0
        %3978 = vmatmul.mubr.bf16.gmra.mrb[0].mxu0 %v3802
        %v3979 = vpop.f32.mrb[0].mxu0
        %v3980 = vadd.f32 0.0, %v3979
        %v3981 = vpop.f32.mrb[0].mxu0
        %v3982 = vpop.f32.mrb[0].mxu0
        %v3983 = vadd.f32 0.0, %v3982
        %v3984 = vpop.f32.mrb[0].mxu0
        %3985 = vmatprep.mubr.bf16.mxu0 0
        %3986 = vmatmul.mubr.bf16.gmra.mrb[0].mxu0 %v3803
        %v3987 = vpop.f32.mrb[0].mxu0
        %v3988 = vadd.f32 0.0, %v3987
        %v3989 = vpop.f32.mrb[0].mxu0
        %v3990 = vpop.f32.mrb[0].mxu0
        %v3991 = vadd.f32 0.0, %v3990
        %v3992 = vpop.f32.mrb[0].mxu0
        %3993 = vmatprep.mubr.bf16.mxu0 0
        %3994 = vmatmul.mubr.bf16.gmra.mrb[0].mxu0 %v3804
        %v3995 = vpop.f32.mrb[0].mxu0
        %v3996 = vadd.f32 0.0, %v3995
        %v3997 = vpop.f32.mrb[0].mxu0
        %v3998 = vpop.f32.mrb[0].mxu0
        %v3999 = vadd.f32 0.0, %v3998
        %v4000 = vpop.f32.mrb[0].mxu0
        %4001 = vmatprep.mubr.bf16.mxu0 0
        %4002 = vmatmul.mubr.bf16.gmra.mrb[0].mxu0 %v3805
        %v4003 = vpop.f32.mrb[0].mxu0
        %v4004 = vadd.f32 0.0, %v4003
        %v4005 = vpop.f32.mrb[0].mxu0
        %v4006 = vpop.f32.mrb[0].mxu0
        %v4007 = vadd.f32 0.0, %v4006
        %v4008 = vpop.f32.mrb[0].mxu0
        %4009 = vmatprep.mubr.bf16.mxu0 0
        %4010 = vmatmul.mubr.bf16.gmra.mrb[0].mxu0 %v3806
        %v4011 = vpop.f32.mrb[0].mxu0
        %v4012 = vadd.f32 0.0, %v4011
        %v4013 = vpop.f32.mrb[0].mxu0
        %v4014 = vpop.f32.mrb[0].mxu0
        %v4015 = vadd.f32 0.0, %v4014
        %v4016 = vpop.f32.mrb[0].mxu0
        %4017 = vmatprep.mubr.bf16.mxu0 0
        %4018 = vmatmul.mubr.bf16.gmra.mrb[0].mxu0 %v3807
        %v4019 = vpop.f32.mrb[0].mxu0
        %v4020 = vadd.f32 0.0, %v4019
        %v4021 = vpop.f32.mrb[0].mxu0
        %v4022 = vpop.f32.mrb[0].mxu0
        %v4023 = vadd.f32 0.0, %v4022
        %v4024 = vpop.f32.mrb[0].mxu0
        %4025 = vmatprep.mubr.bf16.mxu0 0
        %4026 = vmatmul.mubr.bf16.gmra.mrb[0].mxu0 %v3808
        %v4027 = vpop.f32.mrb[0].mxu0
        %v4028 = vadd.f32 0.0, %v4027
        %v4029 = vpop.f32.mrb[0].mxu0
        %v4030 = vpop.f32.mrb[0].mxu0
        %v4031 = vadd.f32 0.0, %v4030
        %v4032 = vpop.f32.mrb[0].mxu0
        %4033 = vdwg.mxu0
        %4034 = vst [vmem:[%s529] sm:$0xff] %v3908
        %4035 = vst [vmem:[%s529 + $0x8] sm:$0xff] %v3911
        %4036 = vst [vmem:[%s529 + $0x10] sm:$0xff] %v3916
        %4037 = vst [vmem:[%s529 + $0x18] sm:$0xff] %v3919
        %4038 = vst [vmem:[%s529 + $0x20] sm:$0xff] %v3924
        %4039 = vst [vmem:[%s529 + $0x28] sm:$0xff] %v3927
        %4040 = vst [vmem:[%s529 + $0x30] sm:$0xff] %v3932
        %4041 = vst [vmem:[%s529 + $0x38] sm:$0xff] %v3935
        %4042 = vst [vmem:[%s529 + $0x40] sm:$0xff] %v3940
        %4043 = vst [vmem:[%s529 + $0x48] sm:$0xff] %v3943
        %4044 = vst [vmem:[%s529 + $0x50] sm:$0xff] %v3948
        %4045 = vst [vmem:[%s529 + $0x58] sm:$0xff] %v3951
        %4046 = vst [vmem:[%s529 + $0x60] sm:$0xff] %v3956
        %4047 = vst [vmem:[%s529 + $0x68] sm:$0xff] %v3959
        %4048 = vst [vmem:[%s529 + $0x70] sm:$0xff] %v3964
        %4049 = vst [vmem:[%s529 + $0x78] sm:$0xff] %v3967
        %4050 = vst [vmem:[%s529 + $0x80] sm:$0xff] %v3972
        %4051 = vst [vmem:[%s529 + $0x88] sm:$0xff] %v3975
        %4052 = vst [vmem:[%s529 + $0x90] sm:$0xff] %v3980
        %4053 = vst [vmem:[%s529 + $0x98] sm:$0xff] %v3983
        %4054 = vst [vmem:[%s529 + $0xa0] sm:$0xff] %v3988
        %4055 = vst [vmem:[%s529 + $0xa8] sm:$0xff] %v3991
        %4056 = vst [vmem:[%s529 + $0xb0] sm:$0xff] %v3996
        %4057 = vst [vmem:[%s529 + $0xb8] sm:$0xff] %v3999
        %4058 = vst [vmem:[%s529 + $0xc0] sm:$0xff] %v4004
        %4059 = vst [vmem:[%s529 + $0xc8] sm:$0xff] %v4007
        %4060 = vst [vmem:[%s529 + $0xd0] sm:$0xff] %v4012
        %4061 = vst [vmem:[%s529 + $0xd8] sm:$0xff] %v4015
        %4062 = vst [vmem:[%s529 + $0xe0] sm:$0xff] %v4020
        %4063 = vst [vmem:[%s529 + $0xe8] sm:$0xff] %v4023
        %4064 = vst [vmem:[%s529 + $0xf0] sm:$0xff] %v4028
        %4065 = vst [vmem:[%s529 + $0xf8] sm:$0xff] %v4031
        %v4066 = vld [vmem:[#allocation11] sm:$0xf]
        %v4067 = vld [vmem:[#allocation11 + $0x4] sm:$0xf]
        %v4068 = vld [vmem:[#allocation11 + $0x8] sm:$0xf]
        %v4069 = vld [vmem:[#allocation11 + $0xc] sm:$0xf]
        %v4070 = vld [vmem:[#allocation11 + $0x10] sm:$0xf]
        %v4071 = vld [vmem:[#allocation11 + $0x14] sm:$0xf]
        %v4072 = vld [vmem:[#allocation11 + $0x18] sm:$0xf]
        %v4073 = vld [vmem:[#allocation11 + $0x1c] sm:$0xf]
        %v4074 = vld [vmem:[#allocation11 + $0x20] sm:$0xf]
        %v4075 = vld [vmem:[#allocation11 + $0x24] sm:$0xf]
        %v4076 = vld [vmem:[#allocation11 + $0x28] sm:$0xf]
        %v4077 = vld [vmem:[#allocation11 + $0x2c] sm:$0xf]
        %v4078 = vld [vmem:[#allocation11 + $0x30] sm:$0xf]
        %v4079 = vld [vmem:[#allocation11 + $0x34] sm:$0xf]
        %v4080 = vld [vmem:[#allocation11 + $0x38] sm:$0xf]
        %v4081 = vld [vmem:[#allocation11 + $0x3c] sm:$0xf]
        %v4098 = vunpack.c.l.b16 %v4066
        %v4099 = vunpack.c.l.b16 %v4067
        %v4100 = vunpack.c.l.b16 %v4068
        %v4101 = vunpack.c.l.b16 %v4069
        %v4102 = vunpack.c.l.b16 %v4070
        %v4103 = vunpack.c.l.b16 %v4071
        %v4104 = vunpack.c.l.b16 %v4072
        %v4105 = vunpack.c.l.b16 %v4073
        %v4106 = vunpack.c.l.b16 %v4074
        %v4107 = vunpack.c.l.b16 %v4075
        %v4108 = vunpack.c.l.b16 %v4076
        %v4109 = vunpack.c.l.b16 %v4077
        %v4110 = vunpack.c.l.b16 %v4078
        %v4111 = vunpack.c.l.b16 %v4079
        %v4112 = vunpack.c.l.b16 %v4080
        %v4113 = vunpack.c.l.b16 %v4081
        %v4114 = vpack.c.b16 %v4099, %v4098
        %v4115 = vpack.c.b16 %v4101, %v4100
        %v4116 = vpack.c.b16 %v4103, %v4102
        %v4117 = vpack.c.b16 %v4105, %v4104
        %v4118 = vpack.c.b16 %v4107, %v4106
        %v4119 = vpack.c.b16 %v4109, %v4108
        %v4120 = vpack.c.b16 %v4111, %v4110
        %v4121 = vpack.c.b16 %v4113, %v4112
        %4130 = vmatprep.subr.bf16.mxu0 0
        %4131 = vmatpush1.bf16.msra.mxu0 %v4114
        %4132 = vmatprep.subr.bf16.mxu0 0
        %4133 = vmatpush1.bf16.msra.mxu0 %v4115
        %4134 = vmatprep.subr.bf16.mxu0 0
        %4135 = vmatpush1.bf16.msra.mxu0 %v4116
        %4136 = vmatprep.subr.bf16.mxu0 0
        %4137 = vmatpush1.bf16.msra.mxu0 %v4117
        %4138 = vmatprep.subr.bf16.mxu0 0
        %4139 = vmatpush1.bf16.msra.mxu0 %v4118
        %4140 = vmatprep.subr.bf16.mxu0 0
        %4141 = vmatpush1.bf16.msra.mxu0 %v4119
        %4142 = vmatprep.subr.bf16.mxu0 0
        %4143 = vmatpush1.bf16.msra.mxu0 %v4120
        %4144 = vmatprep.subr.bf16.mxu0 0
        %4145 = vmatpush1.bf16.msra.mxu0 %v4121
        %4146 = vmatprep.subr.bf16.mxu0 0
        %4147 = vmatpush1.bf16.msra.mxu0 0
        %4148 = vmatprep.subr.bf16.mxu0 0
        %4149 = vmatpush1.bf16.msra.mxu0 0
        %4150 = vmatprep.subr.bf16.mxu0 0
        %4151 = vmatpush1.bf16.msra.mxu0 0
        %4152 = vmatprep.subr.bf16.mxu0 0
        %4153 = vmatpush1.bf16.msra.mxu0 0
        %4154 = vmatprep.subr.bf16.mxu0 0
        %4155 = vmatpush1.bf16.msra.mxu0 0
        %4156 = vmatprep.subr.bf16.mxu0 0
        %4157 = vmatpush1.bf16.msra.mxu0 0
        %4158 = vmatprep.subr.bf16.mxu0 0
        %4159 = vmatpush1.bf16.msra.mxu0 0
        %4160 = vmatprep.subr.bf16.mxu0 0
        %4161 = vmatpush1.bf16.msra.mxu0 0
        %4162 = vmatprep.mubr.bf16.mxu0 0
        %4163 = vmatmul.mubr.bf16.gmra.mrb[0].mxu0 %v1045
        %v4164 = vpop.f32.mrb[0].mxu0
        %v4165 = vadd.f32 0.0, %v4164
        %v4166 = vpop.f32.mrb[0].mxu0
        %v4167 = vpop.f32.mrb[0].mxu0
        %v4168 = vadd.f32 0.0, %v4167
        %v4169 = vpop.f32.mrb[0].mxu0
        %4170 = vmatprep.mubr.bf16.mxu0 0
        %4171 = vmatmul.mubr.bf16.gmra.mrb[0].mxu0 %v1046
        %v4172 = vpop.f32.mrb[0].mxu0
        %v4173 = vadd.f32 0.0, %v4172
        %v4174 = vpop.f32.mrb[0].mxu0
        %v4175 = vpop.f32.mrb[0].mxu0
        %v4176 = vadd.f32 0.0, %v4175
        %v4177 = vpop.f32.mrb[0].mxu0
        %4178 = vmatprep.mubr.bf16.mxu0 0
        %4179 = vmatmul.mubr.bf16.gmra.mrb[0].mxu0 %v1047
        %v4180 = vpop.f32.mrb[0].mxu0
        %v4181 = vadd.f32 0.0, %v4180
        %v4182 = vpop.f32.mrb[0].mxu0
        %v4183 = vpop.f32.mrb[0].mxu0
        %v4184 = vadd.f32 0.0, %v4183
        %v4185 = vpop.f32.mrb[0].mxu0
        %4186 = vmatprep.mubr.bf16.mxu0 0
        %4187 = vmatmul.mubr.bf16.gmra.mrb[0].mxu0 %v1048
        %v4188 = vpop.f32.mrb[0].mxu0
        %v4189 = vadd.f32 0.0, %v4188
        %v4190 = vpop.f32.mrb[0].mxu0
        %v4191 = vpop.f32.mrb[0].mxu0
        %v4192 = vadd.f32 0.0, %v4191
        %v4193 = vpop.f32.mrb[0].mxu0
        %4194 = vmatprep.mubr.bf16.mxu0 0
        %4195 = vmatmul.mubr.bf16.gmra.mrb[0].mxu0 %v1049
        %v4196 = vpop.f32.mrb[0].mxu0
        %v4197 = vadd.f32 0.0, %v4196
        %v4198 = vpop.f32.mrb[0].mxu0
        %v4199 = vpop.f32.mrb[0].mxu0
        %v4200 = vadd.f32 0.0, %v4199
        %v4201 = vpop.f32.mrb[0].mxu0
        %4202 = vmatprep.mubr.bf16.mxu0 0
        %4203 = vmatmul.mubr.bf16.gmra.mrb[0].mxu0 %v1050
        %v4204 = vpop.f32.mrb[0].mxu0
        %v4205 = vadd.f32 0.0, %v4204
        %v4206 = vpop.f32.mrb[0].mxu0
        %v4207 = vpop.f32.mrb[0].mxu0
        %v4208 = vadd.f32 0.0, %v4207
        %v4209 = vpop.f32.mrb[0].mxu0
        %4210 = vmatprep.mubr.bf16.mxu0 0
        %4211 = vmatmul.mubr.bf16.gmra.mrb[0].mxu0 %v1051
        %v4212 = vpop.f32.mrb[0].mxu0
        %v4213 = vadd.f32 0.0, %v4212
        %v4214 = vpop.f32.mrb[0].mxu0
        %v4215 = vpop.f32.mrb[0].mxu0
        %v4216 = vadd.f32 0.0, %v4215
        %v4217 = vpop.f32.mrb[0].mxu0
        %4218 = vmatprep.mubr.bf16.mxu0 0
        %4219 = vmatmul.mubr.bf16.gmra.mrb[0].mxu0 %v1052
        %v4220 = vpop.f32.mrb[0].mxu0
        %v4221 = vadd.f32 0.0, %v4220
        %v4222 = vpop.f32.mrb[0].mxu0
        %v4223 = vpop.f32.mrb[0].mxu0
        %v4224 = vadd.f32 0.0, %v4223
        %v4225 = vpop.f32.mrb[0].mxu0
        %4226 = vmatprep.mubr.bf16.mxu0 0
        %4227 = vmatmul.mubr.bf16.gmra.mrb[0].mxu0 %v1053
        %v4228 = vpop.f32.mrb[0].mxu0
        %v4229 = vadd.f32 0.0, %v4228
        %v4230 = vpop.f32.mrb[0].mxu0
        %v4231 = vpop.f32.mrb[0].mxu0
        %v4232 = vadd.f32 0.0, %v4231
        %v4233 = vpop.f32.mrb[0].mxu0
        %4234 = vmatprep.mubr.bf16.mxu0 0
        %4235 = vmatmul.mubr.bf16.gmra.mrb[0].mxu0 %v1054
        %v4236 = vpop.f32.mrb[0].mxu0
        %v4237 = vadd.f32 0.0, %v4236
        %v4238 = vpop.f32.mrb[0].mxu0
        %v4239 = vpop.f32.mrb[0].mxu0
        %v4240 = vadd.f32 0.0, %v4239
        %v4241 = vpop.f32.mrb[0].mxu0
        %4242 = vmatprep.mubr.bf16.mxu0 0
        %4243 = vmatmul.mubr.bf16.gmra.mrb[0].mxu0 %v1055
        %v4244 = vpop.f32.mrb[0].mxu0
        %v4245 = vadd.f32 0.0, %v4244
        %v4246 = vpop.f32.mrb[0].mxu0
        %v4247 = vpop.f32.mrb[0].mxu0
        %v4248 = vadd.f32 0.0, %v4247
        %v4249 = vpop.f32.mrb[0].mxu0
        %4250 = vmatprep.mubr.bf16.mxu0 0
        %4251 = vmatmul.mubr.bf16.gmra.mrb[0].mxu0 %v1056
        %v4252 = vpop.f32.mrb[0].mxu0
        %v4253 = vadd.f32 0.0, %v4252
        %v4254 = vpop.f32.mrb[0].mxu0
        %v4255 = vpop.f32.mrb[0].mxu0
        %v4256 = vadd.f32 0.0, %v4255
        %v4257 = vpop.f32.mrb[0].mxu0
        %4258 = vmatprep.mubr.bf16.mxu0 0
        %4259 = vmatmul.mubr.bf16.gmra.mrb[0].mxu0 %v1057
        %v4260 = vpop.f32.mrb[0].mxu0
        %v4261 = vadd.f32 0.0, %v4260
        %v4262 = vpop.f32.mrb[0].mxu0
        %v4263 = vpop.f32.mrb[0].mxu0
        %v4264 = vadd.f32 0.0, %v4263
        %v4265 = vpop.f32.mrb[0].mxu0
        %4266 = vmatprep.mubr.bf16.mxu0 0
        %4267 = vmatmul.mubr.bf16.gmra.mrb[0].mxu0 %v1058
        %v4268 = vpop.f32.mrb[0].mxu0
        %v4269 = vadd.f32 0.0, %v4268
        %v4270 = vpop.f32.mrb[0].mxu0
        %v4271 = vpop.f32.mrb[0].mxu0
        %v4272 = vadd.f32 0.0, %v4271
        %v4273 = vpop.f32.mrb[0].mxu0
        %4274 = vmatprep.mubr.bf16.mxu0 0
        %4275 = vmatmul.mubr.bf16.gmra.mrb[0].mxu0 %v1059
        %v4276 = vpop.f32.mrb[0].mxu0
        %v4277 = vadd.f32 0.0, %v4276
        %v4278 = vpop.f32.mrb[0].mxu0
        %v4279 = vpop.f32.mrb[0].mxu0
        %v4280 = vadd.f32 0.0, %v4279
        %v4281 = vpop.f32.mrb[0].mxu0
        %4282 = vmatprep.mubr.bf16.mxu0 0
        %4283 = vmatmul.mubr.bf16.gmra.mrb[0].mxu0 %v2350
        %v4284 = vpop.f32.mrb[0].mxu0
        %v4285 = vadd.f32 0.0, %v4284
        %v4286 = vpop.f32.mrb[0].mxu0
        %v4287 = vpop.f32.mrb[0].mxu0
        %v4288 = vadd.f32 0.0, %v4287
        %v4289 = vpop.f32.mrb[0].mxu0
        %4290 = vdwg.mxu0
        %v4291 = vld [vmem:[#allocation13] sm:$0x1]
        %v4293 = vlaneseq
        %v4294 = vshrl.u32 %v4293, 7
        %v4295 = vsub.s32 0, %v4294
        %v4296 = vrot.slane %v4291, %v4295
        %v4298 = vmul.f32 %v4165, %v4296
        %v4299 = vmul.f32 %v4168, %v4296
        %v4300 = vmul.f32 %v4173, %v4296
        %v4301 = vmul.f32 %v4176, %v4296
        %v4302 = vmul.f32 %v4181, %v4296
        %v4303 = vmul.f32 %v4184, %v4296
        %v4304 = vmul.f32 %v4189, %v4296
        %v4305 = vmul.f32 %v4192, %v4296
        %v4306 = vmul.f32 %v4197, %v4296
        %v4307 = vmul.f32 %v4200, %v4296
        %v4308 = vmul.f32 %v4205, %v4296
        %v4309 = vmul.f32 %v4208, %v4296
        %v4310 = vmul.f32 %v4213, %v4296
        %v4311 = vmul.f32 %v4216, %v4296
        %v4312 = vmul.f32 %v4221, %v4296
        %v4313 = vmul.f32 %v4224, %v4296
        %v4314 = vmul.f32 %v4229, %v4296
        %v4315 = vmul.f32 %v4232, %v4296
        %v4316 = vmul.f32 %v4237, %v4296
        %v4317 = vmul.f32 %v4240, %v4296
        %v4318 = vmul.f32 %v4245, %v4296
        %v4319 = vmul.f32 %v4248, %v4296
        %v4320 = vmul.f32 %v4253, %v4296
        %v4321 = vmul.f32 %v4256, %v4296
        %v4322 = vmul.f32 %v4261, %v4296
        %v4323 = vmul.f32 %v4264, %v4296
        %v4324 = vmul.f32 %v4269, %v4296
        %v4325 = vmul.f32 %v4272, %v4296
        %v4326 = vmul.f32 %v4277, %v4296
        %v4327 = vmul.f32 %v4280, %v4296
        %v4328 = vmul.f32 %v4285, %v4296
        %v4329 = vmul.f32 %v4288, %v4296
        %v4330 = vld [vmem:[#allocation14] sm:$0x1]
        %v4332 = vlaneseq
        %v4333 = vshrl.u32 %v4332, 7
        %v4334 = vsub.s32 0, %v4333
        %v4335 = vrot.slane %v4330, %v4334
        %v4337 = vadd.f32 %v4298, %v4335
        %v4338 = vadd.f32 %v4299, %v4335
        %v4339 = vadd.f32 %v4300, %v4335
        %v4340 = vadd.f32 %v4301, %v4335
        %v4341 = vadd.f32 %v4302, %v4335
        %v4342 = vadd.f32 %v4303, %v4335
        %v4343 = vadd.f32 %v4304, %v4335
        %v4344 = vadd.f32 %v4305, %v4335
        %v4345 = vadd.f32 %v4306, %v4335
        %v4346 = vadd.f32 %v4307, %v4335
        %v4347 = vadd.f32 %v4308, %v4335
        %v4348 = vadd.f32 %v4309, %v4335
        %v4349 = vadd.f32 %v4310, %v4335
        %v4350 = vadd.f32 %v4311, %v4335
        %v4351 = vadd.f32 %v4312, %v4335
        %v4352 = vadd.f32 %v4313, %v4335
        %v4353 = vadd.f32 %v4314, %v4335
        %v4354 = vadd.f32 %v4315, %v4335
        %v4355 = vadd.f32 %v4316, %v4335
        %v4356 = vadd.f32 %v4317, %v4335
        %v4357 = vadd.f32 %v4318, %v4335
        %v4358 = vadd.f32 %v4319, %v4335
        %v4359 = vadd.f32 %v4320, %v4335
        %v4360 = vadd.f32 %v4321, %v4335
        %v4361 = vadd.f32 %v4322, %v4335
        %v4362 = vadd.f32 %v4323, %v4335
        %v4363 = vadd.f32 %v4324, %v4335
        %v4364 = vadd.f32 %v4325, %v4335
        %v4365 = vadd.f32 %v4326, %v4335
        %v4366 = vadd.f32 %v4327, %v4335
        %v4367 = vadd.f32 %v4328, %v4335
        %v4368 = vadd.f32 %v4329, %v4335
        %v4369 = vmax.f32 %v4337, 0.0
        %v4370 = vmax.f32 %v4338, 0.0
        %v4371 = vmax.f32 %v4339, 0.0
        %v4372 = vmax.f32 %v4340, 0.0
        %v4373 = vmax.f32 %v4341, 0.0
        %v4374 = vmax.f32 %v4342, 0.0
        %v4375 = vmax.f32 %v4343, 0.0
        %v4376 = vmax.f32 %v4344, 0.0
        %v4377 = vmax.f32 %v4345, 0.0
        %v4378 = vmax.f32 %v4346, 0.0
        %v4379 = vmax.f32 %v4347, 0.0
        %v4380 = vmax.f32 %v4348, 0.0
        %v4381 = vmax.f32 %v4349, 0.0
        %v4382 = vmax.f32 %v4350, 0.0
        %v4383 = vmax.f32 %v4351, 0.0
        %v4384 = vmax.f32 %v4352, 0.0
        %v4385 = vmax.f32 %v4353, 0.0
        %v4386 = vmax.f32 %v4354, 0.0
        %v4387 = vmax.f32 %v4355, 0.0
        %v4388 = vmax.f32 %v4356, 0.0
        %v4389 = vmax.f32 %v4357, 0.0
        %v4390 = vmax.f32 %v4358, 0.0
        %v4391 = vmax.f32 %v4359, 0.0
        %v4392 = vmax.f32 %v4360, 0.0
        %v4393 = vmax.f32 %v4361, 0.0
        %v4394 = vmax.f32 %v4362, 0.0
        %v4395 = vmax.f32 %v4363, 0.0
        %v4396 = vmax.f32 %v4364, 0.0
        %v4397 = vmax.f32 %v4365, 0.0
        %v4398 = vmax.f32 %v4366, 0.0
        %v4399 = vmax.f32 %v4367, 0.0
        %v4400 = vmax.f32 %v4368, 0.0
        %v4401 = vpack.c.bf16 %v4370, %v4369
        %v4402 = vpack.c.bf16 %v4372, %v4371
        %v4403 = vpack.c.bf16 %v4374, %v4373
        %v4404 = vpack.c.bf16 %v4376, %v4375
        %v4405 = vpack.c.bf16 %v4378, %v4377
        %v4406 = vpack.c.bf16 %v4380, %v4379
        %v4407 = vpack.c.bf16 %v4382, %v4381
        %v4408 = vpack.c.bf16 %v4384, %v4383
        %v4409 = vpack.c.bf16 %v4386, %v4385
        %v4410 = vpack.c.bf16 %v4388, %v4387
        %v4411 = vpack.c.bf16 %v4390, %v4389
        %v4412 = vpack.c.bf16 %v4392, %v4391
        %v4413 = vpack.c.bf16 %v4394, %v4393
        %v4414 = vpack.c.bf16 %v4396, %v4395
        %v4415 = vpack.c.bf16 %v4398, %v4397
        %v4416 = vpack.c.bf16 %v4400, %v4399
        %v4417 = vld [vmem:[#allocation16] sm:$0xf]
        %v4418 = vld [vmem:[#allocation16 + $0x4] sm:$0xf]
        %v4419 = vld [vmem:[#allocation16 + $0x8] sm:$0xf]
        %v4420 = vld [vmem:[#allocation16 + $0xc] sm:$0xf]
        %v4421 = vld [vmem:[#allocation16 + $0x10] sm:$0xf]
        %v4422 = vld [vmem:[#allocation16 + $0x14] sm:$0xf]
        %v4423 = vld [vmem:[#allocation16 + $0x18] sm:$0xf]
        %v4424 = vld [vmem:[#allocation16 + $0x1c] sm:$0xf]
        %v4425 = vld [vmem:[#allocation16 + $0x20] sm:$0xf]
        %v4426 = vld [vmem:[#allocation16 + $0x24] sm:$0xf]
        %v4427 = vld [vmem:[#allocation16 + $0x28] sm:$0xf]
        %v4428 = vld [vmem:[#allocation16 + $0x2c] sm:$0xf]
        %v4429 = vld [vmem:[#allocation16 + $0x30] sm:$0xf]
        %v4430 = vld [vmem:[#allocation16 + $0x34] sm:$0xf]
        %v4431 = vld [vmem:[#allocation16 + $0x38] sm:$0xf]
        %v4432 = vld [vmem:[#allocation16 + $0x3c] sm:$0xf]
        %v4433 = vld [vmem:[#allocation17] sm:$0x1]
        %v4435 = vlaneseq
        %v4436 = vshrl.u32 %v4435, 7
        %v4437 = vsub.s32 0, %v4436
        %v4438 = vrot.slane %v4433, %v4437
        %v4456 = vunpack.c.l.b16 %v4417
        %v4457 = vunpack.c.l.b16 %v4418
        %v4458 = vunpack.c.l.b16 %v4419
        %v4459 = vunpack.c.l.b16 %v4420
        %v4460 = vunpack.c.l.b16 %v4421
        %v4461 = vunpack.c.l.b16 %v4422
        %v4462 = vunpack.c.l.b16 %v4423
        %v4463 = vunpack.c.l.b16 %v4424
        %v4464 = vunpack.c.l.b16 %v4425
        %v4465 = vunpack.c.l.b16 %v4426
        %v4466 = vunpack.c.l.b16 %v4427
        %v4467 = vunpack.c.l.b16 %v4428
        %v4468 = vunpack.c.l.b16 %v4429
        %v4469 = vunpack.c.l.b16 %v4430
        %v4470 = vunpack.c.l.b16 %v4431
        %v4471 = vunpack.c.l.b16 %v4432
        %v4472 = vpack.c.b16 %v4457, %v4456
        %v4473 = vpack.c.b16 %v4459, %v4458
        %v4474 = vpack.c.b16 %v4461, %v4460
        %v4475 = vpack.c.b16 %v4463, %v4462
        %v4476 = vpack.c.b16 %v4465, %v4464
        %v4477 = vpack.c.b16 %v4467, %v4466
        %v4478 = vpack.c.b16 %v4469, %v4468
        %v4479 = vpack.c.b16 %v4471, %v4470
        %4488 = vmatprep.subr.bf16.mxu0 0
        %4489 = vmatpush1.bf16.msra.mxu0 %v4472
        %4490 = vmatprep.subr.bf16.mxu0 0
        %4491 = vmatpush1.bf16.msra.mxu0 %v4473
        %4492 = vmatprep.subr.bf16.mxu0 0
        %4493 = vmatpush1.bf16.msra.mxu0 %v4474
        %4494 = vmatprep.subr.bf16.mxu0 0
        %4495 = vmatpush1.bf16.msra.mxu0 %v4475
        %4496 = vmatprep.subr.bf16.mxu0 0
        %4497 = vmatpush1.bf16.msra.mxu0 %v4476
        %4498 = vmatprep.subr.bf16.mxu0 0
        %4499 = vmatpush1.bf16.msra.mxu0 %v4477
        %4500 = vmatprep.subr.bf16.mxu0 0
        %4501 = vmatpush1.bf16.msra.mxu0 %v4478
        %4502 = vmatprep.subr.bf16.mxu0 0
        %4503 = vmatpush1.bf16.msra.mxu0 %v4479
        %4504 = vmatprep.subr.bf16.mxu0 0
        %4505 = vmatpush1.bf16.msra.mxu0 0
        %4506 = vmatprep.subr.bf16.mxu0 0
        %4507 = vmatpush1.bf16.msra.mxu0 0
        %4508 = vmatprep.subr.bf16.mxu0 0
        %4509 = vmatpush1.bf16.msra.mxu0 0
        %4510 = vmatprep.subr.bf16.mxu0 0
        %4511 = vmatpush1.bf16.msra.mxu0 0
        %4512 = vmatprep.subr.bf16.mxu0 0
        %4513 = vmatpush1.bf16.msra.mxu0 0
        %4514 = vmatprep.subr.bf16.mxu0 0
        %4515 = vmatpush1.bf16.msra.mxu0 0
        %4516 = vmatprep.subr.bf16.mxu0 0
        %4517 = vmatpush1.bf16.msra.mxu0 0
        %4518 = vmatprep.subr.bf16.mxu0 0
        %4519 = vmatpush1.bf16.msra.mxu0 0
        %4520 = vmatprep.mubr.bf16.mxu0 0
        %4521 = vmatmul.mubr.bf16.gmra.mrb[0].mxu0 %v4401
        %v4522 = vpop.f32.mrb[0].mxu0
        %v4523 = vadd.f32 %v4438, %v4522
        %v4524 = vpop.f32.mrb[0].mxu0
        %v4525 = vpop.f32.mrb[0].mxu0
        %v4526 = vadd.f32 %v4438, %v4525
        %v4527 = vpop.f32.mrb[0].mxu0
        %4528 = vmatprep.mubr.bf16.mxu0 0
        %4529 = vmatmul.mubr.bf16.gmra.mrb[0].mxu0 %v4402
        %v4530 = vpop.f32.mrb[0].mxu0
        %v4531 = vadd.f32 %v4438, %v4530
        %v4532 = vpop.f32.mrb[0].mxu0
        %v4533 = vpop.f32.mrb[0].mxu0
        %v4534 = vadd.f32 %v4438, %v4533
        %v4535 = vpop.f32.mrb[0].mxu0
        %4536 = vmatprep.mubr.bf16.mxu0 0
        %4537 = vmatmul.mubr.bf16.gmra.mrb[0].mxu0 %v4403
        %v4538 = vpop.f32.mrb[0].mxu0
        %v4539 = vadd.f32 %v4438, %v4538
        %v4540 = vpop.f32.mrb[0].mxu0
        %v4541 = vpop.f32.mrb[0].mxu0
        %v4542 = vadd.f32 %v4438, %v4541
        %v4543 = vpop.f32.mrb[0].mxu0
        %4544 = vmatprep.mubr.bf16.mxu0 0
        %4545 = vmatmul.mubr.bf16.gmra.mrb[0].mxu0 %v4404
        %v4546 = vpop.f32.mrb[0].mxu0
        %v4547 = vadd.f32 %v4438, %v4546
        %v4548 = vpop.f32.mrb[0].mxu0
        %v4549 = vpop.f32.mrb[0].mxu0
        %v4550 = vadd.f32 %v4438, %v4549
        %v4551 = vpop.f32.mrb[0].mxu0
        %4552 = vmatprep.mubr.bf16.mxu0 0
        %4553 = vmatmul.mubr.bf16.gmra.mrb[0].mxu0 %v4405
        %v4554 = vpop.f32.mrb[0].mxu0
        %v4555 = vadd.f32 %v4438, %v4554
        %v4556 = vpop.f32.mrb[0].mxu0
        %v4557 = vpop.f32.mrb[0].mxu0
        %v4558 = vadd.f32 %v4438, %v4557
        %v4559 = vpop.f32.mrb[0].mxu0
        %4560 = vmatprep.mubr.bf16.mxu0 0
        %4561 = vmatmul.mubr.bf16.gmra.mrb[0].mxu0 %v4406
        %v4562 = vpop.f32.mrb[0].mxu0
        %v4563 = vadd.f32 %v4438, %v4562
        %v4564 = vpop.f32.mrb[0].mxu0
        %v4565 = vpop.f32.mrb[0].mxu0
        %v4566 = vadd.f32 %v4438, %v4565
        %v4567 = vpop.f32.mrb[0].mxu0
        %4568 = vmatprep.mubr.bf16.mxu0 0
        %4569 = vmatmul.mubr.bf16.gmra.mrb[0].mxu0 %v4407
        %v4570 = vpop.f32.mrb[0].mxu0
        %v4571 = vadd.f32 %v4438, %v4570
        %v4572 = vpop.f32.mrb[0].mxu0
        %v4573 = vpop.f32.mrb[0].mxu0
        %v4574 = vadd.f32 %v4438, %v4573
        %v4575 = vpop.f32.mrb[0].mxu0
        %4576 = vmatprep.mubr.bf16.mxu0 0
        %4577 = vmatmul.mubr.bf16.gmra.mrb[0].mxu0 %v4408
        %v4578 = vpop.f32.mrb[0].mxu0
        %v4579 = vadd.f32 %v4438, %v4578
        %v4580 = vpop.f32.mrb[0].mxu0
        %v4581 = vpop.f32.mrb[0].mxu0
        %v4582 = vadd.f32 %v4438, %v4581
        %v4583 = vpop.f32.mrb[0].mxu0
        %4584 = vmatprep.mubr.bf16.mxu0 0
        %4585 = vmatmul.mubr.bf16.gmra.mrb[0].mxu0 %v4409
        %v4586 = vpop.f32.mrb[0].mxu0
        %v4587 = vadd.f32 %v4438, %v4586
        %v4588 = vpop.f32.mrb[0].mxu0
        %v4589 = vpop.f32.mrb[0].mxu0
        %v4590 = vadd.f32 %v4438, %v4589
        %v4591 = vpop.f32.mrb[0].mxu0
        %4592 = vmatprep.mubr.bf16.mxu0 0
        %4593 = vmatmul.mubr.bf16.gmra.mrb[0].mxu0 %v4410
        %v4594 = vpop.f32.mrb[0].mxu0
        %v4595 = vadd.f32 %v4438, %v4594
        %v4596 = vpop.f32.mrb[0].mxu0
        %v4597 = vpop.f32.mrb[0].mxu0
        %v4598 = vadd.f32 %v4438, %v4597
        %v4599 = vpop.f32.mrb[0].mxu0
        %4600 = vmatprep.mubr.bf16.mxu0 0
        %4601 = vmatmul.mubr.bf16.gmra.mrb[0].mxu0 %v4411
        %v4602 = vpop.f32.mrb[0].mxu0
        %v4603 = vadd.f32 %v4438, %v4602
        %v4604 = vpop.f32.mrb[0].mxu0
        %v4605 = vpop.f32.mrb[0].mxu0
        %v4606 = vadd.f32 %v4438, %v4605
        %v4607 = vpop.f32.mrb[0].mxu0
        %4608 = vmatprep.mubr.bf16.mxu0 0
        %4609 = vmatmul.mubr.bf16.gmra.mrb[0].mxu0 %v4412
        %v4610 = vpop.f32.mrb[0].mxu0
        %v4611 = vadd.f32 %v4438, %v4610
        %v4612 = vpop.f32.mrb[0].mxu0
        %v4613 = vpop.f32.mrb[0].mxu0
        %v4614 = vadd.f32 %v4438, %v4613
        %v4615 = vpop.f32.mrb[0].mxu0
        %4616 = vmatprep.mubr.bf16.mxu0 0
        %4617 = vmatmul.mubr.bf16.gmra.mrb[0].mxu0 %v4413
        %v4618 = vpop.f32.mrb[0].mxu0
        %v4619 = vadd.f32 %v4438, %v4618
        %v4620 = vpop.f32.mrb[0].mxu0
        %v4621 = vpop.f32.mrb[0].mxu0
        %v4622 = vadd.f32 %v4438, %v4621
        %v4623 = vpop.f32.mrb[0].mxu0
        %4624 = vmatprep.mubr.bf16.mxu0 0
        %4625 = vmatmul.mubr.bf16.gmra.mrb[0].mxu0 %v4414
        %v4626 = vpop.f32.mrb[0].mxu0
        %v4627 = vadd.f32 %v4438, %v4626
        %v4628 = vpop.f32.mrb[0].mxu0
        %v4629 = vpop.f32.mrb[0].mxu0
        %v4630 = vadd.f32 %v4438, %v4629
        %v4631 = vpop.f32.mrb[0].mxu0
        %4632 = vmatprep.mubr.bf16.mxu0 0
        %4633 = vmatmul.mubr.bf16.gmra.mrb[0].mxu0 %v4415
        %v4634 = vpop.f32.mrb[0].mxu0
        %v4635 = vadd.f32 %v4438, %v4634
        %v4636 = vpop.f32.mrb[0].mxu0
        %v4637 = vpop.f32.mrb[0].mxu0
        %v4638 = vadd.f32 %v4438, %v4637
        %v4639 = vpop.f32.mrb[0].mxu0
        %4640 = vmatprep.mubr.bf16.mxu0 0
        %4641 = vmatmul.mubr.bf16.gmra.mrb[0].mxu0 %v4416
        %v4642 = vpop.f32.mrb[0].mxu0
        %v4643 = vadd.f32 %v4438, %v4642
        %v4644 = vpop.f32.mrb[0].mxu0
        %v4645 = vpop.f32.mrb[0].mxu0
        %v4646 = vadd.f32 %v4438, %v4645
        %v4647 = vpop.f32.mrb[0].mxu0
        %4648 = vdwg.mxu0
        %v4649 = vmul.f32 %v4523, %v4523
        %v4650 = vmul.f32 %v4526, %v4526
        %v4651 = vmul.f32 %v4531, %v4531
        %v4652 = vmul.f32 %v4534, %v4534
        %v4653 = vmul.f32 %v4539, %v4539
        %v4654 = vmul.f32 %v4542, %v4542
        %v4655 = vmul.f32 %v4547, %v4547
        %v4656 = vmul.f32 %v4550, %v4550
        %v4657 = vmul.f32 %v4555, %v4555
        %v4658 = vmul.f32 %v4558, %v4558
        %v4659 = vmul.f32 %v4563, %v4563
        %v4660 = vmul.f32 %v4566, %v4566
        %v4661 = vmul.f32 %v4571, %v4571
        %v4662 = vmul.f32 %v4574, %v4574
        %v4663 = vmul.f32 %v4579, %v4579
        %v4664 = vmul.f32 %v4582, %v4582
        %v4665 = vmul.f32 %v4587, %v4587
        %v4666 = vmul.f32 %v4590, %v4590
        %v4667 = vmul.f32 %v4595, %v4595
        %v4668 = vmul.f32 %v4598, %v4598
        %v4669 = vmul.f32 %v4603, %v4603
        %v4670 = vmul.f32 %v4606, %v4606
        %v4671 = vmul.f32 %v4611, %v4611
        %v4672 = vmul.f32 %v4614, %v4614
        %v4673 = vmul.f32 %v4619, %v4619
        %v4674 = vmul.f32 %v4622, %v4622
        %v4675 = vmul.f32 %v4627, %v4627
        %v4676 = vmul.f32 %v4630, %v4630
        %v4677 = vmul.f32 %v4635, %v4635
        %v4678 = vmul.f32 %v4638, %v4638
        %v4679 = vmul.f32 %v4643, %v4643
        %v4680 = vmul.f32 %v4646, %v4646
        %4681 = vadd.xlane.f32.xlu0 %v4649
        %v4682 = vpop.xlane.xlu0 %4681
        %4683 = vadd.xlane.f32.xlu0 %v4650
        %v4684 = vpop.xlane.xlu0 %4683
        %4685 = vadd.xlane.f32.xlu0 %v4651
        %v4686 = vpop.xlane.xlu0 %4685
        %4687 = vadd.xlane.f32.xlu0 %v4652
        %v4688 = vpop.xlane.xlu0 %4687
        %4689 = vadd.xlane.f32.xlu0 %v4653
        %v4690 = vpop.xlane.xlu0 %4689
        %4691 = vadd.xlane.f32.xlu0 %v4654
        %v4692 = vpop.xlane.xlu0 %4691
        %4693 = vadd.xlane.f32.xlu0 %v4655
        %v4694 = vpop.xlane.xlu0 %4693
        %4695 = vadd.xlane.f32.xlu0 %v4656
        %v4696 = vpop.xlane.xlu0 %4695
        %4697 = vadd.xlane.f32.xlu0 %v4657
        %v4698 = vpop.xlane.xlu0 %4697
        %4699 = vadd.xlane.f32.xlu0 %v4658
        %v4700 = vpop.xlane.xlu0 %4699
        %4701 = vadd.xlane.f32.xlu0 %v4659
        %v4702 = vpop.xlane.xlu0 %4701
        %4703 = vadd.xlane.f32.xlu0 %v4660
        %v4704 = vpop.xlane.xlu0 %4703
        %4705 = vadd.xlane.f32.xlu0 %v4661
        %v4706 = vpop.xlane.xlu0 %4705
        %4707 = vadd.xlane.f32.xlu0 %v4662
        %v4708 = vpop.xlane.xlu0 %4707
        %4709 = vadd.xlane.f32.xlu0 %v4663
        %v4710 = vpop.xlane.xlu0 %4709
        %4711 = vadd.xlane.f32.xlu0 %v4664
        %v4712 = vpop.xlane.xlu0 %4711
        %4713 = vadd.xlane.f32.xlu0 %v4665
        %v4714 = vpop.xlane.xlu0 %4713
        %4715 = vadd.xlane.f32.xlu0 %v4666
        %v4716 = vpop.xlane.xlu0 %4715
        %4717 = vadd.xlane.f32.xlu0 %v4667
        %v4718 = vpop.xlane.xlu0 %4717
        %4719 = vadd.xlane.f32.xlu0 %v4668
        %v4720 = vpop.xlane.xlu0 %4719
        %4721 = vadd.xlane.f32.xlu0 %v4669
        %v4722 = vpop.xlane.xlu0 %4721
        %4723 = vadd.xlane.f32.xlu0 %v4670
        %v4724 = vpop.xlane.xlu0 %4723
        %4725 = vadd.xlane.f32.xlu0 %v4671
        %v4726 = vpop.xlane.xlu0 %4725
        %4727 = vadd.xlane.f32.xlu0 %v4672
        %v4728 = vpop.xlane.xlu0 %4727
        %4729 = vadd.xlane.f32.xlu0 %v4673
        %v4730 = vpop.xlane.xlu0 %4729
        %4731 = vadd.xlane.f32.xlu0 %v4674
        %v4732 = vpop.xlane.xlu0 %4731
        %4733 = vadd.xlane.f32.xlu0 %v4675
        %v4734 = vpop.xlane.xlu0 %4733
        %4735 = vadd.xlane.f32.xlu0 %v4676
        %v4736 = vpop.xlane.xlu0 %4735
        %4737 = vadd.xlane.f32.xlu0 %v4677
        %v4738 = vpop.xlane.xlu0 %4737
        %4739 = vadd.xlane.f32.xlu0 %v4678
        %v4740 = vpop.xlane.xlu0 %4739
        %4741 = vadd.xlane.f32.xlu0 %v4679
        %v4742 = vpop.xlane.xlu0 %4741
        %4743 = vadd.xlane.f32.xlu0 %v4680
        %v4744 = vpop.xlane.xlu0 %4743
        %v4745 = vmax.f32 %v4682, 1e-24
        %v4746 = vmax.f32 %v4684, 1e-24
        %v4747 = vmax.f32 %v4686, 1e-24
        %v4748 = vmax.f32 %v4688, 1e-24
        %v4749 = vmax.f32 %v4690, 1e-24
        %v4750 = vmax.f32 %v4692, 1e-24
        %v4751 = vmax.f32 %v4694, 1e-24
        %v4752 = vmax.f32 %v4696, 1e-24
        %v4753 = vmax.f32 %v4698, 1e-24
        %v4754 = vmax.f32 %v4700, 1e-24
        %v4755 = vmax.f32 %v4702, 1e-24
        %v4756 = vmax.f32 %v4704, 1e-24
        %v4757 = vmax.f32 %v4706, 1e-24
        %v4758 = vmax.f32 %v4708, 1e-24
        %v4759 = vmax.f32 %v4710, 1e-24
        %v4760 = vmax.f32 %v4712, 1e-24
        %v4761 = vmax.f32 %v4714, 1e-24
        %v4762 = vmax.f32 %v4716, 1e-24
        %v4763 = vmax.f32 %v4718, 1e-24
        %v4764 = vmax.f32 %v4720, 1e-24
        %v4765 = vmax.f32 %v4722, 1e-24
        %v4766 = vmax.f32 %v4724, 1e-24
        %v4767 = vmax.f32 %v4726, 1e-24
        %v4768 = vmax.f32 %v4728, 1e-24
        %v4769 = vmax.f32 %v4730, 1e-24
        %v4770 = vmax.f32 %v4732, 1e-24
        %v4771 = vmax.f32 %v4734, 1e-24
        %v4772 = vmax.f32 %v4736, 1e-24
        %v4773 = vmax.f32 %v4738, 1e-24
        %v4774 = vmax.f32 %v4740, 1e-24
        %v4775 = vmax.f32 %v4742, 1e-24
        %v4776 = vmax.f32 %v4744, 1e-24
        %v4777 = vrsqrt.pop %v4745
        %v4778 = vrsqrt.pop %v4746
        %v4779 = vrsqrt.pop %v4747
        %v4780 = vrsqrt.pop %v4748
        %v4781 = vrsqrt.pop %v4749
        %v4782 = vrsqrt.pop %v4750
        %v4783 = vrsqrt.pop %v4751
        %v4784 = vrsqrt.pop %v4752
        %v4785 = vrsqrt.pop %v4753
        %v4786 = vrsqrt.pop %v4754
        %v4787 = vrsqrt.pop %v4755
        %v4788 = vrsqrt.pop %v4756
        %v4789 = vrsqrt.pop %v4757
        %v4790 = vrsqrt.pop %v4758
        %v4791 = vrsqrt.pop %v4759
        %v4792 = vrsqrt.pop %v4760
        %v4793 = vrsqrt.pop %v4761
        %v4794 = vrsqrt.pop %v4762
        %v4795 = vrsqrt.pop %v4763
        %v4796 = vrsqrt.pop %v4764
        %v4797 = vrsqrt.pop %v4765
        %v4798 = vrsqrt.pop %v4766
        %v4799 = vrsqrt.pop %v4767
        %v4800 = vrsqrt.pop %v4768
        %v4801 = vrsqrt.pop %v4769
        %v4802 = vrsqrt.pop %v4770
        %v4803 = vrsqrt.pop %v4771
        %v4804 = vrsqrt.pop %v4772
        %v4805 = vrsqrt.pop %v4773
        %v4806 = vrsqrt.pop %v4774
        %v4807 = vrsqrt.pop %v4775
        %v4808 = vrsqrt.pop %v4776
        %v4809 = vmul.f32 %v4523, %v4777
        %v4810 = vmul.f32 %v4526, %v4778
        %v4811 = vmul.f32 %v4531, %v4779
        %v4812 = vmul.f32 %v4534, %v4780
        %v4813 = vmul.f32 %v4539, %v4781
        %v4814 = vmul.f32 %v4542, %v4782
        %v4815 = vmul.f32 %v4547, %v4783
        %v4816 = vmul.f32 %v4550, %v4784
        %v4817 = vmul.f32 %v4555, %v4785
        %v4818 = vmul.f32 %v4558, %v4786
        %v4819 = vmul.f32 %v4563, %v4787
        %v4820 = vmul.f32 %v4566, %v4788
        %v4821 = vmul.f32 %v4571, %v4789
        %v4822 = vmul.f32 %v4574, %v4790
        %v4823 = vmul.f32 %v4579, %v4791
        %v4824 = vmul.f32 %v4582, %v4792
        %v4825 = vmul.f32 %v4587, %v4793
        %v4826 = vmul.f32 %v4590, %v4794
        %v4827 = vmul.f32 %v4595, %v4795
        %v4828 = vmul.f32 %v4598, %v4796
        %v4829 = vmul.f32 %v4603, %v4797
        %v4830 = vmul.f32 %v4606, %v4798
        %v4831 = vmul.f32 %v4611, %v4799
        %v4832 = vmul.f32 %v4614, %v4800
        %v4833 = vmul.f32 %v4619, %v4801
        %v4834 = vmul.f32 %v4622, %v4802
        %v4835 = vmul.f32 %v4627, %v4803
        %v4836 = vmul.f32 %v4630, %v4804
        %v4837 = vmul.f32 %v4635, %v4805
        %v4838 = vmul.f32 %v4638, %v4806
        %v4839 = vmul.f32 %v4643, %v4807
        %v4840 = vmul.f32 %v4646, %v4808
        %4841 = vst [vmem:[%s536] sm:$0xff] %v4809
        %4842 = vst [vmem:[%s536 + $0x8] sm:$0xff] %v4810
        %4843 = vst [vmem:[%s536 + $0x10] sm:$0xff] %v4811
        %4844 = vst [vmem:[%s536 + $0x18] sm:$0xff] %v4812
        %4845 = vst [vmem:[%s536 + $0x20] sm:$0xff] %v4813
        %4846 = vst [vmem:[%s536 + $0x28] sm:$0xff] %v4814
        %4847 = vst [vmem:[%s536 + $0x30] sm:$0xff] %v4815
        %4848 = vst [vmem:[%s536 + $0x38] sm:$0xff] %v4816
        %4849 = vst [vmem:[%s536 + $0x40] sm:$0xff] %v4817
        %4850 = vst [vmem:[%s536 + $0x48] sm:$0xff] %v4818
        %4851 = vst [vmem:[%s536 + $0x50] sm:$0xff] %v4819
        %4852 = vst [vmem:[%s536 + $0x58] sm:$0xff] %v4820
        %4853 = vst [vmem:[%s536 + $0x60] sm:$0xff] %v4821
        %4854 = vst [vmem:[%s536 + $0x68] sm:$0xff] %v4822
        %4855 = vst [vmem:[%s536 + $0x70] sm:$0xff] %v4823
        %4856 = vst [vmem:[%s536 + $0x78] sm:$0xff] %v4824
        %4857 = vst [vmem:[%s536 + $0x80] sm:$0xff] %v4825
        %4858 = vst [vmem:[%s536 + $0x88] sm:$0xff] %v4826
        %4859 = vst [vmem:[%s536 + $0x90] sm:$0xff] %v4827
        %4860 = vst [vmem:[%s536 + $0x98] sm:$0xff] %v4828
        %4861 = vst [vmem:[%s536 + $0xa0] sm:$0xff] %v4829
        %4862 = vst [vmem:[%s536 + $0xa8] sm:$0xff] %v4830
        %4863 = vst [vmem:[%s536 + $0xb0] sm:$0xff] %v4831
        %4864 = vst [vmem:[%s536 + $0xb8] sm:$0xff] %v4832
        %4865 = vst [vmem:[%s536 + $0xc0] sm:$0xff] %v4833
        %4866 = vst [vmem:[%s536 + $0xc8] sm:$0xff] %v4834
        %4867 = vst [vmem:[%s536 + $0xd0] sm:$0xff] %v4835
        %4868 = vst [vmem:[%s536 + $0xd8] sm:$0xff] %v4836
        %4869 = vst [vmem:[%s536 + $0xe0] sm:$0xff] %v4837
        %4870 = vst [vmem:[%s536 + $0xe8] sm:$0xff] %v4838
        %4871 = vst [vmem:[%s536 + $0xf0] sm:$0xff] %v4839
        %4872 = vst [vmem:[%s536 + $0xf8] sm:$0xff] %v4840
        %s4873 = sand.u32 %s260, 1
        %s4874 = scalar_lea.sflag [#allocation4], %s4873
        %s4875 = sand.u32 %s260, 1
        %s4876 = smul.addr %s4875, 256
        %s4877 = scalar_lea.vmem [#allocation19], %s4876
        %s4878 = sand.u32 %s286, 1
        %s4879 = scalar_lea.sflag [#allocation21], %s4878
        %s4880 = sand.u32 %s286, 1
        %s4881 = smul.addr %s4880, 256
        %s4882 = scalar_lea.vmem [#allocation20], %s4881
        // Predicated region
        $region101: #{forward_jit.3} parent=59 // pred_check
          %p4883 = pneg %p270
        $region102: #{forward_jit.3} parent=59 // pred_check_branch
          %4885 = sbr.rel (%p4883) target = $region104
        $region103: #{forward_jit.3} parent=59 // pred_region
          %s4887 = ssub.s32 4096, 4096
          %4888 = vsyncadd %s4874, %s4887
          %s4889 = smul.addr %s37, 32
          %s4890 = smul.addr %s4889, 128
          %s4891 = scalar_lea.hbm %s10, %s4890
          %s4892 = sshll.u32 %s4877, 4
          %s4893 = int_to_ptr.vmem [resolvable:$true] %s4892
          %4898 = dma.vmem_to_hbm [thread:$0]  %s4893, 4096, %s4891, %s4874, 128, 128, 8
        $region104: #{forward_jit.3} parent=59 // pred_fallthru
          _
        // Predicated region
        $region105: #{forward_jit.3} parent=59 // pred_check
          %p4899 = pneg %p296
        $region106: #{forward_jit.3} parent=59 // pred_check_branch
          %4901 = sbr.rel (%p4899) target = $region108
        $region107: #{forward_jit.3} parent=59 // pred_region
          %s4903 = ssub.s32 4096, 4096
          %4904 = vsyncadd %s4879, %s4903
          %s4905 = smul.addr %s37, 32
          %s4906 = smul.addr %s4905, 128
          %s4907 = scalar_lea.hbm %s11, %s4906
          %s4908 = sshll.u32 %s4882, 4
          %s4909 = int_to_ptr.vmem [resolvable:$true] %s4908
          %4914 = dma.vmem_to_hbm [thread:$0]  %s4909, 4096, %s4907, %s4879, 128, 128, 8
        $region108: #{forward_jit.3} parent=59 // pred_fallthru
          _
      $region60: #{forward_jit.3} parent=5 // pred_fallthru
        _
      %p4915 = scmp.le.s32.totalorder 2, %s32
      // Predicated region
      $region109: #{forward_jit.3} parent=5 // pred_check
        %p4916 = pneg %p4915
      $region110: #{forward_jit.3} parent=5 // pred_check_branch
        %4918 = sbr.rel (%p4916) target = $region112
      $region111: #{forward_jit.3} parent=5 // pred_region
        %s4919 = ssub.s32 %s32, 2
        // Predicated region
        $region113: #{forward_jit.3} parent=111 // pred_check
          %p4920 = pneg %p276
        $region114: #{forward_jit.3} parent=111 // pred_check_branch
          %4922 = sbr.rel (%p4920) target = $region116
        $region115: #{forward_jit.3} parent=111 // pred_region
          %s4923 = sand.u32 %s261, 1
          %s4924 = scalar_lea.sflag [#allocation4], %s4923
          %s4925 = sand.u32 %s261, 1
          %s4926 = smul.addr %s4925, 256
          %s4927 = scalar_lea.vmem [#allocation19], %s4926
          %4928 = dma.done %s4924, 4096
        $region116: #{forward_jit.3} parent=111 // pred_fallthru
          _
        // Predicated region
        $region117: #{forward_jit.3} parent=111 // pred_check
          %p4929 = pneg %p302
        $region118: #{forward_jit.3} parent=111 // pred_check_branch
          %4931 = sbr.rel (%p4929) target = $region120
        $region119: #{forward_jit.3} parent=111 // pred_region
          %s4932 = sand.u32 %s287, 1
          %s4933 = scalar_lea.sflag [#allocation21], %s4932
          %s4934 = sand.u32 %s287, 1
          %s4935 = smul.addr %s4934, 256
          %s4936 = scalar_lea.vmem [#allocation20], %s4935
          %4937 = dma.done %s4933, 4096
        $region120: #{forward_jit.3} parent=111 // pred_fallthru
          _
      $region112: #{forward_jit.3} parent=5 // pred_fallthru
        _
    $region6: #{forward_jit.3} parent=1 // loop_footer
      %s36 = sadd.s32 1, %s32
    $region7: #{forward_jit.3} parent=1 // loop_footer_branch
      %31 = sbr.rel target = $region3
    $region8: #{forward_jit.3} parent=1 // loop_exit
      _
    %4938 = vsyncpa [#allocation3], 1
    %s4939 = scalar_lea.sflag [#allocation3], 1
    %4940 = vsyncpa %s4939, 1
    %4941 = vsyncpa [#allocation6], 1
    %4942 = vsyncpa [#allocation9], 1
    %4943 = vsyncpa [#allocation12], 1
    %4944 = vsyncpa [#allocation15], 1
    %4945 = vsyncpa [#allocation18], 1
    %4946 = vsyncpa [#allocation4], 1
    %s4947 = scalar_lea.sflag [#allocation4], 1
    %4948 = vsyncpa %s4947, 1
    %4949 = vsyncpa [#allocation21], 1
    %s4950 = scalar_lea.sflag [#allocation21], 1
    %4951 = vsyncpa %s4950, 1

// kernel: forward_jit.2
$region0: #{forward_jit.2}
  #allocation0 [shape = 'u32[]', space=smem, size = 0x4, offset = 0x4, fixed_abs, tag = 'smem constant byte address 0x4 - core index']
  #allocation1 [shape = 'u32[144,128]{1,0:T(1,128)}', space=vmem, size = 0x12000, scoped, tag = 'internal scratch']
  %s0 = inlined_call_operand.hbm [shape: bf16[2,16,16,8], index: 0, kind: input, shape index: {}]
  %s1 = inlined_call_operand.hbm [shape: bf16[2,8,128], index: 1, kind: input, shape index: {}]
  %s2 = inlined_call_operand.hbm [shape: bf16[2,4,128], index: 2, kind: input, shape index: {}]
  %s3 = inlined_call_operand.hbm [shape: bf16[2,2,128], index: 3, kind: input, shape index: {}]
  %s4 = inlined_call_operand.hbm [shape: f32[16,8], index: 4, kind: input, shape index: {}, may-alias: {4,5}]
  %s5 = inlined_call_operand.hbm [shape: f32[16,8], index: 5, kind: input, shape index: {}, may-alias: {4,5}]
  %s6 = inlined_call_operand.hbm [shape: f32[16,4], index: 6, kind: input, shape index: {}, may-alias: {6,7}]
  %s7 = inlined_call_operand.hbm [shape: f32[16,4], index: 7, kind: input, shape index: {}, may-alias: {6,7}]
  %s8 = inlined_call_operand.hbm [shape: f32[16,2], index: 8, kind: input, shape index: {}, may-alias: {8,9}]
  %s9 = inlined_call_operand.hbm [shape: f32[16,2], index: 9, kind: input, shape index: {}, may-alias: {8,9}]
  %s10 = inlined_call_operand.hbm [shape: bf16[2,18,18,128], index: 10, kind: output, shape index: {}]
  %s11 = sld [smem:[#allocation0]]
  $region113: #{forward_jit.2} parent=0
    _
  %s13 = ssub.s32 1, %s11
  %s14 = scalar_select 0, %s13, %s11
  $region1: #{forward_jit.2} parent=0
    #allocation2 [shape = 'u8[131072]{0}', space=vmem, size = 0x20000, scoped, tag = 'input window, operand 0']
    #allocation3 [shape = 's32[2]{0}', space=sflag, size = 0x8, scoped, tag = 'scoped memory for forward_jit.2']
    #allocation4 [shape = 's32[2]{0}', space=sflag, size = 0x8, scoped, tag = 'scoped memory for forward_jit.2']
    #allocation5 [shape = 'u8[4096]{0}', space=vmem, size = 0x1000, scoped, tag = 'input window, operand 1']
    #allocation6 [shape = 's32[2]{0}', space=sflag, size = 0x8, scoped, tag = 'scoped memory for forward_jit.2']
    #allocation7 [shape = 'u8[2048]{0}', space=vmem, size = 0x800, scoped, tag = 'input window, operand 2']
    #allocation8 [shape = 'u8[1024]{0}', space=vmem, size = 0x400, scoped, tag = 'input window, operand 3']
    #allocation9 [shape = 's32[2]{0}', space=sflag, size = 0x8, scoped, tag = 'scoped memory for forward_jit.2']
    #allocation10 [shape = 'u8[8192]{0}', space=vmem, size = 0x2000, scoped, tag = 'input window, operand 4, single buffered']
    #allocation11 [shape = 'u8[8192]{0}', space=vmem, size = 0x2000, scoped, tag = 'input window, operand 5, single buffered']
    #allocation12 [shape = 's32[1]{0}', space=sflag, size = 0x4, scoped, tag = 'scoped memory for forward_jit.2']
    #allocation13 [shape = 'u8[8192]{0}', space=vmem, size = 0x2000, scoped, tag = 'input window, operand 6, single buffered']
    #allocation14 [shape = 'u8[8192]{0}', space=vmem, size = 0x2000, scoped, tag = 'input window, operand 7, single buffered']
    #allocation15 [shape = 's32[1]{0}', space=sflag, size = 0x4, scoped, tag = 'scoped memory for forward_jit.2']
    #allocation16 [shape = 'u8[8192]{0}', space=vmem, size = 0x2000, scoped, tag = 'input window, operand 8, single buffered']
    #allocation17 [shape = 'u8[8192]{0}', space=vmem, size = 0x2000, scoped, tag = 'input window, operand 9, single buffered']
    #allocation18 [shape = 's32[1]{0}', space=sflag, size = 0x4, scoped, tag = 'scoped memory for forward_jit.2']
    #allocation19 [shape = 'u8[221184]{0}', space=vmem, size = 0x36000, scoped, tag = 'output window, operand 0']
    %15 = vsyncpa [#allocation3], 0
    %s16 = scalar_lea.sflag [#allocation3], 1
    %17 = vsyncpa %s16, 0
    %18 = vsyncpa [#allocation6], 0
    %s19 = scalar_lea.sflag [#allocation6], 1
    %20 = vsyncpa %s19, 0
    %21 = vsyncpa [#allocation9], 0
    %s22 = scalar_lea.sflag [#allocation9], 1
    %23 = vsyncpa %s22, 0
    %24 = vsyncpa [#allocation12], 0
    %25 = vsyncpa [#allocation15], 0
    %26 = vsyncpa [#allocation18], 0
    %27 = vsyncpa [#allocation4], 0
    %s28 = scalar_lea.sflag [#allocation4], 1
    %29 = vsyncpa %s28, 0
    loop: start=0, step=1, limit=4
    $region2: #{forward_jit.2} parent=1 // loop_pre_header
      _
    $region3: #{forward_jit.2} parent=1 // loop_header
      %s31 = sphi 0, %s35
      %p32 = scmp.ge.s32.totalorder %s31, 4
      %s41 = sphi 0, %s43
      %s44 = sphi 0, %s41
      %s45 = sphi 0, %s44
      %s61 = sphi 0, %s45
      %s67 = sphi 0, %s69
      %s70 = sphi 0, %s67
      %s71 = sphi 0, %s70
      %s87 = sphi 0, %s71
      %s93 = sphi 0, %s95
      %s96 = sphi 0, %s93
      %s97 = sphi 0, %s96
      %s113 = sphi 0, %s97
      %s119 = sphi 0, %s121
      %s122 = sphi 0, %s119
      %s123 = sphi 0, %s122
      %s139 = sphi 0, %s123
      %s143 = sphi 0, %s143
      %s145 = sphi 0, %s143
      %s146 = sphi 0, %s145
      %s160 = sphi 0, %s146
      %s164 = sphi 0, %s164
      %s166 = sphi 0, %s164
      %s167 = sphi 0, %s166
      %s181 = sphi 0, %s167
      %s185 = sphi 0, %s185
      %s187 = sphi 0, %s185
      %s188 = sphi 0, %s187
      %s202 = sphi 0, %s188
      %s206 = sphi 0, %s206
      %s208 = sphi 0, %s206
      %s209 = sphi 0, %s208
      %s223 = sphi 0, %s209
      %s227 = sphi 0, %s227
      %s229 = sphi 0, %s227
      %s230 = sphi 0, %s229
      %s244 = sphi 0, %s230
      %s248 = sphi 0, %s248
      %s250 = sphi 0, %s248
      %s251 = sphi 0, %s250
      %s265 = sphi 0, %s251
      %s271 = sphi 0, %s273
      %s274 = sphi 0, %s271
      %s275 = sphi 0, %s274
      %s291 = sphi 0, %s275
    $region4: #{forward_jit.2} parent=1 // loop_header_branch
      %34 = sbr.rel (%p32) target = $region8
    $region5: #{forward_jit.2} parent=1 // loop_body
      %s36 = ssub.s32 %s31, 1
      %s37 = ssub.s32 %s31, 2
      %s38 = sadd.s32 %s31, 1
      %s39 = ssub.s32 %s31, %s38
      %p40 = scmp.eq.s32.totalorder %s39, 0
      %s42 = sadd.s32 %s41, 1
      %s43 = scalar_select %p40, %s41, %s42
      %p46 = pneg %p40
      %p47 = scmp.eq.s32.totalorder %s31, 1
      %p48 = por %p46, %p47
      %p49 = scmp.ne.s32.totalorder %s41, %s44
      %p50 = scmp.eq.s32.totalorder %s31, 0
      %p51 = por %p49, %p50
      %p52 = scmp.ne.s32.totalorder %s41, %s44
      %p53 = scmp.eq.s32.totalorder %s36, 1
      %p54 = por %p52, %p53
      %p55 = scmp.ne.s32.totalorder %s44, %s45
      %p56 = scmp.eq.s32.totalorder %s36, 0
      %p57 = por %p55, %p56
      %p58 = scmp.ne.s32.totalorder %s44, %s45
      %p59 = scmp.eq.s32.totalorder %s37, 1
      %p60 = por %p58, %p59
      %p62 = scmp.ne.s32.totalorder %s45, %s61
      %p63 = scmp.eq.s32.totalorder %s37, 0
      %p64 = por %p62, %p63
      %s65 = ssub.s32 %s31, %s38
      %p66 = scmp.eq.s32.totalorder %s65, 0
      %s68 = sadd.s32 %s67, 1
      %s69 = scalar_select %p66, %s67, %s68
      %p72 = pneg %p66
      %p73 = scmp.eq.s32.totalorder %s31, 1
      %p74 = por %p72, %p73
      %p75 = scmp.ne.s32.totalorder %s67, %s70
      %p76 = scmp.eq.s32.totalorder %s31, 0
      %p77 = por %p75, %p76
      %p78 = scmp.ne.s32.totalorder %s67, %s70
      %p79 = scmp.eq.s32.totalorder %s36, 1
      %p80 = por %p78, %p79
      %p81 = scmp.ne.s32.totalorder %s70, %s71
      %p82 = scmp.eq.s32.totalorder %s36, 0
      %p83 = por %p81, %p82
      %p84 = scmp.ne.s32.totalorder %s70, %s71
      %p85 = scmp.eq.s32.totalorder %s37, 1
      %p86 = por %p84, %p85
      %p88 = scmp.ne.s32.totalorder %s71, %s87
      %p89 = scmp.eq.s32.totalorder %s37, 0
      %p90 = por %p88, %p89
      %s91 = ssub.s32 %s31, %s38
      %p92 = scmp.eq.s32.totalorder %s91, 0
      %s94 = sadd.s32 %s93, 1
      %s95 = scalar_select %p92, %s93, %s94
      %p98 = pneg %p92
      %p99 = scmp.eq.s32.totalorder %s31, 1
      %p100 = por %p98, %p99
      %p101 = scmp.ne.s32.totalorder %s93, %s96
      %p102 = scmp.eq.s32.totalorder %s31, 0
      %p103 = por %p101, %p102
      %p104 = scmp.ne.s32.totalorder %s93, %s96
      %p105 = scmp.eq.s32.totalorder %s36, 1
      %p106 = por %p104, %p105
      %p107 = scmp.ne.s32.totalorder %s96, %s97
      %p108 = scmp.eq.s32.totalorder %s36, 0
      %p109 = por %p107, %p108
      %p110 = scmp.ne.s32.totalorder %s96, %s97
      %p111 = scmp.eq.s32.totalorder %s37, 1
      %p112 = por %p110, %p111
      %p114 = scmp.ne.s32.totalorder %s97, %s113
      %p115 = scmp.eq.s32.totalorder %s37, 0
      %p116 = por %p114, %p115
      %s117 = ssub.s32 %s31, %s38
      %p118 = scmp.eq.s32.totalorder %s117, 0
      %s120 = sadd.s32 %s119, 1
      %s121 = scalar_select %p118, %s119, %s120
      %p124 = pneg %p118
      %p125 = scmp.eq.s32.totalorder %s31, 1
      %p126 = por %p124, %p125
      %p127 = scmp.ne.s32.totalorder %s119, %s122
      %p128 = scmp.eq.s32.totalorder %s31, 0
      %p129 = por %p127, %p128
      %p130 = scmp.ne.s32.totalorder %s119, %s122
      %p131 = scmp.eq.s32.totalorder %s36, 1
      %p132 = por %p130, %p131
      %p133 = scmp.ne.s32.totalorder %s122, %s123
      %p134 = scmp.eq.s32.totalorder %s36, 0
      %p135 = por %p133, %p134
      %p136 = scmp.ne.s32.totalorder %s122, %s123
      %p137 = scmp.eq.s32.totalorder %s37, 1
      %p138 = por %p136, %p137
      %p140 = scmp.ne.s32.totalorder %s123, %s139
      %p141 = scmp.eq.s32.totalorder %s37, 0
      %p142 = por %p140, %p141
      %s144 = sadd.s32 %s143, 1
      %p147 = scmp.eq.s32.totalorder %s31, 1
      %p148 = scmp.ne.s32.totalorder %s143, %s145
      %p149 = scmp.eq.s32.totalorder %s31, 0
      %p150 = por %p148, %p149
      %p151 = scmp.ne.s32.totalorder %s143, %s145
      %p152 = scmp.eq.s32.totalorder %s36, 1
      %p153 = por %p151, %p152
      %p154 = scmp.ne.s32.totalorder %s145, %s146
      %p155 = scmp.eq.s32.totalorder %s36, 0
      %p156 = por %p154, %p155
      %p157 = scmp.ne.s32.totalorder %s145, %s146
      %p158 = scmp.eq.s32.totalorder %s37, 1
      %p159 = por %p157, %p158
      %p161 = scmp.ne.s32.totalorder %s146, %s160
      %p162 = scmp.eq.s32.totalorder %s37, 0
      %p163 = por %p161, %p162
      %s165 = sadd.s32 %s164, 1
      %p168 = scmp.eq.s32.totalorder %s31, 1
      %p169 = scmp.ne.s32.totalorder %s164, %s166
      %p170 = scmp.eq.s32.totalorder %s31, 0
      %p171 = por %p169, %p170
      %p172 = scmp.ne.s32.totalorder %s164, %s166
      %p173 = scmp.eq.s32.totalorder %s36, 1
      %p174 = por %p172, %p173
      %p175 = scmp.ne.s32.totalorder %s166, %s167
      %p176 = scmp.eq.s32.totalorder %s36, 0
      %p177 = por %p175, %p176
      %p178 = scmp.ne.s32.totalorder %s166, %s167
      %p179 = scmp.eq.s32.totalorder %s37, 1
      %p180 = por %p178, %p179
      %p182 = scmp.ne.s32.totalorder %s167, %s181
      %p183 = scmp.eq.s32.totalorder %s37, 0
      %p184 = por %p182, %p183
      %s186 = sadd.s32 %s185, 1
      %p189 = scmp.eq.s32.totalorder %s31, 1
      %p190 = scmp.ne.s32.totalorder %s185, %s187
      %p191 = scmp.eq.s32.totalorder %s31, 0
      %p192 = por %p190, %p191
      %p193 = scmp.ne.s32.totalorder %s185, %s187
      %p194 = scmp.eq.s32.totalorder %s36, 1
      %p195 = por %p193, %p194
      %p196 = scmp.ne.s32.totalorder %s187, %s188
      %p197 = scmp.eq.s32.totalorder %s36, 0
      %p198 = por %p196, %p197
      %p199 = scmp.ne.s32.totalorder %s187, %s188
      %p200 = scmp.eq.s32.totalorder %s37, 1
      %p201 = por %p199, %p200
      %p203 = scmp.ne.s32.totalorder %s188, %s202
      %p204 = scmp.eq.s32.totalorder %s37, 0
      %p205 = por %p203, %p204
      %s207 = sadd.s32 %s206, 1
      %p210 = scmp.eq.s32.totalorder %s31, 1
      %p211 = scmp.ne.s32.totalorder %s206, %s208
      %p212 = scmp.eq.s32.totalorder %s31, 0
      %p213 = por %p211, %p212
      %p214 = scmp.ne.s32.totalorder %s206, %s208
      %p215 = scmp.eq.s32.totalorder %s36, 1
      %p216 = por %p214, %p215
      %p217 = scmp.ne.s32.totalorder %s208, %s209
      %p218 = scmp.eq.s32.totalorder %s36, 0
      %p219 = por %p217, %p218
      %p220 = scmp.ne.s32.totalorder %s208, %s209
      %p221 = scmp.eq.s32.totalorder %s37, 1
      %p222 = por %p220, %p221
      %p224 = scmp.ne.s32.totalorder %s209, %s223
      %p225 = scmp.eq.s32.totalorder %s37, 0
      %p226 = por %p224, %p225
      %s228 = sadd.s32 %s227, 1
      %p231 = scmp.eq.s32.totalorder %s31, 1
      %p232 = scmp.ne.s32.totalorder %s227, %s229
      %p233 = scmp.eq.s32.totalorder %s31, 0
      %p234 = por %p232, %p233
      %p235 = scmp.ne.s32.totalorder %s227, %s229
      %p236 = scmp.eq.s32.totalorder %s36, 1
      %p237 = por %p235, %p236
      %p238 = scmp.ne.s32.totalorder %s229, %s230
      %p239 = scmp.eq.s32.totalorder %s36, 0
      %p240 = por %p238, %p239
      %p241 = scmp.ne.s32.totalorder %s229, %s230
      %p242 = scmp.eq.s32.totalorder %s37, 1
      %p243 = por %p241, %p242
      %p245 = scmp.ne.s32.totalorder %s230, %s244
      %p246 = scmp.eq.s32.totalorder %s37, 0
      %p247 = por %p245, %p246
      %s249 = sadd.s32 %s248, 1
      %p252 = scmp.eq.s32.totalorder %s31, 1
      %p253 = scmp.ne.s32.totalorder %s248, %s250
      %p254 = scmp.eq.s32.totalorder %s31, 0
      %p255 = por %p253, %p254
      %p256 = scmp.ne.s32.totalorder %s248, %s250
      %p257 = scmp.eq.s32.totalorder %s36, 1
      %p258 = por %p256, %p257
      %p259 = scmp.ne.s32.totalorder %s250, %s251
      %p260 = scmp.eq.s32.totalorder %s36, 0
      %p261 = por %p259, %p260
      %p262 = scmp.ne.s32.totalorder %s250, %s251
      %p263 = scmp.eq.s32.totalorder %s37, 1
      %p264 = por %p262, %p263
      %p266 = scmp.ne.s32.totalorder %s251, %s265
      %p267 = scmp.eq.s32.totalorder %s37, 0
      %p268 = por %p266, %p267
      %s269 = ssub.s32 %s31, %s38
      %p270 = scmp.eq.s32.totalorder %s269, 0
      %s272 = sadd.s32 %s271, 1
      %s273 = scalar_select %p270, %s271, %s272
      %p276 = pneg %p270
      %p277 = scmp.eq.s32.totalorder %s31, 1
      %p278 = por %p276, %p277
      %p279 = scmp.ne.s32.totalorder %s271, %s274
      %p280 = scmp.eq.s32.totalorder %s31, 0
      %p281 = por %p279, %p280
      %p282 = scmp.ne.s32.totalorder %s271, %s274
      %p283 = scmp.eq.s32.totalorder %s36, 1
      %p284 = por %p282, %p283
      %p285 = scmp.ne.s32.totalorder %s274, %s275
      %p286 = scmp.eq.s32.totalorder %s36, 0
      %p287 = por %p285, %p286
      %p288 = scmp.ne.s32.totalorder %s274, %s275
      %p289 = scmp.eq.s32.totalorder %s37, 1
      %p290 = por %p288, %p289
      %p292 = scmp.ne.s32.totalorder %s275, %s291
      %p293 = scmp.eq.s32.totalorder %s37, 0
      %p294 = por %p292, %p293
      %p295 = scmp.le.s32.totalorder 1, %s31
      %p296 = scmp.lt.s32.totalorder %s31, 3
      %p297 = pnand %p295, %p296
      %p298 = pneg %p297
      // Predicated region
      $region9: #{forward_jit.2} parent=5 // pred_check
        _
      $region10: #{forward_jit.2} parent=5 // pred_check_branch
        %300 = sbr.rel (%p297) target = $region12
      $region11: #{forward_jit.2} parent=5 // pred_region
        %s301 = ssub.s32 %s31, 1
        // Predicated region
        $region13: #{forward_jit.2} parent=11 // pred_check
          %p302 = pneg %p156
        $region14: #{forward_jit.2} parent=11 // pred_check_branch
          %304 = sbr.rel (%p302) target = $region16
        $region15: #{forward_jit.2} parent=11 // pred_region
          %s306 = ssub.s32 256, 256
          %307 = vsyncadd [#allocation9], %s306
          %s308 = sshll.u32 [#allocation10], 4
          %s309 = int_to_ptr.vmem [resolvable:$true] %s308
          %314 = dma.hbm_to_vmem [thread:$0]  %s4, 256, %s309, [#allocation9], 128, 128, 8
        $region16: #{forward_jit.2} parent=11 // pred_fallthru
          _
        // Predicated region
        $region17: #{forward_jit.2} parent=11 // pred_check
          %p315 = pneg %p177
        $region18: #{forward_jit.2} parent=11 // pred_check_branch
          %317 = sbr.rel (%p315) target = $region20
        $region19: #{forward_jit.2} parent=11 // pred_region
          %s319 = ssub.s32 256, 256
          %320 = vsyncadd [#allocation12], %s319
          %s321 = sshll.u32 [#allocation11], 4
          %s322 = int_to_ptr.vmem [resolvable:$true] %s321
          %327 = dma.hbm_to_vmem [thread:$0]  %s5, 256, %s322, [#allocation12], 128, 128, 8
        $region20: #{forward_jit.2} parent=11 // pred_fallthru
          _
        // Predicated region
        $region21: #{forward_jit.2} parent=11 // pred_check
          %p328 = pneg %p198
        $region22: #{forward_jit.2} parent=11 // pred_check_branch
          %330 = sbr.rel (%p328) target = $region24
        $region23: #{forward_jit.2} parent=11 // pred_region
          %s332 = ssub.s32 256, 256
          %333 = vsyncadd [#allocation12], %s332
          %s334 = sshll.u32 [#allocation13], 4
          %s335 = int_to_ptr.vmem [resolvable:$true] %s334
          %340 = dma.hbm_to_vmem [thread:$0]  %s6, 256, %s335, [#allocation12], 128, 128, 8
        $region24: #{forward_jit.2} parent=11 // pred_fallthru
          _
        // Predicated region
        $region25: #{forward_jit.2} parent=11 // pred_check
          %p341 = pneg %p219
        $region26: #{forward_jit.2} parent=11 // pred_check_branch
          %343 = sbr.rel (%p341) target = $region28
        $region27: #{forward_jit.2} parent=11 // pred_region
          %s345 = ssub.s32 256, 256
          %346 = vsyncadd [#allocation15], %s345
          %s347 = sshll.u32 [#allocation14], 4
          %s348 = int_to_ptr.vmem [resolvable:$true] %s347
          %353 = dma.hbm_to_vmem [thread:$0]  %s7, 256, %s348, [#allocation15], 128, 128, 8
        $region28: #{forward_jit.2} parent=11 // pred_fallthru
          _
        // Predicated region
        $region29: #{forward_jit.2} parent=11 // pred_check
          %p354 = pneg %p240
        $region30: #{forward_jit.2} parent=11 // pred_check_branch
          %356 = sbr.rel (%p354) target = $region32
        $region31: #{forward_jit.2} parent=11 // pred_region
          %s358 = ssub.s32 256, 256
          %359 = vsyncadd [#allocation15], %s358
          %s360 = sshll.u32 [#allocation16], 4
          %s361 = int_to_ptr.vmem [resolvable:$true] %s360
          %366 = dma.hbm_to_vmem [thread:$0]  %s8, 256, %s361, [#allocation15], 128, 128, 8
        $region32: #{forward_jit.2} parent=11 // pred_fallthru
          _
        // Predicated region
        $region33: #{forward_jit.2} parent=11 // pred_check
          %p367 = pneg %p261
        $region34: #{forward_jit.2} parent=11 // pred_check_branch
          %369 = sbr.rel (%p367) target = $region36
        $region35: #{forward_jit.2} parent=11 // pred_region
          %s371 = ssub.s32 256, 256
          %372 = vsyncadd [#allocation18], %s371
          %s373 = sshll.u32 [#allocation17], 4
          %s374 = int_to_ptr.vmem [resolvable:$true] %s373
          %379 = dma.hbm_to_vmem [thread:$0]  %s9, 256, %s374, [#allocation18], 128, 128, 8
        $region36: #{forward_jit.2} parent=11 // pred_fallthru
          _
      $region12: #{forward_jit.2} parent=5 // pred_fallthru
        _
      %p380 = scmp.lt.s32.totalorder %s31, 2
      // Predicated region
      $region37: #{forward_jit.2} parent=5 // pred_check
        %p381 = pneg %p380
      $region38: #{forward_jit.2} parent=5 // pred_check_branch
        %383 = sbr.rel (%p381) target = $region40
      $region39: #{forward_jit.2} parent=5 // pred_region
        // Predicated region
        $region41: #{forward_jit.2} parent=39 // pred_check
          %p384 = pneg %p51
        $region42: #{forward_jit.2} parent=39 // pred_check_branch
          %386 = sbr.rel (%p384) target = $region44
        $region43: #{forward_jit.2} parent=39 // pred_region
          %s387 = sand.u32 %s41, 1
          %s388 = scalar_lea.sflag [#allocation3], %s387
          %s389 = sand.u32 %s41, 1
          %s390 = smul.addr %s389, 128
          %s391 = scalar_lea.vmem [#allocation2], %s390
          %s393 = ssub.s32 2048, 2048
          %394 = vsyncadd %s388, %s393
          %s395 = smul.addr %s31, 32
          %s396 = smul.addr %s395, 64
          %s397 = scalar_lea.hbm %s0, %s396
          %s398 = sshll.u32 %s391, 4
          %s399 = int_to_ptr.vmem [resolvable:$true] %s398
          %404 = dma.hbm_to_vmem [thread:$0]  %s397, 2048, %s399, %s388, 64, 64, 4
        $region44: #{forward_jit.2} parent=39 // pred_fallthru
          _
        // Predicated region
        $region45: #{forward_jit.2} parent=39 // pred_check
          %p405 = pneg %p77
        $region46: #{forward_jit.2} parent=39 // pred_check_branch
          %407 = sbr.rel (%p405) target = $region48
        $region47: #{forward_jit.2} parent=39 // pred_region
          %s408 = sand.u32 %s31, 1
          %s409 = scalar_lea.sflag [#allocation6], %s408
          %s410 = sand.u32 %s67, 1
          %s411 = smul.addr %s410, 4
          %s412 = scalar_lea.vmem [#allocation5], %s411
          %s414 = ssub.s32 64, 64
          %415 = vsyncadd %s409, %s414
          %s416 = smul.addr %s31, 64
          %s417 = scalar_lea.hbm %s1, %s416
          %s419 = sshll.u32 %s412, 4
          %s420 = int_to_ptr.vmem [resolvable:$true] %s419
          %422 = dma.hbm_to_vmem [thread:$0]  %s417, 64, %s420, %s409
        $region48: #{forward_jit.2} parent=39 // pred_fallthru
          _
        // Predicated region
        $region49: #{forward_jit.2} parent=39 // pred_check
          %p423 = pneg %p103
        $region50: #{forward_jit.2} parent=39 // pred_check_branch
          %425 = sbr.rel (%p423) target = $region52
        $region51: #{forward_jit.2} parent=39 // pred_region
          %s426 = sand.u32 %s31, 1
          %s427 = scalar_lea.sflag [#allocation6], %s426
          %s428 = sand.u32 %s93, 1
          %s429 = smul.addr %s428, 2
          %s430 = scalar_lea.vmem [#allocation7], %s429
          %s432 = ssub.s32 32, 32
          %433 = vsyncadd %s427, %s432
          %s434 = smul.addr %s31, 32
          %s435 = scalar_lea.hbm %s2, %s434
          %s437 = sshll.u32 %s430, 4
          %s438 = int_to_ptr.vmem [resolvable:$true] %s437
          %440 = dma.hbm_to_vmem [thread:$0]  %s435, 32, %s438, %s427
        $region52: #{forward_jit.2} parent=39 // pred_fallthru
          _
        // Predicated region
        $region53: #{forward_jit.2} parent=39 // pred_check
          %p441 = pneg %p129
        $region54: #{forward_jit.2} parent=39 // pred_check_branch
          %443 = sbr.rel (%p441) target = $region56
        $region55: #{forward_jit.2} parent=39 // pred_region
          %s444 = sand.u32 %s31, 1
          %s445 = scalar_lea.sflag [#allocation9], %s444
          %s446 = sand.u32 %s119, 1
          %s447 = scalar_lea.vmem [#allocation8], %s446
          %s449 = ssub.s32 16, 16
          %450 = vsyncadd %s445, %s449
          %s451 = smul.addr %s31, 16
          %s452 = scalar_lea.hbm %s3, %s451
          %s454 = sshll.u32 %s447, 4
          %s455 = int_to_ptr.vmem [resolvable:$true] %s454
          %457 = dma.hbm_to_vmem [thread:$0]  %s452, 16, %s455, %s445
        $region56: #{forward_jit.2} parent=39 // pred_fallthru
          _
      $region40: #{forward_jit.2} parent=5 // pred_fallthru
        _
      %p458 = scmp.le.s32.totalorder 1, %s31
      %p459 = scmp.lt.s32.totalorder %s31, 3
      %p460 = pnand %p458, %p459
      %p461 = pneg %p460
      // Predicated region
      $region57: #{forward_jit.2} parent=5 // pred_check
        _
      $region58: #{forward_jit.2} parent=5 // pred_check_branch
        %463 = sbr.rel (%p460) target = $region60
      $region59: #{forward_jit.2} parent=5 // pred_region
        %s464 = ssub.s32 %s31, 1
        %s465 = sand.u32 %s44, 1
        %s466 = scalar_lea.sflag [#allocation3], %s465
        %s467 = sand.u32 %s44, 1
        %s468 = smul.addr %s467, 128
        %s469 = scalar_lea.vmem [#allocation2], %s468
        // Predicated region
        $region61: #{forward_jit.2} parent=59 // pred_check
          %p470 = pneg %p57
        $region62: #{forward_jit.2} parent=59 // pred_check_branch
          %472 = sbr.rel (%p470) target = $region64
        $region63: #{forward_jit.2} parent=59 // pred_region
          %473 = dma.done %s466, 2048
        $region64: #{forward_jit.2} parent=59 // pred_fallthru
          _
        %s474 = sand.u32 %s36, 1
        %s475 = scalar_lea.sflag [#allocation6], %s474
        %s476 = sand.u32 %s70, 1
        %s477 = smul.addr %s476, 4
        %s478 = scalar_lea.vmem [#allocation5], %s477
        // Predicated region
        $region65: #{forward_jit.2} parent=59 // pred_check
          %p479 = pneg %p83
        $region66: #{forward_jit.2} parent=59 // pred_check_branch
          %481 = sbr.rel (%p479) target = $region68
        $region67: #{forward_jit.2} parent=59 // pred_region
          %482 = dma.done %s475, 64
        $region68: #{forward_jit.2} parent=59 // pred_fallthru
          _
        %s483 = sand.u32 %s36, 1
        %s484 = scalar_lea.sflag [#allocation6], %s483
        %s485 = sand.u32 %s96, 1
        %s486 = smul.addr %s485, 2
        %s487 = scalar_lea.vmem [#allocation7], %s486
        // Predicated region
        $region69: #{forward_jit.2} parent=59 // pred_check
          %p488 = pneg %p109
        $region70: #{forward_jit.2} parent=59 // pred_check_branch
          %490 = sbr.rel (%p488) target = $region72
        $region71: #{forward_jit.2} parent=59 // pred_region
          %491 = dma.done %s484, 32
        $region72: #{forward_jit.2} parent=59 // pred_fallthru
          _
        %s492 = sand.u32 %s36, 1
        %s493 = scalar_lea.sflag [#allocation9], %s492
        %s494 = sand.u32 %s122, 1
        %s495 = scalar_lea.vmem [#allocation8], %s494
        // Predicated region
        $region73: #{forward_jit.2} parent=59 // pred_check
          %p496 = pneg %p135
        $region74: #{forward_jit.2} parent=59 // pred_check_branch
          %498 = sbr.rel (%p496) target = $region76
        $region75: #{forward_jit.2} parent=59 // pred_region
          %499 = dma.done %s493, 16
        $region76: #{forward_jit.2} parent=59 // pred_fallthru
          _
        // Predicated region
        $region77: #{forward_jit.2} parent=59 // pred_check
          %p500 = pneg %p156
        $region78: #{forward_jit.2} parent=59 // pred_check_branch
          %502 = sbr.rel (%p500) target = $region80
        $region79: #{forward_jit.2} parent=59 // pred_region
          %503 = dma.done [#allocation9], 256
        $region80: #{forward_jit.2} parent=59 // pred_fallthru
          _
        // Predicated region
        $region81: #{forward_jit.2} parent=59 // pred_check
          %p504 = pneg %p177
        $region82: #{forward_jit.2} parent=59 // pred_check_branch
          %506 = sbr.rel (%p504) target = $region84
        $region83: #{forward_jit.2} parent=59 // pred_region
          %507 = dma.done [#allocation12], 256
        $region84: #{forward_jit.2} parent=59 // pred_fallthru
          _
        // Predicated region
        $region85: #{forward_jit.2} parent=59 // pred_check
          %p508 = pneg %p198
        $region86: #{forward_jit.2} parent=59 // pred_check_branch
          %510 = sbr.rel (%p508) target = $region88
        $region87: #{forward_jit.2} parent=59 // pred_region
          %511 = dma.done [#allocation12], 256
        $region88: #{forward_jit.2} parent=59 // pred_fallthru
          _
        // Predicated region
        $region89: #{forward_jit.2} parent=59 // pred_check
          %p512 = pneg %p219
        $region90: #{forward_jit.2} parent=59 // pred_check_branch
          %514 = sbr.rel (%p512) target = $region92
        $region91: #{forward_jit.2} parent=59 // pred_region
          %515 = dma.done [#allocation15], 256
        $region92: #{forward_jit.2} parent=59 // pred_fallthru
          _
        // Predicated region
        $region93: #{forward_jit.2} parent=59 // pred_check
          %p516 = pneg %p240
        $region94: #{forward_jit.2} parent=59 // pred_check_branch
          %518 = sbr.rel (%p516) target = $region96
        $region95: #{forward_jit.2} parent=59 // pred_region
          %519 = dma.done [#allocation15], 256
        $region96: #{forward_jit.2} parent=59 // pred_fallthru
          _
        // Predicated region
        $region97: #{forward_jit.2} parent=59 // pred_check
          %p520 = pneg %p261
        $region98: #{forward_jit.2} parent=59 // pred_check_branch
          %522 = sbr.rel (%p520) target = $region100
        $region99: #{forward_jit.2} parent=59 // pred_region
          %523 = dma.done [#allocation18], 256
        $region100: #{forward_jit.2} parent=59 // pred_fallthru
          _
        %s524 = sand.u32 %s44, 1
        %s525 = scalar_lea.sflag [#allocation3], %s524
        %s526 = sand.u32 %s44, 1
        %s527 = smul.addr %s526, 128
        %s528 = scalar_lea.vmem [#allocation2], %s527
        %p529 = pneg %p57
        %p530 = pneg %p54
        %s531 = sand.u32 %s36, 1
        %s532 = scalar_lea.sflag [#allocation6], %s531
        %s533 = sand.u32 %s70, 1
        %s534 = smul.addr %s533, 4
        %s535 = scalar_lea.vmem [#allocation5], %s534
        %p536 = pneg %p83
        %p537 = pneg %p80
        %s538 = sand.u32 %s36, 1
        %s539 = scalar_lea.sflag [#allocation6], %s538
        %s540 = sand.u32 %s96, 1
        %s541 = smul.addr %s540, 2
        %s542 = scalar_lea.vmem [#allocation7], %s541
        %p543 = pneg %p109
        %p544 = pneg %p106
        %s545 = sand.u32 %s36, 1
        %s546 = scalar_lea.sflag [#allocation9], %s545
        %s547 = sand.u32 %s122, 1
        %s548 = scalar_lea.vmem [#allocation8], %s547
        %p549 = pneg %p135
        %p550 = pneg %p132
        %p551 = pneg %p156
        %p552 = pneg %p153
        %p553 = pneg %p177
        %p554 = pneg %p174
        %p555 = pneg %p198
        %p556 = pneg %p195
        %p557 = pneg %p219
        %p558 = pneg %p216
        %p559 = pneg %p240
        %p560 = pneg %p237
        %p561 = pneg %p261
        %p562 = pneg %p258
        %p563 = pneg %p287
        %p564 = pneg %p284
        %s565 = sand.u32 %s274, 1
        %s566 = scalar_lea.sflag [#allocation4], %s565
        %s567 = sand.u32 %s274, 1
        %s568 = smul.addr %s567, 216
        %s569 = scalar_lea.vmem [#allocation19], %s568
        %v571 = vld [vmem:[%s469] sm:$0xf]
        %v572 = vld [vmem:[%s469 + $0x4] sm:$0xf]
        %v573 = vld [vmem:[%s469 + $0x8] sm:$0xf]
        %v574 = vld [vmem:[%s469 + $0xc] sm:$0xf]
        %v575 = vld [vmem:[%s469 + $0x10] sm:$0xf]
        %v576 = vld [vmem:[%s469 + $0x14] sm:$0xf]
        %v577 = vld [vmem:[%s469 + $0x18] sm:$0xf]
        %v578 = vld [vmem:[%s469 + $0x1c] sm:$0xf]
        %v579 = vld [vmem:[%s469 + $0x20] sm:$0xf]
        %v580 = vld [vmem:[%s469 + $0x24] sm:$0xf]
        %v581 = vld [vmem:[%s469 + $0x28] sm:$0xf]
        %v582 = vld [vmem:[%s469 + $0x2c] sm:$0xf]
        %v583 = vld [vmem:[%s469 + $0x30] sm:$0xf]
        %v584 = vld [vmem:[%s469 + $0x34] sm:$0xf]
        %v585 = vld [vmem:[%s469 + $0x38] sm:$0xf]
        %v586 = vld [vmem:[%s469 + $0x3c] sm:$0xf]
        %v587 = vld [vmem:[%s469 + $0x40] sm:$0xf]
        %v588 = vld [vmem:[%s469 + $0x44] sm:$0xf]
        %v589 = vld [vmem:[%s469 + $0x48] sm:$0xf]
        %v590 = vld [vmem:[%s469 + $0x4c] sm:$0xf]
        %v591 = vld [vmem:[%s469 + $0x50] sm:$0xf]
        %v592 = vld [vmem:[%s469 + $0x54] sm:$0xf]
        %v593 = vld [vmem:[%s469 + $0x58] sm:$0xf]
        %v594 = vld [vmem:[%s469 + $0x5c] sm:$0xf]
        %v595 = vld [vmem:[%s469 + $0x60] sm:$0xf]
        %v596 = vld [vmem:[%s469 + $0x64] sm:$0xf]
        %v597 = vld [vmem:[%s469 + $0x68] sm:$0xf]
        %v598 = vld [vmem:[%s469 + $0x6c] sm:$0xf]
        %v599 = vld [vmem:[%s469 + $0x70] sm:$0xf]
        %v600 = vld [vmem:[%s469 + $0x74] sm:$0xf]
        %v601 = vld [vmem:[%s469 + $0x78] sm:$0xf]
        %v602 = vld [vmem:[%s469 + $0x7c] sm:$0xf]
        %v603 = vunpack.c.l.bf16 %v571
        %v604 = vunpack.c.l.bf16 %v572
        %v605 = vunpack.c.l.bf16 %v573
        %v606 = vunpack.c.l.bf16 %v574
        %v607 = vunpack.c.l.bf16 %v575
        %v608 = vunpack.c.l.bf16 %v576
        %v609 = vunpack.c.l.bf16 %v577
        %v610 = vunpack.c.l.bf16 %v578
        %v611 = vunpack.c.l.bf16 %v579
        %v612 = vunpack.c.l.bf16 %v580
        %v613 = vunpack.c.l.bf16 %v581
        %v614 = vunpack.c.l.bf16 %v582
        %v615 = vunpack.c.l.bf16 %v583
        %v616 = vunpack.c.l.bf16 %v584
        %v617 = vunpack.c.l.bf16 %v585
        %v618 = vunpack.c.l.bf16 %v586
        %v619 = vunpack.c.l.bf16 %v587
        %v620 = vunpack.c.l.bf16 %v588
        %v621 = vunpack.c.l.bf16 %v589
        %v622 = vunpack.c.l.bf16 %v590
        %v623 = vunpack.c.l.bf16 %v591
        %v624 = vunpack.c.l.bf16 %v592
        %v625 = vunpack.c.l.bf16 %v593
        %v626 = vunpack.c.l.bf16 %v594
        %v627 = vunpack.c.l.bf16 %v595
        %v628 = vunpack.c.l.bf16 %v596
        %v629 = vunpack.c.l.bf16 %v597
        %v630 = vunpack.c.l.bf16 %v598
        %v631 = vunpack.c.l.bf16 %v599
        %v632 = vunpack.c.l.bf16 %v600
        %v633 = vunpack.c.l.bf16 %v601
        %v634 = vunpack.c.l.bf16 %v602
        %v635 = vld [vmem:[%s478] sm:$0xf]
        %v636 = vunpack.c.l.bf16 %v635
        %v637 = vld [vmem:[#allocation10] sm:$0xff]
        %v638 = vld [vmem:[#allocation10 + $0x8] sm:$0xff]
        %vm639 = vcmask 64512
        %v641 = vsel %vm639, %v637, 0
        %v644 = vsel %vm639, %v638, 0
        %646 = vmatprep.subr.mxu0 0.0
        %647 = vmatpush1.msra.mxu0 %v636
        %648 = vmatprep.subr.mxu0 0.0
        %649 = vmatpush1.msra.mxu0 0.0
        %650 = vmatprep.subr.mxu0 0.0
        %651 = vmatpush1.msra.mxu0 0.0
        %652 = vmatprep.subr.mxu0 0.0
        %653 = vmatpush1.msra.mxu0 0.0
        %654 = vmatprep.subr.mxu0 0.0
        %655 = vmatpush1.msra.mxu0 0.0
        %656 = vmatprep.subr.mxu0 0.0
        %657 = vmatpush1.msra.mxu0 0.0
        %658 = vmatprep.subr.mxu0 0.0
        %659 = vmatpush1.msra.mxu0 0.0
        %660 = vmatprep.subr.mxu0 0.0
        %661 = vmatpush1.msra.mxu0 0.0
        %662 = vmatprep.subr.mxu0 0.0
        %663 = vmatpush1.msra.mxu0 0.0
        %664 = vmatprep.subr.mxu0 0.0
        %665 = vmatpush1.msra.mxu0 0.0
        %666 = vmatprep.subr.mxu0 0.0
        %667 = vmatpush1.msra.mxu0 0.0
        %668 = vmatprep.subr.mxu0 0.0
        %669 = vmatpush1.msra.mxu0 0.0
        %670 = vmatprep.subr.mxu0 0.0
        %671 = vmatpush1.msra.mxu0 0.0
        %672 = vmatprep.subr.mxu0 0.0
        %673 = vmatpush1.msra.mxu0 0.0
        %674 = vmatprep.subr.mxu0 0.0
        %675 = vmatpush1.msra.mxu0 0.0
        %676 = vmatprep.subr.mxu0 0.0
        %677 = vmatpush1.msra.mxu0 0.0
        %678 = vmatprep.subr.mxu0 0.0
        %679 = vmatpush1.msra.mxu0 0.0
        %680 = vmatprep.subr.mxu0 0.0
        %681 = vmatpush1.msra.mxu0 0.0
        %682 = vmatprep.subr.mxu0 0.0
        %683 = vmatpush1.msra.mxu0 0.0
        %684 = vmatprep.subr.mxu0 0.0
        %685 = vmatpush1.msra.mxu0 0.0
        %686 = vmatprep.subr.mxu0 0.0
        %687 = vmatpush1.msra.mxu0 0.0
        %688 = vmatprep.subr.mxu0 0.0
        %689 = vmatpush1.msra.mxu0 0.0
        %690 = vmatprep.subr.mxu0 0.0
        %691 = vmatpush1.msra.mxu0 0.0
        %692 = vmatprep.subr.mxu0 0.0
        %693 = vmatpush1.msra.mxu0 0.0
        %694 = vmatprep.subr.mxu0 0.0
        %695 = vmatpush1.msra.mxu0 0.0
        %696 = vmatprep.subr.mxu0 0.0
        %697 = vmatpush1.msra.mxu0 0.0
        %698 = vmatprep.subr.mxu0 0.0
        %699 = vmatpush1.msra.mxu0 0.0
        %700 = vmatprep.subr.mxu0 0.0
        %701 = vmatpush1.msra.mxu0 0.0
        %702 = vmatprep.subr.mxu0 0.0
        %703 = vmatpush1.msra.mxu0 0.0
        %704 = vmatprep.subr.mxu0 0.0
        %705 = vmatpush1.msra.mxu0 0.0
        %706 = vmatprep.subr.mxu0 0.0
        %707 = vmatpush1.msra.mxu0 0.0
        %708 = vmatprep.subr.mxu0 0.0
        %709 = vmatpush1.msra.mxu0 0.0
        %710 = vmatprep.mubr.f32.mxu0 0.0
        %711 = vmatmul.mubr.f32.gmra.mrb[0].mxu0 %v641
        %v712 = vpop.f32.mrb[0].mxu0
        %v713 = vadd.f32 0.0, %v712
        %v714 = vpop.f32.mrb[0].mxu0
        %715 = vmatprep.mubr.f32.mxu0 0.0
        %716 = vmatmul.mubr.f32.gmra.mrb[0].mxu0 %v644
        %v717 = vpop.f32.mrb[0].mxu0
        %v718 = vadd.f32 0.0, %v717
        %v719 = vpop.f32.mrb[0].mxu0
        %720 = vdwg.mxu0
        %723 = vrot.lane.b32.xlu0 %v713, 112
        %v724 = vpop.permute.xlu0 %723
        %725 = vrot.lane.b32.xlu0 %v718, 112
        %v726 = vpop.permute.xlu0 %725
        %729 = vrot.lane.b32.xlu0 %v713, 96
        %v730 = vpop.permute.xlu0 %729
        %731 = vrot.lane.b32.xlu0 %v718, 96
        %v732 = vpop.permute.xlu0 %731
        %735 = vrot.lane.b32.xlu0 %v713, 80
        %v736 = vpop.permute.xlu0 %735
        %737 = vrot.lane.b32.xlu0 %v718, 80
        %v738 = vpop.permute.xlu0 %737
        %741 = vrot.lane.b32.xlu0 %v713, 64
        %v742 = vpop.permute.xlu0 %741
        %743 = vrot.lane.b32.xlu0 %v718, 64
        %v744 = vpop.permute.xlu0 %743
        %747 = vrot.lane.b32.xlu0 %v713, 48
        %v748 = vpop.permute.xlu0 %747
        %749 = vrot.lane.b32.xlu0 %v718, 48
        %v750 = vpop.permute.xlu0 %749
        %753 = vrot.lane.b32.xlu0 %v713, 32
        %v754 = vpop.permute.xlu0 %753
        %755 = vrot.lane.b32.xlu0 %v718, 32
        %v756 = vpop.permute.xlu0 %755
        %759 = vrot.lane.b32.xlu0 %v713, 16
        %v760 = vpop.permute.xlu0 %759
        %761 = vrot.lane.b32.xlu0 %v718, 16
        %v762 = vpop.permute.xlu0 %761
        %v765 = vcombine.low %v713, %v730
        %v766 = vcombine.high %v713, %v730
        %v768 = vunpack.c.l.s4 1983009808
        %v769 = vunpack.c.0.s8 %v768
        %v770 = vlaneseq
        %v771 = vshrl.u32 %v770, 7
        %v772 = vsub.s32 %v769, %v771
        %v773 = vrot.slane %v765, %v772
        %v775 = vunpack.c.l.s4 1983009808
        %v776 = vunpack.c.0.s8 %v775
        %v777 = vlaneseq
        %v778 = vshrl.u32 %v777, 7
        %v779 = vsub.s32 %v776, %v778
        %v780 = vrot.slane %v766, %v779
        %v781 = vcombine.low %v724, %v736
        %v782 = vcombine.high %v724, %v736
        %v784 = vunpack.c.l.s4 1983009808
        %v785 = vunpack.c.0.s8 %v784
        %v786 = vlaneseq
        %v787 = vshrl.u32 %v786, 7
        %v788 = vsub.s32 %v785, %v787
        %v789 = vrot.slane %v781, %v788
        %v791 = vunpack.c.l.s4 1983009808
        %v792 = vunpack.c.0.s8 %v791
        %v793 = vlaneseq
        %v794 = vshrl.u32 %v793, 7
        %v795 = vsub.s32 %v792, %v794
        %v796 = vrot.slane %v782, %v795
        %v797 = vcombine.low %v742, %v754
        %v798 = vcombine.high %v742, %v754
        %v800 = vunpack.c.l.s4 1983009808
        %v801 = vunpack.c.0.s8 %v800
        %v802 = vlaneseq
        %v803 = vshrl.u32 %v802, 7
        %v804 = vsub.s32 %v801, %v803
        %v805 = vrot.slane %v797, %v804
        %v807 = vunpack.c.l.s4 1983009808
        %v808 = vunpack.c.0.s8 %v807
        %v809 = vlaneseq
        %v810 = vshrl.u32 %v809, 7
        %v811 = vsub.s32 %v808, %v810
        %v812 = vrot.slane %v798, %v811
        %v813 = vcombine.low %v748, %v760
        %v814 = vcombine.high %v748, %v760
        %v816 = vunpack.c.l.s4 1983009808
        %v817 = vunpack.c.0.s8 %v816
        %v818 = vlaneseq
        %v819 = vshrl.u32 %v818, 7
        %v820 = vsub.s32 %v817, %v819
        %v821 = vrot.slane %v813, %v820
        %v823 = vunpack.c.l.s4 1983009808
        %v824 = vunpack.c.0.s8 %v823
        %v825 = vlaneseq
        %v826 = vshrl.u32 %v825, 7
        %v827 = vsub.s32 %v824, %v826
        %v828 = vrot.slane %v814, %v827
        %v829 = vcombine.low %v773, %v789
        %v830 = vcombine.high %v773, %v789
        %v832 = vunpack.c.l.s4 1934713408
        %v833 = vunpack.c.0.s8 %v832
        %v834 = vlaneseq
        %v835 = vshrl.u32 %v834, 7
        %v836 = vsub.s32 %v833, %v835
        %v837 = vrot.slane %v829, %v836
        %v839 = vunpack.c.l.s4 1934713408
        %v840 = vunpack.c.0.s8 %v839
        %v841 = vlaneseq
        %v842 = vshrl.u32 %v841, 7
        %v843 = vsub.s32 %v840, %v842
        %v844 = vrot.slane %v830, %v843
        %v845 = vcombine.low %v780, %v796
        %v846 = vcombine.high %v780, %v796
        %v848 = vunpack.c.l.s4 1934713408
        %v849 = vunpack.c.0.s8 %v848
        %v850 = vlaneseq
        %v851 = vshrl.u32 %v850, 7
        %v852 = vsub.s32 %v849, %v851
        %v853 = vrot.slane %v845, %v852
        %v855 = vunpack.c.l.s4 1934713408
        %v856 = vunpack.c.0.s8 %v855
        %v857 = vlaneseq
        %v858 = vshrl.u32 %v857, 7
        %v859 = vsub.s32 %v856, %v858
        %v860 = vrot.slane %v846, %v859
        %v861 = vcombine.low %v805, %v821
        %v862 = vcombine.high %v805, %v821
        %v864 = vunpack.c.l.s4 1934713408
        %v865 = vunpack.c.0.s8 %v864
        %v866 = vlaneseq
        %v867 = vshrl.u32 %v866, 7
        %v868 = vsub.s32 %v865, %v867
        %v869 = vrot.slane %v861, %v868
        %v871 = vunpack.c.l.s4 1934713408
        %v872 = vunpack.c.0.s8 %v871
        %v873 = vlaneseq
        %v874 = vshrl.u32 %v873, 7
        %v875 = vsub.s32 %v872, %v874
        %v876 = vrot.slane %v862, %v875
        %v877 = vcombine.low %v812, %v828
        %v878 = vcombine.high %v812, %v828
        %v880 = vunpack.c.l.s4 1934713408
        %v881 = vunpack.c.0.s8 %v880
        %v882 = vlaneseq
        %v883 = vshrl.u32 %v882, 7
        %v884 = vsub.s32 %v881, %v883
        %v885 = vrot.slane %v877, %v884
        %v887 = vunpack.c.l.s4 1934713408
        %v888 = vunpack.c.0.s8 %v887
        %v889 = vlaneseq
        %v890 = vshrl.u32 %v889, 7
        %v891 = vsub.s32 %v888, %v890
        %v892 = vrot.slane %v878, %v891
        %v893 = vcombine.low %v837, %v869
        %v894 = vcombine.high %v837, %v869
        %v895 = vcombine.low %v844, %v876
        %v896 = vcombine.high %v844, %v876
        %v897 = vcombine.low %v853, %v885
        %v898 = vcombine.high %v853, %v885
        %v899 = vcombine.low %v860, %v892
        %v900 = vcombine.high %v860, %v892
        %v901 = vcombine.low %v718, %v732
        %v902 = vcombine.high %v718, %v732
        %v904 = vunpack.c.l.s4 1983009808
        %v905 = vunpack.c.0.s8 %v904
        %v906 = vlaneseq
        %v907 = vshrl.u32 %v906, 7
        %v908 = vsub.s32 %v905, %v907
        %v909 = vrot.slane %v901, %v908
        %v911 = vunpack.c.l.s4 1983009808
        %v912 = vunpack.c.0.s8 %v911
        %v913 = vlaneseq
        %v914 = vshrl.u32 %v913, 7
        %v915 = vsub.s32 %v912, %v914
        %v916 = vrot.slane %v902, %v915
        %v917 = vcombine.low %v726, %v738
        %v918 = vcombine.high %v726, %v738
        %v920 = vunpack.c.l.s4 1983009808
        %v921 = vunpack.c.0.s8 %v920
        %v922 = vlaneseq
        %v923 = vshrl.u32 %v922, 7
        %v924 = vsub.s32 %v921, %v923
        %v925 = vrot.slane %v917, %v924
        %v927 = vunpack.c.l.s4 1983009808
        %v928 = vunpack.c.0.s8 %v927
        %v929 = vlaneseq
        %v930 = vshrl.u32 %v929, 7
        %v931 = vsub.s32 %v928, %v930
        %v932 = vrot.slane %v918, %v931
        %v933 = vcombine.low %v744, %v756
        %v934 = vcombine.high %v744, %v756
        %v936 = vunpack.c.l.s4 1983009808
        %v937 = vunpack.c.0.s8 %v936
        %v938 = vlaneseq
        %v939 = vshrl.u32 %v938, 7
        %v940 = vsub.s32 %v937, %v939
        %v941 = vrot.slane %v933, %v940
        %v943 = vunpack.c.l.s4 1983009808
        %v944 = vunpack.c.0.s8 %v943
        %v945 = vlaneseq
        %v946 = vshrl.u32 %v945, 7
        %v947 = vsub.s32 %v944, %v946
        %v948 = vrot.slane %v934, %v947
        %v949 = vcombine.low %v750, %v762
        %v950 = vcombine.high %v750, %v762
        %v952 = vunpack.c.l.s4 1983009808
        %v953 = vunpack.c.0.s8 %v952
        %v954 = vlaneseq
        %v955 = vshrl.u32 %v954, 7
        %v956 = vsub.s32 %v953, %v955
        %v957 = vrot.slane %v949, %v956
        %v959 = vunpack.c.l.s4 1983009808
        %v960 = vunpack.c.0.s8 %v959
        %v961 = vlaneseq
        %v962 = vshrl.u32 %v961, 7
        %v963 = vsub.s32 %v960, %v962
        %v964 = vrot.slane %v950, %v963
        %v965 = vcombine.low %v909, %v925
        %v966 = vcombine.high %v909, %v925
        %v968 = vunpack.c.l.s4 1934713408
        %v969 = vunpack.c.0.s8 %v968
        %v970 = vlaneseq
        %v971 = vshrl.u32 %v970, 7
        %v972 = vsub.s32 %v969, %v971
        %v973 = vrot.slane %v965, %v972
        %v975 = vunpack.c.l.s4 1934713408
        %v976 = vunpack.c.0.s8 %v975
        %v977 = vlaneseq
        %v978 = vshrl.u32 %v977, 7
        %v979 = vsub.s32 %v976, %v978
        %v980 = vrot.slane %v966, %v979
        %v981 = vcombine.low %v916, %v932
        %v982 = vcombine.high %v916, %v932
        %v984 = vunpack.c.l.s4 1934713408
        %v985 = vunpack.c.0.s8 %v984
        %v986 = vlaneseq
        %v987 = vshrl.u32 %v986, 7
        %v988 = vsub.s32 %v985, %v987
        %v989 = vrot.slane %v981, %v988
        %v991 = vunpack.c.l.s4 1934713408
        %v992 = vunpack.c.0.s8 %v991
        %v993 = vlaneseq
        %v994 = vshrl.u32 %v993, 7
        %v995 = vsub.s32 %v992, %v994
        %v996 = vrot.slane %v982, %v995
        %v997 = vcombine.low %v941, %v957
        %v998 = vcombine.high %v941, %v957
        %v1000 = vunpack.c.l.s4 1934713408
        %v1001 = vunpack.c.0.s8 %v1000
        %v1002 = vlaneseq
        %v1003 = vshrl.u32 %v1002, 7
        %v1004 = vsub.s32 %v1001, %v1003
        %v1005 = vrot.slane %v997, %v1004
        %v1007 = vunpack.c.l.s4 1934713408
        %v1008 = vunpack.c.0.s8 %v1007
        %v1009 = vlaneseq
        %v1010 = vshrl.u32 %v1009, 7
        %v1011 = vsub.s32 %v1008, %v1010
        %v1012 = vrot.slane %v998, %v1011
        %v1013 = vcombine.low %v948, %v964
        %v1014 = vcombine.high %v948, %v964
        %v1016 = vunpack.c.l.s4 1934713408
        %v1017 = vunpack.c.0.s8 %v1016
        %v1018 = vlaneseq
        %v1019 = vshrl.u32 %v1018, 7
        %v1020 = vsub.s32 %v1017, %v1019
        %v1021 = vrot.slane %v1013, %v1020
        %v1023 = vunpack.c.l.s4 1934713408
        %v1024 = vunpack.c.0.s8 %v1023
        %v1025 = vlaneseq
        %v1026 = vshrl.u32 %v1025, 7
        %v1027 = vsub.s32 %v1024, %v1026
        %v1028 = vrot.slane %v1014, %v1027
        %v1029 = vcombine.low %v973, %v1005
        %v1030 = vcombine.high %v973, %v1005
        %v1031 = vcombine.low %v980, %v1012
        %v1032 = vcombine.high %v980, %v1012
        %v1033 = vcombine.low %v989, %v1021
        %v1034 = vcombine.high %v989, %v1021
        %v1035 = vcombine.low %v996, %v1028
        %v1036 = vcombine.high %v996, %v1028
        %v1037 = vld [vmem:[#allocation11] sm:$0xff]
        %v1038 = vld [vmem:[#allocation11 + $0x8] sm:$0xff]
        %v1040 = vsel %vm639, %v1037, 0
        %v1043 = vsel %vm639, %v1038, 0
        %1045 = vmatprep.subr.mxu0 0.0
        %1046 = vmatpush1.msra.mxu0 %v893
        %1047 = vmatprep.subr.mxu0 0.0
        %1048 = vmatpush1.msra.mxu0 0.0
        %1049 = vmatprep.subr.mxu0 0.0
        %1050 = vmatpush1.msra.mxu0 0.0
        %1051 = vmatprep.subr.mxu0 0.0
        %1052 = vmatpush1.msra.mxu0 0.0
        %1053 = vmatprep.subr.mxu0 0.0
        %1054 = vmatpush1.msra.mxu0 0.0
        %1055 = vmatprep.subr.mxu0 0.0
        %1056 = vmatpush1.msra.mxu0 0.0
        %1057 = vmatprep.subr.mxu0 0.0
        %1058 = vmatpush1.msra.mxu0 0.0
        %1059 = vmatprep.subr.mxu0 0.0
        %1060 = vmatpush1.msra.mxu0 0.0
        %1061 = vmatprep.subr.mxu0 0.0
        %1062 = vmatpush1.msra.mxu0 0.0
        %1063 = vmatprep.subr.mxu0 0.0
        %1064 = vmatpush1.msra.mxu0 0.0
        %1065 = vmatprep.subr.mxu0 0.0
        %1066 = vmatpush1.msra.mxu0 0.0
        %1067 = vmatprep.subr.mxu0 0.0
        %1068 = vmatpush1.msra.mxu0 0.0
        %1069 = vmatprep.subr.mxu0 0.0
        %1070 = vmatpush1.msra.mxu0 0.0
        %1071 = vmatprep.subr.mxu0 0.0
        %1072 = vmatpush1.msra.mxu0 0.0
        %1073 = vmatprep.subr.mxu0 0.0
        %1074 = vmatpush1.msra.mxu0 0.0
        %1075 = vmatprep.subr.mxu0 0.0
        %1076 = vmatpush1.msra.mxu0 0.0
        %1077 = vmatprep.subr.mxu0 0.0
        %1078 = vmatpush1.msra.mxu0 0.0
        %1079 = vmatprep.subr.mxu0 0.0
        %1080 = vmatpush1.msra.mxu0 0.0
        %1081 = vmatprep.subr.mxu0 0.0
        %1082 = vmatpush1.msra.mxu0 0.0
        %1083 = vmatprep.subr.mxu0 0.0
        %1084 = vmatpush1.msra.mxu0 0.0
        %1085 = vmatprep.subr.mxu0 0.0
        %1086 = vmatpush1.msra.mxu0 0.0
        %1087 = vmatprep.subr.mxu0 0.0
        %1088 = vmatpush1.msra.mxu0 0.0
        %1089 = vmatprep.subr.mxu0 0.0
        %1090 = vmatpush1.msra.mxu0 0.0
        %1091 = vmatprep.subr.mxu0 0.0
        %1092 = vmatpush1.msra.mxu0 0.0
        %1093 = vmatprep.subr.mxu0 0.0
        %1094 = vmatpush1.msra.mxu0 0.0
        %1095 = vmatprep.subr.mxu0 0.0
        %1096 = vmatpush1.msra.mxu0 0.0
        %1097 = vmatprep.subr.mxu0 0.0
        %1098 = vmatpush1.msra.mxu0 0.0
        %1099 = vmatprep.subr.mxu0 0.0
        %1100 = vmatpush1.msra.mxu0 0.0
        %1101 = vmatprep.subr.mxu0 0.0
        %1102 = vmatpush1.msra.mxu0 0.0
        %1103 = vmatprep.subr.mxu0 0.0
        %1104 = vmatpush1.msra.mxu0 0.0
        %1105 = vmatprep.subr.mxu0 0.0
        %1106 = vmatpush1.msra.mxu0 0.0
        %1107 = vmatprep.subr.mxu0 0.0
        %1108 = vmatpush1.msra.mxu0 0.0
        %1109 = vmatprep.mubr.f32.mxu0 0.0
        %1110 = vmatmul.mubr.f32.gmra.mrb[0].mxu0 %v1040
        %v1111 = vpop.f32.mrb[0].mxu0
        %v1112 = vadd.f32 0.0, %v1111
        %v1113 = vpop.f32.mrb[0].mxu0
        %1114 = vmatprep.mubr.f32.mxu0 0.0
        %1115 = vmatmul.mubr.f32.gmra.mrb[0].mxu0 %v1043
        %v1116 = vpop.f32.mrb[0].mxu0
        %v1117 = vadd.f32 0.0, %v1116
        %v1118 = vpop.f32.mrb[0].mxu0
        %1119 = vdwg.mxu0
        %1120 = vmatprep.subr.mxu0 0.0
        %1121 = vmatpush1.msra.mxu0 %v894
        %1122 = vmatprep.subr.mxu0 0.0
        %1123 = vmatpush1.msra.mxu0 0.0
        %1124 = vmatprep.subr.mxu0 0.0
        %1125 = vmatpush1.msra.mxu0 0.0
        %1126 = vmatprep.subr.mxu0 0.0
        %1127 = vmatpush1.msra.mxu0 0.0
        %1128 = vmatprep.subr.mxu0 0.0
        %1129 = vmatpush1.msra.mxu0 0.0
        %1130 = vmatprep.subr.mxu0 0.0
        %1131 = vmatpush1.msra.mxu0 0.0
        %1132 = vmatprep.subr.mxu0 0.0
        %1133 = vmatpush1.msra.mxu0 0.0
        %1134 = vmatprep.subr.mxu0 0.0
        %1135 = vmatpush1.msra.mxu0 0.0
        %1136 = vmatprep.subr.mxu0 0.0
        %1137 = vmatpush1.msra.mxu0 0.0
        %1138 = vmatprep.subr.mxu0 0.0
        %1139 = vmatpush1.msra.mxu0 0.0
        %1140 = vmatprep.subr.mxu0 0.0
        %1141 = vmatpush1.msra.mxu0 0.0
        %1142 = vmatprep.subr.mxu0 0.0
        %1143 = vmatpush1.msra.mxu0 0.0
        %1144 = vmatprep.subr.mxu0 0.0
        %1145 = vmatpush1.msra.mxu0 0.0
        %1146 = vmatprep.subr.mxu0 0.0
        %1147 = vmatpush1.msra.mxu0 0.0
        %1148 = vmatprep.subr.mxu0 0.0
        %1149 = vmatpush1.msra.mxu0 0.0
        %1150 = vmatprep.subr.mxu0 0.0
        %1151 = vmatpush1.msra.mxu0 0.0
        %1152 = vmatprep.subr.mxu0 0.0
        %1153 = vmatpush1.msra.mxu0 0.0
        %1154 = vmatprep.subr.mxu0 0.0
        %1155 = vmatpush1.msra.mxu0 0.0
        %1156 = vmatprep.subr.mxu0 0.0
        %1157 = vmatpush1.msra.mxu0 0.0
        %1158 = vmatprep.subr.mxu0 0.0
        %1159 = vmatpush1.msra.mxu0 0.0
        %1160 = vmatprep.subr.mxu0 0.0
        %1161 = vmatpush1.msra.mxu0 0.0
        %1162 = vmatprep.subr.mxu0 0.0
        %1163 = vmatpush1.msra.mxu0 0.0
        %1164 = vmatprep.subr.mxu0 0.0
        %1165 = vmatpush1.msra.mxu0 0.0
        %1166 = vmatprep.subr.mxu0 0.0
        %1167 = vmatpush1.msra.mxu0 0.0
        %1168 = vmatprep.subr.mxu0 0.0
        %1169 = vmatpush1.msra.mxu0 0.0
        %1170 = vmatprep.subr.mxu0 0.0
        %1171 = vmatpush1.msra.mxu0 0.0
        %1172 = vmatprep.subr.mxu0 0.0
        %1173 = vmatpush1.msra.mxu0 0.0
        %1174 = vmatprep.subr.mxu0 0.0
        %1175 = vmatpush1.msra.mxu0 0.0
        %1176 = vmatprep.subr.mxu0 0.0
        %1177 = vmatpush1.msra.mxu0 0.0
        %1178 = vmatprep.subr.mxu0 0.0
        %1179 = vmatpush1.msra.mxu0 0.0
        %1180 = vmatprep.subr.mxu0 0.0
        %1181 = vmatpush1.msra.mxu0 0.0
        %1182 = vmatprep.subr.mxu0 0.0
        %1183 = vmatpush1.msra.mxu0 0.0
        %1184 = vmatprep.mubr.f32.mxu0 0.0
        %1185 = vmatmul.mubr.f32.gmra.mrb[0].mxu0 %v1040
        %v1186 = vpop.f32.mrb[0].mxu0
        %v1187 = vadd.f32 0.0, %v1186
        %v1188 = vpop.f32.mrb[0].mxu0
        %1189 = vmatprep.mubr.f32.mxu0 0.0
        %1190 = vmatmul.mubr.f32.gmra.mrb[0].mxu0 %v1043
        %v1191 = vpop.f32.mrb[0].mxu0
        %v1192 = vadd.f32 0.0, %v1191
        %v1193 = vpop.f32.mrb[0].mxu0
        %1194 = vdwg.mxu0
        %1195 = vmatprep.subr.mxu0 0.0
        %1196 = vmatpush1.msra.mxu0 %v895
        %1197 = vmatprep.subr.mxu0 0.0
        %1198 = vmatpush1.msra.mxu0 0.0
        %1199 = vmatprep.subr.mxu0 0.0
        %1200 = vmatpush1.msra.mxu0 0.0
        %1201 = vmatprep.subr.mxu0 0.0
        %1202 = vmatpush1.msra.mxu0 0.0
        %1203 = vmatprep.subr.mxu0 0.0
        %1204 = vmatpush1.msra.mxu0 0.0
        %1205 = vmatprep.subr.mxu0 0.0
        %1206 = vmatpush1.msra.mxu0 0.0
        %1207 = vmatprep.subr.mxu0 0.0
        %1208 = vmatpush1.msra.mxu0 0.0
        %1209 = vmatprep.subr.mxu0 0.0
        %1210 = vmatpush1.msra.mxu0 0.0
        %1211 = vmatprep.subr.mxu0 0.0
        %1212 = vmatpush1.msra.mxu0 0.0
        %1213 = vmatprep.subr.mxu0 0.0
        %1214 = vmatpush1.msra.mxu0 0.0
        %1215 = vmatprep.subr.mxu0 0.0
        %1216 = vmatpush1.msra.mxu0 0.0
        %1217 = vmatprep.subr.mxu0 0.0
        %1218 = vmatpush1.msra.mxu0 0.0
        %1219 = vmatprep.subr.mxu0 0.0
        %1220 = vmatpush1.msra.mxu0 0.0
        %1221 = vmatprep.subr.mxu0 0.0
        %1222 = vmatpush1.msra.mxu0 0.0
        %1223 = vmatprep.subr.mxu0 0.0
        %1224 = vmatpush1.msra.mxu0 0.0
        %1225 = vmatprep.subr.mxu0 0.0
        %1226 = vmatpush1.msra.mxu0 0.0
        %1227 = vmatprep.subr.mxu0 0.0
        %1228 = vmatpush1.msra.mxu0 0.0
        %1229 = vmatprep.subr.mxu0 0.0
        %1230 = vmatpush1.msra.mxu0 0.0
        %1231 = vmatprep.subr.mxu0 0.0
        %1232 = vmatpush1.msra.mxu0 0.0
        %1233 = vmatprep.subr.mxu0 0.0
        %1234 = vmatpush1.msra.mxu0 0.0
        %1235 = vmatprep.subr.mxu0 0.0
        %1236 = vmatpush1.msra.mxu0 0.0
        %1237 = vmatprep.subr.mxu0 0.0
        %1238 = vmatpush1.msra.mxu0 0.0
        %1239 = vmatprep.subr.mxu0 0.0
        %1240 = vmatpush1.msra.mxu0 0.0
        %1241 = vmatprep.subr.mxu0 0.0
        %1242 = vmatpush1.msra.mxu0 0.0
        %1243 = vmatprep.subr.mxu0 0.0
        %1244 = vmatpush1.msra.mxu0 0.0
        %1245 = vmatprep.subr.mxu0 0.0
        %1246 = vmatpush1.msra.mxu0 0.0
        %1247 = vmatprep.subr.mxu0 0.0
        %1248 = vmatpush1.msra.mxu0 0.0
        %1249 = vmatprep.subr.mxu0 0.0
        %1250 = vmatpush1.msra.mxu0 0.0
        %1251 = vmatprep.subr.mxu0 0.0
        %1252 = vmatpush1.msra.mxu0 0.0
        %1253 = vmatprep.subr.mxu0 0.0
        %1254 = vmatpush1.msra.mxu0 0.0
        %1255 = vmatprep.subr.mxu0 0.0
        %1256 = vmatpush1.msra.mxu0 0.0
        %1257 = vmatprep.subr.mxu0 0.0
        %1258 = vmatpush1.msra.mxu0 0.0
        %1259 = vmatprep.mubr.f32.mxu0 0.0
        %1260 = vmatmul.mubr.f32.gmra.mrb[0].mxu0 %v1040
        %v1261 = vpop.f32.mrb[0].mxu0
        %v1262 = vadd.f32 0.0, %v1261
        %v1263 = vpop.f32.mrb[0].mxu0
        %1264 = vmatprep.mubr.f32.mxu0 0.0
        %1265 = vmatmul.mubr.f32.gmra.mrb[0].mxu0 %v1043
        %v1266 = vpop.f32.mrb[0].mxu0
        %v1267 = vadd.f32 0.0, %v1266
        %v1268 = vpop.f32.mrb[0].mxu0
        %1269 = vdwg.mxu0
        %1270 = vmatprep.subr.mxu0 0.0
        %1271 = vmatpush1.msra.mxu0 %v896
        %1272 = vmatprep.subr.mxu0 0.0
        %1273 = vmatpush1.msra.mxu0 0.0
        %1274 = vmatprep.subr.mxu0 0.0
        %1275 = vmatpush1.msra.mxu0 0.0
        %1276 = vmatprep.subr.mxu0 0.0
        %1277 = vmatpush1.msra.mxu0 0.0
        %1278 = vmatprep.subr.mxu0 0.0
        %1279 = vmatpush1.msra.mxu0 0.0
        %1280 = vmatprep.subr.mxu0 0.0
        %1281 = vmatpush1.msra.mxu0 0.0
        %1282 = vmatprep.subr.mxu0 0.0
        %1283 = vmatpush1.msra.mxu0 0.0
        %1284 = vmatprep.subr.mxu0 0.0
        %1285 = vmatpush1.msra.mxu0 0.0
        %1286 = vmatprep.subr.mxu0 0.0
        %1287 = vmatpush1.msra.mxu0 0.0
        %1288 = vmatprep.subr.mxu0 0.0
        %1289 = vmatpush1.msra.mxu0 0.0
        %1290 = vmatprep.subr.mxu0 0.0
        %1291 = vmatpush1.msra.mxu0 0.0
        %1292 = vmatprep.subr.mxu0 0.0
        %1293 = vmatpush1.msra.mxu0 0.0
        %1294 = vmatprep.subr.mxu0 0.0
        %1295 = vmatpush1.msra.mxu0 0.0
        %1296 = vmatprep.subr.mxu0 0.0
        %1297 = vmatpush1.msra.mxu0 0.0
        %1298 = vmatprep.subr.mxu0 0.0
        %1299 = vmatpush1.msra.mxu0 0.0
        %1300 = vmatprep.subr.mxu0 0.0
        %1301 = vmatpush1.msra.mxu0 0.0
        %1302 = vmatprep.subr.mxu0 0.0
        %1303 = vmatpush1.msra.mxu0 0.0
        %1304 = vmatprep.subr.mxu0 0.0
        %1305 = vmatpush1.msra.mxu0 0.0
        %1306 = vmatprep.subr.mxu0 0.0
        %1307 = vmatpush1.msra.mxu0 0.0
        %1308 = vmatprep.subr.mxu0 0.0
        %1309 = vmatpush1.msra.mxu0 0.0
        %1310 = vmatprep.subr.mxu0 0.0
        %1311 = vmatpush1.msra.mxu0 0.0
        %1312 = vmatprep.subr.mxu0 0.0
        %1313 = vmatpush1.msra.mxu0 0.0
        %1314 = vmatprep.subr.mxu0 0.0
        %1315 = vmatpush1.msra.mxu0 0.0
        %1316 = vmatprep.subr.mxu0 0.0
        %1317 = vmatpush1.msra.mxu0 0.0
        %1318 = vmatprep.subr.mxu0 0.0
        %1319 = vmatpush1.msra.mxu0 0.0
        %1320 = vmatprep.subr.mxu0 0.0
        %1321 = vmatpush1.msra.mxu0 0.0
        %1322 = vmatprep.subr.mxu0 0.0
        %1323 = vmatpush1.msra.mxu0 0.0
        %1324 = vmatprep.subr.mxu0 0.0
        %1325 = vmatpush1.msra.mxu0 0.0
        %1326 = vmatprep.subr.mxu0 0.0
        %1327 = vmatpush1.msra.mxu0 0.0
        %1328 = vmatprep.subr.mxu0 0.0
        %1329 = vmatpush1.msra.mxu0 0.0
        %1330 = vmatprep.subr.mxu0 0.0
        %1331 = vmatpush1.msra.mxu0 0.0
        %1332 = vmatprep.subr.mxu0 0.0
        %1333 = vmatpush1.msra.mxu0 0.0
        %1334 = vmatprep.mubr.f32.mxu0 0.0
        %1335 = vmatmul.mubr.f32.gmra.mrb[0].mxu0 %v1040
        %v1336 = vpop.f32.mrb[0].mxu0
        %v1337 = vadd.f32 0.0, %v1336
        %v1338 = vpop.f32.mrb[0].mxu0
        %1339 = vmatprep.mubr.f32.mxu0 0.0
        %1340 = vmatmul.mubr.f32.gmra.mrb[0].mxu0 %v1043
        %v1341 = vpop.f32.mrb[0].mxu0
        %v1342 = vadd.f32 0.0, %v1341
        %v1343 = vpop.f32.mrb[0].mxu0
        %1344 = vdwg.mxu0
        %1345 = vmatprep.subr.mxu0 0.0
        %1346 = vmatpush1.msra.mxu0 %v897
        %1347 = vmatprep.subr.mxu0 0.0
        %1348 = vmatpush1.msra.mxu0 0.0
        %1349 = vmatprep.subr.mxu0 0.0
        %1350 = vmatpush1.msra.mxu0 0.0
        %1351 = vmatprep.subr.mxu0 0.0
        %1352 = vmatpush1.msra.mxu0 0.0
        %1353 = vmatprep.subr.mxu0 0.0
        %1354 = vmatpush1.msra.mxu0 0.0
        %1355 = vmatprep.subr.mxu0 0.0
        %1356 = vmatpush1.msra.mxu0 0.0
        %1357 = vmatprep.subr.mxu0 0.0
        %1358 = vmatpush1.msra.mxu0 0.0
        %1359 = vmatprep.subr.mxu0 0.0
        %1360 = vmatpush1.msra.mxu0 0.0
        %1361 = vmatprep.subr.mxu0 0.0
        %1362 = vmatpush1.msra.mxu0 0.0
        %1363 = vmatprep.subr.mxu0 0.0
        %1364 = vmatpush1.msra.mxu0 0.0
        %1365 = vmatprep.subr.mxu0 0.0
        %1366 = vmatpush1.msra.mxu0 0.0
        %1367 = vmatprep.subr.mxu0 0.0
        %1368 = vmatpush1.msra.mxu0 0.0
        %1369 = vmatprep.subr.mxu0 0.0
        %1370 = vmatpush1.msra.mxu0 0.0
        %1371 = vmatprep.subr.mxu0 0.0
        %1372 = vmatpush1.msra.mxu0 0.0
        %1373 = vmatprep.subr.mxu0 0.0
        %1374 = vmatpush1.msra.mxu0 0.0
        %1375 = vmatprep.subr.mxu0 0.0
        %1376 = vmatpush1.msra.mxu0 0.0
        %1377 = vmatprep.subr.mxu0 0.0
        %1378 = vmatpush1.msra.mxu0 0.0
        %1379 = vmatprep.subr.mxu0 0.0
        %1380 = vmatpush1.msra.mxu0 0.0
        %1381 = vmatprep.subr.mxu0 0.0
        %1382 = vmatpush1.msra.mxu0 0.0
        %1383 = vmatprep.subr.mxu0 0.0
        %1384 = vmatpush1.msra.mxu0 0.0
        %1385 = vmatprep.subr.mxu0 0.0
        %1386 = vmatpush1.msra.mxu0 0.0
        %1387 = vmatprep.subr.mxu0 0.0
        %1388 = vmatpush1.msra.mxu0 0.0
        %1389 = vmatprep.subr.mxu0 0.0
        %1390 = vmatpush1.msra.mxu0 0.0
        %1391 = vmatprep.subr.mxu0 0.0
        %1392 = vmatpush1.msra.mxu0 0.0
        %1393 = vmatprep.subr.mxu0 0.0
        %1394 = vmatpush1.msra.mxu0 0.0
        %1395 = vmatprep.subr.mxu0 0.0
        %1396 = vmatpush1.msra.mxu0 0.0
        %1397 = vmatprep.subr.mxu0 0.0
        %1398 = vmatpush1.msra.mxu0 0.0
        %1399 = vmatprep.subr.mxu0 0.0
        %1400 = vmatpush1.msra.mxu0 0.0
        %1401 = vmatprep.subr.mxu0 0.0
        %1402 = vmatpush1.msra.mxu0 0.0
        %1403 = vmatprep.subr.mxu0 0.0
        %1404 = vmatpush1.msra.mxu0 0.0
        %1405 = vmatprep.subr.mxu0 0.0
        %1406 = vmatpush1.msra.mxu0 0.0
        %1407 = vmatprep.subr.mxu0 0.0
        %1408 = vmatpush1.msra.mxu0 0.0
        %1409 = vmatprep.mubr.f32.mxu0 0.0
        %1410 = vmatmul.mubr.f32.gmra.mrb[0].mxu0 %v1040
        %v1411 = vpop.f32.mrb[0].mxu0
        %v1412 = vadd.f32 0.0, %v1411
        %v1413 = vpop.f32.mrb[0].mxu0
        %1414 = vmatprep.mubr.f32.mxu0 0.0
        %1415 = vmatmul.mubr.f32.gmra.mrb[0].mxu0 %v1043
        %v1416 = vpop.f32.mrb[0].mxu0
        %v1417 = vadd.f32 0.0, %v1416
        %v1418 = vpop.f32.mrb[0].mxu0
        %1419 = vdwg.mxu0
        %1420 = vmatprep.subr.mxu0 0.0
        %1421 = vmatpush1.msra.mxu0 %v898
        %1422 = vmatprep.subr.mxu0 0.0
        %1423 = vmatpush1.msra.mxu0 0.0
        %1424 = vmatprep.subr.mxu0 0.0
        %1425 = vmatpush1.msra.mxu0 0.0
        %1426 = vmatprep.subr.mxu0 0.0
        %1427 = vmatpush1.msra.mxu0 0.0
        %1428 = vmatprep.subr.mxu0 0.0
        %1429 = vmatpush1.msra.mxu0 0.0
        %1430 = vmatprep.subr.mxu0 0.0
        %1431 = vmatpush1.msra.mxu0 0.0
        %1432 = vmatprep.subr.mxu0 0.0
        %1433 = vmatpush1.msra.mxu0 0.0
        %1434 = vmatprep.subr.mxu0 0.0
        %1435 = vmatpush1.msra.mxu0 0.0
        %1436 = vmatprep.subr.mxu0 0.0
        %1437 = vmatpush1.msra.mxu0 0.0
        %1438 = vmatprep.subr.mxu0 0.0
        %1439 = vmatpush1.msra.mxu0 0.0
        %1440 = vmatprep.subr.mxu0 0.0
        %1441 = vmatpush1.msra.mxu0 0.0
        %1442 = vmatprep.subr.mxu0 0.0
        %1443 = vmatpush1.msra.mxu0 0.0
        %1444 = vmatprep.subr.mxu0 0.0
        %1445 = vmatpush1.msra.mxu0 0.0
        %1446 = vmatprep.subr.mxu0 0.0
        %1447 = vmatpush1.msra.mxu0 0.0
        %1448 = vmatprep.subr.mxu0 0.0
        %1449 = vmatpush1.msra.mxu0 0.0
        %1450 = vmatprep.subr.mxu0 0.0
        %1451 = vmatpush1.msra.mxu0 0.0
        %1452 = vmatprep.subr.mxu0 0.0
        %1453 = vmatpush1.msra.mxu0 0.0
        %1454 = vmatprep.subr.mxu0 0.0
        %1455 = vmatpush1.msra.mxu0 0.0
        %1456 = vmatprep.subr.mxu0 0.0
        %1457 = vmatpush1.msra.mxu0 0.0
        %1458 = vmatprep.subr.mxu0 0.0
        %1459 = vmatpush1.msra.mxu0 0.0
        %1460 = vmatprep.subr.mxu0 0.0
        %1461 = vmatpush1.msra.mxu0 0.0
        %1462 = vmatprep.subr.mxu0 0.0
        %1463 = vmatpush1.msra.mxu0 0.0
        %1464 = vmatprep.subr.mxu0 0.0
        %1465 = vmatpush1.msra.mxu0 0.0
        %1466 = vmatprep.subr.mxu0 0.0
        %1467 = vmatpush1.msra.mxu0 0.0
        %1468 = vmatprep.subr.mxu0 0.0
        %1469 = vmatpush1.msra.mxu0 0.0
        %1470 = vmatprep.subr.mxu0 0.0
        %1471 = vmatpush1.msra.mxu0 0.0
        %1472 = vmatprep.subr.mxu0 0.0
        %1473 = vmatpush1.msra.mxu0 0.0
        %1474 = vmatprep.subr.mxu0 0.0
        %1475 = vmatpush1.msra.mxu0 0.0
        %1476 = vmatprep.subr.mxu0 0.0
        %1477 = vmatpush1.msra.mxu0 0.0
        %1478 = vmatprep.subr.mxu0 0.0
        %1479 = vmatpush1.msra.mxu0 0.0
        %1480 = vmatprep.subr.mxu0 0.0
        %1481 = vmatpush1.msra.mxu0 0.0
        %1482 = vmatprep.subr.mxu0 0.0
        %1483 = vmatpush1.msra.mxu0 0.0
        %1484 = vmatprep.mubr.f32.mxu0 0.0
        %1485 = vmatmul.mubr.f32.gmra.mrb[0].mxu0 %v1040
        %v1486 = vpop.f32.mrb[0].mxu0
        %v1487 = vadd.f32 0.0, %v1486
        %v1488 = vpop.f32.mrb[0].mxu0
        %1489 = vmatprep.mubr.f32.mxu0 0.0
        %1490 = vmatmul.mubr.f32.gmra.mrb[0].mxu0 %v1043
        %v1491 = vpop.f32.mrb[0].mxu0
        %v1492 = vadd.f32 0.0, %v1491
        %v1493 = vpop.f32.mrb[0].mxu0
        %1494 = vdwg.mxu0
        %1495 = vmatprep.subr.mxu0 0.0
        %1496 = vmatpush1.msra.mxu0 %v899
        %1497 = vmatprep.subr.mxu0 0.0
        %1498 = vmatpush1.msra.mxu0 0.0
        %1499 = vmatprep.subr.mxu0 0.0
        %1500 = vmatpush1.msra.mxu0 0.0
        %1501 = vmatprep.subr.mxu0 0.0
        %1502 = vmatpush1.msra.mxu0 0.0
        %1503 = vmatprep.subr.mxu0 0.0
        %1504 = vmatpush1.msra.mxu0 0.0
        %1505 = vmatprep.subr.mxu0 0.0
        %1506 = vmatpush1.msra.mxu0 0.0
        %1507 = vmatprep.subr.mxu0 0.0
        %1508 = vmatpush1.msra.mxu0 0.0
        %1509 = vmatprep.subr.mxu0 0.0
        %1510 = vmatpush1.msra.mxu0 0.0
        %1511 = vmatprep.subr.mxu0 0.0
        %1512 = vmatpush1.msra.mxu0 0.0
        %1513 = vmatprep.subr.mxu0 0.0
        %1514 = vmatpush1.msra.mxu0 0.0
        %1515 = vmatprep.subr.mxu0 0.0
        %1516 = vmatpush1.msra.mxu0 0.0
        %1517 = vmatprep.subr.mxu0 0.0
        %1518 = vmatpush1.msra.mxu0 0.0
        %1519 = vmatprep.subr.mxu0 0.0
        %1520 = vmatpush1.msra.mxu0 0.0
        %1521 = vmatprep.subr.mxu0 0.0
        %1522 = vmatpush1.msra.mxu0 0.0
        %1523 = vmatprep.subr.mxu0 0.0
        %1524 = vmatpush1.msra.mxu0 0.0
        %1525 = vmatprep.subr.mxu0 0.0
        %1526 = vmatpush1.msra.mxu0 0.0
        %1527 = vmatprep.subr.mxu0 0.0
        %1528 = vmatpush1.msra.mxu0 0.0
        %1529 = vmatprep.subr.mxu0 0.0
        %1530 = vmatpush1.msra.mxu0 0.0
        %1531 = vmatprep.subr.mxu0 0.0
        %1532 = vmatpush1.msra.mxu0 0.0
        %1533 = vmatprep.subr.mxu0 0.0
        %1534 = vmatpush1.msra.mxu0 0.0
        %1535 = vmatprep.subr.mxu0 0.0
        %1536 = vmatpush1.msra.mxu0 0.0
        %1537 = vmatprep.subr.mxu0 0.0
        %1538 = vmatpush1.msra.mxu0 0.0
        %1539 = vmatprep.subr.mxu0 0.0
        %1540 = vmatpush1.msra.mxu0 0.0
        %1541 = vmatprep.subr.mxu0 0.0
        %1542 = vmatpush1.msra.mxu0 0.0
        %1543 = vmatprep.subr.mxu0 0.0
        %1544 = vmatpush1.msra.mxu0 0.0
        %1545 = vmatprep.subr.mxu0 0.0
        %1546 = vmatpush1.msra.mxu0 0.0
        %1547 = vmatprep.subr.mxu0 0.0
        %1548 = vmatpush1.msra.mxu0 0.0
        %1549 = vmatprep.subr.mxu0 0.0
        %1550 = vmatpush1.msra.mxu0 0.0
        %1551 = vmatprep.subr.mxu0 0.0
        %1552 = vmatpush1.msra.mxu0 0.0
        %1553 = vmatprep.subr.mxu0 0.0
        %1554 = vmatpush1.msra.mxu0 0.0
        %1555 = vmatprep.subr.mxu0 0.0
        %1556 = vmatpush1.msra.mxu0 0.0
        %1557 = vmatprep.subr.mxu0 0.0
        %1558 = vmatpush1.msra.mxu0 0.0
        %1559 = vmatprep.mubr.f32.mxu0 0.0
        %1560 = vmatmul.mubr.f32.gmra.mrb[0].mxu0 %v1040
        %v1561 = vpop.f32.mrb[0].mxu0
        %v1562 = vadd.f32 0.0, %v1561
        %v1563 = vpop.f32.mrb[0].mxu0
        %1564 = vmatprep.mubr.f32.mxu0 0.0
        %1565 = vmatmul.mubr.f32.gmra.mrb[0].mxu0 %v1043
        %v1566 = vpop.f32.mrb[0].mxu0
        %v1567 = vadd.f32 0.0, %v1566
        %v1568 = vpop.f32.mrb[0].mxu0
        %1569 = vdwg.mxu0
        %1570 = vmatprep.subr.mxu0 0.0
        %1571 = vmatpush1.msra.mxu0 %v900
        %1572 = vmatprep.subr.mxu0 0.0
        %1573 = vmatpush1.msra.mxu0 0.0
        %1574 = vmatprep.subr.mxu0 0.0
        %1575 = vmatpush1.msra.mxu0 0.0
        %1576 = vmatprep.subr.mxu0 0.0
        %1577 = vmatpush1.msra.mxu0 0.0
        %1578 = vmatprep.subr.mxu0 0.0
        %1579 = vmatpush1.msra.mxu0 0.0
        %1580 = vmatprep.subr.mxu0 0.0
        %1581 = vmatpush1.msra.mxu0 0.0
        %1582 = vmatprep.subr.mxu0 0.0
        %1583 = vmatpush1.msra.mxu0 0.0
        %1584 = vmatprep.subr.mxu0 0.0
        %1585 = vmatpush1.msra.mxu0 0.0
        %1586 = vmatprep.subr.mxu0 0.0
        %1587 = vmatpush1.msra.mxu0 0.0
        %1588 = vmatprep.subr.mxu0 0.0
        %1589 = vmatpush1.msra.mxu0 0.0
        %1590 = vmatprep.subr.mxu0 0.0
        %1591 = vmatpush1.msra.mxu0 0.0
        %1592 = vmatprep.subr.mxu0 0.0
        %1593 = vmatpush1.msra.mxu0 0.0
        %1594 = vmatprep.subr.mxu0 0.0
        %1595 = vmatpush1.msra.mxu0 0.0
        %1596 = vmatprep.subr.mxu0 0.0
        %1597 = vmatpush1.msra.mxu0 0.0
        %1598 = vmatprep.subr.mxu0 0.0
        %1599 = vmatpush1.msra.mxu0 0.0
        %1600 = vmatprep.subr.mxu0 0.0
        %1601 = vmatpush1.msra.mxu0 0.0
        %1602 = vmatprep.subr.mxu0 0.0
        %1603 = vmatpush1.msra.mxu0 0.0
        %1604 = vmatprep.subr.mxu0 0.0
        %1605 = vmatpush1.msra.mxu0 0.0
        %1606 = vmatprep.subr.mxu0 0.0
        %1607 = vmatpush1.msra.mxu0 0.0
        %1608 = vmatprep.subr.mxu0 0.0
        %1609 = vmatpush1.msra.mxu0 0.0
        %1610 = vmatprep.subr.mxu0 0.0
        %1611 = vmatpush1.msra.mxu0 0.0
        %1612 = vmatprep.subr.mxu0 0.0
        %1613 = vmatpush1.msra.mxu0 0.0
        %1614 = vmatprep.subr.mxu0 0.0
        %1615 = vmatpush1.msra.mxu0 0.0
        %1616 = vmatprep.subr.mxu0 0.0
        %1617 = vmatpush1.msra.mxu0 0.0
        %1618 = vmatprep.subr.mxu0 0.0
        %1619 = vmatpush1.msra.mxu0 0.0
        %1620 = vmatprep.subr.mxu0 0.0
        %1621 = vmatpush1.msra.mxu0 0.0
        %1622 = vmatprep.subr.mxu0 0.0
        %1623 = vmatpush1.msra.mxu0 0.0
        %1624 = vmatprep.subr.mxu0 0.0
        %1625 = vmatpush1.msra.mxu0 0.0
        %1626 = vmatprep.subr.mxu0 0.0
        %1627 = vmatpush1.msra.mxu0 0.0
        %1628 = vmatprep.subr.mxu0 0.0
        %1629 = vmatpush1.msra.mxu0 0.0
        %1630 = vmatprep.subr.mxu0 0.0
        %1631 = vmatpush1.msra.mxu0 0.0
        %1632 = vmatprep.subr.mxu0 0.0
        %1633 = vmatpush1.msra.mxu0 0.0
        %1634 = vmatprep.mubr.f32.mxu0 0.0
        %1635 = vmatmul.mubr.f32.gmra.mrb[0].mxu0 %v1040
        %v1636 = vpop.f32.mrb[0].mxu0
        %v1637 = vadd.f32 0.0, %v1636
        %v1638 = vpop.f32.mrb[0].mxu0
        %1639 = vmatprep.mubr.f32.mxu0 0.0
        %1640 = vmatmul.mubr.f32.gmra.mrb[0].mxu0 %v1043
        %v1641 = vpop.f32.mrb[0].mxu0
        %v1642 = vadd.f32 0.0, %v1641
        %v1643 = vpop.f32.mrb[0].mxu0
        %1644 = vdwg.mxu0
        %1645 = vmatprep.subr.mxu0 0.0
        %1646 = vmatpush1.msra.mxu0 %v1029
        %1647 = vmatprep.subr.mxu0 0.0
        %1648 = vmatpush1.msra.mxu0 0.0
        %1649 = vmatprep.subr.mxu0 0.0
        %1650 = vmatpush1.msra.mxu0 0.0
        %1651 = vmatprep.subr.mxu0 0.0
        %1652 = vmatpush1.msra.mxu0 0.0
        %1653 = vmatprep.subr.mxu0 0.0
        %1654 = vmatpush1.msra.mxu0 0.0
        %1655 = vmatprep.subr.mxu0 0.0
        %1656 = vmatpush1.msra.mxu0 0.0
        %1657 = vmatprep.subr.mxu0 0.0
        %1658 = vmatpush1.msra.mxu0 0.0
        %1659 = vmatprep.subr.mxu0 0.0
        %1660 = vmatpush1.msra.mxu0 0.0
        %1661 = vmatprep.subr.mxu0 0.0
        %1662 = vmatpush1.msra.mxu0 0.0
        %1663 = vmatprep.subr.mxu0 0.0
        %1664 = vmatpush1.msra.mxu0 0.0
        %1665 = vmatprep.subr.mxu0 0.0
        %1666 = vmatpush1.msra.mxu0 0.0
        %1667 = vmatprep.subr.mxu0 0.0
        %1668 = vmatpush1.msra.mxu0 0.0
        %1669 = vmatprep.subr.mxu0 0.0
        %1670 = vmatpush1.msra.mxu0 0.0
        %1671 = vmatprep.subr.mxu0 0.0
        %1672 = vmatpush1.msra.mxu0 0.0
        %1673 = vmatprep.subr.mxu0 0.0
        %1674 = vmatpush1.msra.mxu0 0.0
        %1675 = vmatprep.subr.mxu0 0.0
        %1676 = vmatpush1.msra.mxu0 0.0
        %1677 = vmatprep.subr.mxu0 0.0
        %1678 = vmatpush1.msra.mxu0 0.0
        %1679 = vmatprep.subr.mxu0 0.0
        %1680 = vmatpush1.msra.mxu0 0.0
        %1681 = vmatprep.subr.mxu0 0.0
        %1682 = vmatpush1.msra.mxu0 0.0
        %1683 = vmatprep.subr.mxu0 0.0
        %1684 = vmatpush1.msra.mxu0 0.0
        %1685 = vmatprep.subr.mxu0 0.0
        %1686 = vmatpush1.msra.mxu0 0.0
        %1687 = vmatprep.subr.mxu0 0.0
        %1688 = vmatpush1.msra.mxu0 0.0
        %1689 = vmatprep.subr.mxu0 0.0
        %1690 = vmatpush1.msra.mxu0 0.0
        %1691 = vmatprep.subr.mxu0 0.0
        %1692 = vmatpush1.msra.mxu0 0.0
        %1693 = vmatprep.subr.mxu0 0.0
        %1694 = vmatpush1.msra.mxu0 0.0
        %1695 = vmatprep.subr.mxu0 0.0
        %1696 = vmatpush1.msra.mxu0 0.0
        %1697 = vmatprep.subr.mxu0 0.0
        %1698 = vmatpush1.msra.mxu0 0.0
        %1699 = vmatprep.subr.mxu0 0.0
        %1700 = vmatpush1.msra.mxu0 0.0
        %1701 = vmatprep.subr.mxu0 0.0
        %1702 = vmatpush1.msra.mxu0 0.0
        %1703 = vmatprep.subr.mxu0 0.0
        %1704 = vmatpush1.msra.mxu0 0.0
        %1705 = vmatprep.subr.mxu0 0.0
        %1706 = vmatpush1.msra.mxu0 0.0
        %1707 = vmatprep.subr.mxu0 0.0
        %1708 = vmatpush1.msra.mxu0 0.0
        %1709 = vmatprep.mubr.f32.mxu0 0.0
        %1710 = vmatmul.mubr.f32.gmra.mrb[0].mxu0 %v1040
        %v1711 = vpop.f32.mrb[0].mxu0
        %v1712 = vadd.f32 0.0, %v1711
        %v1713 = vpop.f32.mrb[0].mxu0
        %1714 = vmatprep.mubr.f32.mxu0 0.0
        %1715 = vmatmul.mubr.f32.gmra.mrb[0].mxu0 %v1043
        %v1716 = vpop.f32.mrb[0].mxu0
        %v1717 = vadd.f32 0.0, %v1716
        %v1718 = vpop.f32.mrb[0].mxu0
        %1719 = vdwg.mxu0
        %1720 = vmatprep.subr.mxu0 0.0
        %1721 = vmatpush1.msra.mxu0 %v1030
        %1722 = vmatprep.subr.mxu0 0.0
        %1723 = vmatpush1.msra.mxu0 0.0
        %1724 = vmatprep.subr.mxu0 0.0
        %1725 = vmatpush1.msra.mxu0 0.0
        %1726 = vmatprep.subr.mxu0 0.0
        %1727 = vmatpush1.msra.mxu0 0.0
        %1728 = vmatprep.subr.mxu0 0.0
        %1729 = vmatpush1.msra.mxu0 0.0
        %1730 = vmatprep.subr.mxu0 0.0
        %1731 = vmatpush1.msra.mxu0 0.0
        %1732 = vmatprep.subr.mxu0 0.0
        %1733 = vmatpush1.msra.mxu0 0.0
        %1734 = vmatprep.subr.mxu0 0.0
        %1735 = vmatpush1.msra.mxu0 0.0
        %1736 = vmatprep.subr.mxu0 0.0
        %1737 = vmatpush1.msra.mxu0 0.0
        %1738 = vmatprep.subr.mxu0 0.0
        %1739 = vmatpush1.msra.mxu0 0.0
        %1740 = vmatprep.subr.mxu0 0.0
        %1741 = vmatpush1.msra.mxu0 0.0
        %1742 = vmatprep.subr.mxu0 0.0
        %1743 = vmatpush1.msra.mxu0 0.0
        %1744 = vmatprep.subr.mxu0 0.0
        %1745 = vmatpush1.msra.mxu0 0.0
        %1746 = vmatprep.subr.mxu0 0.0
        %1747 = vmatpush1.msra.mxu0 0.0
        %1748 = vmatprep.subr.mxu0 0.0
        %1749 = vmatpush1.msra.mxu0 0.0
        %1750 = vmatprep.subr.mxu0 0.0
        %1751 = vmatpush1.msra.mxu0 0.0
        %1752 = vmatprep.subr.mxu0 0.0
        %1753 = vmatpush1.msra.mxu0 0.0
        %1754 = vmatprep.subr.mxu0 0.0
        %1755 = vmatpush1.msra.mxu0 0.0
        %1756 = vmatprep.subr.mxu0 0.0
        %1757 = vmatpush1.msra.mxu0 0.0
        %1758 = vmatprep.subr.mxu0 0.0
        %1759 = vmatpush1.msra.mxu0 0.0
        %1760 = vmatprep.subr.mxu0 0.0
        %1761 = vmatpush1.msra.mxu0 0.0
        %1762 = vmatprep.subr.mxu0 0.0
        %1763 = vmatpush1.msra.mxu0 0.0
        %1764 = vmatprep.subr.mxu0 0.0
        %1765 = vmatpush1.msra.mxu0 0.0
        %1766 = vmatprep.subr.mxu0 0.0
        %1767 = vmatpush1.msra.mxu0 0.0
        %1768 = vmatprep.subr.mxu0 0.0
        %1769 = vmatpush1.msra.mxu0 0.0
        %1770 = vmatprep.subr.mxu0 0.0
        %1771 = vmatpush1.msra.mxu0 0.0
        %1772 = vmatprep.subr.mxu0 0.0
        %1773 = vmatpush1.msra.mxu0 0.0
        %1774 = vmatprep.subr.mxu0 0.0
        %1775 = vmatpush1.msra.mxu0 0.0
        %1776 = vmatprep.subr.mxu0 0.0
        %1777 = vmatpush1.msra.mxu0 0.0
        %1778 = vmatprep.subr.mxu0 0.0
        %1779 = vmatpush1.msra.mxu0 0.0
        %1780 = vmatprep.subr.mxu0 0.0
        %1781 = vmatpush1.msra.mxu0 0.0
        %1782 = vmatprep.subr.mxu0 0.0
        %1783 = vmatpush1.msra.mxu0 0.0
        %1784 = vmatprep.mubr.f32.mxu0 0.0
        %1785 = vmatmul.mubr.f32.gmra.mrb[0].mxu0 %v1040
        %v1786 = vpop.f32.mrb[0].mxu0
        %v1787 = vadd.f32 0.0, %v1786
        %v1788 = vpop.f32.mrb[0].mxu0
        %1789 = vmatprep.mubr.f32.mxu0 0.0
        %1790 = vmatmul.mubr.f32.gmra.mrb[0].mxu0 %v1043
        %v1791 = vpop.f32.mrb[0].mxu0
        %v1792 = vadd.f32 0.0, %v1791
        %v1793 = vpop.f32.mrb[0].mxu0
        %1794 = vdwg.mxu0
        %1795 = vmatprep.subr.mxu0 0.0
        %1796 = vmatpush1.msra.mxu0 %v1031
        %1797 = vmatprep.subr.mxu0 0.0
        %1798 = vmatpush1.msra.mxu0 0.0
        %1799 = vmatprep.subr.mxu0 0.0
        %1800 = vmatpush1.msra.mxu0 0.0
        %1801 = vmatprep.subr.mxu0 0.0
        %1802 = vmatpush1.msra.mxu0 0.0
        %1803 = vmatprep.subr.mxu0 0.0
        %1804 = vmatpush1.msra.mxu0 0.0
        %1805 = vmatprep.subr.mxu0 0.0
        %1806 = vmatpush1.msra.mxu0 0.0
        %1807 = vmatprep.subr.mxu0 0.0
        %1808 = vmatpush1.msra.mxu0 0.0
        %1809 = vmatprep.subr.mxu0 0.0
        %1810 = vmatpush1.msra.mxu0 0.0
        %1811 = vmatprep.subr.mxu0 0.0
        %1812 = vmatpush1.msra.mxu0 0.0
        %1813 = vmatprep.subr.mxu0 0.0
        %1814 = vmatpush1.msra.mxu0 0.0
        %1815 = vmatprep.subr.mxu0 0.0
        %1816 = vmatpush1.msra.mxu0 0.0
        %1817 = vmatprep.subr.mxu0 0.0
        %1818 = vmatpush1.msra.mxu0 0.0
        %1819 = vmatprep.subr.mxu0 0.0
        %1820 = vmatpush1.msra.mxu0 0.0
        %1821 = vmatprep.subr.mxu0 0.0
        %1822 = vmatpush1.msra.mxu0 0.0
        %1823 = vmatprep.subr.mxu0 0.0
        %1824 = vmatpush1.msra.mxu0 0.0
        %1825 = vmatprep.subr.mxu0 0.0
        %1826 = vmatpush1.msra.mxu0 0.0
        %1827 = vmatprep.subr.mxu0 0.0
        %1828 = vmatpush1.msra.mxu0 0.0
        %1829 = vmatprep.subr.mxu0 0.0
        %1830 = vmatpush1.msra.mxu0 0.0
        %1831 = vmatprep.subr.mxu0 0.0
        %1832 = vmatpush1.msra.mxu0 0.0
        %1833 = vmatprep.subr.mxu0 0.0
        %1834 = vmatpush1.msra.mxu0 0.0
        %1835 = vmatprep.subr.mxu0 0.0
        %1836 = vmatpush1.msra.mxu0 0.0
        %1837 = vmatprep.subr.mxu0 0.0
        %1838 = vmatpush1.msra.mxu0 0.0
        %1839 = vmatprep.subr.mxu0 0.0
        %1840 = vmatpush1.msra.mxu0 0.0
        %1841 = vmatprep.subr.mxu0 0.0
        %1842 = vmatpush1.msra.mxu0 0.0
        %1843 = vmatprep.subr.mxu0 0.0
        %1844 = vmatpush1.msra.mxu0 0.0
        %1845 = vmatprep.subr.mxu0 0.0
        %1846 = vmatpush1.msra.mxu0 0.0
        %1847 = vmatprep.subr.mxu0 0.0
        %1848 = vmatpush1.msra.mxu0 0.0
        %1849 = vmatprep.subr.mxu0 0.0
        %1850 = vmatpush1.msra.mxu0 0.0
        %1851 = vmatprep.subr.mxu0 0.0
        %1852 = vmatpush1.msra.mxu0 0.0
        %1853 = vmatprep.subr.mxu0 0.0
        %1854 = vmatpush1.msra.mxu0 0.0
        %1855 = vmatprep.subr.mxu0 0.0
        %1856 = vmatpush1.msra.mxu0 0.0
        %1857 = vmatprep.subr.mxu0 0.0
        %1858 = vmatpush1.msra.mxu0 0.0
        %1859 = vmatprep.mubr.f32.mxu0 0.0
        %1860 = vmatmul.mubr.f32.gmra.mrb[0].mxu0 %v1040
        %v1861 = vpop.f32.mrb[0].mxu0
        %v1862 = vadd.f32 0.0, %v1861
        %v1863 = vpop.f32.mrb[0].mxu0
        %1864 = vmatprep.mubr.f32.mxu0 0.0
        %1865 = vmatmul.mubr.f32.gmra.mrb[0].mxu0 %v1043
        %v1866 = vpop.f32.mrb[0].mxu0
        %v1867 = vadd.f32 0.0, %v1866
        %v1868 = vpop.f32.mrb[0].mxu0
        %1869 = vdwg.mxu0
        %1870 = vmatprep.subr.mxu0 0.0
        %1871 = vmatpush1.msra.mxu0 %v1032
        %1872 = vmatprep.subr.mxu0 0.0
        %1873 = vmatpush1.msra.mxu0 0.0
        %1874 = vmatprep.subr.mxu0 0.0
        %1875 = vmatpush1.msra.mxu0 0.0
        %1876 = vmatprep.subr.mxu0 0.0
        %1877 = vmatpush1.msra.mxu0 0.0
        %1878 = vmatprep.subr.mxu0 0.0
        %1879 = vmatpush1.msra.mxu0 0.0
        %1880 = vmatprep.subr.mxu0 0.0
        %1881 = vmatpush1.msra.mxu0 0.0
        %1882 = vmatprep.subr.mxu0 0.0
        %1883 = vmatpush1.msra.mxu0 0.0
        %1884 = vmatprep.subr.mxu0 0.0
        %1885 = vmatpush1.msra.mxu0 0.0
        %1886 = vmatprep.subr.mxu0 0.0
        %1887 = vmatpush1.msra.mxu0 0.0
        %1888 = vmatprep.subr.mxu0 0.0
        %1889 = vmatpush1.msra.mxu0 0.0
        %1890 = vmatprep.subr.mxu0 0.0
        %1891 = vmatpush1.msra.mxu0 0.0
        %1892 = vmatprep.subr.mxu0 0.0
        %1893 = vmatpush1.msra.mxu0 0.0
        %1894 = vmatprep.subr.mxu0 0.0
        %1895 = vmatpush1.msra.mxu0 0.0
        %1896 = vmatprep.subr.mxu0 0.0
        %1897 = vmatpush1.msra.mxu0 0.0
        %1898 = vmatprep.subr.mxu0 0.0
        %1899 = vmatpush1.msra.mxu0 0.0
        %1900 = vmatprep.subr.mxu0 0.0
        %1901 = vmatpush1.msra.mxu0 0.0
        %1902 = vmatprep.subr.mxu0 0.0
        %1903 = vmatpush1.msra.mxu0 0.0
        %1904 = vmatprep.subr.mxu0 0.0
        %1905 = vmatpush1.msra.mxu0 0.0
        %1906 = vmatprep.subr.mxu0 0.0
        %1907 = vmatpush1.msra.mxu0 0.0
        %1908 = vmatprep.subr.mxu0 0.0
        %1909 = vmatpush1.msra.mxu0 0.0
        %1910 = vmatprep.subr.mxu0 0.0
        %1911 = vmatpush1.msra.mxu0 0.0
        %1912 = vmatprep.subr.mxu0 0.0
        %1913 = vmatpush1.msra.mxu0 0.0
        %1914 = vmatprep.subr.mxu0 0.0
        %1915 = vmatpush1.msra.mxu0 0.0
        %1916 = vmatprep.subr.mxu0 0.0
        %1917 = vmatpush1.msra.mxu0 0.0
        %1918 = vmatprep.subr.mxu0 0.0
        %1919 = vmatpush1.msra.mxu0 0.0
        %1920 = vmatprep.subr.mxu0 0.0
        %1921 = vmatpush1.msra.mxu0 0.0
        %1922 = vmatprep.subr.mxu0 0.0
        %1923 = vmatpush1.msra.mxu0 0.0
        %1924 = vmatprep.subr.mxu0 0.0
        %1925 = vmatpush1.msra.mxu0 0.0
        %1926 = vmatprep.subr.mxu0 0.0
        %1927 = vmatpush1.msra.mxu0 0.0
        %1928 = vmatprep.subr.mxu0 0.0
        %1929 = vmatpush1.msra.mxu0 0.0
        %1930 = vmatprep.subr.mxu0 0.0
        %1931 = vmatpush1.msra.mxu0 0.0
        %1932 = vmatprep.subr.mxu0 0.0
        %1933 = vmatpush1.msra.mxu0 0.0
        %1934 = vmatprep.mubr.f32.mxu0 0.0
        %1935 = vmatmul.mubr.f32.gmra.mrb[0].mxu0 %v1040
        %v1936 = vpop.f32.mrb[0].mxu0
        %v1937 = vadd.f32 0.0, %v1936
        %v1938 = vpop.f32.mrb[0].mxu0
        %1939 = vmatprep.mubr.f32.mxu0 0.0
        %1940 = vmatmul.mubr.f32.gmra.mrb[0].mxu0 %v1043
        %v1941 = vpop.f32.mrb[0].mxu0
        %v1942 = vadd.f32 0.0, %v1941
        %v1943 = vpop.f32.mrb[0].mxu0
        %1944 = vdwg.mxu0
        %1945 = vmatprep.subr.mxu0 0.0
        %1946 = vmatpush1.msra.mxu0 %v1033
        %1947 = vmatprep.subr.mxu0 0.0
        %1948 = vmatpush1.msra.mxu0 0.0
        %1949 = vmatprep.subr.mxu0 0.0
        %1950 = vmatpush1.msra.mxu0 0.0
        %1951 = vmatprep.subr.mxu0 0.0
        %1952 = vmatpush1.msra.mxu0 0.0
        %1953 = vmatprep.subr.mxu0 0.0
        %1954 = vmatpush1.msra.mxu0 0.0
        %1955 = vmatprep.subr.mxu0 0.0
        %1956 = vmatpush1.msra.mxu0 0.0
        %1957 = vmatprep.subr.mxu0 0.0
        %1958 = vmatpush1.msra.mxu0 0.0
        %1959 = vmatprep.subr.mxu0 0.0
        %1960 = vmatpush1.msra.mxu0 0.0
        %1961 = vmatprep.subr.mxu0 0.0
        %1962 = vmatpush1.msra.mxu0 0.0
        %1963 = vmatprep.subr.mxu0 0.0
        %1964 = vmatpush1.msra.mxu0 0.0
        %1965 = vmatprep.subr.mxu0 0.0
        %1966 = vmatpush1.msra.mxu0 0.0
        %1967 = vmatprep.subr.mxu0 0.0
        %1968 = vmatpush1.msra.mxu0 0.0
        %1969 = vmatprep.subr.mxu0 0.0
        %1970 = vmatpush1.msra.mxu0 0.0
        %1971 = vmatprep.subr.mxu0 0.0
        %1972 = vmatpush1.msra.mxu0 0.0
        %1973 = vmatprep.subr.mxu0 0.0
        %1974 = vmatpush1.msra.mxu0 0.0
        %1975 = vmatprep.subr.mxu0 0.0
        %1976 = vmatpush1.msra.mxu0 0.0
        %1977 = vmatprep.subr.mxu0 0.0
        %1978 = vmatpush1.msra.mxu0 0.0
        %1979 = vmatprep.subr.mxu0 0.0
        %1980 = vmatpush1.msra.mxu0 0.0
        %1981 = vmatprep.subr.mxu0 0.0
        %1982 = vmatpush1.msra.mxu0 0.0
        %1983 = vmatprep.subr.mxu0 0.0
        %1984 = vmatpush1.msra.mxu0 0.0
        %1985 = vmatprep.subr.mxu0 0.0
        %1986 = vmatpush1.msra.mxu0 0.0
        %1987 = vmatprep.subr.mxu0 0.0
        %1988 = vmatpush1.msra.mxu0 0.0
        %1989 = vmatprep.subr.mxu0 0.0
        %1990 = vmatpush1.msra.mxu0 0.0
        %1991 = vmatprep.subr.mxu0 0.0
        %1992 = vmatpush1.msra.mxu0 0.0
        %1993 = vmatprep.subr.mxu0 0.0
        %1994 = vmatpush1.msra.mxu0 0.0
        %1995 = vmatprep.subr.mxu0 0.0
        %1996 = vmatpush1.msra.mxu0 0.0
        %1997 = vmatprep.subr.mxu0 0.0
        %1998 = vmatpush1.msra.mxu0 0.0
        %1999 = vmatprep.subr.mxu0 0.0
        %2000 = vmatpush1.msra.mxu0 0.0
        %2001 = vmatprep.subr.mxu0 0.0
        %2002 = vmatpush1.msra.mxu0 0.0
        %2003 = vmatprep.subr.mxu0 0.0
        %2004 = vmatpush1.msra.mxu0 0.0
        %2005 = vmatprep.subr.mxu0 0.0
        %2006 = vmatpush1.msra.mxu0 0.0
        %2007 = vmatprep.subr.mxu0 0.0
        %2008 = vmatpush1.msra.mxu0 0.0
        %2009 = vmatprep.mubr.f32.mxu0 0.0
        %2010 = vmatmul.mubr.f32.gmra.mrb[0].mxu0 %v1040
        %v2011 = vpop.f32.mrb[0].mxu0
        %v2012 = vadd.f32 0.0, %v2011
        %v2013 = vpop.f32.mrb[0].mxu0
        %2014 = vmatprep.mubr.f32.mxu0 0.0
        %2015 = vmatmul.mubr.f32.gmra.mrb[0].mxu0 %v1043
        %v2016 = vpop.f32.mrb[0].mxu0
        %v2017 = vadd.f32 0.0, %v2016
        %v2018 = vpop.f32.mrb[0].mxu0
        %2019 = vdwg.mxu0
        %2020 = vmatprep.subr.mxu0 0.0
        %2021 = vmatpush1.msra.mxu0 %v1034
        %2022 = vmatprep.subr.mxu0 0.0
        %2023 = vmatpush1.msra.mxu0 0.0
        %2024 = vmatprep.subr.mxu0 0.0
        %2025 = vmatpush1.msra.mxu0 0.0
        %2026 = vmatprep.subr.mxu0 0.0
        %2027 = vmatpush1.msra.mxu0 0.0
        %2028 = vmatprep.subr.mxu0 0.0
        %2029 = vmatpush1.msra.mxu0 0.0
        %2030 = vmatprep.subr.mxu0 0.0
        %2031 = vmatpush1.msra.mxu0 0.0
        %2032 = vmatprep.subr.mxu0 0.0
        %2033 = vmatpush1.msra.mxu0 0.0
        %2034 = vmatprep.subr.mxu0 0.0
        %2035 = vmatpush1.msra.mxu0 0.0
        %2036 = vmatprep.subr.mxu0 0.0
        %2037 = vmatpush1.msra.mxu0 0.0
        %2038 = vmatprep.subr.mxu0 0.0
        %2039 = vmatpush1.msra.mxu0 0.0
        %2040 = vmatprep.subr.mxu0 0.0
        %2041 = vmatpush1.msra.mxu0 0.0
        %2042 = vmatprep.subr.mxu0 0.0
        %2043 = vmatpush1.msra.mxu0 0.0
        %2044 = vmatprep.subr.mxu0 0.0
        %2045 = vmatpush1.msra.mxu0 0.0
        %2046 = vmatprep.subr.mxu0 0.0
        %2047 = vmatpush1.msra.mxu0 0.0
        %2048 = vmatprep.subr.mxu0 0.0
        %2049 = vmatpush1.msra.mxu0 0.0
        %2050 = vmatprep.subr.mxu0 0.0
        %2051 = vmatpush1.msra.mxu0 0.0
        %2052 = vmatprep.subr.mxu0 0.0
        %2053 = vmatpush1.msra.mxu0 0.0
        %2054 = vmatprep.subr.mxu0 0.0
        %2055 = vmatpush1.msra.mxu0 0.0
        %2056 = vmatprep.subr.mxu0 0.0
        %2057 = vmatpush1.msra.mxu0 0.0
        %2058 = vmatprep.subr.mxu0 0.0
        %2059 = vmatpush1.msra.mxu0 0.0
        %2060 = vmatprep.subr.mxu0 0.0
        %2061 = vmatpush1.msra.mxu0 0.0
        %2062 = vmatprep.subr.mxu0 0.0
        %2063 = vmatpush1.msra.mxu0 0.0
        %2064 = vmatprep.subr.mxu0 0.0
        %2065 = vmatpush1.msra.mxu0 0.0
        %2066 = vmatprep.subr.mxu0 0.0
        %2067 = vmatpush1.msra.mxu0 0.0
        %2068 = vmatprep.subr.mxu0 0.0
        %2069 = vmatpush1.msra.mxu0 0.0
        %2070 = vmatprep.subr.mxu0 0.0
        %2071 = vmatpush1.msra.mxu0 0.0
        %2072 = vmatprep.subr.mxu0 0.0
        %2073 = vmatpush1.msra.mxu0 0.0
        %2074 = vmatprep.subr.mxu0 0.0
        %2075 = vmatpush1.msra.mxu0 0.0
        %2076 = vmatprep.subr.mxu0 0.0
        %2077 = vmatpush1.msra.mxu0 0.0
        %2078 = vmatprep.subr.mxu0 0.0
        %2079 = vmatpush1.msra.mxu0 0.0
        %2080 = vmatprep.subr.mxu0 0.0
        %2081 = vmatpush1.msra.mxu0 0.0
        %2082 = vmatprep.subr.mxu0 0.0
        %2083 = vmatpush1.msra.mxu0 0.0
        %2084 = vmatprep.mubr.f32.mxu0 0.0
        %2085 = vmatmul.mubr.f32.gmra.mrb[0].mxu0 %v1040
        %v2086 = vpop.f32.mrb[0].mxu0
        %v2087 = vadd.f32 0.0, %v2086
        %v2088 = vpop.f32.mrb[0].mxu0
        %2089 = vmatprep.mubr.f32.mxu0 0.0
        %2090 = vmatmul.mubr.f32.gmra.mrb[0].mxu0 %v1043
        %v2091 = vpop.f32.mrb[0].mxu0
        %v2092 = vadd.f32 0.0, %v2091
        %v2093 = vpop.f32.mrb[0].mxu0
        %2094 = vdwg.mxu0
        %2095 = vmatprep.subr.mxu0 0.0
        %2096 = vmatpush1.msra.mxu0 %v1035
        %2097 = vmatprep.subr.mxu0 0.0
        %2098 = vmatpush1.msra.mxu0 0.0
        %2099 = vmatprep.subr.mxu0 0.0
        %2100 = vmatpush1.msra.mxu0 0.0
        %2101 = vmatprep.subr.mxu0 0.0
        %2102 = vmatpush1.msra.mxu0 0.0
        %2103 = vmatprep.subr.mxu0 0.0
        %2104 = vmatpush1.msra.mxu0 0.0
        %2105 = vmatprep.subr.mxu0 0.0
        %2106 = vmatpush1.msra.mxu0 0.0
        %2107 = vmatprep.subr.mxu0 0.0
        %2108 = vmatpush1.msra.mxu0 0.0
        %2109 = vmatprep.subr.mxu0 0.0
        %2110 = vmatpush1.msra.mxu0 0.0
        %2111 = vmatprep.subr.mxu0 0.0
        %2112 = vmatpush1.msra.mxu0 0.0
        %2113 = vmatprep.subr.mxu0 0.0
        %2114 = vmatpush1.msra.mxu0 0.0
        %2115 = vmatprep.subr.mxu0 0.0
        %2116 = vmatpush1.msra.mxu0 0.0
        %2117 = vmatprep.subr.mxu0 0.0
        %2118 = vmatpush1.msra.mxu0 0.0
        %2119 = vmatprep.subr.mxu0 0.0
        %2120 = vmatpush1.msra.mxu0 0.0
        %2121 = vmatprep.subr.mxu0 0.0
        %2122 = vmatpush1.msra.mxu0 0.0
        %2123 = vmatprep.subr.mxu0 0.0
        %2124 = vmatpush1.msra.mxu0 0.0
        %2125 = vmatprep.subr.mxu0 0.0
        %2126 = vmatpush1.msra.mxu0 0.0
        %2127 = vmatprep.subr.mxu0 0.0
        %2128 = vmatpush1.msra.mxu0 0.0
        %2129 = vmatprep.subr.mxu0 0.0
        %2130 = vmatpush1.msra.mxu0 0.0
        %2131 = vmatprep.subr.mxu0 0.0
        %2132 = vmatpush1.msra.mxu0 0.0
        %2133 = vmatprep.subr.mxu0 0.0
        %2134 = vmatpush1.msra.mxu0 0.0
        %2135 = vmatprep.subr.mxu0 0.0
        %2136 = vmatpush1.msra.mxu0 0.0
        %2137 = vmatprep.subr.mxu0 0.0
        %2138 = vmatpush1.msra.mxu0 0.0
        %2139 = vmatprep.subr.mxu0 0.0
        %2140 = vmatpush1.msra.mxu0 0.0
        %2141 = vmatprep.subr.mxu0 0.0
        %2142 = vmatpush1.msra.mxu0 0.0
        %2143 = vmatprep.subr.mxu0 0.0
        %2144 = vmatpush1.msra.mxu0 0.0
        %2145 = vmatprep.subr.mxu0 0.0
        %2146 = vmatpush1.msra.mxu0 0.0
        %2147 = vmatprep.subr.mxu0 0.0
        %2148 = vmatpush1.msra.mxu0 0.0
        %2149 = vmatprep.subr.mxu0 0.0
        %2150 = vmatpush1.msra.mxu0 0.0
        %2151 = vmatprep.subr.mxu0 0.0
        %2152 = vmatpush1.msra.mxu0 0.0
        %2153 = vmatprep.subr.mxu0 0.0
        %2154 = vmatpush1.msra.mxu0 0.0
        %2155 = vmatprep.subr.mxu0 0.0
        %2156 = vmatpush1.msra.mxu0 0.0
        %2157 = vmatprep.subr.mxu0 0.0
        %2158 = vmatpush1.msra.mxu0 0.0
        %2159 = vmatprep.mubr.f32.mxu0 0.0
        %2160 = vmatmul.mubr.f32.gmra.mrb[0].mxu0 %v1040
        %v2161 = vpop.f32.mrb[0].mxu0
        %v2162 = vadd.f32 0.0, %v2161
        %v2163 = vpop.f32.mrb[0].mxu0
        %2164 = vmatprep.mubr.f32.mxu0 0.0
        %2165 = vmatmul.mubr.f32.gmra.mrb[0].mxu0 %v1043
        %v2166 = vpop.f32.mrb[0].mxu0
        %v2167 = vadd.f32 0.0, %v2166
        %v2168 = vpop.f32.mrb[0].mxu0
        %2169 = vdwg.mxu0
        %2170 = vmatprep.subr.mxu0 0.0
        %2171 = vmatpush1.msra.mxu0 %v1036
        %2172 = vmatprep.subr.mxu0 0.0
        %2173 = vmatpush1.msra.mxu0 0.0
        %2174 = vmatprep.subr.mxu0 0.0
        %2175 = vmatpush1.msra.mxu0 0.0
        %2176 = vmatprep.subr.mxu0 0.0
        %2177 = vmatpush1.msra.mxu0 0.0
        %2178 = vmatprep.subr.mxu0 0.0
        %2179 = vmatpush1.msra.mxu0 0.0
        %2180 = vmatprep.subr.mxu0 0.0
        %2181 = vmatpush1.msra.mxu0 0.0
        %2182 = vmatprep.subr.mxu0 0.0
        %2183 = vmatpush1.msra.mxu0 0.0
        %2184 = vmatprep.subr.mxu0 0.0
        %2185 = vmatpush1.msra.mxu0 0.0
        %2186 = vmatprep.subr.mxu0 0.0
        %2187 = vmatpush1.msra.mxu0 0.0
        %2188 = vmatprep.subr.mxu0 0.0
        %2189 = vmatpush1.msra.mxu0 0.0
        %2190 = vmatprep.subr.mxu0 0.0
        %2191 = vmatpush1.msra.mxu0 0.0
        %2192 = vmatprep.subr.mxu0 0.0
        %2193 = vmatpush1.msra.mxu0 0.0
        %2194 = vmatprep.subr.mxu0 0.0
        %2195 = vmatpush1.msra.mxu0 0.0
        %2196 = vmatprep.subr.mxu0 0.0
        %2197 = vmatpush1.msra.mxu0 0.0
        %2198 = vmatprep.subr.mxu0 0.0
        %2199 = vmatpush1.msra.mxu0 0.0
        %2200 = vmatprep.subr.mxu0 0.0
        %2201 = vmatpush1.msra.mxu0 0.0
        %2202 = vmatprep.subr.mxu0 0.0
        %2203 = vmatpush1.msra.mxu0 0.0
        %2204 = vmatprep.subr.mxu0 0.0
        %2205 = vmatpush1.msra.mxu0 0.0
        %2206 = vmatprep.subr.mxu0 0.0
        %2207 = vmatpush1.msra.mxu0 0.0
        %2208 = vmatprep.subr.mxu0 0.0
        %2209 = vmatpush1.msra.mxu0 0.0
        %2210 = vmatprep.subr.mxu0 0.0
        %2211 = vmatpush1.msra.mxu0 0.0
        %2212 = vmatprep.subr.mxu0 0.0
        %2213 = vmatpush1.msra.mxu0 0.0
        %2214 = vmatprep.subr.mxu0 0.0
        %2215 = vmatpush1.msra.mxu0 0.0
        %2216 = vmatprep.subr.mxu0 0.0
        %2217 = vmatpush1.msra.mxu0 0.0
        %2218 = vmatprep.subr.mxu0 0.0
        %2219 = vmatpush1.msra.mxu0 0.0
        %2220 = vmatprep.subr.mxu0 0.0
        %2221 = vmatpush1.msra.mxu0 0.0
        %2222 = vmatprep.subr.mxu0 0.0
        %2223 = vmatpush1.msra.mxu0 0.0
        %2224 = vmatprep.subr.mxu0 0.0
        %2225 = vmatpush1.msra.mxu0 0.0
        %2226 = vmatprep.subr.mxu0 0.0
        %2227 = vmatpush1.msra.mxu0 0.0
        %2228 = vmatprep.subr.mxu0 0.0
        %2229 = vmatpush1.msra.mxu0 0.0
        %2230 = vmatprep.subr.mxu0 0.0
        %2231 = vmatpush1.msra.mxu0 0.0
        %2232 = vmatprep.subr.mxu0 0.0
        %2233 = vmatpush1.msra.mxu0 0.0
        %2234 = vmatprep.mubr.f32.mxu0 0.0
        %2235 = vmatmul.mubr.f32.gmra.mrb[0].mxu0 %v1040
        %v2236 = vpop.f32.mrb[0].mxu0
        %v2237 = vadd.f32 0.0, %v2236
        %v2238 = vpop.f32.mrb[0].mxu0
        %2239 = vmatprep.mubr.f32.mxu0 0.0
        %2240 = vmatmul.mubr.f32.gmra.mrb[0].mxu0 %v1043
        %v2241 = vpop.f32.mrb[0].mxu0
        %v2242 = vadd.f32 0.0, %v2241
        %v2243 = vpop.f32.mrb[0].mxu0
        %2244 = vdwg.mxu0
        %v2245 = vld [vmem:[%s487] sm:$0x3]
        %v2246 = vunpack.c.l.bf16 %v2245
        %v2247 = vld [vmem:[#allocation13] sm:$0xff]
        %v2248 = vld [vmem:[#allocation13 + $0x8] sm:$0xff]
        %vm2249 = vcmask 31744
        %v2251 = vsel %vm2249, %v2247, 0
        %v2254 = vsel %vm2249, %v2248, 0
        %vm2256 = vcmask 1043456
        %v2258 = vsel %vm2256, %v2246, 0
        %2260 = vmatprep.subr.mxu0 0.0
        %2261 = vmatpush1.msra.mxu0 %v2258
        %2262 = vmatprep.subr.mxu0 0.0
        %2263 = vmatpush1.msra.mxu0 0.0
        %2264 = vmatprep.subr.mxu0 0.0
        %2265 = vmatpush1.msra.mxu0 0.0
        %2266 = vmatprep.subr.mxu0 0.0
        %2267 = vmatpush1.msra.mxu0 0.0
        %2268 = vmatprep.subr.mxu0 0.0
        %2269 = vmatpush1.msra.mxu0 0.0
        %2270 = vmatprep.subr.mxu0 0.0
        %2271 = vmatpush1.msra.mxu0 0.0
        %2272 = vmatprep.subr.mxu0 0.0
        %2273 = vmatpush1.msra.mxu0 0.0
        %2274 = vmatprep.subr.mxu0 0.0
        %2275 = vmatpush1.msra.mxu0 0.0
        %2276 = vmatprep.subr.mxu0 0.0
        %2277 = vmatpush1.msra.mxu0 0.0
        %2278 = vmatprep.subr.mxu0 0.0
        %2279 = vmatpush1.msra.mxu0 0.0
        %2280 = vmatprep.subr.mxu0 0.0
        %2281 = vmatpush1.msra.mxu0 0.0
        %2282 = vmatprep.subr.mxu0 0.0
        %2283 = vmatpush1.msra.mxu0 0.0
        %2284 = vmatprep.subr.mxu0 0.0
        %2285 = vmatpush1.msra.mxu0 0.0
        %2286 = vmatprep.subr.mxu0 0.0
        %2287 = vmatpush1.msra.mxu0 0.0
        %2288 = vmatprep.subr.mxu0 0.0
        %2289 = vmatpush1.msra.mxu0 0.0
        %2290 = vmatprep.subr.mxu0 0.0
        %2291 = vmatpush1.msra.mxu0 0.0
        %2292 = vmatprep.subr.mxu0 0.0
        %2293 = vmatpush1.msra.mxu0 0.0
        %2294 = vmatprep.subr.mxu0 0.0
        %2295 = vmatpush1.msra.mxu0 0.0
        %2296 = vmatprep.subr.mxu0 0.0
        %2297 = vmatpush1.msra.mxu0 0.0
        %2298 = vmatprep.subr.mxu0 0.0
        %2299 = vmatpush1.msra.mxu0 0.0
        %2300 = vmatprep.subr.mxu0 0.0
        %2301 = vmatpush1.msra.mxu0 0.0
        %2302 = vmatprep.subr.mxu0 0.0
        %2303 = vmatpush1.msra.mxu0 0.0
        %2304 = vmatprep.subr.mxu0 0.0
        %2305 = vmatpush1.msra.mxu0 0.0
        %2306 = vmatprep.subr.mxu0 0.0
        %2307 = vmatpush1.msra.mxu0 0.0
        %2308 = vmatprep.subr.mxu0 0.0
        %2309 = vmatpush1.msra.mxu0 0.0
        %2310 = vmatprep.subr.mxu0 0.0
        %2311 = vmatpush1.msra.mxu0 0.0
        %2312 = vmatprep.subr.mxu0 0.0
        %2313 = vmatpush1.msra.mxu0 0.0
        %2314 = vmatprep.subr.mxu0 0.0
        %2315 = vmatpush1.msra.mxu0 0.0
        %2316 = vmatprep.subr.mxu0 0.0
        %2317 = vmatpush1.msra.mxu0 0.0
        %2318 = vmatprep.subr.mxu0 0.0
        %2319 = vmatpush1.msra.mxu0 0.0
        %2320 = vmatprep.subr.mxu0 0.0
        %2321 = vmatpush1.msra.mxu0 0.0
        %2322 = vmatprep.subr.mxu0 0.0
        %2323 = vmatpush1.msra.mxu0 0.0
        %2324 = vmatprep.mubr.f32.mxu0 0.0
        %2325 = vmatmul.mubr.f32.gmra.mrb[0].mxu0 %v2251
        %v2326 = vpop.f32.mrb[0].mxu0
        %v2327 = vadd.f32 0.0, %v2326
        %v2328 = vpop.f32.mrb[0].mxu0
        %2329 = vmatprep.mubr.f32.mxu0 0.0
        %2330 = vmatmul.mubr.f32.gmra.mrb[0].mxu0 %v2254
        %v2331 = vpop.f32.mrb[0].mxu0
        %v2332 = vadd.f32 0.0, %v2331
        %v2333 = vpop.f32.mrb[0].mxu0
        %2334 = vdwg.mxu0
        %2337 = vrot.lane.b32.xlu0 %v2327, 96
        %v2338 = vpop.permute.xlu0 %2337
        %2339 = vrot.lane.b32.xlu0 %v2332, 96
        %v2340 = vpop.permute.xlu0 %2339
        %2343 = vrot.lane.b32.xlu0 %v2327, 64
        %v2344 = vpop.permute.xlu0 %2343
        %2345 = vrot.lane.b32.xlu0 %v2332, 64
        %v2346 = vpop.permute.xlu0 %2345
        %2349 = vrot.lane.b32.xlu0 %v2327, 32
        %v2350 = vpop.permute.xlu0 %2349
        %2351 = vrot.lane.b32.xlu0 %v2332, 32
        %v2352 = vpop.permute.xlu0 %2351
        %v2355 = vcombine.low %v2327, %v2344
        %v2356 = vcombine.high %v2327, %v2344
        %v2358 = vunpack.c.l.s4 1983009808
        %v2359 = vunpack.c.0.s8 %v2358
        %v2360 = vlaneseq
        %v2361 = vshrl.u32 %v2360, 7
        %v2362 = vsub.s32 %v2359, %v2361
        %v2363 = vrot.slane %v2355, %v2362
        %v2365 = vunpack.c.l.s4 1983009808
        %v2366 = vunpack.c.0.s8 %v2365
        %v2367 = vlaneseq
        %v2368 = vshrl.u32 %v2367, 7
        %v2369 = vsub.s32 %v2366, %v2368
        %v2370 = vrot.slane %v2356, %v2369
        %v2371 = vcombine.low %v2338, %v2350
        %v2372 = vcombine.high %v2338, %v2350
        %v2374 = vunpack.c.l.s4 1983009808
        %v2375 = vunpack.c.0.s8 %v2374
        %v2376 = vlaneseq
        %v2377 = vshrl.u32 %v2376, 7
        %v2378 = vsub.s32 %v2375, %v2377
        %v2379 = vrot.slane %v2371, %v2378
        %v2381 = vunpack.c.l.s4 1983009808
        %v2382 = vunpack.c.0.s8 %v2381
        %v2383 = vlaneseq
        %v2384 = vshrl.u32 %v2383, 7
        %v2385 = vsub.s32 %v2382, %v2384
        %v2386 = vrot.slane %v2372, %v2385
        %v2387 = vcombine.low %v2363, %v2379
        %v2388 = vcombine.high %v2363, %v2379
        %v2390 = vunpack.c.l.s4 1934713408
        %v2391 = vunpack.c.0.s8 %v2390
        %v2392 = vlaneseq
        %v2393 = vshrl.u32 %v2392, 7
        %v2394 = vsub.s32 %v2391, %v2393
        %v2395 = vrot.slane %v2387, %v2394
        %v2397 = vunpack.c.l.s4 1934713408
        %v2398 = vunpack.c.0.s8 %v2397
        %v2399 = vlaneseq
        %v2400 = vshrl.u32 %v2399, 7
        %v2401 = vsub.s32 %v2398, %v2400
        %v2402 = vrot.slane %v2388, %v2401
        %v2403 = vcombine.low %v2370, %v2386
        %v2404 = vcombine.high %v2370, %v2386
        %v2406 = vunpack.c.l.s4 1934713408
        %v2407 = vunpack.c.0.s8 %v2406
        %v2408 = vlaneseq
        %v2409 = vshrl.u32 %v2408, 7
        %v2410 = vsub.s32 %v2407, %v2409
        %v2411 = vrot.slane %v2403, %v2410
        %v2413 = vunpack.c.l.s4 1934713408
        %v2414 = vunpack.c.0.s8 %v2413
        %v2415 = vlaneseq
        %v2416 = vshrl.u32 %v2415, 7
        %v2417 = vsub.s32 %v2414, %v2416
        %v2418 = vrot.slane %v2404, %v2417
        %v2419 = vcombine.high %v2395, 0.0
        %v2420 = vcombine.high %v2402, 0.0
        %v2421 = vcombine.high %v2411, 0.0
        %v2422 = vcombine.high %v2418, 0.0
        %v2423 = vcombine.low %v2332, %v2346
        %v2424 = vcombine.high %v2332, %v2346
        %v2426 = vunpack.c.l.s4 1983009808
        %v2427 = vunpack.c.0.s8 %v2426
        %v2428 = vlaneseq
        %v2429 = vshrl.u32 %v2428, 7
        %v2430 = vsub.s32 %v2427, %v2429
        %v2431 = vrot.slane %v2423, %v2430
        %v2433 = vunpack.c.l.s4 1983009808
        %v2434 = vunpack.c.0.s8 %v2433
        %v2435 = vlaneseq
        %v2436 = vshrl.u32 %v2435, 7
        %v2437 = vsub.s32 %v2434, %v2436
        %v2438 = vrot.slane %v2424, %v2437
        %v2439 = vcombine.low %v2340, %v2352
        %v2440 = vcombine.high %v2340, %v2352
        %v2442 = vunpack.c.l.s4 1983009808
        %v2443 = vunpack.c.0.s8 %v2442
        %v2444 = vlaneseq
        %v2445 = vshrl.u32 %v2444, 7
        %v2446 = vsub.s32 %v2443, %v2445
        %v2447 = vrot.slane %v2439, %v2446
        %v2449 = vunpack.c.l.s4 1983009808
        %v2450 = vunpack.c.0.s8 %v2449
        %v2451 = vlaneseq
        %v2452 = vshrl.u32 %v2451, 7
        %v2453 = vsub.s32 %v2450, %v2452
        %v2454 = vrot.slane %v2440, %v2453
        %v2455 = vcombine.low %v2431, %v2447
        %v2456 = vcombine.high %v2431, %v2447
        %v2458 = vunpack.c.l.s4 1934713408
        %v2459 = vunpack.c.0.s8 %v2458
        %v2460 = vlaneseq
        %v2461 = vshrl.u32 %v2460, 7
        %v2462 = vsub.s32 %v2459, %v2461
        %v2463 = vrot.slane %v2455, %v2462
        %v2465 = vunpack.c.l.s4 1934713408
        %v2466 = vunpack.c.0.s8 %v2465
        %v2467 = vlaneseq
        %v2468 = vshrl.u32 %v2467, 7
        %v2469 = vsub.s32 %v2466, %v2468
        %v2470 = vrot.slane %v2456, %v2469
        %v2471 = vcombine.low %v2438, %v2454
        %v2472 = vcombine.high %v2438, %v2454
        %v2474 = vunpack.c.l.s4 1934713408
        %v2475 = vunpack.c.0.s8 %v2474
        %v2476 = vlaneseq
        %v2477 = vshrl.u32 %v2476, 7
        %v2478 = vsub.s32 %v2475, %v2477
        %v2479 = vrot.slane %v2471, %v2478
        %v2481 = vunpack.c.l.s4 1934713408
        %v2482 = vunpack.c.0.s8 %v2481
        %v2483 = vlaneseq
        %v2484 = vshrl.u32 %v2483, 7
        %v2485 = vsub.s32 %v2482, %v2484
        %v2486 = vrot.slane %v2472, %v2485
        %v2487 = vcombine.high %v2463, 0.0
        %v2488 = vcombine.high %v2470, 0.0
        %v2489 = vcombine.high %v2479, 0.0
        %v2490 = vcombine.high %v2486, 0.0
        %v2491 = vld [vmem:[#allocation14] sm:$0xff]
        %v2492 = vld [vmem:[#allocation14 + $0x8] sm:$0xff]
        %v2494 = vsel %vm2249, %v2491, 0
        %v2497 = vsel %vm2249, %v2492, 0
        %v2500 = vsel %vm2256, %v2395, 0
        %2502 = vmatprep.subr.mxu0 0.0
        %2503 = vmatpush1.msra.mxu0 %v2500
        %2504 = vmatprep.subr.mxu0 0.0
        %2505 = vmatpush1.msra.mxu0 0.0
        %2506 = vmatprep.subr.mxu0 0.0
        %2507 = vmatpush1.msra.mxu0 0.0
        %2508 = vmatprep.subr.mxu0 0.0
        %2509 = vmatpush1.msra.mxu0 0.0
        %2510 = vmatprep.subr.mxu0 0.0
        %2511 = vmatpush1.msra.mxu0 0.0
        %2512 = vmatprep.subr.mxu0 0.0
        %2513 = vmatpush1.msra.mxu0 0.0
        %2514 = vmatprep.subr.mxu0 0.0
        %2515 = vmatpush1.msra.mxu0 0.0
        %2516 = vmatprep.subr.mxu0 0.0
        %2517 = vmatpush1.msra.mxu0 0.0
        %2518 = vmatprep.subr.mxu0 0.0
        %2519 = vmatpush1.msra.mxu0 0.0
        %2520 = vmatprep.subr.mxu0 0.0
        %2521 = vmatpush1.msra.mxu0 0.0
        %2522 = vmatprep.subr.mxu0 0.0
        %2523 = vmatpush1.msra.mxu0 0.0
        %2524 = vmatprep.subr.mxu0 0.0
        %2525 = vmatpush1.msra.mxu0 0.0
        %2526 = vmatprep.subr.mxu0 0.0
        %2527 = vmatpush1.msra.mxu0 0.0
        %2528 = vmatprep.subr.mxu0 0.0
        %2529 = vmatpush1.msra.mxu0 0.0
        %2530 = vmatprep.subr.mxu0 0.0
        %2531 = vmatpush1.msra.mxu0 0.0
        %2532 = vmatprep.subr.mxu0 0.0
        %2533 = vmatpush1.msra.mxu0 0.0
        %2534 = vmatprep.subr.mxu0 0.0
        %2535 = vmatpush1.msra.mxu0 0.0
        %2536 = vmatprep.subr.mxu0 0.0
        %2537 = vmatpush1.msra.mxu0 0.0
        %2538 = vmatprep.subr.mxu0 0.0
        %2539 = vmatpush1.msra.mxu0 0.0
        %2540 = vmatprep.subr.mxu0 0.0
        %2541 = vmatpush1.msra.mxu0 0.0
        %2542 = vmatprep.subr.mxu0 0.0
        %2543 = vmatpush1.msra.mxu0 0.0
        %2544 = vmatprep.subr.mxu0 0.0
        %2545 = vmatpush1.msra.mxu0 0.0
        %2546 = vmatprep.subr.mxu0 0.0
        %2547 = vmatpush1.msra.mxu0 0.0
        %2548 = vmatprep.subr.mxu0 0.0
        %2549 = vmatpush1.msra.mxu0 0.0
        %2550 = vmatprep.subr.mxu0 0.0
        %2551 = vmatpush1.msra.mxu0 0.0
        %2552 = vmatprep.subr.mxu0 0.0
        %2553 = vmatpush1.msra.mxu0 0.0
        %2554 = vmatprep.subr.mxu0 0.0
        %2555 = vmatpush1.msra.mxu0 0.0
        %2556 = vmatprep.subr.mxu0 0.0
        %2557 = vmatpush1.msra.mxu0 0.0
        %2558 = vmatprep.subr.mxu0 0.0
        %2559 = vmatpush1.msra.mxu0 0.0
        %2560 = vmatprep.subr.mxu0 0.0
        %2561 = vmatpush1.msra.mxu0 0.0
        %2562 = vmatprep.subr.mxu0 0.0
        %2563 = vmatpush1.msra.mxu0 0.0
        %2564 = vmatprep.subr.mxu0 0.0
        %2565 = vmatpush1.msra.mxu0 0.0
        %2566 = vmatprep.mubr.f32.mxu0 0.0
        %2567 = vmatmul.mubr.f32.gmra.mrb[0].mxu0 %v2494
        %v2568 = vpop.f32.mrb[0].mxu0
        %v2569 = vadd.f32 0.0, %v2568
        %v2570 = vpop.f32.mrb[0].mxu0
        %2571 = vmatprep.mubr.f32.mxu0 0.0
        %2572 = vmatmul.mubr.f32.gmra.mrb[0].mxu0 %v2497
        %v2573 = vpop.f32.mrb[0].mxu0
        %v2574 = vadd.f32 0.0, %v2573
        %v2575 = vpop.f32.mrb[0].mxu0
        %2576 = vdwg.mxu0
        %v2578 = vsel %vm2256, %v2419, 0
        %2580 = vmatprep.subr.mxu0 0.0
        %2581 = vmatpush1.msra.mxu0 %v2578
        %2582 = vmatprep.subr.mxu0 0.0
        %2583 = vmatpush1.msra.mxu0 0.0
        %2584 = vmatprep.subr.mxu0 0.0
        %2585 = vmatpush1.msra.mxu0 0.0
        %2586 = vmatprep.subr.mxu0 0.0
        %2587 = vmatpush1.msra.mxu0 0.0
        %2588 = vmatprep.subr.mxu0 0.0
        %2589 = vmatpush1.msra.mxu0 0.0
        %2590 = vmatprep.subr.mxu0 0.0
        %2591 = vmatpush1.msra.mxu0 0.0
        %2592 = vmatprep.subr.mxu0 0.0
        %2593 = vmatpush1.msra.mxu0 0.0
        %2594 = vmatprep.subr.mxu0 0.0
        %2595 = vmatpush1.msra.mxu0 0.0
        %2596 = vmatprep.subr.mxu0 0.0
        %2597 = vmatpush1.msra.mxu0 0.0
        %2598 = vmatprep.subr.mxu0 0.0
        %2599 = vmatpush1.msra.mxu0 0.0
        %2600 = vmatprep.subr.mxu0 0.0
        %2601 = vmatpush1.msra.mxu0 0.0
        %2602 = vmatprep.subr.mxu0 0.0
        %2603 = vmatpush1.msra.mxu0 0.0
        %2604 = vmatprep.subr.mxu0 0.0
        %2605 = vmatpush1.msra.mxu0 0.0
        %2606 = vmatprep.subr.mxu0 0.0
        %2607 = vmatpush1.msra.mxu0 0.0
        %2608 = vmatprep.subr.mxu0 0.0
        %2609 = vmatpush1.msra.mxu0 0.0
        %2610 = vmatprep.subr.mxu0 0.0
        %2611 = vmatpush1.msra.mxu0 0.0
        %2612 = vmatprep.subr.mxu0 0.0
        %2613 = vmatpush1.msra.mxu0 0.0
        %2614 = vmatprep.subr.mxu0 0.0
        %2615 = vmatpush1.msra.mxu0 0.0
        %2616 = vmatprep.subr.mxu0 0.0
        %2617 = vmatpush1.msra.mxu0 0.0
        %2618 = vmatprep.subr.mxu0 0.0
        %2619 = vmatpush1.msra.mxu0 0.0
        %2620 = vmatprep.subr.mxu0 0.0
        %2621 = vmatpush1.msra.mxu0 0.0
        %2622 = vmatprep.subr.mxu0 0.0
        %2623 = vmatpush1.msra.mxu0 0.0
        %2624 = vmatprep.subr.mxu0 0.0
        %2625 = vmatpush1.msra.mxu0 0.0
        %2626 = vmatprep.subr.mxu0 0.0
        %2627 = vmatpush1.msra.mxu0 0.0
        %2628 = vmatprep.subr.mxu0 0.0
        %2629 = vmatpush1.msra.mxu0 0.0
        %2630 = vmatprep.subr.mxu0 0.0
        %2631 = vmatpush1.msra.mxu0 0.0
        %2632 = vmatprep.subr.mxu0 0.0
        %2633 = vmatpush1.msra.mxu0 0.0
        %2634 = vmatprep.subr.mxu0 0.0
        %2635 = vmatpush1.msra.mxu0 0.0
        %2636 = vmatprep.subr.mxu0 0.0
        %2637 = vmatpush1.msra.mxu0 0.0
        %2638 = vmatprep.subr.mxu0 0.0
        %2639 = vmatpush1.msra.mxu0 0.0
        %2640 = vmatprep.subr.mxu0 0.0
        %2641 = vmatpush1.msra.mxu0 0.0
        %2642 = vmatprep.subr.mxu0 0.0
        %2643 = vmatpush1.msra.mxu0 0.0
        %2644 = vmatprep.mubr.f32.mxu0 0.0
        %2645 = vmatmul.mubr.f32.gmra.mrb[0].mxu0 %v2494
        %v2646 = vpop.f32.mrb[0].mxu0
        %v2647 = vadd.f32 0.0, %v2646
        %v2648 = vpop.f32.mrb[0].mxu0
        %2649 = vmatprep.mubr.f32.mxu0 0.0
        %2650 = vmatmul.mubr.f32.gmra.mrb[0].mxu0 %v2497
        %v2651 = vpop.f32.mrb[0].mxu0
        %v2652 = vadd.f32 0.0, %v2651
        %v2653 = vpop.f32.mrb[0].mxu0
        %2654 = vdwg.mxu0
        %v2656 = vsel %vm2256, %v2402, 0
        %2658 = vmatprep.subr.mxu0 0.0
        %2659 = vmatpush1.msra.mxu0 %v2656
        %2660 = vmatprep.subr.mxu0 0.0
        %2661 = vmatpush1.msra.mxu0 0.0
        %2662 = vmatprep.subr.mxu0 0.0
        %2663 = vmatpush1.msra.mxu0 0.0
        %2664 = vmatprep.subr.mxu0 0.0
        %2665 = vmatpush1.msra.mxu0 0.0
        %2666 = vmatprep.subr.mxu0 0.0
        %2667 = vmatpush1.msra.mxu0 0.0
        %2668 = vmatprep.subr.mxu0 0.0
        %2669 = vmatpush1.msra.mxu0 0.0
        %2670 = vmatprep.subr.mxu0 0.0
        %2671 = vmatpush1.msra.mxu0 0.0
        %2672 = vmatprep.subr.mxu0 0.0
        %2673 = vmatpush1.msra.mxu0 0.0
        %2674 = vmatprep.subr.mxu0 0.0
        %2675 = vmatpush1.msra.mxu0 0.0
        %2676 = vmatprep.subr.mxu0 0.0
        %2677 = vmatpush1.msra.mxu0 0.0
        %2678 = vmatprep.subr.mxu0 0.0
        %2679 = vmatpush1.msra.mxu0 0.0
        %2680 = vmatprep.subr.mxu0 0.0
        %2681 = vmatpush1.msra.mxu0 0.0
        %2682 = vmatprep.subr.mxu0 0.0
        %2683 = vmatpush1.msra.mxu0 0.0
        %2684 = vmatprep.subr.mxu0 0.0
        %2685 = vmatpush1.msra.mxu0 0.0
        %2686 = vmatprep.subr.mxu0 0.0
        %2687 = vmatpush1.msra.mxu0 0.0
        %2688 = vmatprep.subr.mxu0 0.0
        %2689 = vmatpush1.msra.mxu0 0.0
        %2690 = vmatprep.subr.mxu0 0.0
        %2691 = vmatpush1.msra.mxu0 0.0
        %2692 = vmatprep.subr.mxu0 0.0
        %2693 = vmatpush1.msra.mxu0 0.0
        %2694 = vmatprep.subr.mxu0 0.0
        %2695 = vmatpush1.msra.mxu0 0.0
        %2696 = vmatprep.subr.mxu0 0.0
        %2697 = vmatpush1.msra.mxu0 0.0
        %2698 = vmatprep.subr.mxu0 0.0
        %2699 = vmatpush1.msra.mxu0 0.0
        %2700 = vmatprep.subr.mxu0 0.0
        %2701 = vmatpush1.msra.mxu0 0.0
        %2702 = vmatprep.subr.mxu0 0.0
        %2703 = vmatpush1.msra.mxu0 0.0
        %2704 = vmatprep.subr.mxu0 0.0
        %2705 = vmatpush1.msra.mxu0 0.0
        %2706 = vmatprep.subr.mxu0 0.0
        %2707 = vmatpush1.msra.mxu0 0.0
        %2708 = vmatprep.subr.mxu0 0.0
        %2709 = vmatpush1.msra.mxu0 0.0
        %2710 = vmatprep.subr.mxu0 0.0
        %2711 = vmatpush1.msra.mxu0 0.0
        %2712 = vmatprep.subr.mxu0 0.0
        %2713 = vmatpush1.msra.mxu0 0.0
        %2714 = vmatprep.subr.mxu0 0.0
        %2715 = vmatpush1.msra.mxu0 0.0
        %2716 = vmatprep.subr.mxu0 0.0
        %2717 = vmatpush1.msra.mxu0 0.0
        %2718 = vmatprep.subr.mxu0 0.0
        %2719 = vmatpush1.msra.mxu0 0.0
        %2720 = vmatprep.subr.mxu0 0.0
        %2721 = vmatpush1.msra.mxu0 0.0
        %2722 = vmatprep.mubr.f32.mxu0 0.0
        %2723 = vmatmul.mubr.f32.gmra.mrb[0].mxu0 %v2494
        %v2724 = vpop.f32.mrb[0].mxu0
        %v2725 = vadd.f32 0.0, %v2724
        %v2726 = vpop.f32.mrb[0].mxu0
        %2727 = vmatprep.mubr.f32.mxu0 0.0
        %2728 = vmatmul.mubr.f32.gmra.mrb[0].mxu0 %v2497
        %v2729 = vpop.f32.mrb[0].mxu0
        %v2730 = vadd.f32 0.0, %v2729
        %v2731 = vpop.f32.mrb[0].mxu0
        %2732 = vdwg.mxu0
        %v2734 = vsel %vm2256, %v2420, 0
        %2736 = vmatprep.subr.mxu0 0.0
        %2737 = vmatpush1.msra.mxu0 %v2734
        %2738 = vmatprep.subr.mxu0 0.0
        %2739 = vmatpush1.msra.mxu0 0.0
        %2740 = vmatprep.subr.mxu0 0.0
        %2741 = vmatpush1.msra.mxu0 0.0
        %2742 = vmatprep.subr.mxu0 0.0
        %2743 = vmatpush1.msra.mxu0 0.0
        %2744 = vmatprep.subr.mxu0 0.0
        %2745 = vmatpush1.msra.mxu0 0.0
        %2746 = vmatprep.subr.mxu0 0.0
        %2747 = vmatpush1.msra.mxu0 0.0
        %2748 = vmatprep.subr.mxu0 0.0
        %2749 = vmatpush1.msra.mxu0 0.0
        %2750 = vmatprep.subr.mxu0 0.0
        %2751 = vmatpush1.msra.mxu0 0.0
        %2752 = vmatprep.subr.mxu0 0.0
        %2753 = vmatpush1.msra.mxu0 0.0
        %2754 = vmatprep.subr.mxu0 0.0
        %2755 = vmatpush1.msra.mxu0 0.0
        %2756 = vmatprep.subr.mxu0 0.0
        %2757 = vmatpush1.msra.mxu0 0.0
        %2758 = vmatprep.subr.mxu0 0.0
        %2759 = vmatpush1.msra.mxu0 0.0
        %2760 = vmatprep.subr.mxu0 0.0
        %2761 = vmatpush1.msra.mxu0 0.0
        %2762 = vmatprep.subr.mxu0 0.0
        %2763 = vmatpush1.msra.mxu0 0.0
        %2764 = vmatprep.subr.mxu0 0.0
        %2765 = vmatpush1.msra.mxu0 0.0
        %2766 = vmatprep.subr.mxu0 0.0
        %2767 = vmatpush1.msra.mxu0 0.0
        %2768 = vmatprep.subr.mxu0 0.0
        %2769 = vmatpush1.msra.mxu0 0.0
        %2770 = vmatprep.subr.mxu0 0.0
        %2771 = vmatpush1.msra.mxu0 0.0
        %2772 = vmatprep.subr.mxu0 0.0
        %2773 = vmatpush1.msra.mxu0 0.0
        %2774 = vmatprep.subr.mxu0 0.0
        %2775 = vmatpush1.msra.mxu0 0.0
        %2776 = vmatprep.subr.mxu0 0.0
        %2777 = vmatpush1.msra.mxu0 0.0
        %2778 = vmatprep.subr.mxu0 0.0
        %2779 = vmatpush1.msra.mxu0 0.0
        %2780 = vmatprep.subr.mxu0 0.0
        %2781 = vmatpush1.msra.mxu0 0.0
        %2782 = vmatprep.subr.mxu0 0.0
        %2783 = vmatpush1.msra.mxu0 0.0
        %2784 = vmatprep.subr.mxu0 0.0
        %2785 = vmatpush1.msra.mxu0 0.0
        %2786 = vmatprep.subr.mxu0 0.0
        %2787 = vmatpush1.msra.mxu0 0.0
        %2788 = vmatprep.subr.mxu0 0.0
        %2789 = vmatpush1.msra.mxu0 0.0
        %2790 = vmatprep.subr.mxu0 0.0
        %2791 = vmatpush1.msra.mxu0 0.0
        %2792 = vmatprep.subr.mxu0 0.0
        %2793 = vmatpush1.msra.mxu0 0.0
        %2794 = vmatprep.subr.mxu0 0.0
        %2795 = vmatpush1.msra.mxu0 0.0
        %2796 = vmatprep.subr.mxu0 0.0
        %2797 = vmatpush1.msra.mxu0 0.0
        %2798 = vmatprep.subr.mxu0 0.0
        %2799 = vmatpush1.msra.mxu0 0.0
        %2800 = vmatprep.mubr.f32.mxu0 0.0
        %2801 = vmatmul.mubr.f32.gmra.mrb[0].mxu0 %v2494
        %v2802 = vpop.f32.mrb[0].mxu0
        %v2803 = vadd.f32 0.0, %v2802
        %v2804 = vpop.f32.mrb[0].mxu0
        %2805 = vmatprep.mubr.f32.mxu0 0.0
        %2806 = vmatmul.mubr.f32.gmra.mrb[0].mxu0 %v2497
        %v2807 = vpop.f32.mrb[0].mxu0
        %v2808 = vadd.f32 0.0, %v2807
        %v2809 = vpop.f32.mrb[0].mxu0
        %2810 = vdwg.mxu0
        %v2812 = vsel %vm2256, %v2411, 0
        %2814 = vmatprep.subr.mxu0 0.0
        %2815 = vmatpush1.msra.mxu0 %v2812
        %2816 = vmatprep.subr.mxu0 0.0
        %2817 = vmatpush1.msra.mxu0 0.0
        %2818 = vmatprep.subr.mxu0 0.0
        %2819 = vmatpush1.msra.mxu0 0.0
        %2820 = vmatprep.subr.mxu0 0.0
        %2821 = vmatpush1.msra.mxu0 0.0
        %2822 = vmatprep.subr.mxu0 0.0
        %2823 = vmatpush1.msra.mxu0 0.0
        %2824 = vmatprep.subr.mxu0 0.0
        %2825 = vmatpush1.msra.mxu0 0.0
        %2826 = vmatprep.subr.mxu0 0.0
        %2827 = vmatpush1.msra.mxu0 0.0
        %2828 = vmatprep.subr.mxu0 0.0
        %2829 = vmatpush1.msra.mxu0 0.0
        %2830 = vmatprep.subr.mxu0 0.0
        %2831 = vmatpush1.msra.mxu0 0.0
        %2832 = vmatprep.subr.mxu0 0.0
        %2833 = vmatpush1.msra.mxu0 0.0
        %2834 = vmatprep.subr.mxu0 0.0
        %2835 = vmatpush1.msra.mxu0 0.0
        %2836 = vmatprep.subr.mxu0 0.0
        %2837 = vmatpush1.msra.mxu0 0.0
        %2838 = vmatprep.subr.mxu0 0.0
        %2839 = vmatpush1.msra.mxu0 0.0
        %2840 = vmatprep.subr.mxu0 0.0
        %2841 = vmatpush1.msra.mxu0 0.0
        %2842 = vmatprep.subr.mxu0 0.0
        %2843 = vmatpush1.msra.mxu0 0.0
        %2844 = vmatprep.subr.mxu0 0.0
        %2845 = vmatpush1.msra.mxu0 0.0
        %2846 = vmatprep.subr.mxu0 0.0
        %2847 = vmatpush1.msra.mxu0 0.0
        %2848 = vmatprep.subr.mxu0 0.0
        %2849 = vmatpush1.msra.mxu0 0.0
        %2850 = vmatprep.subr.mxu0 0.0
        %2851 = vmatpush1.msra.mxu0 0.0
        %2852 = vmatprep.subr.mxu0 0.0
        %2853 = vmatpush1.msra.mxu0 0.0
        %2854 = vmatprep.subr.mxu0 0.0
        %2855 = vmatpush1.msra.mxu0 0.0
        %2856 = vmatprep.subr.mxu0 0.0
        %2857 = vmatpush1.msra.mxu0 0.0
        %2858 = vmatprep.subr.mxu0 0.0
        %2859 = vmatpush1.msra.mxu0 0.0
        %2860 = vmatprep.subr.mxu0 0.0
        %2861 = vmatpush1.msra.mxu0 0.0
        %2862 = vmatprep.subr.mxu0 0.0
        %2863 = vmatpush1.msra.mxu0 0.0
        %2864 = vmatprep.subr.mxu0 0.0
        %2865 = vmatpush1.msra.mxu0 0.0
        %2866 = vmatprep.subr.mxu0 0.0
        %2867 = vmatpush1.msra.mxu0 0.0
        %2868 = vmatprep.subr.mxu0 0.0
        %2869 = vmatpush1.msra.mxu0 0.0
        %2870 = vmatprep.subr.mxu0 0.0
        %2871 = vmatpush1.msra.mxu0 0.0
        %2872 = vmatprep.subr.mxu0 0.0
        %2873 = vmatpush1.msra.mxu0 0.0
        %2874 = vmatprep.subr.mxu0 0.0
        %2875 = vmatpush1.msra.mxu0 0.0
        %2876 = vmatprep.subr.mxu0 0.0
        %2877 = vmatpush1.msra.mxu0 0.0
        %2878 = vmatprep.mubr.f32.mxu0 0.0
        %2879 = vmatmul.mubr.f32.gmra.mrb[0].mxu0 %v2494
        %v2880 = vpop.f32.mrb[0].mxu0
        %v2881 = vadd.f32 0.0, %v2880
        %v2882 = vpop.f32.mrb[0].mxu0
        %2883 = vmatprep.mubr.f32.mxu0 0.0
        %2884 = vmatmul.mubr.f32.gmra.mrb[0].mxu0 %v2497
        %v2885 = vpop.f32.mrb[0].mxu0
        %v2886 = vadd.f32 0.0, %v2885
        %v2887 = vpop.f32.mrb[0].mxu0
        %2888 = vdwg.mxu0
        %v2890 = vsel %vm2256, %v2421, 0
        %2892 = vmatprep.subr.mxu0 0.0
        %2893 = vmatpush1.msra.mxu0 %v2890
        %2894 = vmatprep.subr.mxu0 0.0
        %2895 = vmatpush1.msra.mxu0 0.0
        %2896 = vmatprep.subr.mxu0 0.0
        %2897 = vmatpush1.msra.mxu0 0.0
        %2898 = vmatprep.subr.mxu0 0.0
        %2899 = vmatpush1.msra.mxu0 0.0
        %2900 = vmatprep.subr.mxu0 0.0
        %2901 = vmatpush1.msra.mxu0 0.0
        %2902 = vmatprep.subr.mxu0 0.0
        %2903 = vmatpush1.msra.mxu0 0.0
        %2904 = vmatprep.subr.mxu0 0.0
        %2905 = vmatpush1.msra.mxu0 0.0
        %2906 = vmatprep.subr.mxu0 0.0
        %2907 = vmatpush1.msra.mxu0 0.0
        %2908 = vmatprep.subr.mxu0 0.0
        %2909 = vmatpush1.msra.mxu0 0.0
        %2910 = vmatprep.subr.mxu0 0.0
        %2911 = vmatpush1.msra.mxu0 0.0
        %2912 = vmatprep.subr.mxu0 0.0
        %2913 = vmatpush1.msra.mxu0 0.0
        %2914 = vmatprep.subr.mxu0 0.0
        %2915 = vmatpush1.msra.mxu0 0.0
        %2916 = vmatprep.subr.mxu0 0.0
        %2917 = vmatpush1.msra.mxu0 0.0
        %2918 = vmatprep.subr.mxu0 0.0
        %2919 = vmatpush1.msra.mxu0 0.0
        %2920 = vmatprep.subr.mxu0 0.0
        %2921 = vmatpush1.msra.mxu0 0.0
        %2922 = vmatprep.subr.mxu0 0.0
        %2923 = vmatpush1.msra.mxu0 0.0
        %2924 = vmatprep.subr.mxu0 0.0
        %2925 = vmatpush1.msra.mxu0 0.0
        %2926 = vmatprep.subr.mxu0 0.0
        %2927 = vmatpush1.msra.mxu0 0.0
        %2928 = vmatprep.subr.mxu0 0.0
        %2929 = vmatpush1.msra.mxu0 0.0
        %2930 = vmatprep.subr.mxu0 0.0
        %2931 = vmatpush1.msra.mxu0 0.0
        %2932 = vmatprep.subr.mxu0 0.0
        %2933 = vmatpush1.msra.mxu0 0.0
        %2934 = vmatprep.subr.mxu0 0.0
        %2935 = vmatpush1.msra.mxu0 0.0
        %2936 = vmatprep.subr.mxu0 0.0
        %2937 = vmatpush1.msra.mxu0 0.0
        %2938 = vmatprep.subr.mxu0 0.0
        %2939 = vmatpush1.msra.mxu0 0.0
        %2940 = vmatprep.subr.mxu0 0.0
        %2941 = vmatpush1.msra.mxu0 0.0
        %2942 = vmatprep.subr.mxu0 0.0
        %2943 = vmatpush1.msra.mxu0 0.0
        %2944 = vmatprep.subr.mxu0 0.0
        %2945 = vmatpush1.msra.mxu0 0.0
        %2946 = vmatprep.subr.mxu0 0.0
        %2947 = vmatpush1.msra.mxu0 0.0
        %2948 = vmatprep.subr.mxu0 0.0
        %2949 = vmatpush1.msra.mxu0 0.0
        %2950 = vmatprep.subr.mxu0 0.0
        %2951 = vmatpush1.msra.mxu0 0.0
        %2952 = vmatprep.subr.mxu0 0.0
        %2953 = vmatpush1.msra.mxu0 0.0
        %2954 = vmatprep.subr.mxu0 0.0
        %2955 = vmatpush1.msra.mxu0 0.0
        %2956 = vmatprep.mubr.f32.mxu0 0.0
        %2957 = vmatmul.mubr.f32.gmra.mrb[0].mxu0 %v2494
        %v2958 = vpop.f32.mrb[0].mxu0
        %v2959 = vadd.f32 0.0, %v2958
        %v2960 = vpop.f32.mrb[0].mxu0
        %2961 = vmatprep.mubr.f32.mxu0 0.0
        %2962 = vmatmul.mubr.f32.gmra.mrb[0].mxu0 %v2497
        %v2963 = vpop.f32.mrb[0].mxu0
        %v2964 = vadd.f32 0.0, %v2963
        %v2965 = vpop.f32.mrb[0].mxu0
        %2966 = vdwg.mxu0
        %v2968 = vsel %vm2256, %v2418, 0
        %2970 = vmatprep.subr.mxu0 0.0
        %2971 = vmatpush1.msra.mxu0 %v2968
        %2972 = vmatprep.subr.mxu0 0.0
        %2973 = vmatpush1.msra.mxu0 0.0
        %2974 = vmatprep.subr.mxu0 0.0
        %2975 = vmatpush1.msra.mxu0 0.0
        %2976 = vmatprep.subr.mxu0 0.0
        %2977 = vmatpush1.msra.mxu0 0.0
        %2978 = vmatprep.subr.mxu0 0.0
        %2979 = vmatpush1.msra.mxu0 0.0
        %2980 = vmatprep.subr.mxu0 0.0
        %2981 = vmatpush1.msra.mxu0 0.0
        %2982 = vmatprep.subr.mxu0 0.0
        %2983 = vmatpush1.msra.mxu0 0.0
        %2984 = vmatprep.subr.mxu0 0.0
        %2985 = vmatpush1.msra.mxu0 0.0
        %2986 = vmatprep.subr.mxu0 0.0
        %2987 = vmatpush1.msra.mxu0 0.0
        %2988 = vmatprep.subr.mxu0 0.0
        %2989 = vmatpush1.msra.mxu0 0.0
        %2990 = vmatprep.subr.mxu0 0.0
        %2991 = vmatpush1.msra.mxu0 0.0
        %2992 = vmatprep.subr.mxu0 0.0
        %2993 = vmatpush1.msra.mxu0 0.0
        %2994 = vmatprep.subr.mxu0 0.0
        %2995 = vmatpush1.msra.mxu0 0.0
        %2996 = vmatprep.subr.mxu0 0.0
        %2997 = vmatpush1.msra.mxu0 0.0
        %2998 = vmatprep.subr.mxu0 0.0
        %2999 = vmatpush1.msra.mxu0 0.0
        %3000 = vmatprep.subr.mxu0 0.0
        %3001 = vmatpush1.msra.mxu0 0.0
        %3002 = vmatprep.subr.mxu0 0.0
        %3003 = vmatpush1.msra.mxu0 0.0
        %3004 = vmatprep.subr.mxu0 0.0
        %3005 = vmatpush1.msra.mxu0 0.0
        %3006 = vmatprep.subr.mxu0 0.0
        %3007 = vmatpush1.msra.mxu0 0.0
        %3008 = vmatprep.subr.mxu0 0.0
        %3009 = vmatpush1.msra.mxu0 0.0
        %3010 = vmatprep.subr.mxu0 0.0
        %3011 = vmatpush1.msra.mxu0 0.0
        %3012 = vmatprep.subr.mxu0 0.0
        %3013 = vmatpush1.msra.mxu0 0.0
        %3014 = vmatprep.subr.mxu0 0.0
        %3015 = vmatpush1.msra.mxu0 0.0
        %3016 = vmatprep.subr.mxu0 0.0
        %3017 = vmatpush1.msra.mxu0 0.0
        %3018 = vmatprep.subr.mxu0 0.0
        %3019 = vmatpush1.msra.mxu0 0.0
        %3020 = vmatprep.subr.mxu0 0.0
        %3021 = vmatpush1.msra.mxu0 0.0
        %3022 = vmatprep.subr.mxu0 0.0
        %3023 = vmatpush1.msra.mxu0 0.0
        %3024 = vmatprep.subr.mxu0 0.0
        %3025 = vmatpush1.msra.mxu0 0.0
        %3026 = vmatprep.subr.mxu0 0.0
        %3027 = vmatpush1.msra.mxu0 0.0
        %3028 = vmatprep.subr.mxu0 0.0
        %3029 = vmatpush1.msra.mxu0 0.0
        %3030 = vmatprep.subr.mxu0 0.0
        %3031 = vmatpush1.msra.mxu0 0.0
        %3032 = vmatprep.subr.mxu0 0.0
        %3033 = vmatpush1.msra.mxu0 0.0
        %3034 = vmatprep.mubr.f32.mxu0 0.0
        %3035 = vmatmul.mubr.f32.gmra.mrb[0].mxu0 %v2494
        %v3036 = vpop.f32.mrb[0].mxu0
        %v3037 = vadd.f32 0.0, %v3036
        %v3038 = vpop.f32.mrb[0].mxu0
        %3039 = vmatprep.mubr.f32.mxu0 0.0
        %3040 = vmatmul.mubr.f32.gmra.mrb[0].mxu0 %v2497
        %v3041 = vpop.f32.mrb[0].mxu0
        %v3042 = vadd.f32 0.0, %v3041
        %v3043 = vpop.f32.mrb[0].mxu0
        %3044 = vdwg.mxu0
        %v3046 = vsel %vm2256, %v2422, 0
        %3048 = vmatprep.subr.mxu0 0.0
        %3049 = vmatpush1.msra.mxu0 %v3046
        %3050 = vmatprep.subr.mxu0 0.0
        %3051 = vmatpush1.msra.mxu0 0.0
        %3052 = vmatprep.subr.mxu0 0.0
        %3053 = vmatpush1.msra.mxu0 0.0
        %3054 = vmatprep.subr.mxu0 0.0
        %3055 = vmatpush1.msra.mxu0 0.0
        %3056 = vmatprep.subr.mxu0 0.0
        %3057 = vmatpush1.msra.mxu0 0.0
        %3058 = vmatprep.subr.mxu0 0.0
        %3059 = vmatpush1.msra.mxu0 0.0
        %3060 = vmatprep.subr.mxu0 0.0
        %3061 = vmatpush1.msra.mxu0 0.0
        %3062 = vmatprep.subr.mxu0 0.0
        %3063 = vmatpush1.msra.mxu0 0.0
        %3064 = vmatprep.subr.mxu0 0.0
        %3065 = vmatpush1.msra.mxu0 0.0
        %3066 = vmatprep.subr.mxu0 0.0
        %3067 = vmatpush1.msra.mxu0 0.0
        %3068 = vmatprep.subr.mxu0 0.0
        %3069 = vmatpush1.msra.mxu0 0.0
        %3070 = vmatprep.subr.mxu0 0.0
        %3071 = vmatpush1.msra.mxu0 0.0
        %3072 = vmatprep.subr.mxu0 0.0
        %3073 = vmatpush1.msra.mxu0 0.0
        %3074 = vmatprep.subr.mxu0 0.0
        %3075 = vmatpush1.msra.mxu0 0.0
        %3076 = vmatprep.subr.mxu0 0.0
        %3077 = vmatpush1.msra.mxu0 0.0
        %3078 = vmatprep.subr.mxu0 0.0
        %3079 = vmatpush1.msra.mxu0 0.0
        %3080 = vmatprep.subr.mxu0 0.0
        %3081 = vmatpush1.msra.mxu0 0.0
        %3082 = vmatprep.subr.mxu0 0.0
        %3083 = vmatpush1.msra.mxu0 0.0
        %3084 = vmatprep.subr.mxu0 0.0
        %3085 = vmatpush1.msra.mxu0 0.0
        %3086 = vmatprep.subr.mxu0 0.0
        %3087 = vmatpush1.msra.mxu0 0.0
        %3088 = vmatprep.subr.mxu0 0.0
        %3089 = vmatpush1.msra.mxu0 0.0
        %3090 = vmatprep.subr.mxu0 0.0
        %3091 = vmatpush1.msra.mxu0 0.0
        %3092 = vmatprep.subr.mxu0 0.0
        %3093 = vmatpush1.msra.mxu0 0.0
        %3094 = vmatprep.subr.mxu0 0.0
        %3095 = vmatpush1.msra.mxu0 0.0
        %3096 = vmatprep.subr.mxu0 0.0
        %3097 = vmatpush1.msra.mxu0 0.0
        %3098 = vmatprep.subr.mxu0 0.0
        %3099 = vmatpush1.msra.mxu0 0.0
        %3100 = vmatprep.subr.mxu0 0.0
        %3101 = vmatpush1.msra.mxu0 0.0
        %3102 = vmatprep.subr.mxu0 0.0
        %3103 = vmatpush1.msra.mxu0 0.0
        %3104 = vmatprep.subr.mxu0 0.0
        %3105 = vmatpush1.msra.mxu0 0.0
        %3106 = vmatprep.subr.mxu0 0.0
        %3107 = vmatpush1.msra.mxu0 0.0
        %3108 = vmatprep.subr.mxu0 0.0
        %3109 = vmatpush1.msra.mxu0 0.0
        %3110 = vmatprep.subr.mxu0 0.0
        %3111 = vmatpush1.msra.mxu0 0.0
        %3112 = vmatprep.mubr.f32.mxu0 0.0
        %3113 = vmatmul.mubr.f32.gmra.mrb[0].mxu0 %v2494
        %v3114 = vpop.f32.mrb[0].mxu0
        %v3115 = vadd.f32 0.0, %v3114
        %v3116 = vpop.f32.mrb[0].mxu0
        %3117 = vmatprep.mubr.f32.mxu0 0.0
        %3118 = vmatmul.mubr.f32.gmra.mrb[0].mxu0 %v2497
        %v3119 = vpop.f32.mrb[0].mxu0
        %v3120 = vadd.f32 0.0, %v3119
        %v3121 = vpop.f32.mrb[0].mxu0
        %3122 = vdwg.mxu0
        %v3124 = vsel %vm2256, %v2463, 0
        %3126 = vmatprep.subr.mxu0 0.0
        %3127 = vmatpush1.msra.mxu0 %v3124
        %3128 = vmatprep.subr.mxu0 0.0
        %3129 = vmatpush1.msra.mxu0 0.0
        %3130 = vmatprep.subr.mxu0 0.0
        %3131 = vmatpush1.msra.mxu0 0.0
        %3132 = vmatprep.subr.mxu0 0.0
        %3133 = vmatpush1.msra.mxu0 0.0
        %3134 = vmatprep.subr.mxu0 0.0
        %3135 = vmatpush1.msra.mxu0 0.0
        %3136 = vmatprep.subr.mxu0 0.0
        %3137 = vmatpush1.msra.mxu0 0.0
        %3138 = vmatprep.subr.mxu0 0.0
        %3139 = vmatpush1.msra.mxu0 0.0
        %3140 = vmatprep.subr.mxu0 0.0
        %3141 = vmatpush1.msra.mxu0 0.0
        %3142 = vmatprep.subr.mxu0 0.0
        %3143 = vmatpush1.msra.mxu0 0.0
        %3144 = vmatprep.subr.mxu0 0.0
        %3145 = vmatpush1.msra.mxu0 0.0
        %3146 = vmatprep.subr.mxu0 0.0
        %3147 = vmatpush1.msra.mxu0 0.0
        %3148 = vmatprep.subr.mxu0 0.0
        %3149 = vmatpush1.msra.mxu0 0.0
        %3150 = vmatprep.subr.mxu0 0.0
        %3151 = vmatpush1.msra.mxu0 0.0
        %3152 = vmatprep.subr.mxu0 0.0
        %3153 = vmatpush1.msra.mxu0 0.0
        %3154 = vmatprep.subr.mxu0 0.0
        %3155 = vmatpush1.msra.mxu0 0.0
        %3156 = vmatprep.subr.mxu0 0.0
        %3157 = vmatpush1.msra.mxu0 0.0
        %3158 = vmatprep.subr.mxu0 0.0
        %3159 = vmatpush1.msra.mxu0 0.0
        %3160 = vmatprep.subr.mxu0 0.0
        %3161 = vmatpush1.msra.mxu0 0.0
        %3162 = vmatprep.subr.mxu0 0.0
        %3163 = vmatpush1.msra.mxu0 0.0
        %3164 = vmatprep.subr.mxu0 0.0
        %3165 = vmatpush1.msra.mxu0 0.0
        %3166 = vmatprep.subr.mxu0 0.0
        %3167 = vmatpush1.msra.mxu0 0.0
        %3168 = vmatprep.subr.mxu0 0.0
        %3169 = vmatpush1.msra.mxu0 0.0
        %3170 = vmatprep.subr.mxu0 0.0
        %3171 = vmatpush1.msra.mxu0 0.0
        %3172 = vmatprep.subr.mxu0 0.0
        %3173 = vmatpush1.msra.mxu0 0.0
        %3174 = vmatprep.subr.mxu0 0.0
        %3175 = vmatpush1.msra.mxu0 0.0
        %3176 = vmatprep.subr.mxu0 0.0
        %3177 = vmatpush1.msra.mxu0 0.0
        %3178 = vmatprep.subr.mxu0 0.0
        %3179 = vmatpush1.msra.mxu0 0.0
        %3180 = vmatprep.subr.mxu0 0.0
        %3181 = vmatpush1.msra.mxu0 0.0
        %3182 = vmatprep.subr.mxu0 0.0
        %3183 = vmatpush1.msra.mxu0 0.0
        %3184 = vmatprep.subr.mxu0 0.0
        %3185 = vmatpush1.msra.mxu0 0.0
        %3186 = vmatprep.subr.mxu0 0.0
        %3187 = vmatpush1.msra.mxu0 0.0
        %3188 = vmatprep.subr.mxu0 0.0
        %3189 = vmatpush1.msra.mxu0 0.0
        %3190 = vmatprep.mubr.f32.mxu0 0.0
        %3191 = vmatmul.mubr.f32.gmra.mrb[0].mxu0 %v2494
        %v3192 = vpop.f32.mrb[0].mxu0
        %v3193 = vadd.f32 0.0, %v3192
        %v3194 = vpop.f32.mrb[0].mxu0
        %3195 = vmatprep.mubr.f32.mxu0 0.0
        %3196 = vmatmul.mubr.f32.gmra.mrb[0].mxu0 %v2497
        %v3197 = vpop.f32.mrb[0].mxu0
        %v3198 = vadd.f32 0.0, %v3197
        %v3199 = vpop.f32.mrb[0].mxu0
        %3200 = vdwg.mxu0
        %v3202 = vsel %vm2256, %v2487, 0
        %3204 = vmatprep.subr.mxu0 0.0
        %3205 = vmatpush1.msra.mxu0 %v3202
        %3206 = vmatprep.subr.mxu0 0.0
        %3207 = vmatpush1.msra.mxu0 0.0
        %3208 = vmatprep.subr.mxu0 0.0
        %3209 = vmatpush1.msra.mxu0 0.0
        %3210 = vmatprep.subr.mxu0 0.0
        %3211 = vmatpush1.msra.mxu0 0.0
        %3212 = vmatprep.subr.mxu0 0.0
        %3213 = vmatpush1.msra.mxu0 0.0
        %3214 = vmatprep.subr.mxu0 0.0
        %3215 = vmatpush1.msra.mxu0 0.0
        %3216 = vmatprep.subr.mxu0 0.0
        %3217 = vmatpush1.msra.mxu0 0.0
        %3218 = vmatprep.subr.mxu0 0.0
        %3219 = vmatpush1.msra.mxu0 0.0
        %3220 = vmatprep.subr.mxu0 0.0
        %3221 = vmatpush1.msra.mxu0 0.0
        %3222 = vmatprep.subr.mxu0 0.0
        %3223 = vmatpush1.msra.mxu0 0.0
        %3224 = vmatprep.subr.mxu0 0.0
        %3225 = vmatpush1.msra.mxu0 0.0
        %3226 = vmatprep.subr.mxu0 0.0
        %3227 = vmatpush1.msra.mxu0 0.0
        %3228 = vmatprep.subr.mxu0 0.0
        %3229 = vmatpush1.msra.mxu0 0.0
        %3230 = vmatprep.subr.mxu0 0.0
        %3231 = vmatpush1.msra.mxu0 0.0
        %3232 = vmatprep.subr.mxu0 0.0
        %3233 = vmatpush1.msra.mxu0 0.0
        %3234 = vmatprep.subr.mxu0 0.0
        %3235 = vmatpush1.msra.mxu0 0.0
        %3236 = vmatprep.subr.mxu0 0.0
        %3237 = vmatpush1.msra.mxu0 0.0
        %3238 = vmatprep.subr.mxu0 0.0
        %3239 = vmatpush1.msra.mxu0 0.0
        %3240 = vmatprep.subr.mxu0 0.0
        %3241 = vmatpush1.msra.mxu0 0.0
        %3242 = vmatprep.subr.mxu0 0.0
        %3243 = vmatpush1.msra.mxu0 0.0
        %3244 = vmatprep.subr.mxu0 0.0
        %3245 = vmatpush1.msra.mxu0 0.0
        %3246 = vmatprep.subr.mxu0 0.0
        %3247 = vmatpush1.msra.mxu0 0.0
        %3248 = vmatprep.subr.mxu0 0.0
        %3249 = vmatpush1.msra.mxu0 0.0
        %3250 = vmatprep.subr.mxu0 0.0
        %3251 = vmatpush1.msra.mxu0 0.0
        %3252 = vmatprep.subr.mxu0 0.0
        %3253 = vmatpush1.msra.mxu0 0.0
        %3254 = vmatprep.subr.mxu0 0.0
        %3255 = vmatpush1.msra.mxu0 0.0
        %3256 = vmatprep.subr.mxu0 0.0
        %3257 = vmatpush1.msra.mxu0 0.0
        %3258 = vmatprep.subr.mxu0 0.0
        %3259 = vmatpush1.msra.mxu0 0.0
        %3260 = vmatprep.subr.mxu0 0.0
        %3261 = vmatpush1.msra.mxu0 0.0
        %3262 = vmatprep.subr.mxu0 0.0
        %3263 = vmatpush1.msra.mxu0 0.0
        %3264 = vmatprep.subr.mxu0 0.0
        %3265 = vmatpush1.msra.mxu0 0.0
        %3266 = vmatprep.subr.mxu0 0.0
        %3267 = vmatpush1.msra.mxu0 0.0
        %3268 = vmatprep.mubr.f32.mxu0 0.0
        %3269 = vmatmul.mubr.f32.gmra.mrb[0].mxu0 %v2494
        %v3270 = vpop.f32.mrb[0].mxu0
        %v3271 = vadd.f32 0.0, %v3270
        %v3272 = vpop.f32.mrb[0].mxu0
        %3273 = vmatprep.mubr.f32.mxu0 0.0
        %3274 = vmatmul.mubr.f32.gmra.mrb[0].mxu0 %v2497
        %v3275 = vpop.f32.mrb[0].mxu0
        %v3276 = vadd.f32 0.0, %v3275
        %v3277 = vpop.f32.mrb[0].mxu0
        %3278 = vdwg.mxu0
        %v3280 = vsel %vm2256, %v2470, 0
        %3282 = vmatprep.subr.mxu0 0.0
        %3283 = vmatpush1.msra.mxu0 %v3280
        %3284 = vmatprep.subr.mxu0 0.0
        %3285 = vmatpush1.msra.mxu0 0.0
        %3286 = vmatprep.subr.mxu0 0.0
        %3287 = vmatpush1.msra.mxu0 0.0
        %3288 = vmatprep.subr.mxu0 0.0
        %3289 = vmatpush1.msra.mxu0 0.0
        %3290 = vmatprep.subr.mxu0 0.0
        %3291 = vmatpush1.msra.mxu0 0.0
        %3292 = vmatprep.subr.mxu0 0.0
        %3293 = vmatpush1.msra.mxu0 0.0
        %3294 = vmatprep.subr.mxu0 0.0
        %3295 = vmatpush1.msra.mxu0 0.0
        %3296 = vmatprep.subr.mxu0 0.0
        %3297 = vmatpush1.msra.mxu0 0.0
        %3298 = vmatprep.subr.mxu0 0.0
        %3299 = vmatpush1.msra.mxu0 0.0
        %3300 = vmatprep.subr.mxu0 0.0
        %3301 = vmatpush1.msra.mxu0 0.0
        %3302 = vmatprep.subr.mxu0 0.0
        %3303 = vmatpush1.msra.mxu0 0.0
        %3304 = vmatprep.subr.mxu0 0.0
        %3305 = vmatpush1.msra.mxu0 0.0
        %3306 = vmatprep.subr.mxu0 0.0
        %3307 = vmatpush1.msra.mxu0 0.0
        %3308 = vmatprep.subr.mxu0 0.0
        %3309 = vmatpush1.msra.mxu0 0.0
        %3310 = vmatprep.subr.mxu0 0.0
        %3311 = vmatpush1.msra.mxu0 0.0
        %3312 = vmatprep.subr.mxu0 0.0
        %3313 = vmatpush1.msra.mxu0 0.0
        %3314 = vmatprep.subr.mxu0 0.0
        %3315 = vmatpush1.msra.mxu0 0.0
        %3316 = vmatprep.subr.mxu0 0.0
        %3317 = vmatpush1.msra.mxu0 0.0
        %3318 = vmatprep.subr.mxu0 0.0
        %3319 = vmatpush1.msra.mxu0 0.0
        %3320 = vmatprep.subr.mxu0 0.0
        %3321 = vmatpush1.msra.mxu0 0.0
        %3322 = vmatprep.subr.mxu0 0.0
        %3323 = vmatpush1.msra.mxu0 0.0
        %3324 = vmatprep.subr.mxu0 0.0
        %3325 = vmatpush1.msra.mxu0 0.0
        %3326 = vmatprep.subr.mxu0 0.0
        %3327 = vmatpush1.msra.mxu0 0.0
        %3328 = vmatprep.subr.mxu0 0.0
        %3329 = vmatpush1.msra.mxu0 0.0
        %3330 = vmatprep.subr.mxu0 0.0
        %3331 = vmatpush1.msra.mxu0 0.0
        %3332 = vmatprep.subr.mxu0 0.0
        %3333 = vmatpush1.msra.mxu0 0.0
        %3334 = vmatprep.subr.mxu0 0.0
        %3335 = vmatpush1.msra.mxu0 0.0
        %3336 = vmatprep.subr.mxu0 0.0
        %3337 = vmatpush1.msra.mxu0 0.0
        %3338 = vmatprep.subr.mxu0 0.0
        %3339 = vmatpush1.msra.mxu0 0.0
        %3340 = vmatprep.subr.mxu0 0.0
        %3341 = vmatpush1.msra.mxu0 0.0
        %3342 = vmatprep.subr.mxu0 0.0
        %3343 = vmatpush1.msra.mxu0 0.0
        %3344 = vmatprep.subr.mxu0 0.0
        %3345 = vmatpush1.msra.mxu0 0.0
        %3346 = vmatprep.mubr.f32.mxu0 0.0
        %3347 = vmatmul.mubr.f32.gmra.mrb[0].mxu0 %v2494
        %v3348 = vpop.f32.mrb[0].mxu0
        %v3349 = vadd.f32 0.0, %v3348
        %v3350 = vpop.f32.mrb[0].mxu0
        %3351 = vmatprep.mubr.f32.mxu0 0.0
        %3352 = vmatmul.mubr.f32.gmra.mrb[0].mxu0 %v2497
        %v3353 = vpop.f32.mrb[0].mxu0
        %v3354 = vadd.f32 0.0, %v3353
        %v3355 = vpop.f32.mrb[0].mxu0
        %3356 = vdwg.mxu0
        %v3358 = vsel %vm2256, %v2488, 0
        %3360 = vmatprep.subr.mxu0 0.0
        %3361 = vmatpush1.msra.mxu0 %v3358
        %3362 = vmatprep.subr.mxu0 0.0
        %3363 = vmatpush1.msra.mxu0 0.0
        %3364 = vmatprep.subr.mxu0 0.0
        %3365 = vmatpush1.msra.mxu0 0.0
        %3366 = vmatprep.subr.mxu0 0.0
        %3367 = vmatpush1.msra.mxu0 0.0
        %3368 = vmatprep.subr.mxu0 0.0
        %3369 = vmatpush1.msra.mxu0 0.0
        %3370 = vmatprep.subr.mxu0 0.0
        %3371 = vmatpush1.msra.mxu0 0.0
        %3372 = vmatprep.subr.mxu0 0.0
        %3373 = vmatpush1.msra.mxu0 0.0
        %3374 = vmatprep.subr.mxu0 0.0
        %3375 = vmatpush1.msra.mxu0 0.0
        %3376 = vmatprep.subr.mxu0 0.0
        %3377 = vmatpush1.msra.mxu0 0.0
        %3378 = vmatprep.subr.mxu0 0.0
        %3379 = vmatpush1.msra.mxu0 0.0
        %3380 = vmatprep.subr.mxu0 0.0
        %3381 = vmatpush1.msra.mxu0 0.0
        %3382 = vmatprep.subr.mxu0 0.0
        %3383 = vmatpush1.msra.mxu0 0.0
        %3384 = vmatprep.subr.mxu0 0.0
        %3385 = vmatpush1.msra.mxu0 0.0
        %3386 = vmatprep.subr.mxu0 0.0
        %3387 = vmatpush1.msra.mxu0 0.0
        %3388 = vmatprep.subr.mxu0 0.0
        %3389 = vmatpush1.msra.mxu0 0.0
        %3390 = vmatprep.subr.mxu0 0.0
        %3391 = vmatpush1.msra.mxu0 0.0
        %3392 = vmatprep.subr.mxu0 0.0
        %3393 = vmatpush1.msra.mxu0 0.0
        %3394 = vmatprep.subr.mxu0 0.0
        %3395 = vmatpush1.msra.mxu0 0.0
        %3396 = vmatprep.subr.mxu0 0.0
        %3397 = vmatpush1.msra.mxu0 0.0
        %3398 = vmatprep.subr.mxu0 0.0
        %3399 = vmatpush1.msra.mxu0 0.0
        %3400 = vmatprep.subr.mxu0 0.0
        %3401 = vmatpush1.msra.mxu0 0.0
        %3402 = vmatprep.subr.mxu0 0.0
        %3403 = vmatpush1.msra.mxu0 0.0
        %3404 = vmatprep.subr.mxu0 0.0
        %3405 = vmatpush1.msra.mxu0 0.0
        %3406 = vmatprep.subr.mxu0 0.0
        %3407 = vmatpush1.msra.mxu0 0.0
        %3408 = vmatprep.subr.mxu0 0.0
        %3409 = vmatpush1.msra.mxu0 0.0
        %3410 = vmatprep.subr.mxu0 0.0
        %3411 = vmatpush1.msra.mxu0 0.0
        %3412 = vmatprep.subr.mxu0 0.0
        %3413 = vmatpush1.msra.mxu0 0.0
        %3414 = vmatprep.subr.mxu0 0.0
        %3415 = vmatpush1.msra.mxu0 0.0
        %3416 = vmatprep.subr.mxu0 0.0
        %3417 = vmatpush1.msra.mxu0 0.0
        %3418 = vmatprep.subr.mxu0 0.0
        %3419 = vmatpush1.msra.mxu0 0.0
        %3420 = vmatprep.subr.mxu0 0.0
        %3421 = vmatpush1.msra.mxu0 0.0
        %3422 = vmatprep.subr.mxu0 0.0
        %3423 = vmatpush1.msra.mxu0 0.0
        %3424 = vmatprep.mubr.f32.mxu0 0.0
        %3425 = vmatmul.mubr.f32.gmra.mrb[0].mxu0 %v2494
        %v3426 = vpop.f32.mrb[0].mxu0
        %v3427 = vadd.f32 0.0, %v3426
        %v3428 = vpop.f32.mrb[0].mxu0
        %3429 = vmatprep.mubr.f32.mxu0 0.0
        %3430 = vmatmul.mubr.f32.gmra.mrb[0].mxu0 %v2497
        %v3431 = vpop.f32.mrb[0].mxu0
        %v3432 = vadd.f32 0.0, %v3431
        %v3433 = vpop.f32.mrb[0].mxu0
        %3434 = vdwg.mxu0
        %v3436 = vsel %vm2256, %v2479, 0
        %3438 = vmatprep.subr.mxu0 0.0
        %3439 = vmatpush1.msra.mxu0 %v3436
        %3440 = vmatprep.subr.mxu0 0.0
        %3441 = vmatpush1.msra.mxu0 0.0
        %3442 = vmatprep.subr.mxu0 0.0
        %3443 = vmatpush1.msra.mxu0 0.0
        %3444 = vmatprep.subr.mxu0 0.0
        %3445 = vmatpush1.msra.mxu0 0.0
        %3446 = vmatprep.subr.mxu0 0.0
        %3447 = vmatpush1.msra.mxu0 0.0
        %3448 = vmatprep.subr.mxu0 0.0
        %3449 = vmatpush1.msra.mxu0 0.0
        %3450 = vmatprep.subr.mxu0 0.0
        %3451 = vmatpush1.msra.mxu0 0.0
        %3452 = vmatprep.subr.mxu0 0.0
        %3453 = vmatpush1.msra.mxu0 0.0
        %3454 = vmatprep.subr.mxu0 0.0
        %3455 = vmatpush1.msra.mxu0 0.0
        %3456 = vmatprep.subr.mxu0 0.0
        %3457 = vmatpush1.msra.mxu0 0.0
        %3458 = vmatprep.subr.mxu0 0.0
        %3459 = vmatpush1.msra.mxu0 0.0
        %3460 = vmatprep.subr.mxu0 0.0
        %3461 = vmatpush1.msra.mxu0 0.0
        %3462 = vmatprep.subr.mxu0 0.0
        %3463 = vmatpush1.msra.mxu0 0.0
        %3464 = vmatprep.subr.mxu0 0.0
        %3465 = vmatpush1.msra.mxu0 0.0
        %3466 = vmatprep.subr.mxu0 0.0
        %3467 = vmatpush1.msra.mxu0 0.0
        %3468 = vmatprep.subr.mxu0 0.0
        %3469 = vmatpush1.msra.mxu0 0.0
        %3470 = vmatprep.subr.mxu0 0.0
        %3471 = vmatpush1.msra.mxu0 0.0
        %3472 = vmatprep.subr.mxu0 0.0
        %3473 = vmatpush1.msra.mxu0 0.0
        %3474 = vmatprep.subr.mxu0 0.0
        %3475 = vmatpush1.msra.mxu0 0.0
        %3476 = vmatprep.subr.mxu0 0.0
        %3477 = vmatpush1.msra.mxu0 0.0
        %3478 = vmatprep.subr.mxu0 0.0
        %3479 = vmatpush1.msra.mxu0 0.0
        %3480 = vmatprep.subr.mxu0 0.0
        %3481 = vmatpush1.msra.mxu0 0.0
        %3482 = vmatprep.subr.mxu0 0.0
        %3483 = vmatpush1.msra.mxu0 0.0
        %3484 = vmatprep.subr.mxu0 0.0
        %3485 = vmatpush1.msra.mxu0 0.0
        %3486 = vmatprep.subr.mxu0 0.0
        %3487 = vmatpush1.msra.mxu0 0.0
        %3488 = vmatprep.subr.mxu0 0.0
        %3489 = vmatpush1.msra.mxu0 0.0
        %3490 = vmatprep.subr.mxu0 0.0
        %3491 = vmatpush1.msra.mxu0 0.0
        %3492 = vmatprep.subr.mxu0 0.0
        %3493 = vmatpush1.msra.mxu0 0.0
        %3494 = vmatprep.subr.mxu0 0.0
        %3495 = vmatpush1.msra.mxu0 0.0
        %3496 = vmatprep.subr.mxu0 0.0
        %3497 = vmatpush1.msra.mxu0 0.0
        %3498 = vmatprep.subr.mxu0 0.0
        %3499 = vmatpush1.msra.mxu0 0.0
        %3500 = vmatprep.subr.mxu0 0.0
        %3501 = vmatpush1.msra.mxu0 0.0
        %3502 = vmatprep.mubr.f32.mxu0 0.0
        %3503 = vmatmul.mubr.f32.gmra.mrb[0].mxu0 %v2494
        %v3504 = vpop.f32.mrb[0].mxu0
        %v3505 = vadd.f32 0.0, %v3504
        %v3506 = vpop.f32.mrb[0].mxu0
        %3507 = vmatprep.mubr.f32.mxu0 0.0
        %3508 = vmatmul.mubr.f32.gmra.mrb[0].mxu0 %v2497
        %v3509 = vpop.f32.mrb[0].mxu0
        %v3510 = vadd.f32 0.0, %v3509
        %v3511 = vpop.f32.mrb[0].mxu0
        %3512 = vdwg.mxu0
        %v3514 = vsel %vm2256, %v2489, 0
        %3516 = vmatprep.subr.mxu0 0.0
        %3517 = vmatpush1.msra.mxu0 %v3514
        %3518 = vmatprep.subr.mxu0 0.0
        %3519 = vmatpush1.msra.mxu0 0.0
        %3520 = vmatprep.subr.mxu0 0.0
        %3521 = vmatpush1.msra.mxu0 0.0
        %3522 = vmatprep.subr.mxu0 0.0
        %3523 = vmatpush1.msra.mxu0 0.0
        %3524 = vmatprep.subr.mxu0 0.0
        %3525 = vmatpush1.msra.mxu0 0.0
        %3526 = vmatprep.subr.mxu0 0.0
        %3527 = vmatpush1.msra.mxu0 0.0
        %3528 = vmatprep.subr.mxu0 0.0
        %3529 = vmatpush1.msra.mxu0 0.0
        %3530 = vmatprep.subr.mxu0 0.0
        %3531 = vmatpush1.msra.mxu0 0.0
        %3532 = vmatprep.subr.mxu0 0.0
        %3533 = vmatpush1.msra.mxu0 0.0
        %3534 = vmatprep.subr.mxu0 0.0
        %3535 = vmatpush1.msra.mxu0 0.0
        %3536 = vmatprep.subr.mxu0 0.0
        %3537 = vmatpush1.msra.mxu0 0.0
        %3538 = vmatprep.subr.mxu0 0.0
        %3539 = vmatpush1.msra.mxu0 0.0
        %3540 = vmatprep.subr.mxu0 0.0
        %3541 = vmatpush1.msra.mxu0 0.0
        %3542 = vmatprep.subr.mxu0 0.0
        %3543 = vmatpush1.msra.mxu0 0.0
        %3544 = vmatprep.subr.mxu0 0.0
        %3545 = vmatpush1.msra.mxu0 0.0
        %3546 = vmatprep.subr.mxu0 0.0
        %3547 = vmatpush1.msra.mxu0 0.0
        %3548 = vmatprep.subr.mxu0 0.0
        %3549 = vmatpush1.msra.mxu0 0.0
        %3550 = vmatprep.subr.mxu0 0.0
        %3551 = vmatpush1.msra.mxu0 0.0
        %3552 = vmatprep.subr.mxu0 0.0
        %3553 = vmatpush1.msra.mxu0 0.0
        %3554 = vmatprep.subr.mxu0 0.0
        %3555 = vmatpush1.msra.mxu0 0.0
        %3556 = vmatprep.subr.mxu0 0.0
        %3557 = vmatpush1.msra.mxu0 0.0
        %3558 = vmatprep.subr.mxu0 0.0
        %3559 = vmatpush1.msra.mxu0 0.0
        %3560 = vmatprep.subr.mxu0 0.0
        %3561 = vmatpush1.msra.mxu0 0.0
        %3562 = vmatprep.subr.mxu0 0.0
        %3563 = vmatpush1.msra.mxu0 0.0
        %3564 = vmatprep.subr.mxu0 0.0
        %3565 = vmatpush1.msra.mxu0 0.0
        %3566 = vmatprep.subr.mxu0 0.0
        %3567 = vmatpush1.msra.mxu0 0.0
        %3568 = vmatprep.subr.mxu0 0.0
        %3569 = vmatpush1.msra.mxu0 0.0
        %3570 = vmatprep.subr.mxu0 0.0
        %3571 = vmatpush1.msra.mxu0 0.0
        %3572 = vmatprep.subr.mxu0 0.0
        %3573 = vmatpush1.msra.mxu0 0.0
        %3574 = vmatprep.subr.mxu0 0.0
        %3575 = vmatpush1.msra.mxu0 0.0
        %3576 = vmatprep.subr.mxu0 0.0
        %3577 = vmatpush1.msra.mxu0 0.0
        %3578 = vmatprep.subr.mxu0 0.0
        %3579 = vmatpush1.msra.mxu0 0.0
        %3580 = vmatprep.mubr.f32.mxu0 0.0
        %3581 = vmatmul.mubr.f32.gmra.mrb[0].mxu0 %v2494
        %v3582 = vpop.f32.mrb[0].mxu0
        %v3583 = vadd.f32 0.0, %v3582
        %v3584 = vpop.f32.mrb[0].mxu0
        %3585 = vmatprep.mubr.f32.mxu0 0.0
        %3586 = vmatmul.mubr.f32.gmra.mrb[0].mxu0 %v2497
        %v3587 = vpop.f32.mrb[0].mxu0
        %v3588 = vadd.f32 0.0, %v3587
        %v3589 = vpop.f32.mrb[0].mxu0
        %3590 = vdwg.mxu0
        %v3592 = vsel %vm2256, %v2486, 0
        %3594 = vmatprep.subr.mxu0 0.0
        %3595 = vmatpush1.msra.mxu0 %v3592
        %3596 = vmatprep.subr.mxu0 0.0
        %3597 = vmatpush1.msra.mxu0 0.0
        %3598 = vmatprep.subr.mxu0 0.0
        %3599 = vmatpush1.msra.mxu0 0.0
        %3600 = vmatprep.subr.mxu0 0.0
        %3601 = vmatpush1.msra.mxu0 0.0
        %3602 = vmatprep.subr.mxu0 0.0
        %3603 = vmatpush1.msra.mxu0 0.0
        %3604 = vmatprep.subr.mxu0 0.0
        %3605 = vmatpush1.msra.mxu0 0.0
        %3606 = vmatprep.subr.mxu0 0.0
        %3607 = vmatpush1.msra.mxu0 0.0
        %3608 = vmatprep.subr.mxu0 0.0
        %3609 = vmatpush1.msra.mxu0 0.0
        %3610 = vmatprep.subr.mxu0 0.0
        %3611 = vmatpush1.msra.mxu0 0.0
        %3612 = vmatprep.subr.mxu0 0.0
        %3613 = vmatpush1.msra.mxu0 0.0
        %3614 = vmatprep.subr.mxu0 0.0
        %3615 = vmatpush1.msra.mxu0 0.0
        %3616 = vmatprep.subr.mxu0 0.0
        %3617 = vmatpush1.msra.mxu0 0.0
        %3618 = vmatprep.subr.mxu0 0.0
        %3619 = vmatpush1.msra.mxu0 0.0
        %3620 = vmatprep.subr.mxu0 0.0
        %3621 = vmatpush1.msra.mxu0 0.0
        %3622 = vmatprep.subr.mxu0 0.0
        %3623 = vmatpush1.msra.mxu0 0.0
        %3624 = vmatprep.subr.mxu0 0.0
        %3625 = vmatpush1.msra.mxu0 0.0
        %3626 = vmatprep.subr.mxu0 0.0
        %3627 = vmatpush1.msra.mxu0 0.0
        %3628 = vmatprep.subr.mxu0 0.0
        %3629 = vmatpush1.msra.mxu0 0.0
        %3630 = vmatprep.subr.mxu0 0.0
        %3631 = vmatpush1.msra.mxu0 0.0
        %3632 = vmatprep.subr.mxu0 0.0
        %3633 = vmatpush1.msra.mxu0 0.0
        %3634 = vmatprep.subr.mxu0 0.0
        %3635 = vmatpush1.msra.mxu0 0.0
        %3636 = vmatprep.subr.mxu0 0.0
        %3637 = vmatpush1.msra.mxu0 0.0
        %3638 = vmatprep.subr.mxu0 0.0
        %3639 = vmatpush1.msra.mxu0 0.0
        %3640 = vmatprep.subr.mxu0 0.0
        %3641 = vmatpush1.msra.mxu0 0.0
        %3642 = vmatprep.subr.mxu0 0.0
        %3643 = vmatpush1.msra.mxu0 0.0
        %3644 = vmatprep.subr.mxu0 0.0
        %3645 = vmatpush1.msra.mxu0 0.0
        %3646 = vmatprep.subr.mxu0 0.0
        %3647 = vmatpush1.msra.mxu0 0.0
        %3648 = vmatprep.subr.mxu0 0.0
        %3649 = vmatpush1.msra.mxu0 0.0
        %3650 = vmatprep.subr.mxu0 0.0
        %3651 = vmatpush1.msra.mxu0 0.0
        %3652 = vmatprep.subr.mxu0 0.0
        %3653 = vmatpush1.msra.mxu0 0.0
        %3654 = vmatprep.subr.mxu0 0.0
        %3655 = vmatpush1.msra.mxu0 0.0
        %3656 = vmatprep.subr.mxu0 0.0
        %3657 = vmatpush1.msra.mxu0 0.0
        %3658 = vmatprep.mubr.f32.mxu0 0.0
        %3659 = vmatmul.mubr.f32.gmra.mrb[0].mxu0 %v2494
        %v3660 = vpop.f32.mrb[0].mxu0
        %v3661 = vadd.f32 0.0, %v3660
        %v3662 = vpop.f32.mrb[0].mxu0
        %3663 = vmatprep.mubr.f32.mxu0 0.0
        %3664 = vmatmul.mubr.f32.gmra.mrb[0].mxu0 %v2497
        %v3665 = vpop.f32.mrb[0].mxu0
        %v3666 = vadd.f32 0.0, %v3665
        %v3667 = vpop.f32.mrb[0].mxu0
        %3668 = vdwg.mxu0
        %v3670 = vsel %vm2256, %v2490, 0
        %3672 = vmatprep.subr.mxu0 0.0
        %3673 = vmatpush1.msra.mxu0 %v3670
        %3674 = vmatprep.subr.mxu0 0.0
        %3675 = vmatpush1.msra.mxu0 0.0
        %3676 = vmatprep.subr.mxu0 0.0
        %3677 = vmatpush1.msra.mxu0 0.0
        %3678 = vmatprep.subr.mxu0 0.0
        %3679 = vmatpush1.msra.mxu0 0.0
        %3680 = vmatprep.subr.mxu0 0.0
        %3681 = vmatpush1.msra.mxu0 0.0
        %3682 = vmatprep.subr.mxu0 0.0
        %3683 = vmatpush1.msra.mxu0 0.0
        %3684 = vmatprep.subr.mxu0 0.0
        %3685 = vmatpush1.msra.mxu0 0.0
        %3686 = vmatprep.subr.mxu0 0.0
        %3687 = vmatpush1.msra.mxu0 0.0
        %3688 = vmatprep.subr.mxu0 0.0
        %3689 = vmatpush1.msra.mxu0 0.0
        %3690 = vmatprep.subr.mxu0 0.0
        %3691 = vmatpush1.msra.mxu0 0.0
        %3692 = vmatprep.subr.mxu0 0.0
        %3693 = vmatpush1.msra.mxu0 0.0
        %3694 = vmatprep.subr.mxu0 0.0
        %3695 = vmatpush1.msra.mxu0 0.0
        %3696 = vmatprep.subr.mxu0 0.0
        %3697 = vmatpush1.msra.mxu0 0.0
        %3698 = vmatprep.subr.mxu0 0.0
        %3699 = vmatpush1.msra.mxu0 0.0
        %3700 = vmatprep.subr.mxu0 0.0
        %3701 = vmatpush1.msra.mxu0 0.0
        %3702 = vmatprep.subr.mxu0 0.0
        %3703 = vmatpush1.msra.mxu0 0.0
        %3704 = vmatprep.subr.mxu0 0.0
        %3705 = vmatpush1.msra.mxu0 0.0
        %3706 = vmatprep.subr.mxu0 0.0
        %3707 = vmatpush1.msra.mxu0 0.0
        %3708 = vmatprep.subr.mxu0 0.0
        %3709 = vmatpush1.msra.mxu0 0.0
        %3710 = vmatprep.subr.mxu0 0.0
        %3711 = vmatpush1.msra.mxu0 0.0
        %3712 = vmatprep.subr.mxu0 0.0
        %3713 = vmatpush1.msra.mxu0 0.0
        %3714 = vmatprep.subr.mxu0 0.0
        %3715 = vmatpush1.msra.mxu0 0.0
        %3716 = vmatprep.subr.mxu0 0.0
        %3717 = vmatpush1.msra.mxu0 0.0
        %3718 = vmatprep.subr.mxu0 0.0
        %3719 = vmatpush1.msra.mxu0 0.0
        %3720 = vmatprep.subr.mxu0 0.0
        %3721 = vmatpush1.msra.mxu0 0.0
        %3722 = vmatprep.subr.mxu0 0.0
        %3723 = vmatpush1.msra.mxu0 0.0
        %3724 = vmatprep.subr.mxu0 0.0
        %3725 = vmatpush1.msra.mxu0 0.0
        %3726 = vmatprep.subr.mxu0 0.0
        %3727 = vmatpush1.msra.mxu0 0.0
        %3728 = vmatprep.subr.mxu0 0.0
        %3729 = vmatpush1.msra.mxu0 0.0
        %3730 = vmatprep.subr.mxu0 0.0
        %3731 = vmatpush1.msra.mxu0 0.0
        %3732 = vmatprep.subr.mxu0 0.0
        %3733 = vmatpush1.msra.mxu0 0.0
        %3734 = vmatprep.subr.mxu0 0.0
        %3735 = vmatpush1.msra.mxu0 0.0
        %3736 = vmatprep.mubr.f32.mxu0 0.0
        %3737 = vmatmul.mubr.f32.gmra.mrb[0].mxu0 %v2494
        %v3738 = vpop.f32.mrb[0].mxu0
        %v3739 = vadd.f32 0.0, %v3738
        %v3740 = vpop.f32.mrb[0].mxu0
        %3741 = vmatprep.mubr.f32.mxu0 0.0
        %3742 = vmatmul.mubr.f32.gmra.mrb[0].mxu0 %v2497
        %v3743 = vpop.f32.mrb[0].mxu0
        %v3744 = vadd.f32 0.0, %v3743
        %v3745 = vpop.f32.mrb[0].mxu0
        %3746 = vdwg.mxu0
        %v3747 = vld [vmem:[%s495] sm:$0x1]
        %v3748 = vunpack.c.l.bf16 %v3747
        %v3749 = vld [vmem:[#allocation16] sm:$0xff]
        %v3750 = vld [vmem:[#allocation16 + $0x8] sm:$0xff]
        %vm3751 = vcmask 15360
        %v3753 = vsel %vm3751, %v3749, 0
        %v3756 = vsel %vm3751, %v3750, 0
        %vm3758 = vcmask 1041408
        %v3760 = vsel %vm3758, %v3748, 0
        %3762 = vmatprep.subr.mxu0 0.0
        %3763 = vmatpush1.msra.mxu0 %v3760
        %3764 = vmatprep.subr.mxu0 0.0
        %3765 = vmatpush1.msra.mxu0 0.0
        %3766 = vmatprep.subr.mxu0 0.0
        %3767 = vmatpush1.msra.mxu0 0.0
        %3768 = vmatprep.subr.mxu0 0.0
        %3769 = vmatpush1.msra.mxu0 0.0
        %3770 = vmatprep.subr.mxu0 0.0
        %3771 = vmatpush1.msra.mxu0 0.0
        %3772 = vmatprep.subr.mxu0 0.0
        %3773 = vmatpush1.msra.mxu0 0.0
        %3774 = vmatprep.subr.mxu0 0.0
        %3775 = vmatpush1.msra.mxu0 0.0
        %3776 = vmatprep.subr.mxu0 0.0
        %3777 = vmatpush1.msra.mxu0 0.0
        %3778 = vmatprep.subr.mxu0 0.0
        %3779 = vmatpush1.msra.mxu0 0.0
        %3780 = vmatprep.subr.mxu0 0.0
        %3781 = vmatpush1.msra.mxu0 0.0
        %3782 = vmatprep.subr.mxu0 0.0
        %3783 = vmatpush1.msra.mxu0 0.0
        %3784 = vmatprep.subr.mxu0 0.0
        %3785 = vmatpush1.msra.mxu0 0.0
        %3786 = vmatprep.subr.mxu0 0.0
        %3787 = vmatpush1.msra.mxu0 0.0
        %3788 = vmatprep.subr.mxu0 0.0
        %3789 = vmatpush1.msra.mxu0 0.0
        %3790 = vmatprep.subr.mxu0 0.0
        %3791 = vmatpush1.msra.mxu0 0.0
        %3792 = vmatprep.subr.mxu0 0.0
        %3793 = vmatpush1.msra.mxu0 0.0
        %3794 = vmatprep.subr.mxu0 0.0
        %3795 = vmatpush1.msra.mxu0 0.0
        %3796 = vmatprep.subr.mxu0 0.0
        %3797 = vmatpush1.msra.mxu0 0.0
        %3798 = vmatprep.subr.mxu0 0.0
        %3799 = vmatpush1.msra.mxu0 0.0
        %3800 = vmatprep.subr.mxu0 0.0
        %3801 = vmatpush1.msra.mxu0 0.0
        %3802 = vmatprep.subr.mxu0 0.0
        %3803 = vmatpush1.msra.mxu0 0.0
        %3804 = vmatprep.subr.mxu0 0.0
        %3805 = vmatpush1.msra.mxu0 0.0
        %3806 = vmatprep.subr.mxu0 0.0
        %3807 = vmatpush1.msra.mxu0 0.0
        %3808 = vmatprep.subr.mxu0 0.0
        %3809 = vmatpush1.msra.mxu0 0.0
        %3810 = vmatprep.subr.mxu0 0.0
        %3811 = vmatpush1.msra.mxu0 0.0
        %3812 = vmatprep.subr.mxu0 0.0
        %3813 = vmatpush1.msra.mxu0 0.0
        %3814 = vmatprep.subr.mxu0 0.0
        %3815 = vmatpush1.msra.mxu0 0.0
        %3816 = vmatprep.subr.mxu0 0.0
        %3817 = vmatpush1.msra.mxu0 0.0
        %3818 = vmatprep.subr.mxu0 0.0
        %3819 = vmatpush1.msra.mxu0 0.0
        %3820 = vmatprep.subr.mxu0 0.0
        %3821 = vmatpush1.msra.mxu0 0.0
        %3822 = vmatprep.subr.mxu0 0.0
        %3823 = vmatpush1.msra.mxu0 0.0
        %3824 = vmatprep.subr.mxu0 0.0
        %3825 = vmatpush1.msra.mxu0 0.0
        %3826 = vmatprep.mubr.f32.mxu0 0.0
        %3827 = vmatmul.mubr.f32.gmra.mrb[0].mxu0 %v3753
        %v3828 = vpop.f32.mrb[0].mxu0
        %v3829 = vadd.f32 0.0, %v3828
        %v3830 = vpop.f32.mrb[0].mxu0
        %3831 = vmatprep.mubr.f32.mxu0 0.0
        %3832 = vmatmul.mubr.f32.gmra.mrb[0].mxu0 %v3756
        %v3833 = vpop.f32.mrb[0].mxu0
        %v3834 = vadd.f32 0.0, %v3833
        %v3835 = vpop.f32.mrb[0].mxu0
        %3836 = vdwg.mxu0
        %3839 = vrot.lane.b32.xlu0 %v3829, 64
        %v3840 = vpop.permute.xlu0 %3839
        %3841 = vrot.lane.b32.xlu0 %v3834, 64
        %v3842 = vpop.permute.xlu0 %3841
        %v3845 = vcombine.high %v3829, 0.0
        %v3847 = vunpack.c.l.s4 1983009808
        %v3848 = vunpack.c.0.s8 %v3847
        %v3849 = vlaneseq
        %v3850 = vshrl.u32 %v3849, 7
        %v3851 = vsub.s32 %v3848, %v3850
        %v3852 = vrot.slane %v3829, %v3851
        %v3854 = vunpack.c.l.s4 1983009808
        %v3855 = vunpack.c.0.s8 %v3854
        %v3856 = vlaneseq
        %v3857 = vshrl.u32 %v3856, 7
        %v3858 = vsub.s32 %v3855, %v3857
        %v3859 = vrot.slane %v3845, %v3858
        %v3860 = vcombine.high %v3840, 0.0
        %v3862 = vunpack.c.l.s4 1983009808
        %v3863 = vunpack.c.0.s8 %v3862
        %v3864 = vlaneseq
        %v3865 = vshrl.u32 %v3864, 7
        %v3866 = vsub.s32 %v3863, %v3865
        %v3867 = vrot.slane %v3840, %v3866
        %v3869 = vunpack.c.l.s4 1983009808
        %v3870 = vunpack.c.0.s8 %v3869
        %v3871 = vlaneseq
        %v3872 = vshrl.u32 %v3871, 7
        %v3873 = vsub.s32 %v3870, %v3872
        %v3874 = vrot.slane %v3860, %v3873
        %v3875 = vcombine.low %v3852, %v3867
        %v3876 = vcombine.high %v3852, %v3867
        %v3878 = vunpack.c.l.s4 1934713408
        %v3879 = vunpack.c.0.s8 %v3878
        %v3880 = vlaneseq
        %v3881 = vshrl.u32 %v3880, 7
        %v3882 = vsub.s32 %v3879, %v3881
        %v3883 = vrot.slane %v3875, %v3882
        %v3885 = vunpack.c.l.s4 1934713408
        %v3886 = vunpack.c.0.s8 %v3885
        %v3887 = vlaneseq
        %v3888 = vshrl.u32 %v3887, 7
        %v3889 = vsub.s32 %v3886, %v3888
        %v3890 = vrot.slane %v3876, %v3889
        %v3891 = vcombine.low %v3859, %v3874
        %v3892 = vcombine.high %v3859, %v3874
        %v3894 = vunpack.c.l.s4 1934713408
        %v3895 = vunpack.c.0.s8 %v3894
        %v3896 = vlaneseq
        %v3897 = vshrl.u32 %v3896, 7
        %v3898 = vsub.s32 %v3895, %v3897
        %v3899 = vrot.slane %v3891, %v3898
        %v3901 = vunpack.c.l.s4 1934713408
        %v3902 = vunpack.c.0.s8 %v3901
        %v3903 = vlaneseq
        %v3904 = vshrl.u32 %v3903, 7
        %v3905 = vsub.s32 %v3902, %v3904
        %v3906 = vrot.slane %v3892, %v3905
        %v3907 = vcombine.high %v3883, 0.0
        %v3908 = vcombine.high %v3890, 0.0
        %v3909 = vcombine.high %v3899, 0.0
        %v3910 = vcombine.high %v3906, 0.0
        %v3911 = vcombine.high %v3834, 0.0
        %v3913 = vunpack.c.l.s4 1983009808
        %v3914 = vunpack.c.0.s8 %v3913
        %v3915 = vlaneseq
        %v3916 = vshrl.u32 %v3915, 7
        %v3917 = vsub.s32 %v3914, %v3916
        %v3918 = vrot.slane %v3834, %v3917
        %v3920 = vunpack.c.l.s4 1983009808
        %v3921 = vunpack.c.0.s8 %v3920
        %v3922 = vlaneseq
        %v3923 = vshrl.u32 %v3922, 7
        %v3924 = vsub.s32 %v3921, %v3923
        %v3925 = vrot.slane %v3911, %v3924
        %v3926 = vcombine.high %v3842, 0.0
        %v3928 = vunpack.c.l.s4 1983009808
        %v3929 = vunpack.c.0.s8 %v3928
        %v3930 = vlaneseq
        %v3931 = vshrl.u32 %v3930, 7
        %v3932 = vsub.s32 %v3929, %v3931
        %v3933 = vrot.slane %v3842, %v3932
        %v3935 = vunpack.c.l.s4 1983009808
        %v3936 = vunpack.c.0.s8 %v3935
        %v3937 = vlaneseq
        %v3938 = vshrl.u32 %v3937, 7
        %v3939 = vsub.s32 %v3936, %v3938
        %v3940 = vrot.slane %v3926, %v3939
        %v3941 = vcombine.low %v3918, %v3933
        %v3942 = vcombine.high %v3918, %v3933
        %v3944 = vunpack.c.l.s4 1934713408
        %v3945 = vunpack.c.0.s8 %v3944
        %v3946 = vlaneseq
        %v3947 = vshrl.u32 %v3946, 7
        %v3948 = vsub.s32 %v3945, %v3947
        %v3949 = vrot.slane %v3941, %v3948
        %v3951 = vunpack.c.l.s4 1934713408
        %v3952 = vunpack.c.0.s8 %v3951
        %v3953 = vlaneseq
        %v3954 = vshrl.u32 %v3953, 7
        %v3955 = vsub.s32 %v3952, %v3954
        %v3956 = vrot.slane %v3942, %v3955
        %v3957 = vcombine.low %v3925, %v3940
        %v3958 = vcombine.high %v3925, %v3940
        %v3960 = vunpack.c.l.s4 1934713408
        %v3961 = vunpack.c.0.s8 %v3960
        %v3962 = vlaneseq
        %v3963 = vshrl.u32 %v3962, 7
        %v3964 = vsub.s32 %v3961, %v3963
        %v3965 = vrot.slane %v3957, %v3964
        %v3967 = vunpack.c.l.s4 1934713408
        %v3968 = vunpack.c.0.s8 %v3967
        %v3969 = vlaneseq
        %v3970 = vshrl.u32 %v3969, 7
        %v3971 = vsub.s32 %v3968, %v3970
        %v3972 = vrot.slane %v3958, %v3971
        %v3973 = vcombine.high %v3949, 0.0
        %v3974 = vcombine.high %v3956, 0.0
        %v3975 = vcombine.high %v3965, 0.0
        %v3976 = vcombine.high %v3972, 0.0
        %v3977 = vld [vmem:[#allocation17] sm:$0xff]
        %v3978 = vld [vmem:[#allocation17 + $0x8] sm:$0xff]
        %v3980 = vsel %vm3751, %v3977, 0
        %v3983 = vsel %vm3751, %v3978, 0
        %v3986 = vsel %vm3758, %v3883, 0
        %3988 = vmatprep.subr.mxu0 0.0
        %3989 = vmatpush1.msra.mxu0 %v3986
        %3990 = vmatprep.subr.mxu0 0.0
        %3991 = vmatpush1.msra.mxu0 0.0
        %3992 = vmatprep.subr.mxu0 0.0
        %3993 = vmatpush1.msra.mxu0 0.0
        %3994 = vmatprep.subr.mxu0 0.0
        %3995 = vmatpush1.msra.mxu0 0.0
        %3996 = vmatprep.subr.mxu0 0.0
        %3997 = vmatpush1.msra.mxu0 0.0
        %3998 = vmatprep.subr.mxu0 0.0
        %3999 = vmatpush1.msra.mxu0 0.0
        %4000 = vmatprep.subr.mxu0 0.0
        %4001 = vmatpush1.msra.mxu0 0.0
        %4002 = vmatprep.subr.mxu0 0.0
        %4003 = vmatpush1.msra.mxu0 0.0
        %4004 = vmatprep.subr.mxu0 0.0
        %4005 = vmatpush1.msra.mxu0 0.0
        %4006 = vmatprep.subr.mxu0 0.0
        %4007 = vmatpush1.msra.mxu0 0.0
        %4008 = vmatprep.subr.mxu0 0.0
        %4009 = vmatpush1.msra.mxu0 0.0
        %4010 = vmatprep.subr.mxu0 0.0
        %4011 = vmatpush1.msra.mxu0 0.0
        %4012 = vmatprep.subr.mxu0 0.0
        %4013 = vmatpush1.msra.mxu0 0.0
        %4014 = vmatprep.subr.mxu0 0.0
        %4015 = vmatpush1.msra.mxu0 0.0
        %4016 = vmatprep.subr.mxu0 0.0
        %4017 = vmatpush1.msra.mxu0 0.0
        %4018 = vmatprep.subr.mxu0 0.0
        %4019 = vmatpush1.msra.mxu0 0.0
        %4020 = vmatprep.subr.mxu0 0.0
        %4021 = vmatpush1.msra.mxu0 0.0
        %4022 = vmatprep.subr.mxu0 0.0
        %4023 = vmatpush1.msra.mxu0 0.0
        %4024 = vmatprep.subr.mxu0 0.0
        %4025 = vmatpush1.msra.mxu0 0.0
        %4026 = vmatprep.subr.mxu0 0.0
        %4027 = vmatpush1.msra.mxu0 0.0
        %4028 = vmatprep.subr.mxu0 0.0
        %4029 = vmatpush1.msra.mxu0 0.0
        %4030 = vmatprep.subr.mxu0 0.0
        %4031 = vmatpush1.msra.mxu0 0.0
        %4032 = vmatprep.subr.mxu0 0.0
        %4033 = vmatpush1.msra.mxu0 0.0
        %4034 = vmatprep.subr.mxu0 0.0
        %4035 = vmatpush1.msra.mxu0 0.0
        %4036 = vmatprep.subr.mxu0 0.0
        %4037 = vmatpush1.msra.mxu0 0.0
        %4038 = vmatprep.subr.mxu0 0.0
        %4039 = vmatpush1.msra.mxu0 0.0
        %4040 = vmatprep.subr.mxu0 0.0
        %4041 = vmatpush1.msra.mxu0 0.0
        %4042 = vmatprep.subr.mxu0 0.0
        %4043 = vmatpush1.msra.mxu0 0.0
        %4044 = vmatprep.subr.mxu0 0.0
        %4045 = vmatpush1.msra.mxu0 0.0
        %4046 = vmatprep.subr.mxu0 0.0
        %4047 = vmatpush1.msra.mxu0 0.0
        %4048 = vmatprep.subr.mxu0 0.0
        %4049 = vmatpush1.msra.mxu0 0.0
        %4050 = vmatprep.subr.mxu0 0.0
        %4051 = vmatpush1.msra.mxu0 0.0
        %4052 = vmatprep.mubr.f32.mxu0 0.0
        %4053 = vmatmul.mubr.f32.gmra.mrb[0].mxu0 %v3980
        %v4054 = vpop.f32.mrb[0].mxu0
        %v4055 = vadd.f32 0.0, %v4054
        %v4056 = vpop.f32.mrb[0].mxu0
        %4057 = vmatprep.mubr.f32.mxu0 0.0
        %4058 = vmatmul.mubr.f32.gmra.mrb[0].mxu0 %v3983
        %v4059 = vpop.f32.mrb[0].mxu0
        %v4060 = vadd.f32 0.0, %v4059
        %v4061 = vpop.f32.mrb[0].mxu0
        %4062 = vdwg.mxu0
        %v4064 = vsel %vm3758, %v3907, 0
        %4066 = vmatprep.subr.mxu0 0.0
        %4067 = vmatpush1.msra.mxu0 %v4064
        %4068 = vmatprep.subr.mxu0 0.0
        %4069 = vmatpush1.msra.mxu0 0.0
        %4070 = vmatprep.subr.mxu0 0.0
        %4071 = vmatpush1.msra.mxu0 0.0
        %4072 = vmatprep.subr.mxu0 0.0
        %4073 = vmatpush1.msra.mxu0 0.0
        %4074 = vmatprep.subr.mxu0 0.0
        %4075 = vmatpush1.msra.mxu0 0.0
        %4076 = vmatprep.subr.mxu0 0.0
        %4077 = vmatpush1.msra.mxu0 0.0
        %4078 = vmatprep.subr.mxu0 0.0
        %4079 = vmatpush1.msra.mxu0 0.0
        %4080 = vmatprep.subr.mxu0 0.0
        %4081 = vmatpush1.msra.mxu0 0.0
        %4082 = vmatprep.subr.mxu0 0.0
        %4083 = vmatpush1.msra.mxu0 0.0
        %4084 = vmatprep.subr.mxu0 0.0
        %4085 = vmatpush1.msra.mxu0 0.0
        %4086 = vmatprep.subr.mxu0 0.0
        %4087 = vmatpush1.msra.mxu0 0.0
        %4088 = vmatprep.subr.mxu0 0.0
        %4089 = vmatpush1.msra.mxu0 0.0
        %4090 = vmatprep.subr.mxu0 0.0
        %4091 = vmatpush1.msra.mxu0 0.0
        %4092 = vmatprep.subr.mxu0 0.0
        %4093 = vmatpush1.msra.mxu0 0.0
        %4094 = vmatprep.subr.mxu0 0.0
        %4095 = vmatpush1.msra.mxu0 0.0
        %4096 = vmatprep.subr.mxu0 0.0
        %4097 = vmatpush1.msra.mxu0 0.0
        %4098 = vmatprep.subr.mxu0 0.0
        %4099 = vmatpush1.msra.mxu0 0.0
        %4100 = vmatprep.subr.mxu0 0.0
        %4101 = vmatpush1.msra.mxu0 0.0
        %4102 = vmatprep.subr.mxu0 0.0
        %4103 = vmatpush1.msra.mxu0 0.0
        %4104 = vmatprep.subr.mxu0 0.0
        %4105 = vmatpush1.msra.mxu0 0.0
        %4106 = vmatprep.subr.mxu0 0.0
        %4107 = vmatpush1.msra.mxu0 0.0
        %4108 = vmatprep.subr.mxu0 0.0
        %4109 = vmatpush1.msra.mxu0 0.0
        %4110 = vmatprep.subr.mxu0 0.0
        %4111 = vmatpush1.msra.mxu0 0.0
        %4112 = vmatprep.subr.mxu0 0.0
        %4113 = vmatpush1.msra.mxu0 0.0
        %4114 = vmatprep.subr.mxu0 0.0
        %4115 = vmatpush1.msra.mxu0 0.0
        %4116 = vmatprep.subr.mxu0 0.0
        %4117 = vmatpush1.msra.mxu0 0.0
        %4118 = vmatprep.subr.mxu0 0.0
        %4119 = vmatpush1.msra.mxu0 0.0
        %4120 = vmatprep.subr.mxu0 0.0
        %4121 = vmatpush1.msra.mxu0 0.0
        %4122 = vmatprep.subr.mxu0 0.0
        %4123 = vmatpush1.msra.mxu0 0.0
        %4124 = vmatprep.subr.mxu0 0.0
        %4125 = vmatpush1.msra.mxu0 0.0
        %4126 = vmatprep.subr.mxu0 0.0
        %4127 = vmatpush1.msra.mxu0 0.0
        %4128 = vmatprep.subr.mxu0 0.0
        %4129 = vmatpush1.msra.mxu0 0.0
        %4130 = vmatprep.mubr.f32.mxu0 0.0
        %4131 = vmatmul.mubr.f32.gmra.mrb[0].mxu0 %v3980
        %v4132 = vpop.f32.mrb[0].mxu0
        %v4133 = vadd.f32 0.0, %v4132
        %v4134 = vpop.f32.mrb[0].mxu0
        %4135 = vmatprep.mubr.f32.mxu0 0.0
        %4136 = vmatmul.mubr.f32.gmra.mrb[0].mxu0 %v3983
        %v4137 = vpop.f32.mrb[0].mxu0
        %v4138 = vadd.f32 0.0, %v4137
        %v4139 = vpop.f32.mrb[0].mxu0
        %4140 = vdwg.mxu0
        %v4142 = vsel %vm3758, %v3890, 0
        %4144 = vmatprep.subr.mxu0 0.0
        %4145 = vmatpush1.msra.mxu0 %v4142
        %4146 = vmatprep.subr.mxu0 0.0
        %4147 = vmatpush1.msra.mxu0 0.0
        %4148 = vmatprep.subr.mxu0 0.0
        %4149 = vmatpush1.msra.mxu0 0.0
        %4150 = vmatprep.subr.mxu0 0.0
        %4151 = vmatpush1.msra.mxu0 0.0
        %4152 = vmatprep.subr.mxu0 0.0
        %4153 = vmatpush1.msra.mxu0 0.0
        %4154 = vmatprep.subr.mxu0 0.0
        %4155 = vmatpush1.msra.mxu0 0.0
        %4156 = vmatprep.subr.mxu0 0.0
        %4157 = vmatpush1.msra.mxu0 0.0
        %4158 = vmatprep.subr.mxu0 0.0
        %4159 = vmatpush1.msra.mxu0 0.0
        %4160 = vmatprep.subr.mxu0 0.0
        %4161 = vmatpush1.msra.mxu0 0.0
        %4162 = vmatprep.subr.mxu0 0.0
        %4163 = vmatpush1.msra.mxu0 0.0
        %4164 = vmatprep.subr.mxu0 0.0
        %4165 = vmatpush1.msra.mxu0 0.0
        %4166 = vmatprep.subr.mxu0 0.0
        %4167 = vmatpush1.msra.mxu0 0.0
        %4168 = vmatprep.subr.mxu0 0.0
        %4169 = vmatpush1.msra.mxu0 0.0
        %4170 = vmatprep.subr.mxu0 0.0
        %4171 = vmatpush1.msra.mxu0 0.0
        %4172 = vmatprep.subr.mxu0 0.0
        %4173 = vmatpush1.msra.mxu0 0.0
        %4174 = vmatprep.subr.mxu0 0.0
        %4175 = vmatpush1.msra.mxu0 0.0
        %4176 = vmatprep.subr.mxu0 0.0
        %4177 = vmatpush1.msra.mxu0 0.0
        %4178 = vmatprep.subr.mxu0 0.0
        %4179 = vmatpush1.msra.mxu0 0.0
        %4180 = vmatprep.subr.mxu0 0.0
        %4181 = vmatpush1.msra.mxu0 0.0
        %4182 = vmatprep.subr.mxu0 0.0
        %4183 = vmatpush1.msra.mxu0 0.0
        %4184 = vmatprep.subr.mxu0 0.0
        %4185 = vmatpush1.msra.mxu0 0.0
        %4186 = vmatprep.subr.mxu0 0.0
        %4187 = vmatpush1.msra.mxu0 0.0
        %4188 = vmatprep.subr.mxu0 0.0
        %4189 = vmatpush1.msra.mxu0 0.0
        %4190 = vmatprep.subr.mxu0 0.0
        %4191 = vmatpush1.msra.mxu0 0.0
        %4192 = vmatprep.subr.mxu0 0.0
        %4193 = vmatpush1.msra.mxu0 0.0
        %4194 = vmatprep.subr.mxu0 0.0
        %4195 = vmatpush1.msra.mxu0 0.0
        %4196 = vmatprep.subr.mxu0 0.0
        %4197 = vmatpush1.msra.mxu0 0.0
        %4198 = vmatprep.subr.mxu0 0.0
        %4199 = vmatpush1.msra.mxu0 0.0
        %4200 = vmatprep.subr.mxu0 0.0
        %4201 = vmatpush1.msra.mxu0 0.0
        %4202 = vmatprep.subr.mxu0 0.0
        %4203 = vmatpush1.msra.mxu0 0.0
        %4204 = vmatprep.subr.mxu0 0.0
        %4205 = vmatpush1.msra.mxu0 0.0
        %4206 = vmatprep.subr.mxu0 0.0
        %4207 = vmatpush1.msra.mxu0 0.0
        %4208 = vmatprep.mubr.f32.mxu0 0.0
        %4209 = vmatmul.mubr.f32.gmra.mrb[0].mxu0 %v3980
        %v4210 = vpop.f32.mrb[0].mxu0
        %v4211 = vadd.f32 0.0, %v4210
        %v4212 = vpop.f32.mrb[0].mxu0
        %4213 = vmatprep.mubr.f32.mxu0 0.0
        %4214 = vmatmul.mubr.f32.gmra.mrb[0].mxu0 %v3983
        %v4215 = vpop.f32.mrb[0].mxu0
        %v4216 = vadd.f32 0.0, %v4215
        %v4217 = vpop.f32.mrb[0].mxu0
        %4218 = vdwg.mxu0
        %v4220 = vsel %vm3758, %v3908, 0
        %4222 = vmatprep.subr.mxu0 0.0
        %4223 = vmatpush1.msra.mxu0 %v4220
        %4224 = vmatprep.subr.mxu0 0.0
        %4225 = vmatpush1.msra.mxu0 0.0
        %4226 = vmatprep.subr.mxu0 0.0
        %4227 = vmatpush1.msra.mxu0 0.0
        %4228 = vmatprep.subr.mxu0 0.0
        %4229 = vmatpush1.msra.mxu0 0.0
        %4230 = vmatprep.subr.mxu0 0.0
        %4231 = vmatpush1.msra.mxu0 0.0
        %4232 = vmatprep.subr.mxu0 0.0
        %4233 = vmatpush1.msra.mxu0 0.0
        %4234 = vmatprep.subr.mxu0 0.0
        %4235 = vmatpush1.msra.mxu0 0.0
        %4236 = vmatprep.subr.mxu0 0.0
        %4237 = vmatpush1.msra.mxu0 0.0
        %4238 = vmatprep.subr.mxu0 0.0
        %4239 = vmatpush1.msra.mxu0 0.0
        %4240 = vmatprep.subr.mxu0 0.0
        %4241 = vmatpush1.msra.mxu0 0.0
        %4242 = vmatprep.subr.mxu0 0.0
        %4243 = vmatpush1.msra.mxu0 0.0
        %4244 = vmatprep.subr.mxu0 0.0
        %4245 = vmatpush1.msra.mxu0 0.0
        %4246 = vmatprep.subr.mxu0 0.0
        %4247 = vmatpush1.msra.mxu0 0.0
        %4248 = vmatprep.subr.mxu0 0.0
        %4249 = vmatpush1.msra.mxu0 0.0
        %4250 = vmatprep.subr.mxu0 0.0
        %4251 = vmatpush1.msra.mxu0 0.0
        %4252 = vmatprep.subr.mxu0 0.0
        %4253 = vmatpush1.msra.mxu0 0.0
        %4254 = vmatprep.subr.mxu0 0.0
        %4255 = vmatpush1.msra.mxu0 0.0
        %4256 = vmatprep.subr.mxu0 0.0
        %4257 = vmatpush1.msra.mxu0 0.0
        %4258 = vmatprep.subr.mxu0 0.0
        %4259 = vmatpush1.msra.mxu0 0.0
        %4260 = vmatprep.subr.mxu0 0.0
        %4261 = vmatpush1.msra.mxu0 0.0
        %4262 = vmatprep.subr.mxu0 0.0
        %4263 = vmatpush1.msra.mxu0 0.0
        %4264 = vmatprep.subr.mxu0 0.0
        %4265 = vmatpush1.msra.mxu0 0.0
        %4266 = vmatprep.subr.mxu0 0.0
        %4267 = vmatpush1.msra.mxu0 0.0
        %4268 = vmatprep.subr.mxu0 0.0
        %4269 = vmatpush1.msra.mxu0 0.0
        %4270 = vmatprep.subr.mxu0 0.0
        %4271 = vmatpush1.msra.mxu0 0.0
        %4272 = vmatprep.subr.mxu0 0.0
        %4273 = vmatpush1.msra.mxu0 0.0
        %4274 = vmatprep.subr.mxu0 0.0
        %4275 = vmatpush1.msra.mxu0 0.0
        %4276 = vmatprep.subr.mxu0 0.0
        %4277 = vmatpush1.msra.mxu0 0.0
        %4278 = vmatprep.subr.mxu0 0.0
        %4279 = vmatpush1.msra.mxu0 0.0
        %4280 = vmatprep.subr.mxu0 0.0
        %4281 = vmatpush1.msra.mxu0 0.0
        %4282 = vmatprep.subr.mxu0 0.0
        %4283 = vmatpush1.msra.mxu0 0.0
        %4284 = vmatprep.subr.mxu0 0.0
        %4285 = vmatpush1.msra.mxu0 0.0
        %4286 = vmatprep.mubr.f32.mxu0 0.0
        %4287 = vmatmul.mubr.f32.gmra.mrb[0].mxu0 %v3980
        %v4288 = vpop.f32.mrb[0].mxu0
        %v4289 = vadd.f32 0.0, %v4288
        %v4290 = vpop.f32.mrb[0].mxu0
        %4291 = vmatprep.mubr.f32.mxu0 0.0
        %4292 = vmatmul.mubr.f32.gmra.mrb[0].mxu0 %v3983
        %v4293 = vpop.f32.mrb[0].mxu0
        %v4294 = vadd.f32 0.0, %v4293
        %v4295 = vpop.f32.mrb[0].mxu0
        %4296 = vdwg.mxu0
        %v4298 = vsel %vm3758, %v3899, 0
        %4300 = vmatprep.subr.mxu0 0.0
        %4301 = vmatpush1.msra.mxu0 %v4298
        %4302 = vmatprep.subr.mxu0 0.0
        %4303 = vmatpush1.msra.mxu0 0.0
        %4304 = vmatprep.subr.mxu0 0.0
        %4305 = vmatpush1.msra.mxu0 0.0
        %4306 = vmatprep.subr.mxu0 0.0
        %4307 = vmatpush1.msra.mxu0 0.0
        %4308 = vmatprep.subr.mxu0 0.0
        %4309 = vmatpush1.msra.mxu0 0.0
        %4310 = vmatprep.subr.mxu0 0.0
        %4311 = vmatpush1.msra.mxu0 0.0
        %4312 = vmatprep.subr.mxu0 0.0
        %4313 = vmatpush1.msra.mxu0 0.0
        %4314 = vmatprep.subr.mxu0 0.0
        %4315 = vmatpush1.msra.mxu0 0.0
        %4316 = vmatprep.subr.mxu0 0.0
        %4317 = vmatpush1.msra.mxu0 0.0
        %4318 = vmatprep.subr.mxu0 0.0
        %4319 = vmatpush1.msra.mxu0 0.0
        %4320 = vmatprep.subr.mxu0 0.0
        %4321 = vmatpush1.msra.mxu0 0.0
        %4322 = vmatprep.subr.mxu0 0.0
        %4323 = vmatpush1.msra.mxu0 0.0
        %4324 = vmatprep.subr.mxu0 0.0
        %4325 = vmatpush1.msra.mxu0 0.0
        %4326 = vmatprep.subr.mxu0 0.0
        %4327 = vmatpush1.msra.mxu0 0.0
        %4328 = vmatprep.subr.mxu0 0.0
        %4329 = vmatpush1.msra.mxu0 0.0
        %4330 = vmatprep.subr.mxu0 0.0
        %4331 = vmatpush1.msra.mxu0 0.0
        %4332 = vmatprep.subr.mxu0 0.0
        %4333 = vmatpush1.msra.mxu0 0.0
        %4334 = vmatprep.subr.mxu0 0.0
        %4335 = vmatpush1.msra.mxu0 0.0
        %4336 = vmatprep.subr.mxu0 0.0
        %4337 = vmatpush1.msra.mxu0 0.0
        %4338 = vmatprep.subr.mxu0 0.0
        %4339 = vmatpush1.msra.mxu0 0.0
        %4340 = vmatprep.subr.mxu0 0.0
        %4341 = vmatpush1.msra.mxu0 0.0
        %4342 = vmatprep.subr.mxu0 0.0
        %4343 = vmatpush1.msra.mxu0 0.0
        %4344 = vmatprep.subr.mxu0 0.0
        %4345 = vmatpush1.msra.mxu0 0.0
        %4346 = vmatprep.subr.mxu0 0.0
        %4347 = vmatpush1.msra.mxu0 0.0
        %4348 = vmatprep.subr.mxu0 0.0
        %4349 = vmatpush1.msra.mxu0 0.0
        %4350 = vmatprep.subr.mxu0 0.0
        %4351 = vmatpush1.msra.mxu0 0.0
        %4352 = vmatprep.subr.mxu0 0.0
        %4353 = vmatpush1.msra.mxu0 0.0
        %4354 = vmatprep.subr.mxu0 0.0
        %4355 = vmatpush1.msra.mxu0 0.0
        %4356 = vmatprep.subr.mxu0 0.0
        %4357 = vmatpush1.msra.mxu0 0.0
        %4358 = vmatprep.subr.mxu0 0.0
        %4359 = vmatpush1.msra.mxu0 0.0
        %4360 = vmatprep.subr.mxu0 0.0
        %4361 = vmatpush1.msra.mxu0 0.0
        %4362 = vmatprep.subr.mxu0 0.0
        %4363 = vmatpush1.msra.mxu0 0.0
        %4364 = vmatprep.mubr.f32.mxu0 0.0
        %4365 = vmatmul.mubr.f32.gmra.mrb[0].mxu0 %v3980
        %v4366 = vpop.f32.mrb[0].mxu0
        %v4367 = vadd.f32 0.0, %v4366
        %v4368 = vpop.f32.mrb[0].mxu0
        %4369 = vmatprep.mubr.f32.mxu0 0.0
        %4370 = vmatmul.mubr.f32.gmra.mrb[0].mxu0 %v3983
        %v4371 = vpop.f32.mrb[0].mxu0
        %v4372 = vadd.f32 0.0, %v4371
        %v4373 = vpop.f32.mrb[0].mxu0
        %4374 = vdwg.mxu0
        %v4376 = vsel %vm3758, %v3909, 0
        %4378 = vmatprep.subr.mxu0 0.0
        %4379 = vmatpush1.msra.mxu0 %v4376
        %4380 = vmatprep.subr.mxu0 0.0
        %4381 = vmatpush1.msra.mxu0 0.0
        %4382 = vmatprep.subr.mxu0 0.0
        %4383 = vmatpush1.msra.mxu0 0.0
        %4384 = vmatprep.subr.mxu0 0.0
        %4385 = vmatpush1.msra.mxu0 0.0
        %4386 = vmatprep.subr.mxu0 0.0
        %4387 = vmatpush1.msra.mxu0 0.0
        %4388 = vmatprep.subr.mxu0 0.0
        %4389 = vmatpush1.msra.mxu0 0.0
        %4390 = vmatprep.subr.mxu0 0.0
        %4391 = vmatpush1.msra.mxu0 0.0
        %4392 = vmatprep.subr.mxu0 0.0
        %4393 = vmatpush1.msra.mxu0 0.0
        %4394 = vmatprep.subr.mxu0 0.0
        %4395 = vmatpush1.msra.mxu0 0.0
        %4396 = vmatprep.subr.mxu0 0.0
        %4397 = vmatpush1.msra.mxu0 0.0
        %4398 = vmatprep.subr.mxu0 0.0
        %4399 = vmatpush1.msra.mxu0 0.0
        %4400 = vmatprep.subr.mxu0 0.0
        %4401 = vmatpush1.msra.mxu0 0.0
        %4402 = vmatprep.subr.mxu0 0.0
        %4403 = vmatpush1.msra.mxu0 0.0
        %4404 = vmatprep.subr.mxu0 0.0
        %4405 = vmatpush1.msra.mxu0 0.0
        %4406 = vmatprep.subr.mxu0 0.0
        %4407 = vmatpush1.msra.mxu0 0.0
        %4408 = vmatprep.subr.mxu0 0.0
        %4409 = vmatpush1.msra.mxu0 0.0
        %4410 = vmatprep.subr.mxu0 0.0
        %4411 = vmatpush1.msra.mxu0 0.0
        %4412 = vmatprep.subr.mxu0 0.0
        %4413 = vmatpush1.msra.mxu0 0.0
        %4414 = vmatprep.subr.mxu0 0.0
        %4415 = vmatpush1.msra.mxu0 0.0
        %4416 = vmatprep.subr.mxu0 0.0
        %4417 = vmatpush1.msra.mxu0 0.0
        %4418 = vmatprep.subr.mxu0 0.0
        %4419 = vmatpush1.msra.mxu0 0.0
        %4420 = vmatprep.subr.mxu0 0.0
        %4421 = vmatpush1.msra.mxu0 0.0
        %4422 = vmatprep.subr.mxu0 0.0
        %4423 = vmatpush1.msra.mxu0 0.0
        %4424 = vmatprep.subr.mxu0 0.0
        %4425 = vmatpush1.msra.mxu0 0.0
        %4426 = vmatprep.subr.mxu0 0.0
        %4427 = vmatpush1.msra.mxu0 0.0
        %4428 = vmatprep.subr.mxu0 0.0
        %4429 = vmatpush1.msra.mxu0 0.0
        %4430 = vmatprep.subr.mxu0 0.0
        %4431 = vmatpush1.msra.mxu0 0.0
        %4432 = vmatprep.subr.mxu0 0.0
        %4433 = vmatpush1.msra.mxu0 0.0
        %4434 = vmatprep.subr.mxu0 0.0
        %4435 = vmatpush1.msra.mxu0 0.0
        %4436 = vmatprep.subr.mxu0 0.0
        %4437 = vmatpush1.msra.mxu0 0.0
        %4438 = vmatprep.subr.mxu0 0.0
        %4439 = vmatpush1.msra.mxu0 0.0
        %4440 = vmatprep.subr.mxu0 0.0
        %4441 = vmatpush1.msra.mxu0 0.0
        %4442 = vmatprep.mubr.f32.mxu0 0.0
        %4443 = vmatmul.mubr.f32.gmra.mrb[0].mxu0 %v3980
        %v4444 = vpop.f32.mrb[0].mxu0
        %v4445 = vadd.f32 0.0, %v4444
        %v4446 = vpop.f32.mrb[0].mxu0
        %4447 = vmatprep.mubr.f32.mxu0 0.0
        %4448 = vmatmul.mubr.f32.gmra.mrb[0].mxu0 %v3983
        %v4449 = vpop.f32.mrb[0].mxu0
        %v4450 = vadd.f32 0.0, %v4449
        %v4451 = vpop.f32.mrb[0].mxu0
        %4452 = vdwg.mxu0
        %v4454 = vsel %vm3758, %v3906, 0
        %4456 = vmatprep.subr.mxu0 0.0
        %4457 = vmatpush1.msra.mxu0 %v4454
        %4458 = vmatprep.subr.mxu0 0.0
        %4459 = vmatpush1.msra.mxu0 0.0
        %4460 = vmatprep.subr.mxu0 0.0
        %4461 = vmatpush1.msra.mxu0 0.0
        %4462 = vmatprep.subr.mxu0 0.0
        %4463 = vmatpush1.msra.mxu0 0.0
        %4464 = vmatprep.subr.mxu0 0.0
        %4465 = vmatpush1.msra.mxu0 0.0
        %4466 = vmatprep.subr.mxu0 0.0
        %4467 = vmatpush1.msra.mxu0 0.0
        %4468 = vmatprep.subr.mxu0 0.0
        %4469 = vmatpush1.msra.mxu0 0.0
        %4470 = vmatprep.subr.mxu0 0.0
        %4471 = vmatpush1.msra.mxu0 0.0
        %4472 = vmatprep.subr.mxu0 0.0
        %4473 = vmatpush1.msra.mxu0 0.0
        %4474 = vmatprep.subr.mxu0 0.0
        %4475 = vmatpush1.msra.mxu0 0.0
        %4476 = vmatprep.subr.mxu0 0.0
        %4477 = vmatpush1.msra.mxu0 0.0
        %4478 = vmatprep.subr.mxu0 0.0
        %4479 = vmatpush1.msra.mxu0 0.0
        %4480 = vmatprep.subr.mxu0 0.0
        %4481 = vmatpush1.msra.mxu0 0.0
        %4482 = vmatprep.subr.mxu0 0.0
        %4483 = vmatpush1.msra.mxu0 0.0
        %4484 = vmatprep.subr.mxu0 0.0
        %4485 = vmatpush1.msra.mxu0 0.0
        %4486 = vmatprep.subr.mxu0 0.0
        %4487 = vmatpush1.msra.mxu0 0.0
        %4488 = vmatprep.subr.mxu0 0.0
        %4489 = vmatpush1.msra.mxu0 0.0
        %4490 = vmatprep.subr.mxu0 0.0
        %4491 = vmatpush1.msra.mxu0 0.0
        %4492 = vmatprep.subr.mxu0 0.0
        %4493 = vmatpush1.msra.mxu0 0.0
        %4494 = vmatprep.subr.mxu0 0.0
        %4495 = vmatpush1.msra.mxu0 0.0
        %4496 = vmatprep.subr.mxu0 0.0
        %4497 = vmatpush1.msra.mxu0 0.0
        %4498 = vmatprep.subr.mxu0 0.0
        %4499 = vmatpush1.msra.mxu0 0.0
        %4500 = vmatprep.subr.mxu0 0.0
        %4501 = vmatpush1.msra.mxu0 0.0
        %4502 = vmatprep.subr.mxu0 0.0
        %4503 = vmatpush1.msra.mxu0 0.0
        %4504 = vmatprep.subr.mxu0 0.0
        %4505 = vmatpush1.msra.mxu0 0.0
        %4506 = vmatprep.subr.mxu0 0.0
        %4507 = vmatpush1.msra.mxu0 0.0
        %4508 = vmatprep.subr.mxu0 0.0
        %4509 = vmatpush1.msra.mxu0 0.0
        %4510 = vmatprep.subr.mxu0 0.0
        %4511 = vmatpush1.msra.mxu0 0.0
        %4512 = vmatprep.subr.mxu0 0.0
        %4513 = vmatpush1.msra.mxu0 0.0
        %4514 = vmatprep.subr.mxu0 0.0
        %4515 = vmatpush1.msra.mxu0 0.0
        %4516 = vmatprep.subr.mxu0 0.0
        %4517 = vmatpush1.msra.mxu0 0.0
        %4518 = vmatprep.subr.mxu0 0.0
        %4519 = vmatpush1.msra.mxu0 0.0
        %4520 = vmatprep.mubr.f32.mxu0 0.0
        %4521 = vmatmul.mubr.f32.gmra.mrb[0].mxu0 %v3980
        %v4522 = vpop.f32.mrb[0].mxu0
        %v4523 = vadd.f32 0.0, %v4522
        %v4524 = vpop.f32.mrb[0].mxu0
        %4525 = vmatprep.mubr.f32.mxu0 0.0
        %4526 = vmatmul.mubr.f32.gmra.mrb[0].mxu0 %v3983
        %v4527 = vpop.f32.mrb[0].mxu0
        %v4528 = vadd.f32 0.0, %v4527
        %v4529 = vpop.f32.mrb[0].mxu0
        %4530 = vdwg.mxu0
        %v4532 = vsel %vm3758, %v3910, 0
        %4534 = vmatprep.subr.mxu0 0.0
        %4535 = vmatpush1.msra.mxu0 %v4532
        %4536 = vmatprep.subr.mxu0 0.0
        %4537 = vmatpush1.msra.mxu0 0.0
        %4538 = vmatprep.subr.mxu0 0.0
        %4539 = vmatpush1.msra.mxu0 0.0
        %4540 = vmatprep.subr.mxu0 0.0
        %4541 = vmatpush1.msra.mxu0 0.0
        %4542 = vmatprep.subr.mxu0 0.0
        %4543 = vmatpush1.msra.mxu0 0.0
        %4544 = vmatprep.subr.mxu0 0.0
        %4545 = vmatpush1.msra.mxu0 0.0
        %4546 = vmatprep.subr.mxu0 0.0
        %4547 = vmatpush1.msra.mxu0 0.0
        %4548 = vmatprep.subr.mxu0 0.0
        %4549 = vmatpush1.msra.mxu0 0.0
        %4550 = vmatprep.subr.mxu0 0.0
        %4551 = vmatpush1.msra.mxu0 0.0
        %4552 = vmatprep.subr.mxu0 0.0
        %4553 = vmatpush1.msra.mxu0 0.0
        %4554 = vmatprep.subr.mxu0 0.0
        %4555 = vmatpush1.msra.mxu0 0.0
        %4556 = vmatprep.subr.mxu0 0.0
        %4557 = vmatpush1.msra.mxu0 0.0
        %4558 = vmatprep.subr.mxu0 0.0
        %4559 = vmatpush1.msra.mxu0 0.0
        %4560 = vmatprep.subr.mxu0 0.0
        %4561 = vmatpush1.msra.mxu0 0.0
        %4562 = vmatprep.subr.mxu0 0.0
        %4563 = vmatpush1.msra.mxu0 0.0
        %4564 = vmatprep.subr.mxu0 0.0
        %4565 = vmatpush1.msra.mxu0 0.0
        %4566 = vmatprep.subr.mxu0 0.0
        %4567 = vmatpush1.msra.mxu0 0.0
        %4568 = vmatprep.subr.mxu0 0.0
        %4569 = vmatpush1.msra.mxu0 0.0
        %4570 = vmatprep.subr.mxu0 0.0
        %4571 = vmatpush1.msra.mxu0 0.0
        %4572 = vmatprep.subr.mxu0 0.0
        %4573 = vmatpush1.msra.mxu0 0.0
        %4574 = vmatprep.subr.mxu0 0.0
        %4575 = vmatpush1.msra.mxu0 0.0
        %4576 = vmatprep.subr.mxu0 0.0
        %4577 = vmatpush1.msra.mxu0 0.0
        %4578 = vmatprep.subr.mxu0 0.0
        %4579 = vmatpush1.msra.mxu0 0.0
        %4580 = vmatprep.subr.mxu0 0.0
        %4581 = vmatpush1.msra.mxu0 0.0
        %4582 = vmatprep.subr.mxu0 0.0
        %4583 = vmatpush1.msra.mxu0 0.0
        %4584 = vmatprep.subr.mxu0 0.0
        %4585 = vmatpush1.msra.mxu0 0.0
        %4586 = vmatprep.subr.mxu0 0.0
        %4587 = vmatpush1.msra.mxu0 0.0
        %4588 = vmatprep.subr.mxu0 0.0
        %4589 = vmatpush1.msra.mxu0 0.0
        %4590 = vmatprep.subr.mxu0 0.0
        %4591 = vmatpush1.msra.mxu0 0.0
        %4592 = vmatprep.subr.mxu0 0.0
        %4593 = vmatpush1.msra.mxu0 0.0
        %4594 = vmatprep.subr.mxu0 0.0
        %4595 = vmatpush1.msra.mxu0 0.0
        %4596 = vmatprep.subr.mxu0 0.0
        %4597 = vmatpush1.msra.mxu0 0.0
        %4598 = vmatprep.mubr.f32.mxu0 0.0
        %4599 = vmatmul.mubr.f32.gmra.mrb[0].mxu0 %v3980
        %v4600 = vpop.f32.mrb[0].mxu0
        %v4601 = vadd.f32 0.0, %v4600
        %v4602 = vpop.f32.mrb[0].mxu0
        %4603 = vmatprep.mubr.f32.mxu0 0.0
        %4604 = vmatmul.mubr.f32.gmra.mrb[0].mxu0 %v3983
        %v4605 = vpop.f32.mrb[0].mxu0
        %v4606 = vadd.f32 0.0, %v4605
        %v4607 = vpop.f32.mrb[0].mxu0
        %4608 = vdwg.mxu0
        %v4610 = vsel %vm3758, %v3949, 0
        %4612 = vmatprep.subr.mxu0 0.0
        %4613 = vmatpush1.msra.mxu0 %v4610
        %4614 = vmatprep.subr.mxu0 0.0
        %4615 = vmatpush1.msra.mxu0 0.0
        %4616 = vmatprep.subr.mxu0 0.0
        %4617 = vmatpush1.msra.mxu0 0.0
        %4618 = vmatprep.subr.mxu0 0.0
        %4619 = vmatpush1.msra.mxu0 0.0
        %4620 = vmatprep.subr.mxu0 0.0
        %4621 = vmatpush1.msra.mxu0 0.0
        %4622 = vmatprep.subr.mxu0 0.0
        %4623 = vmatpush1.msra.mxu0 0.0
        %4624 = vmatprep.subr.mxu0 0.0
        %4625 = vmatpush1.msra.mxu0 0.0
        %4626 = vmatprep.subr.mxu0 0.0
        %4627 = vmatpush1.msra.mxu0 0.0
        %4628 = vmatprep.subr.mxu0 0.0
        %4629 = vmatpush1.msra.mxu0 0.0
        %4630 = vmatprep.subr.mxu0 0.0
        %4631 = vmatpush1.msra.mxu0 0.0
        %4632 = vmatprep.subr.mxu0 0.0
        %4633 = vmatpush1.msra.mxu0 0.0
        %4634 = vmatprep.subr.mxu0 0.0
        %4635 = vmatpush1.msra.mxu0 0.0
        %4636 = vmatprep.subr.mxu0 0.0
        %4637 = vmatpush1.msra.mxu0 0.0
        %4638 = vmatprep.subr.mxu0 0.0
        %4639 = vmatpush1.msra.mxu0 0.0
        %4640 = vmatprep.subr.mxu0 0.0
        %4641 = vmatpush1.msra.mxu0 0.0
        %4642 = vmatprep.subr.mxu0 0.0
        %4643 = vmatpush1.msra.mxu0 0.0
        %4644 = vmatprep.subr.mxu0 0.0
        %4645 = vmatpush1.msra.mxu0 0.0
        %4646 = vmatprep.subr.mxu0 0.0
        %4647 = vmatpush1.msra.mxu0 0.0
        %4648 = vmatprep.subr.mxu0 0.0
        %4649 = vmatpush1.msra.mxu0 0.0
        %4650 = vmatprep.subr.mxu0 0.0
        %4651 = vmatpush1.msra.mxu0 0.0
        %4652 = vmatprep.subr.mxu0 0.0
        %4653 = vmatpush1.msra.mxu0 0.0
        %4654 = vmatprep.subr.mxu0 0.0
        %4655 = vmatpush1.msra.mxu0 0.0
        %4656 = vmatprep.subr.mxu0 0.0
        %4657 = vmatpush1.msra.mxu0 0.0
        %4658 = vmatprep.subr.mxu0 0.0
        %4659 = vmatpush1.msra.mxu0 0.0
        %4660 = vmatprep.subr.mxu0 0.0
        %4661 = vmatpush1.msra.mxu0 0.0
        %4662 = vmatprep.subr.mxu0 0.0
        %4663 = vmatpush1.msra.mxu0 0.0
        %4664 = vmatprep.subr.mxu0 0.0
        %4665 = vmatpush1.msra.mxu0 0.0
        %4666 = vmatprep.subr.mxu0 0.0
        %4667 = vmatpush1.msra.mxu0 0.0
        %4668 = vmatprep.subr.mxu0 0.0
        %4669 = vmatpush1.msra.mxu0 0.0
        %4670 = vmatprep.subr.mxu0 0.0
        %4671 = vmatpush1.msra.mxu0 0.0
        %4672 = vmatprep.subr.mxu0 0.0
        %4673 = vmatpush1.msra.mxu0 0.0
        %4674 = vmatprep.subr.mxu0 0.0
        %4675 = vmatpush1.msra.mxu0 0.0
        %4676 = vmatprep.mubr.f32.mxu0 0.0
        %4677 = vmatmul.mubr.f32.gmra.mrb[0].mxu0 %v3980
        %v4678 = vpop.f32.mrb[0].mxu0
        %v4679 = vadd.f32 0.0, %v4678
        %v4680 = vpop.f32.mrb[0].mxu0
        %4681 = vmatprep.mubr.f32.mxu0 0.0
        %4682 = vmatmul.mubr.f32.gmra.mrb[0].mxu0 %v3983
        %v4683 = vpop.f32.mrb[0].mxu0
        %v4684 = vadd.f32 0.0, %v4683
        %v4685 = vpop.f32.mrb[0].mxu0
        %4686 = vdwg.mxu0
        %v4688 = vsel %vm3758, %v3973, 0
        %4690 = vmatprep.subr.mxu0 0.0
        %4691 = vmatpush1.msra.mxu0 %v4688
        %4692 = vmatprep.subr.mxu0 0.0
        %4693 = vmatpush1.msra.mxu0 0.0
        %4694 = vmatprep.subr.mxu0 0.0
        %4695 = vmatpush1.msra.mxu0 0.0
        %4696 = vmatprep.subr.mxu0 0.0
        %4697 = vmatpush1.msra.mxu0 0.0
        %4698 = vmatprep.subr.mxu0 0.0
        %4699 = vmatpush1.msra.mxu0 0.0
        %4700 = vmatprep.subr.mxu0 0.0
        %4701 = vmatpush1.msra.mxu0 0.0
        %4702 = vmatprep.subr.mxu0 0.0
        %4703 = vmatpush1.msra.mxu0 0.0
        %4704 = vmatprep.subr.mxu0 0.0
        %4705 = vmatpush1.msra.mxu0 0.0
        %4706 = vmatprep.subr.mxu0 0.0
        %4707 = vmatpush1.msra.mxu0 0.0
        %4708 = vmatprep.subr.mxu0 0.0
        %4709 = vmatpush1.msra.mxu0 0.0
        %4710 = vmatprep.subr.mxu0 0.0
        %4711 = vmatpush1.msra.mxu0 0.0
        %4712 = vmatprep.subr.mxu0 0.0
        %4713 = vmatpush1.msra.mxu0 0.0
        %4714 = vmatprep.subr.mxu0 0.0
        %4715 = vmatpush1.msra.mxu0 0.0
        %4716 = vmatprep.subr.mxu0 0.0
        %4717 = vmatpush1.msra.mxu0 0.0
        %4718 = vmatprep.subr.mxu0 0.0
        %4719 = vmatpush1.msra.mxu0 0.0
        %4720 = vmatprep.subr.mxu0 0.0
        %4721 = vmatpush1.msra.mxu0 0.0
        %4722 = vmatprep.subr.mxu0 0.0
        %4723 = vmatpush1.msra.mxu0 0.0
        %4724 = vmatprep.subr.mxu0 0.0
        %4725 = vmatpush1.msra.mxu0 0.0
        %4726 = vmatprep.subr.mxu0 0.0
        %4727 = vmatpush1.msra.mxu0 0.0
        %4728 = vmatprep.subr.mxu0 0.0
        %4729 = vmatpush1.msra.mxu0 0.0
        %4730 = vmatprep.subr.mxu0 0.0
        %4731 = vmatpush1.msra.mxu0 0.0
        %4732 = vmatprep.subr.mxu0 0.0
        %4733 = vmatpush1.msra.mxu0 0.0
        %4734 = vmatprep.subr.mxu0 0.0
        %4735 = vmatpush1.msra.mxu0 0.0
        %4736 = vmatprep.subr.mxu0 0.0
        %4737 = vmatpush1.msra.mxu0 0.0
        %4738 = vmatprep.subr.mxu0 0.0
        %4739 = vmatpush1.msra.mxu0 0.0
        %4740 = vmatprep.subr.mxu0 0.0
        %4741 = vmatpush1.msra.mxu0 0.0
        %4742 = vmatprep.subr.mxu0 0.0
        %4743 = vmatpush1.msra.mxu0 0.0
        %4744 = vmatprep.subr.mxu0 0.0
        %4745 = vmatpush1.msra.mxu0 0.0
        %4746 = vmatprep.subr.mxu0 0.0
        %4747 = vmatpush1.msra.mxu0 0.0
        %4748 = vmatprep.subr.mxu0 0.0
        %4749 = vmatpush1.msra.mxu0 0.0
        %4750 = vmatprep.subr.mxu0 0.0
        %4751 = vmatpush1.msra.mxu0 0.0
        %4752 = vmatprep.subr.mxu0 0.0
        %4753 = vmatpush1.msra.mxu0 0.0
        %4754 = vmatprep.mubr.f32.mxu0 0.0
        %4755 = vmatmul.mubr.f32.gmra.mrb[0].mxu0 %v3980
        %v4756 = vpop.f32.mrb[0].mxu0
        %v4757 = vadd.f32 0.0, %v4756
        %v4758 = vpop.f32.mrb[0].mxu0
        %4759 = vmatprep.mubr.f32.mxu0 0.0
        %4760 = vmatmul.mubr.f32.gmra.mrb[0].mxu0 %v3983
        %v4761 = vpop.f32.mrb[0].mxu0
        %v4762 = vadd.f32 0.0, %v4761
        %v4763 = vpop.f32.mrb[0].mxu0
        %4764 = vdwg.mxu0
        %v4766 = vsel %vm3758, %v3956, 0
        %4768 = vmatprep.subr.mxu0 0.0
        %4769 = vmatpush1.msra.mxu0 %v4766
        %4770 = vmatprep.subr.mxu0 0.0
        %4771 = vmatpush1.msra.mxu0 0.0
        %4772 = vmatprep.subr.mxu0 0.0
        %4773 = vmatpush1.msra.mxu0 0.0
        %4774 = vmatprep.subr.mxu0 0.0
        %4775 = vmatpush1.msra.mxu0 0.0
        %4776 = vmatprep.subr.mxu0 0.0
        %4777 = vmatpush1.msra.mxu0 0.0
        %4778 = vmatprep.subr.mxu0 0.0
        %4779 = vmatpush1.msra.mxu0 0.0
        %4780 = vmatprep.subr.mxu0 0.0
        %4781 = vmatpush1.msra.mxu0 0.0
        %4782 = vmatprep.subr.mxu0 0.0
        %4783 = vmatpush1.msra.mxu0 0.0
        %4784 = vmatprep.subr.mxu0 0.0
        %4785 = vmatpush1.msra.mxu0 0.0
        %4786 = vmatprep.subr.mxu0 0.0
        %4787 = vmatpush1.msra.mxu0 0.0
        %4788 = vmatprep.subr.mxu0 0.0
        %4789 = vmatpush1.msra.mxu0 0.0
        %4790 = vmatprep.subr.mxu0 0.0
        %4791 = vmatpush1.msra.mxu0 0.0
        %4792 = vmatprep.subr.mxu0 0.0
        %4793 = vmatpush1.msra.mxu0 0.0
        %4794 = vmatprep.subr.mxu0 0.0
        %4795 = vmatpush1.msra.mxu0 0.0
        %4796 = vmatprep.subr.mxu0 0.0
        %4797 = vmatpush1.msra.mxu0 0.0
        %4798 = vmatprep.subr.mxu0 0.0
        %4799 = vmatpush1.msra.mxu0 0.0
        %4800 = vmatprep.subr.mxu0 0.0
        %4801 = vmatpush1.msra.mxu0 0.0
        %4802 = vmatprep.subr.mxu0 0.0
        %4803 = vmatpush1.msra.mxu0 0.0
        %4804 = vmatprep.subr.mxu0 0.0
        %4805 = vmatpush1.msra.mxu0 0.0
        %4806 = vmatprep.subr.mxu0 0.0
        %4807 = vmatpush1.msra.mxu0 0.0
        %4808 = vmatprep.subr.mxu0 0.0
        %4809 = vmatpush1.msra.mxu0 0.0
        %4810 = vmatprep.subr.mxu0 0.0
        %4811 = vmatpush1.msra.mxu0 0.0
        %4812 = vmatprep.subr.mxu0 0.0
        %4813 = vmatpush1.msra.mxu0 0.0
        %4814 = vmatprep.subr.mxu0 0.0
        %4815 = vmatpush1.msra.mxu0 0.0
        %4816 = vmatprep.subr.mxu0 0.0
        %4817 = vmatpush1.msra.mxu0 0.0
        %4818 = vmatprep.subr.mxu0 0.0
        %4819 = vmatpush1.msra.mxu0 0.0
        %4820 = vmatprep.subr.mxu0 0.0
        %4821 = vmatpush1.msra.mxu0 0.0
        %4822 = vmatprep.subr.mxu0 0.0
        %4823 = vmatpush1.msra.mxu0 0.0
        %4824 = vmatprep.subr.mxu0 0.0
        %4825 = vmatpush1.msra.mxu0 0.0
        %4826 = vmatprep.subr.mxu0 0.0
        %4827 = vmatpush1.msra.mxu0 0.0
        %4828 = vmatprep.subr.mxu0 0.0
        %4829 = vmatpush1.msra.mxu0 0.0
        %4830 = vmatprep.subr.mxu0 0.0
        %4831 = vmatpush1.msra.mxu0 0.0
        %4832 = vmatprep.mubr.f32.mxu0 0.0
        %4833 = vmatmul.mubr.f32.gmra.mrb[0].mxu0 %v3980
        %v4834 = vpop.f32.mrb[0].mxu0
        %v4835 = vadd.f32 0.0, %v4834
        %v4836 = vpop.f32.mrb[0].mxu0
        %4837 = vmatprep.mubr.f32.mxu0 0.0
        %4838 = vmatmul.mubr.f32.gmra.mrb[0].mxu0 %v3983
        %v4839 = vpop.f32.mrb[0].mxu0
        %v4840 = vadd.f32 0.0, %v4839
        %v4841 = vpop.f32.mrb[0].mxu0
        %4842 = vdwg.mxu0
        %v4844 = vsel %vm3758, %v3974, 0
        %4846 = vmatprep.subr.mxu0 0.0
        %4847 = vmatpush1.msra.mxu0 %v4844
        %4848 = vmatprep.subr.mxu0 0.0
        %4849 = vmatpush1.msra.mxu0 0.0
        %4850 = vmatprep.subr.mxu0 0.0
        %4851 = vmatpush1.msra.mxu0 0.0
        %4852 = vmatprep.subr.mxu0 0.0
        %4853 = vmatpush1.msra.mxu0 0.0
        %4854 = vmatprep.subr.mxu0 0.0
        %4855 = vmatpush1.msra.mxu0 0.0
        %4856 = vmatprep.subr.mxu0 0.0
        %4857 = vmatpush1.msra.mxu0 0.0
        %4858 = vmatprep.subr.mxu0 0.0
        %4859 = vmatpush1.msra.mxu0 0.0
        %4860 = vmatprep.subr.mxu0 0.0
        %4861 = vmatpush1.msra.mxu0 0.0
        %4862 = vmatprep.subr.mxu0 0.0
        %4863 = vmatpush1.msra.mxu0 0.0
        %4864 = vmatprep.subr.mxu0 0.0
        %4865 = vmatpush1.msra.mxu0 0.0
        %4866 = vmatprep.subr.mxu0 0.0
        %4867 = vmatpush1.msra.mxu0 0.0
        %4868 = vmatprep.subr.mxu0 0.0
        %4869 = vmatpush1.msra.mxu0 0.0
        %4870 = vmatprep.subr.mxu0 0.0
        %4871 = vmatpush1.msra.mxu0 0.0
        %4872 = vmatprep.subr.mxu0 0.0
        %4873 = vmatpush1.msra.mxu0 0.0
        %4874 = vmatprep.subr.mxu0 0.0
        %4875 = vmatpush1.msra.mxu0 0.0
        %4876 = vmatprep.subr.mxu0 0.0
        %4877 = vmatpush1.msra.mxu0 0.0
        %4878 = vmatprep.subr.mxu0 0.0
        %4879 = vmatpush1.msra.mxu0 0.0
        %4880 = vmatprep.subr.mxu0 0.0
        %4881 = vmatpush1.msra.mxu0 0.0
        %4882 = vmatprep.subr.mxu0 0.0
        %4883 = vmatpush1.msra.mxu0 0.0
        %4884 = vmatprep.subr.mxu0 0.0
        %4885 = vmatpush1.msra.mxu0 0.0
        %4886 = vmatprep.subr.mxu0 0.0
        %4887 = vmatpush1.msra.mxu0 0.0
        %4888 = vmatprep.subr.mxu0 0.0
        %4889 = vmatpush1.msra.mxu0 0.0
        %4890 = vmatprep.subr.mxu0 0.0
        %4891 = vmatpush1.msra.mxu0 0.0
        %4892 = vmatprep.subr.mxu0 0.0
        %4893 = vmatpush1.msra.mxu0 0.0
        %4894 = vmatprep.subr.mxu0 0.0
        %4895 = vmatpush1.msra.mxu0 0.0
        %4896 = vmatprep.subr.mxu0 0.0
        %4897 = vmatpush1.msra.mxu0 0.0
        %4898 = vmatprep.subr.mxu0 0.0
        %4899 = vmatpush1.msra.mxu0 0.0
        %4900 = vmatprep.subr.mxu0 0.0
        %4901 = vmatpush1.msra.mxu0 0.0
        %4902 = vmatprep.subr.mxu0 0.0
        %4903 = vmatpush1.msra.mxu0 0.0
        %4904 = vmatprep.subr.mxu0 0.0
        %4905 = vmatpush1.msra.mxu0 0.0
        %4906 = vmatprep.subr.mxu0 0.0
        %4907 = vmatpush1.msra.mxu0 0.0
        %4908 = vmatprep.subr.mxu0 0.0
        %4909 = vmatpush1.msra.mxu0 0.0
        %4910 = vmatprep.mubr.f32.mxu0 0.0
        %4911 = vmatmul.mubr.f32.gmra.mrb[0].mxu0 %v3980
        %v4912 = vpop.f32.mrb[0].mxu0
        %v4913 = vadd.f32 0.0, %v4912
        %v4914 = vpop.f32.mrb[0].mxu0
        %4915 = vmatprep.mubr.f32.mxu0 0.0
        %4916 = vmatmul.mubr.f32.gmra.mrb[0].mxu0 %v3983
        %v4917 = vpop.f32.mrb[0].mxu0
        %v4918 = vadd.f32 0.0, %v4917
        %v4919 = vpop.f32.mrb[0].mxu0
        %4920 = vdwg.mxu0
        %v4922 = vsel %vm3758, %v3965, 0
        %4924 = vmatprep.subr.mxu0 0.0
        %4925 = vmatpush1.msra.mxu0 %v4922
        %4926 = vmatprep.subr.mxu0 0.0
        %4927 = vmatpush1.msra.mxu0 0.0
        %4928 = vmatprep.subr.mxu0 0.0
        %4929 = vmatpush1.msra.mxu0 0.0
        %4930 = vmatprep.subr.mxu0 0.0
        %4931 = vmatpush1.msra.mxu0 0.0
        %4932 = vmatprep.subr.mxu0 0.0
        %4933 = vmatpush1.msra.mxu0 0.0
        %4934 = vmatprep.subr.mxu0 0.0
        %4935 = vmatpush1.msra.mxu0 0.0
        %4936 = vmatprep.subr.mxu0 0.0
        %4937 = vmatpush1.msra.mxu0 0.0
        %4938 = vmatprep.subr.mxu0 0.0
        %4939 = vmatpush1.msra.mxu0 0.0
        %4940 = vmatprep.subr.mxu0 0.0
        %4941 = vmatpush1.msra.mxu0 0.0
        %4942 = vmatprep.subr.mxu0 0.0
        %4943 = vmatpush1.msra.mxu0 0.0
        %4944 = vmatprep.subr.mxu0 0.0
        %4945 = vmatpush1.msra.mxu0 0.0
        %4946 = vmatprep.subr.mxu0 0.0
        %4947 = vmatpush1.msra.mxu0 0.0
        %4948 = vmatprep.subr.mxu0 0.0
        %4949 = vmatpush1.msra.mxu0 0.0
        %4950 = vmatprep.subr.mxu0 0.0
        %4951 = vmatpush1.msra.mxu0 0.0
        %4952 = vmatprep.subr.mxu0 0.0
        %4953 = vmatpush1.msra.mxu0 0.0
        %4954 = vmatprep.subr.mxu0 0.0
        %4955 = vmatpush1.msra.mxu0 0.0
        %4956 = vmatprep.subr.mxu0 0.0
        %4957 = vmatpush1.msra.mxu0 0.0
        %4958 = vmatprep.subr.mxu0 0.0
        %4959 = vmatpush1.msra.mxu0 0.0
        %4960 = vmatprep.subr.mxu0 0.0
        %4961 = vmatpush1.msra.mxu0 0.0
        %4962 = vmatprep.subr.mxu0 0.0
        %4963 = vmatpush1.msra.mxu0 0.0
        %4964 = vmatprep.subr.mxu0 0.0
        %4965 = vmatpush1.msra.mxu0 0.0
        %4966 = vmatprep.subr.mxu0 0.0
        %4967 = vmatpush1.msra.mxu0 0.0
        %4968 = vmatprep.subr.mxu0 0.0
        %4969 = vmatpush1.msra.mxu0 0.0
        %4970 = vmatprep.subr.mxu0 0.0
        %4971 = vmatpush1.msra.mxu0 0.0
        %4972 = vmatprep.subr.mxu0 0.0
        %4973 = vmatpush1.msra.mxu0 0.0
        %4974 = vmatprep.subr.mxu0 0.0
        %4975 = vmatpush1.msra.mxu0 0.0
        %4976 = vmatprep.subr.mxu0 0.0
        %4977 = vmatpush1.msra.mxu0 0.0
        %4978 = vmatprep.subr.mxu0 0.0
        %4979 = vmatpush1.msra.mxu0 0.0
        %4980 = vmatprep.subr.mxu0 0.0
        %4981 = vmatpush1.msra.mxu0 0.0
        %4982 = vmatprep.subr.mxu0 0.0
        %4983 = vmatpush1.msra.mxu0 0.0
        %4984 = vmatprep.subr.mxu0 0.0
        %4985 = vmatpush1.msra.mxu0 0.0
        %4986 = vmatprep.subr.mxu0 0.0
        %4987 = vmatpush1.msra.mxu0 0.0
        %4988 = vmatprep.mubr.f32.mxu0 0.0
        %4989 = vmatmul.mubr.f32.gmra.mrb[0].mxu0 %v3980
        %v4990 = vpop.f32.mrb[0].mxu0
        %v4991 = vadd.f32 0.0, %v4990
        %v4992 = vpop.f32.mrb[0].mxu0
        %4993 = vmatprep.mubr.f32.mxu0 0.0
        %4994 = vmatmul.mubr.f32.gmra.mrb[0].mxu0 %v3983
        %v4995 = vpop.f32.mrb[0].mxu0
        %v4996 = vadd.f32 0.0, %v4995
        %v4997 = vpop.f32.mrb[0].mxu0
        %4998 = vdwg.mxu0
        %v5000 = vsel %vm3758, %v3975, 0
        %5002 = vmatprep.subr.mxu0 0.0
        %5003 = vmatpush1.msra.mxu0 %v5000
        %5004 = vmatprep.subr.mxu0 0.0
        %5005 = vmatpush1.msra.mxu0 0.0
        %5006 = vmatprep.subr.mxu0 0.0
        %5007 = vmatpush1.msra.mxu0 0.0
        %5008 = vmatprep.subr.mxu0 0.0
        %5009 = vmatpush1.msra.mxu0 0.0
        %5010 = vmatprep.subr.mxu0 0.0
        %5011 = vmatpush1.msra.mxu0 0.0
        %5012 = vmatprep.subr.mxu0 0.0
        %5013 = vmatpush1.msra.mxu0 0.0
        %5014 = vmatprep.subr.mxu0 0.0
        %5015 = vmatpush1.msra.mxu0 0.0
        %5016 = vmatprep.subr.mxu0 0.0
        %5017 = vmatpush1.msra.mxu0 0.0
        %5018 = vmatprep.subr.mxu0 0.0
        %5019 = vmatpush1.msra.mxu0 0.0
        %5020 = vmatprep.subr.mxu0 0.0
        %5021 = vmatpush1.msra.mxu0 0.0
        %5022 = vmatprep.subr.mxu0 0.0
        %5023 = vmatpush1.msra.mxu0 0.0
        %5024 = vmatprep.subr.mxu0 0.0
        %5025 = vmatpush1.msra.mxu0 0.0
        %5026 = vmatprep.subr.mxu0 0.0
        %5027 = vmatpush1.msra.mxu0 0.0
        %5028 = vmatprep.subr.mxu0 0.0
        %5029 = vmatpush1.msra.mxu0 0.0
        %5030 = vmatprep.subr.mxu0 0.0
        %5031 = vmatpush1.msra.mxu0 0.0
        %5032 = vmatprep.subr.mxu0 0.0
        %5033 = vmatpush1.msra.mxu0 0.0
        %5034 = vmatprep.subr.mxu0 0.0
        %5035 = vmatpush1.msra.mxu0 0.0
        %5036 = vmatprep.subr.mxu0 0.0
        %5037 = vmatpush1.msra.mxu0 0.0
        %5038 = vmatprep.subr.mxu0 0.0
        %5039 = vmatpush1.msra.mxu0 0.0
        %5040 = vmatprep.subr.mxu0 0.0
        %5041 = vmatpush1.msra.mxu0 0.0
        %5042 = vmatprep.subr.mxu0 0.0
        %5043 = vmatpush1.msra.mxu0 0.0
        %5044 = vmatprep.subr.mxu0 0.0
        %5045 = vmatpush1.msra.mxu0 0.0
        %5046 = vmatprep.subr.mxu0 0.0
        %5047 = vmatpush1.msra.mxu0 0.0
        %5048 = vmatprep.subr.mxu0 0.0
        %5049 = vmatpush1.msra.mxu0 0.0
        %5050 = vmatprep.subr.mxu0 0.0
        %5051 = vmatpush1.msra.mxu0 0.0
        %5052 = vmatprep.subr.mxu0 0.0
        %5053 = vmatpush1.msra.mxu0 0.0
        %5054 = vmatprep.subr.mxu0 0.0
        %5055 = vmatpush1.msra.mxu0 0.0
        %5056 = vmatprep.subr.mxu0 0.0
        %5057 = vmatpush1.msra.mxu0 0.0
        %5058 = vmatprep.subr.mxu0 0.0
        %5059 = vmatpush1.msra.mxu0 0.0
        %5060 = vmatprep.subr.mxu0 0.0
        %5061 = vmatpush1.msra.mxu0 0.0
        %5062 = vmatprep.subr.mxu0 0.0
        %5063 = vmatpush1.msra.mxu0 0.0
        %5064 = vmatprep.subr.mxu0 0.0
        %5065 = vmatpush1.msra.mxu0 0.0
        %5066 = vmatprep.mubr.f32.mxu0 0.0
        %5067 = vmatmul.mubr.f32.gmra.mrb[0].mxu0 %v3980
        %v5068 = vpop.f32.mrb[0].mxu0
        %v5069 = vadd.f32 0.0, %v5068
        %v5070 = vpop.f32.mrb[0].mxu0
        %5071 = vmatprep.mubr.f32.mxu0 0.0
        %5072 = vmatmul.mubr.f32.gmra.mrb[0].mxu0 %v3983
        %v5073 = vpop.f32.mrb[0].mxu0
        %v5074 = vadd.f32 0.0, %v5073
        %v5075 = vpop.f32.mrb[0].mxu0
        %5076 = vdwg.mxu0
        %v5078 = vsel %vm3758, %v3972, 0
        %5080 = vmatprep.subr.mxu0 0.0
        %5081 = vmatpush1.msra.mxu0 %v5078
        %5082 = vmatprep.subr.mxu0 0.0
        %5083 = vmatpush1.msra.mxu0 0.0
        %5084 = vmatprep.subr.mxu0 0.0
        %5085 = vmatpush1.msra.mxu0 0.0
        %5086 = vmatprep.subr.mxu0 0.0
        %5087 = vmatpush1.msra.mxu0 0.0
        %5088 = vmatprep.subr.mxu0 0.0
        %5089 = vmatpush1.msra.mxu0 0.0
        %5090 = vmatprep.subr.mxu0 0.0
        %5091 = vmatpush1.msra.mxu0 0.0
        %5092 = vmatprep.subr.mxu0 0.0
        %5093 = vmatpush1.msra.mxu0 0.0
        %5094 = vmatprep.subr.mxu0 0.0
        %5095 = vmatpush1.msra.mxu0 0.0
        %5096 = vmatprep.subr.mxu0 0.0
        %5097 = vmatpush1.msra.mxu0 0.0
        %5098 = vmatprep.subr.mxu0 0.0
        %5099 = vmatpush1.msra.mxu0 0.0
        %5100 = vmatprep.subr.mxu0 0.0
        %5101 = vmatpush1.msra.mxu0 0.0
        %5102 = vmatprep.subr.mxu0 0.0
        %5103 = vmatpush1.msra.mxu0 0.0
        %5104 = vmatprep.subr.mxu0 0.0
        %5105 = vmatpush1.msra.mxu0 0.0
        %5106 = vmatprep.subr.mxu0 0.0
        %5107 = vmatpush1.msra.mxu0 0.0
        %5108 = vmatprep.subr.mxu0 0.0
        %5109 = vmatpush1.msra.mxu0 0.0
        %5110 = vmatprep.subr.mxu0 0.0
        %5111 = vmatpush1.msra.mxu0 0.0
        %5112 = vmatprep.subr.mxu0 0.0
        %5113 = vmatpush1.msra.mxu0 0.0
        %5114 = vmatprep.subr.mxu0 0.0
        %5115 = vmatpush1.msra.mxu0 0.0
        %5116 = vmatprep.subr.mxu0 0.0
        %5117 = vmatpush1.msra.mxu0 0.0
        %5118 = vmatprep.subr.mxu0 0.0
        %5119 = vmatpush1.msra.mxu0 0.0
        %5120 = vmatprep.subr.mxu0 0.0
        %5121 = vmatpush1.msra.mxu0 0.0
        %5122 = vmatprep.subr.mxu0 0.0
        %5123 = vmatpush1.msra.mxu0 0.0
        %5124 = vmatprep.subr.mxu0 0.0
        %5125 = vmatpush1.msra.mxu0 0.0
        %5126 = vmatprep.subr.mxu0 0.0
        %5127 = vmatpush1.msra.mxu0 0.0
        %5128 = vmatprep.subr.mxu0 0.0
        %5129 = vmatpush1.msra.mxu0 0.0
        %5130 = vmatprep.subr.mxu0 0.0
        %5131 = vmatpush1.msra.mxu0 0.0
        %5132 = vmatprep.subr.mxu0 0.0
        %5133 = vmatpush1.msra.mxu0 0.0
        %5134 = vmatprep.subr.mxu0 0.0
        %5135 = vmatpush1.msra.mxu0 0.0
        %5136 = vmatprep.subr.mxu0 0.0
        %5137 = vmatpush1.msra.mxu0 0.0
        %5138 = vmatprep.subr.mxu0 0.0
        %5139 = vmatpush1.msra.mxu0 0.0
        %5140 = vmatprep.subr.mxu0 0.0
        %5141 = vmatpush1.msra.mxu0 0.0
        %5142 = vmatprep.subr.mxu0 0.0
        %5143 = vmatpush1.msra.mxu0 0.0
        %5144 = vmatprep.mubr.f32.mxu0 0.0
        %5145 = vmatmul.mubr.f32.gmra.mrb[0].mxu0 %v3980
        %v5146 = vpop.f32.mrb[0].mxu0
        %v5147 = vadd.f32 0.0, %v5146
        %v5148 = vpop.f32.mrb[0].mxu0
        %5149 = vmatprep.mubr.f32.mxu0 0.0
        %5150 = vmatmul.mubr.f32.gmra.mrb[0].mxu0 %v3983
        %v5151 = vpop.f32.mrb[0].mxu0
        %v5152 = vadd.f32 0.0, %v5151
        %v5153 = vpop.f32.mrb[0].mxu0
        %5154 = vdwg.mxu0
        %v5156 = vsel %vm3758, %v3976, 0
        %5158 = vmatprep.subr.mxu0 0.0
        %5159 = vmatpush1.msra.mxu0 %v5156
        %5160 = vmatprep.subr.mxu0 0.0
        %5161 = vmatpush1.msra.mxu0 0.0
        %5162 = vmatprep.subr.mxu0 0.0
        %5163 = vmatpush1.msra.mxu0 0.0
        %5164 = vmatprep.subr.mxu0 0.0
        %5165 = vmatpush1.msra.mxu0 0.0
        %5166 = vmatprep.subr.mxu0 0.0
        %5167 = vmatpush1.msra.mxu0 0.0
        %5168 = vmatprep.subr.mxu0 0.0
        %5169 = vmatpush1.msra.mxu0 0.0
        %5170 = vmatprep.subr.mxu0 0.0
        %5171 = vmatpush1.msra.mxu0 0.0
        %5172 = vmatprep.subr.mxu0 0.0
        %5173 = vmatpush1.msra.mxu0 0.0
        %5174 = vmatprep.subr.mxu0 0.0
        %5175 = vmatpush1.msra.mxu0 0.0
        %5176 = vmatprep.subr.mxu0 0.0
        %5177 = vmatpush1.msra.mxu0 0.0
        %5178 = vmatprep.subr.mxu0 0.0
        %5179 = vmatpush1.msra.mxu0 0.0
        %5180 = vmatprep.subr.mxu0 0.0
        %5181 = vmatpush1.msra.mxu0 0.0
        %5182 = vmatprep.subr.mxu0 0.0
        %5183 = vmatpush1.msra.mxu0 0.0
        %5184 = vmatprep.subr.mxu0 0.0
        %5185 = vmatpush1.msra.mxu0 0.0
        %5186 = vmatprep.subr.mxu0 0.0
        %5187 = vmatpush1.msra.mxu0 0.0
        %5188 = vmatprep.subr.mxu0 0.0
        %5189 = vmatpush1.msra.mxu0 0.0
        %5190 = vmatprep.subr.mxu0 0.0
        %5191 = vmatpush1.msra.mxu0 0.0
        %5192 = vmatprep.subr.mxu0 0.0
        %5193 = vmatpush1.msra.mxu0 0.0
        %5194 = vmatprep.subr.mxu0 0.0
        %5195 = vmatpush1.msra.mxu0 0.0
        %5196 = vmatprep.subr.mxu0 0.0
        %5197 = vmatpush1.msra.mxu0 0.0
        %5198 = vmatprep.subr.mxu0 0.0
        %5199 = vmatpush1.msra.mxu0 0.0
        %5200 = vmatprep.subr.mxu0 0.0
        %5201 = vmatpush1.msra.mxu0 0.0
        %5202 = vmatprep.subr.mxu0 0.0
        %5203 = vmatpush1.msra.mxu0 0.0
        %5204 = vmatprep.subr.mxu0 0.0
        %5205 = vmatpush1.msra.mxu0 0.0
        %5206 = vmatprep.subr.mxu0 0.0
        %5207 = vmatpush1.msra.mxu0 0.0
        %5208 = vmatprep.subr.mxu0 0.0
        %5209 = vmatpush1.msra.mxu0 0.0
        %5210 = vmatprep.subr.mxu0 0.0
        %5211 = vmatpush1.msra.mxu0 0.0
        %5212 = vmatprep.subr.mxu0 0.0
        %5213 = vmatpush1.msra.mxu0 0.0
        %5214 = vmatprep.subr.mxu0 0.0
        %5215 = vmatpush1.msra.mxu0 0.0
        %5216 = vmatprep.subr.mxu0 0.0
        %5217 = vmatpush1.msra.mxu0 0.0
        %5218 = vmatprep.subr.mxu0 0.0
        %5219 = vmatpush1.msra.mxu0 0.0
        %5220 = vmatprep.subr.mxu0 0.0
        %5221 = vmatpush1.msra.mxu0 0.0
        %5222 = vmatprep.mubr.f32.mxu0 0.0
        %5223 = vmatmul.mubr.f32.gmra.mrb[0].mxu0 %v3980
        %v5224 = vpop.f32.mrb[0].mxu0
        %v5225 = vadd.f32 0.0, %v5224
        %v5226 = vpop.f32.mrb[0].mxu0
        %5227 = vmatprep.mubr.f32.mxu0 0.0
        %5228 = vmatmul.mubr.f32.gmra.mrb[0].mxu0 %v3983
        %v5229 = vpop.f32.mrb[0].mxu0
        %v5230 = vadd.f32 0.0, %v5229
        %v5231 = vpop.f32.mrb[0].mxu0
        %5232 = vdwg.mxu0
        %5265 = vrot.lane.b32.xlu0 %v1112, 8
        %v5266 = vpop.permute.xlu0 %5265
        %5267 = vrot.lane.b32.xlu0 %v1117, 8
        %v5268 = vpop.permute.xlu0 %5267
        %5269 = vrot.lane.b32.xlu0 %v1187, 8
        %v5270 = vpop.permute.xlu0 %5269
        %5271 = vrot.lane.b32.xlu0 %v1192, 8
        %v5272 = vpop.permute.xlu0 %5271
        %5273 = vrot.lane.b32.xlu0 %v1262, 8
        %v5274 = vpop.permute.xlu0 %5273
        %5275 = vrot.lane.b32.xlu0 %v1267, 8
        %v5276 = vpop.permute.xlu0 %5275
        %5277 = vrot.lane.b32.xlu0 %v1337, 8
        %v5278 = vpop.permute.xlu0 %5277
        %5279 = vrot.lane.b32.xlu0 %v1342, 8
        %v5280 = vpop.permute.xlu0 %5279
        %5281 = vrot.lane.b32.xlu0 %v1412, 8
        %v5282 = vpop.permute.xlu0 %5281
        %5283 = vrot.lane.b32.xlu0 %v1417, 8
        %v5284 = vpop.permute.xlu0 %5283
        %5285 = vrot.lane.b32.xlu0 %v1487, 8
        %v5286 = vpop.permute.xlu0 %5285
        %5287 = vrot.lane.b32.xlu0 %v1492, 8
        %v5288 = vpop.permute.xlu0 %5287
        %5289 = vrot.lane.b32.xlu0 %v1562, 8
        %v5290 = vpop.permute.xlu0 %5289
        %5291 = vrot.lane.b32.xlu0 %v1567, 8
        %v5292 = vpop.permute.xlu0 %5291
        %5293 = vrot.lane.b32.xlu0 %v1637, 8
        %v5294 = vpop.permute.xlu0 %5293
        %5295 = vrot.lane.b32.xlu0 %v1642, 8
        %v5296 = vpop.permute.xlu0 %5295
        %5297 = vrot.lane.b32.xlu0 %v1712, 8
        %v5298 = vpop.permute.xlu0 %5297
        %5299 = vrot.lane.b32.xlu0 %v1717, 8
        %v5300 = vpop.permute.xlu0 %5299
        %5301 = vrot.lane.b32.xlu0 %v1787, 8
        %v5302 = vpop.permute.xlu0 %5301
        %5303 = vrot.lane.b32.xlu0 %v1792, 8
        %v5304 = vpop.permute.xlu0 %5303
        %5305 = vrot.lane.b32.xlu0 %v1862, 8
        %v5306 = vpop.permute.xlu0 %5305
        %5307 = vrot.lane.b32.xlu0 %v1867, 8
        %v5308 = vpop.permute.xlu0 %5307
        %5309 = vrot.lane.b32.xlu0 %v1937, 8
        %v5310 = vpop.permute.xlu0 %5309
        %5311 = vrot.lane.b32.xlu0 %v1942, 8
        %v5312 = vpop.permute.xlu0 %5311
        %5313 = vrot.lane.b32.xlu0 %v2012, 8
        %v5314 = vpop.permute.xlu0 %5313
        %5315 = vrot.lane.b32.xlu0 %v2017, 8
        %v5316 = vpop.permute.xlu0 %5315
        %5317 = vrot.lane.b32.xlu0 %v2087, 8
        %v5318 = vpop.permute.xlu0 %5317
        %5319 = vrot.lane.b32.xlu0 %v2092, 8
        %v5320 = vpop.permute.xlu0 %5319
        %5321 = vrot.lane.b32.xlu0 %v2162, 8
        %v5322 = vpop.permute.xlu0 %5321
        %5323 = vrot.lane.b32.xlu0 %v2167, 8
        %v5324 = vpop.permute.xlu0 %5323
        %5325 = vrot.lane.b32.xlu0 %v2237, 8
        %v5326 = vpop.permute.xlu0 %5325
        %5327 = vrot.lane.b32.xlu0 %v2242, 8
        %v5328 = vpop.permute.xlu0 %5327
        %5393 = vrot.lane.b32.xlu0 %v2569, 24
        %v5394 = vpop.permute.xlu0 %5393
        %5395 = vrot.lane.b32.xlu0 %v2574, 24
        %v5396 = vpop.permute.xlu0 %5395
        %5397 = vrot.lane.b32.xlu0 %v2647, 24
        %v5398 = vpop.permute.xlu0 %5397
        %5399 = vrot.lane.b32.xlu0 %v2652, 24
        %v5400 = vpop.permute.xlu0 %5399
        %5401 = vrot.lane.b32.xlu0 %v2725, 24
        %v5402 = vpop.permute.xlu0 %5401
        %5403 = vrot.lane.b32.xlu0 %v2730, 24
        %v5404 = vpop.permute.xlu0 %5403
        %5405 = vrot.lane.b32.xlu0 %v2803, 24
        %v5406 = vpop.permute.xlu0 %5405
        %5407 = vrot.lane.b32.xlu0 %v2808, 24
        %v5408 = vpop.permute.xlu0 %5407
        %5409 = vrot.lane.b32.xlu0 %v2881, 24
        %v5410 = vpop.permute.xlu0 %5409
        %5411 = vrot.lane.b32.xlu0 %v2886, 24
        %v5412 = vpop.permute.xlu0 %5411
        %5413 = vrot.lane.b32.xlu0 %v2959, 24
        %v5414 = vpop.permute.xlu0 %5413
        %5415 = vrot.lane.b32.xlu0 %v2964, 24
        %v5416 = vpop.permute.xlu0 %5415
        %5417 = vrot.lane.b32.xlu0 %v3037, 24
        %v5418 = vpop.permute.xlu0 %5417
        %5419 = vrot.lane.b32.xlu0 %v3042, 24
        %v5420 = vpop.permute.xlu0 %5419
        %5421 = vrot.lane.b32.xlu0 %v3115, 24
        %v5422 = vpop.permute.xlu0 %5421
        %5423 = vrot.lane.b32.xlu0 %v3120, 24
        %v5424 = vpop.permute.xlu0 %5423
        %5425 = vrot.lane.b32.xlu0 %v3193, 24
        %v5426 = vpop.permute.xlu0 %5425
        %5427 = vrot.lane.b32.xlu0 %v3198, 24
        %v5428 = vpop.permute.xlu0 %5427
        %5429 = vrot.lane.b32.xlu0 %v3271, 24
        %v5430 = vpop.permute.xlu0 %5429
        %5431 = vrot.lane.b32.xlu0 %v3276, 24
        %v5432 = vpop.permute.xlu0 %5431
        %5433 = vrot.lane.b32.xlu0 %v3349, 24
        %v5434 = vpop.permute.xlu0 %5433
        %5435 = vrot.lane.b32.xlu0 %v3354, 24
        %v5436 = vpop.permute.xlu0 %5435
        %5437 = vrot.lane.b32.xlu0 %v3427, 24
        %v5438 = vpop.permute.xlu0 %5437
        %5439 = vrot.lane.b32.xlu0 %v3432, 24
        %v5440 = vpop.permute.xlu0 %5439
        %5441 = vrot.lane.b32.xlu0 %v3505, 24
        %v5442 = vpop.permute.xlu0 %5441
        %5443 = vrot.lane.b32.xlu0 %v3510, 24
        %v5444 = vpop.permute.xlu0 %5443
        %5445 = vrot.lane.b32.xlu0 %v3583, 24
        %v5446 = vpop.permute.xlu0 %5445
        %5447 = vrot.lane.b32.xlu0 %v3588, 24
        %v5448 = vpop.permute.xlu0 %5447
        %5449 = vrot.lane.b32.xlu0 %v3661, 24
        %v5450 = vpop.permute.xlu0 %5449
        %5451 = vrot.lane.b32.xlu0 %v3666, 24
        %v5452 = vpop.permute.xlu0 %5451
        %5453 = vrot.lane.b32.xlu0 %v3739, 24
        %v5454 = vpop.permute.xlu0 %5453
        %5455 = vrot.lane.b32.xlu0 %v3744, 24
        %v5456 = vpop.permute.xlu0 %5455
        %5521 = vrot.lane.b32.xlu0 %v4055, 56
        %v5522 = vpop.permute.xlu0 %5521
        %5523 = vrot.lane.b32.xlu0 %v4060, 56
        %v5524 = vpop.permute.xlu0 %5523
        %5525 = vrot.lane.b32.xlu0 %v4133, 56
        %v5526 = vpop.permute.xlu0 %5525
        %5527 = vrot.lane.b32.xlu0 %v4138, 56
        %v5528 = vpop.permute.xlu0 %5527
        %5529 = vrot.lane.b32.xlu0 %v4211, 56
        %v5530 = vpop.permute.xlu0 %5529
        %5531 = vrot.lane.b32.xlu0 %v4216, 56
        %v5532 = vpop.permute.xlu0 %5531
        %5533 = vrot.lane.b32.xlu0 %v4289, 56
        %v5534 = vpop.permute.xlu0 %5533
        %5535 = vrot.lane.b32.xlu0 %v4294, 56
        %v5536 = vpop.permute.xlu0 %5535
        %5537 = vrot.lane.b32.xlu0 %v4367, 56
        %v5538 = vpop.permute.xlu0 %5537
        %5539 = vrot.lane.b32.xlu0 %v4372, 56
        %v5540 = vpop.permute.xlu0 %5539
        %5541 = vrot.lane.b32.xlu0 %v4445, 56
        %v5542 = vpop.permute.xlu0 %5541
        %5543 = vrot.lane.b32.xlu0 %v4450, 56
        %v5544 = vpop.permute.xlu0 %5543
        %5545 = vrot.lane.b32.xlu0 %v4523, 56
        %v5546 = vpop.permute.xlu0 %5545
        %5547 = vrot.lane.b32.xlu0 %v4528, 56
        %v5548 = vpop.permute.xlu0 %5547
        %5549 = vrot.lane.b32.xlu0 %v4601, 56
        %v5550 = vpop.permute.xlu0 %5549
        %5551 = vrot.lane.b32.xlu0 %v4606, 56
        %v5552 = vpop.permute.xlu0 %5551
        %5553 = vrot.lane.b32.xlu0 %v4679, 56
        %v5554 = vpop.permute.xlu0 %5553
        %5555 = vrot.lane.b32.xlu0 %v4684, 56
        %v5556 = vpop.permute.xlu0 %5555
        %5557 = vrot.lane.b32.xlu0 %v4757, 56
        %v5558 = vpop.permute.xlu0 %5557
        %5559 = vrot.lane.b32.xlu0 %v4762, 56
        %v5560 = vpop.permute.xlu0 %5559
        %5561 = vrot.lane.b32.xlu0 %v4835, 56
        %v5562 = vpop.permute.xlu0 %5561
        %5563 = vrot.lane.b32.xlu0 %v4840, 56
        %v5564 = vpop.permute.xlu0 %5563
        %5565 = vrot.lane.b32.xlu0 %v4913, 56
        %v5566 = vpop.permute.xlu0 %5565
        %5567 = vrot.lane.b32.xlu0 %v4918, 56
        %v5568 = vpop.permute.xlu0 %5567
        %5569 = vrot.lane.b32.xlu0 %v4991, 56
        %v5570 = vpop.permute.xlu0 %5569
        %5571 = vrot.lane.b32.xlu0 %v4996, 56
        %v5572 = vpop.permute.xlu0 %5571
        %5573 = vrot.lane.b32.xlu0 %v5069, 56
        %v5574 = vpop.permute.xlu0 %5573
        %5575 = vrot.lane.b32.xlu0 %v5074, 56
        %v5576 = vpop.permute.xlu0 %5575
        %5577 = vrot.lane.b32.xlu0 %v5147, 56
        %v5578 = vpop.permute.xlu0 %5577
        %5579 = vrot.lane.b32.xlu0 %v5152, 56
        %v5580 = vpop.permute.xlu0 %5579
        %5581 = vrot.lane.b32.xlu0 %v5225, 56
        %v5582 = vpop.permute.xlu0 %5581
        %5583 = vrot.lane.b32.xlu0 %v5230, 56
        %v5584 = vpop.permute.xlu0 %5583
        %v5617 = vsel %vm639, %v603, %v5266
        %v5618 = vsel %vm639, %v604, %v5268
        %v5619 = vsel %vm639, %v605, %v5270
        %v5620 = vsel %vm639, %v606, %v5272
        %v5621 = vsel %vm639, %v607, %v5274
        %v5622 = vsel %vm639, %v608, %v5276
        %v5623 = vsel %vm639, %v609, %v5278
        %v5624 = vsel %vm639, %v610, %v5280
        %v5625 = vsel %vm639, %v611, %v5282
        %v5626 = vsel %vm639, %v612, %v5284
        %v5627 = vsel %vm639, %v613, %v5286
        %v5628 = vsel %vm639, %v614, %v5288
        %v5629 = vsel %vm639, %v615, %v5290
        %v5630 = vsel %vm639, %v616, %v5292
        %v5631 = vsel %vm639, %v617, %v5294
        %v5632 = vsel %vm639, %v618, %v5296
        %v5633 = vsel %vm639, %v619, %v5298
        %v5634 = vsel %vm639, %v620, %v5300
        %v5635 = vsel %vm639, %v621, %v5302
        %v5636 = vsel %vm639, %v622, %v5304
        %v5637 = vsel %vm639, %v623, %v5306
        %v5638 = vsel %vm639, %v624, %v5308
        %v5639 = vsel %vm639, %v625, %v5310
        %v5640 = vsel %vm639, %v626, %v5312
        %v5641 = vsel %vm639, %v627, %v5314
        %v5642 = vsel %vm639, %v628, %v5316
        %v5643 = vsel %vm639, %v629, %v5318
        %v5644 = vsel %vm639, %v630, %v5320
        %v5645 = vsel %vm639, %v631, %v5322
        %v5646 = vsel %vm639, %v632, %v5324
        %v5647 = vsel %vm639, %v633, %v5326
        %v5648 = vsel %vm639, %v634, %v5328
        %vm5649 = vcmask 195584
        %v5650 = vsel %vm5649, %v5617, %v5394
        %v5651 = vsel %vm5649, %v5618, %v5396
        %v5652 = vsel %vm5649, %v5619, %v5398
        %v5653 = vsel %vm5649, %v5620, %v5400
        %v5654 = vsel %vm5649, %v5621, %v5402
        %v5655 = vsel %vm5649, %v5622, %v5404
        %v5656 = vsel %vm5649, %v5623, %v5406
        %v5657 = vsel %vm5649, %v5624, %v5408
        %v5658 = vsel %vm5649, %v5625, %v5410
        %v5659 = vsel %vm5649, %v5626, %v5412
        %v5660 = vsel %vm5649, %v5627, %v5414
        %v5661 = vsel %vm5649, %v5628, %v5416
        %v5662 = vsel %vm5649, %v5629, %v5418
        %v5663 = vsel %vm5649, %v5630, %v5420
        %v5664 = vsel %vm5649, %v5631, %v5422
        %v5665 = vsel %vm5649, %v5632, %v5424
        %v5666 = vsel %vm5649, %v5633, %v5426
        %v5667 = vsel %vm5649, %v5634, %v5428
        %v5668 = vsel %vm5649, %v5635, %v5430
        %v5669 = vsel %vm5649, %v5636, %v5432
        %v5670 = vsel %vm5649, %v5637, %v5434
        %v5671 = vsel %vm5649, %v5638, %v5436
        %v5672 = vsel %vm5649, %v5639, %v5438
        %v5673 = vsel %vm5649, %v5640, %v5440
        %v5674 = vsel %vm5649, %v5641, %v5442
        %v5675 = vsel %vm5649, %v5642, %v5444
        %v5676 = vsel %vm5649, %v5643, %v5446
        %v5677 = vsel %vm5649, %v5644, %v5448
        %v5678 = vsel %vm5649, %v5645, %v5450
        %v5679 = vsel %vm5649, %v5646, %v5452
        %v5680 = vsel %vm5649, %v5647, %v5454
        %v5681 = vsel %vm5649, %v5648, %v5456
        %vm5682 = vcmask 457728
        %v5683 = vsel %vm5682, %v5650, %v5522
        %v5684 = vsel %vm5682, %v5651, %v5524
        %v5685 = vsel %vm5682, %v5652, %v5526
        %v5686 = vsel %vm5682, %v5653, %v5528
        %v5687 = vsel %vm5682, %v5654, %v5530
        %v5688 = vsel %vm5682, %v5655, %v5532
        %v5689 = vsel %vm5682, %v5656, %v5534
        %v5690 = vsel %vm5682, %v5657, %v5536
        %v5691 = vsel %vm5682, %v5658, %v5538
        %v5692 = vsel %vm5682, %v5659, %v5540
        %v5693 = vsel %vm5682, %v5660, %v5542
        %v5694 = vsel %vm5682, %v5661, %v5544
        %v5695 = vsel %vm5682, %v5662, %v5546
        %v5696 = vsel %vm5682, %v5663, %v5548
        %v5697 = vsel %vm5682, %v5664, %v5550
        %v5698 = vsel %vm5682, %v5665, %v5552
        %v5699 = vsel %vm5682, %v5666, %v5554
        %v5700 = vsel %vm5682, %v5667, %v5556
        %v5701 = vsel %vm5682, %v5668, %v5558
        %v5702 = vsel %vm5682, %v5669, %v5560
        %v5703 = vsel %vm5682, %v5670, %v5562
        %v5704 = vsel %vm5682, %v5671, %v5564
        %v5705 = vsel %vm5682, %v5672, %v5566
        %v5706 = vsel %vm5682, %v5673, %v5568
        %v5707 = vsel %vm5682, %v5674, %v5570
        %v5708 = vsel %vm5682, %v5675, %v5572
        %v5709 = vsel %vm5682, %v5676, %v5574
        %v5710 = vsel %vm5682, %v5677, %v5576
        %v5711 = vsel %vm5682, %v5678, %v5578
        %v5712 = vsel %vm5682, %v5679, %v5580
        %v5713 = vsel %vm5682, %v5680, %v5582
        %v5714 = vsel %vm5682, %v5681, %v5584
        %vm5715 = vcmask 982016
        %v5716 = vsel %vm5715, %v5683, 0.0
        %v5717 = vsel %vm5715, %v5684, 0.0
        %v5718 = vsel %vm5715, %v5685, 0.0
        %v5719 = vsel %vm5715, %v5686, 0.0
        %v5720 = vsel %vm5715, %v5687, 0.0
        %v5721 = vsel %vm5715, %v5688, 0.0
        %v5722 = vsel %vm5715, %v5689, 0.0
        %v5723 = vsel %vm5715, %v5690, 0.0
        %v5724 = vsel %vm5715, %v5691, 0.0
        %v5725 = vsel %vm5715, %v5692, 0.0
        %v5726 = vsel %vm5715, %v5693, 0.0
        %v5727 = vsel %vm5715, %v5694, 0.0
        %v5728 = vsel %vm5715, %v5695, 0.0
        %v5729 = vsel %vm5715, %v5696, 0.0
        %v5730 = vsel %vm5715, %v5697, 0.0
        %v5731 = vsel %vm5715, %v5698, 0.0
        %v5732 = vsel %vm5715, %v5699, 0.0
        %v5733 = vsel %vm5715, %v5700, 0.0
        %v5734 = vsel %vm5715, %v5701, 0.0
        %v5735 = vsel %vm5715, %v5702, 0.0
        %v5736 = vsel %vm5715, %v5703, 0.0
        %v5737 = vsel %vm5715, %v5704, 0.0
        %v5738 = vsel %vm5715, %v5705, 0.0
        %v5739 = vsel %vm5715, %v5706, 0.0
        %v5740 = vsel %vm5715, %v5707, 0.0
        %v5741 = vsel %vm5715, %v5708, 0.0
        %v5742 = vsel %vm5715, %v5709, 0.0
        %v5743 = vsel %vm5715, %v5710, 0.0
        %v5744 = vsel %vm5715, %v5711, 0.0
        %v5745 = vsel %vm5715, %v5712, 0.0
        %v5746 = vsel %vm5715, %v5713, 0.0
        %v5747 = vsel %vm5715, %v5714, 0.0
        %v5748 = vpack.c.bf16 %v5717, %v5716
        %v5749 = vpack.c.bf16 %v5719, %v5718
        %v5750 = vpack.c.bf16 %v5721, %v5720
        %v5751 = vpack.c.bf16 %v5723, %v5722
        %v5752 = vpack.c.bf16 %v5725, %v5724
        %v5753 = vpack.c.bf16 %v5727, %v5726
        %v5754 = vpack.c.bf16 %v5729, %v5728
        %v5755 = vpack.c.bf16 %v5731, %v5730
        %v5756 = vpack.c.bf16 %v5733, %v5732
        %v5757 = vpack.c.bf16 %v5735, %v5734
        %v5758 = vpack.c.bf16 %v5737, %v5736
        %v5759 = vpack.c.bf16 %v5739, %v5738
        %v5760 = vpack.c.bf16 %v5741, %v5740
        %v5761 = vpack.c.bf16 %v5743, %v5742
        %v5762 = vpack.c.bf16 %v5745, %v5744
        %v5763 = vpack.c.bf16 %v5747, %v5746
        %5764 = vst [vmem:[%s569] sm:$0xf] 0
        %5765 = vst [vmem:[%s569 + $0x4] sm:$0xf] 0
        %5766 = vst [vmem:[%s569 + $0x8] sm:$0x1] 0
        %5767 = vst [vmem:[%s569 + $0xc] sm:$0xf] 0
        %5768 = vst [vmem:[%s569 + $0x10] sm:$0xf] 0
        %5769 = vst [vmem:[%s569 + $0x14] sm:$0x1] 0
        %5770 = vst [vmem:[%s569 + $0x18] sm:$0xf] 0
        %5771 = vst [vmem:[%s569 + $0x1c] sm:$0xf] 0
        %5772 = vst [vmem:[%s569 + $0x20] sm:$0x1] 0
        %5773 = vst [vmem:[%s569 + $0x24] sm:$0xf] 0
        %5774 = vst [vmem:[%s569 + $0x28] sm:$0xf] 0
        %5775 = vst [vmem:[%s569 + $0x2c] sm:$0x1] 0
        %5776 = vst [vmem:[%s569 + $0x30] sm:$0xf] 0
        %5777 = vst [vmem:[%s569 + $0x34] sm:$0xf] 0
        %5778 = vst [vmem:[%s569 + $0x38] sm:$0x1] 0
        %5779 = vst [vmem:[%s569 + $0x3c] sm:$0xf] 0
        %5780 = vst [vmem:[%s569 + $0x40] sm:$0xf] 0
        %5781 = vst [vmem:[%s569 + $0x44] sm:$0x1] 0
        %5782 = vst [vmem:[%s569 + $0x48] sm:$0xf] 0
        %5783 = vst [vmem:[%s569 + $0x4c] sm:$0xf] 0
        %5784 = vst [vmem:[%s569 + $0x50] sm:$0x1] 0
        %5785 = vst [vmem:[%s569 + $0x54] sm:$0xf] 0
        %5786 = vst [vmem:[%s569 + $0x58] sm:$0xf] 0
        %5787 = vst [vmem:[%s569 + $0x5c] sm:$0x1] 0
        %5788 = vst [vmem:[%s569 + $0x60] sm:$0xf] 0
        %5789 = vst [vmem:[%s569 + $0x64] sm:$0xf] 0
        %5790 = vst [vmem:[%s569 + $0x68] sm:$0x1] 0
        %5791 = vst [vmem:[%s569 + $0x6c] sm:$0xf] 0
        %5792 = vst [vmem:[%s569 + $0x70] sm:$0xf] 0
        %5793 = vst [vmem:[%s569 + $0x74] sm:$0x1] 0
        %5794 = vst [vmem:[%s569 + $0x78] sm:$0xf] 0
        %5795 = vst [vmem:[%s569 + $0x7c] sm:$0xf] 0
        %5796 = vst [vmem:[%s569 + $0x80] sm:$0x1] 0
        %5797 = vst [vmem:[%s569 + $0x84] sm:$0xf] 0
        %5798 = vst [vmem:[%s569 + $0x88] sm:$0xf] 0
        %5799 = vst [vmem:[%s569 + $0x8c] sm:$0x1] 0
        %5800 = vst [vmem:[%s569 + $0x90] sm:$0xf] 0
        %5801 = vst [vmem:[%s569 + $0x94] sm:$0xf] 0
        %5802 = vst [vmem:[%s569 + $0x98] sm:$0x1] 0
        %5803 = vst [vmem:[%s569 + $0x9c] sm:$0xf] 0
        %5804 = vst [vmem:[%s569 + $0xa0] sm:$0xf] 0
        %5805 = vst [vmem:[%s569 + $0xa4] sm:$0x1] 0
        %5806 = vst [vmem:[%s569 + $0xa8] sm:$0xf] 0
        %5807 = vst [vmem:[%s569 + $0xac] sm:$0xf] 0
        %5808 = vst [vmem:[%s569 + $0xb0] sm:$0x1] 0
        %5809 = vst [vmem:[%s569 + $0xb4] sm:$0xf] 0
        %5810 = vst [vmem:[%s569 + $0xb8] sm:$0xf] 0
        %5811 = vst [vmem:[%s569 + $0xbc] sm:$0x1] 0
        %5812 = vst [vmem:[%s569 + $0xc0] sm:$0xf] 0
        %5813 = vst [vmem:[%s569 + $0xc4] sm:$0xf] 0
        %5814 = vst [vmem:[%s569 + $0xc8] sm:$0x1] 0
        %5815 = vst [vmem:[%s569 + $0xcc] sm:$0xf] 0
        %5816 = vst [vmem:[%s569 + $0xd0] sm:$0xf] 0
        %5817 = vst [vmem:[%s569 + $0xd4] sm:$0x1] 0
        %v5834 = vunpack.c.l.b16 %v5748
        %v5835 = vunpack.c.h.b16 %v5748
        %v5836 = vunpack.c.l.b16 %v5749
        %v5837 = vunpack.c.h.b16 %v5749
        %v5838 = vunpack.c.l.b16 %v5750
        %v5839 = vunpack.c.h.b16 %v5750
        %v5840 = vunpack.c.l.b16 %v5751
        %v5841 = vunpack.c.h.b16 %v5751
        %v5842 = vunpack.c.l.b16 %v5752
        %v5843 = vunpack.c.h.b16 %v5752
        %v5844 = vunpack.c.l.b16 %v5753
        %v5845 = vunpack.c.h.b16 %v5753
        %v5846 = vunpack.c.l.b16 %v5754
        %v5847 = vunpack.c.h.b16 %v5754
        %v5848 = vunpack.c.l.b16 %v5755
        %v5849 = vunpack.c.h.b16 %v5755
        %v5850 = vunpack.c.l.b16 %v5756
        %v5851 = vunpack.c.h.b16 %v5756
        %v5852 = vunpack.c.l.b16 %v5757
        %v5853 = vunpack.c.h.b16 %v5757
        %v5854 = vunpack.c.l.b16 %v5758
        %v5855 = vunpack.c.h.b16 %v5758
        %v5856 = vunpack.c.l.b16 %v5759
        %v5857 = vunpack.c.h.b16 %v5759
        %v5858 = vunpack.c.l.b16 %v5760
        %v5859 = vunpack.c.h.b16 %v5760
        %v5860 = vunpack.c.l.b16 %v5761
        %v5861 = vunpack.c.h.b16 %v5761
        %v5862 = vunpack.c.l.b16 %v5762
        %v5863 = vunpack.c.h.b16 %v5762
        %v5864 = vunpack.c.l.b16 %v5763
        %v5865 = vunpack.c.h.b16 %v5763
        %v5866 = vpack.c.b16 %v5834, %v5834
        %v5867 = vpack.c.b16 %v5835, %v5835
        %v5868 = vpack.c.b16 %v5836, %v5836
        %v5869 = vpack.c.b16 %v5837, %v5837
        %v5870 = vpack.c.b16 %v5838, %v5838
        %v5871 = vpack.c.b16 %v5839, %v5839
        %v5872 = vpack.c.b16 %v5840, %v5840
        %v5873 = vpack.c.b16 %v5841, %v5841
        %v5874 = vpack.c.b16 %v5842, %v5842
        %v5875 = vpack.c.b16 %v5843, %v5843
        %v5876 = vpack.c.b16 %v5844, %v5844
        %v5877 = vpack.c.b16 %v5845, %v5845
        %v5878 = vpack.c.b16 %v5846, %v5846
        %v5879 = vpack.c.b16 %v5847, %v5847
        %v5880 = vpack.c.b16 %v5848, %v5848
        %v5881 = vpack.c.b16 %v5849, %v5849
        %v5882 = vpack.c.b16 %v5850, %v5850
        %v5883 = vpack.c.b16 %v5851, %v5851
        %v5884 = vpack.c.b16 %v5852, %v5852
        %v5885 = vpack.c.b16 %v5853, %v5853
        %v5886 = vpack.c.b16 %v5854, %v5854
        %v5887 = vpack.c.b16 %v5855, %v5855
        %v5888 = vpack.c.b16 %v5856, %v5856
        %v5889 = vpack.c.b16 %v5857, %v5857
        %v5890 = vpack.c.b16 %v5858, %v5858
        %v5891 = vpack.c.b16 %v5859, %v5859
        %v5892 = vpack.c.b16 %v5860, %v5860
        %v5893 = vpack.c.b16 %v5861, %v5861
        %v5894 = vpack.c.b16 %v5862, %v5862
        %v5895 = vpack.c.b16 %v5863, %v5863
        %v5896 = vpack.c.b16 %v5864, %v5864
        %v5897 = vpack.c.b16 %v5865, %v5865
        %vm5898 = vsmask.f32 256
        %vm5899 = vsmask.f32 4368
        %vm5900 = vmor %vm5898, %vm5899
        %v5902 = vshrl.u32 %v5866, 16
        %v5904 = vrot.slane %v5902, 7
        %v5905 = vshll.u32 %v5866, 16
        %v5907 = vor.u32 %v5904, %v5905
        %v5908 = vrot.slane %v5904, 4
        %v5910 = vshrl.u32 %v5867, 16
        %v5912 = vrot.slane %v5910, 7
        %v5913 = vshll.u32 %v5867, 16
        %v5915 = vor.u32 %v5912, %v5913
        %v5916 = vsel %vm5900, %v5908, %v5915
        %v5917 = vrot.slane %v5912, 4
        %v5919 = vshrl.u32 %v5868, 16
        %v5921 = vrot.slane %v5919, 7
        %v5922 = vshll.u32 %v5868, 16
        %v5924 = vor.u32 %v5921, %v5922
        %v5925 = vrot.slane %v5921, 4
        %v5927 = vshrl.u32 %v5869, 16
        %v5929 = vrot.slane %v5927, 7
        %v5930 = vshll.u32 %v5869, 16
        %v5932 = vor.u32 %v5929, %v5930
        %v5933 = vsel %vm5900, %v5925, %v5932
        %v5934 = vrot.slane %v5929, 4
        %v5936 = vshrl.u32 %v5870, 16
        %v5938 = vrot.slane %v5936, 7
        %v5939 = vshll.u32 %v5870, 16
        %v5941 = vor.u32 %v5938, %v5939
        %v5942 = vrot.slane %v5938, 4
        %v5944 = vshrl.u32 %v5871, 16
        %v5946 = vrot.slane %v5944, 7
        %v5947 = vshll.u32 %v5871, 16
        %v5949 = vor.u32 %v5946, %v5947
        %v5950 = vsel %vm5900, %v5942, %v5949
        %v5951 = vrot.slane %v5946, 4
        %v5953 = vshrl.u32 %v5872, 16
        %v5955 = vrot.slane %v5953, 7
        %v5956 = vshll.u32 %v5872, 16
        %v5958 = vor.u32 %v5955, %v5956
        %v5959 = vrot.slane %v5955, 4
        %v5961 = vshrl.u32 %v5873, 16
        %v5963 = vrot.slane %v5961, 7
        %v5964 = vshll.u32 %v5873, 16
        %v5966 = vor.u32 %v5963, %v5964
        %v5967 = vsel %vm5900, %v5959, %v5966
        %v5968 = vrot.slane %v5963, 4
        %v5970 = vshrl.u32 %v5874, 16
        %v5972 = vrot.slane %v5970, 7
        %v5973 = vshll.u32 %v5874, 16
        %v5975 = vor.u32 %v5972, %v5973
        %v5976 = vrot.slane %v5972, 4
        %v5978 = vshrl.u32 %v5875, 16
        %v5980 = vrot.slane %v5978, 7
        %v5981 = vshll.u32 %v5875, 16
        %v5983 = vor.u32 %v5980, %v5981
        %v5984 = vsel %vm5900, %v5976, %v5983
        %v5985 = vrot.slane %v5980, 4
        %v5987 = vshrl.u32 %v5876, 16
        %v5989 = vrot.slane %v5987, 7
        %v5990 = vshll.u32 %v5876, 16
        %v5992 = vor.u32 %v5989, %v5990
        %v5993 = vrot.slane %v5989, 4
        %v5995 = vshrl.u32 %v5877, 16
        %v5997 = vrot.slane %v5995, 7
        %v5998 = vshll.u32 %v5877, 16
        %v6000 = vor.u32 %v5997, %v5998
        %v6001 = vsel %vm5900, %v5993, %v6000
        %v6002 = vrot.slane %v5997, 4
        %v6004 = vshrl.u32 %v5878, 16
        %v6006 = vrot.slane %v6004, 7
        %v6007 = vshll.u32 %v5878, 16
        %v6009 = vor.u32 %v6006, %v6007
        %v6010 = vrot.slane %v6006, 4
        %v6012 = vshrl.u32 %v5879, 16
        %v6014 = vrot.slane %v6012, 7
        %v6015 = vshll.u32 %v5879, 16
        %v6017 = vor.u32 %v6014, %v6015
        %v6018 = vsel %vm5900, %v6010, %v6017
        %v6019 = vrot.slane %v6014, 4
        %v6021 = vshrl.u32 %v5880, 16
        %v6023 = vrot.slane %v6021, 7
        %v6024 = vshll.u32 %v5880, 16
        %v6026 = vor.u32 %v6023, %v6024
        %v6027 = vrot.slane %v6023, 4
        %v6029 = vshrl.u32 %v5881, 16
        %v6031 = vrot.slane %v6029, 7
        %v6032 = vshll.u32 %v5881, 16
        %v6034 = vor.u32 %v6031, %v6032
        %v6035 = vsel %vm5900, %v6027, %v6034
        %v6036 = vrot.slane %v6031, 4
        %v6038 = vshrl.u32 %v5882, 16
        %v6040 = vrot.slane %v6038, 7
        %v6041 = vshll.u32 %v5882, 16
        %v6043 = vor.u32 %v6040, %v6041
        %v6044 = vrot.slane %v6040, 4
        %v6046 = vshrl.u32 %v5883, 16
        %v6048 = vrot.slane %v6046, 7
        %v6049 = vshll.u32 %v5883, 16
        %v6051 = vor.u32 %v6048, %v6049
        %v6052 = vsel %vm5900, %v6044, %v6051
        %v6053 = vrot.slane %v6048, 4
        %v6055 = vshrl.u32 %v5884, 16
        %v6057 = vrot.slane %v6055, 7
        %v6058 = vshll.u32 %v5884, 16
        %v6060 = vor.u32 %v6057, %v6058
        %v6061 = vrot.slane %v6057, 4
        %v6063 = vshrl.u32 %v5885, 16
        %v6065 = vrot.slane %v6063, 7
        %v6066 = vshll.u32 %v5885, 16
        %v6068 = vor.u32 %v6065, %v6066
        %v6069 = vsel %vm5900, %v6061, %v6068
        %v6070 = vrot.slane %v6065, 4
        %v6072 = vshrl.u32 %v5886, 16
        %v6074 = vrot.slane %v6072, 7
        %v6075 = vshll.u32 %v5886, 16
        %v6077 = vor.u32 %v6074, %v6075
        %v6078 = vrot.slane %v6074, 4
        %v6080 = vshrl.u32 %v5887, 16
        %v6082 = vrot.slane %v6080, 7
        %v6083 = vshll.u32 %v5887, 16
        %v6085 = vor.u32 %v6082, %v6083
        %v6086 = vsel %vm5900, %v6078, %v6085
        %v6087 = vrot.slane %v6082, 4
        %v6089 = vshrl.u32 %v5888, 16
        %v6091 = vrot.slane %v6089, 7
        %v6092 = vshll.u32 %v5888, 16
        %v6094 = vor.u32 %v6091, %v6092
        %v6095 = vrot.slane %v6091, 4
        %v6097 = vshrl.u32 %v5889, 16
        %v6099 = vrot.slane %v6097, 7
        %v6100 = vshll.u32 %v5889, 16
        %v6102 = vor.u32 %v6099, %v6100
        %v6103 = vsel %vm5900, %v6095, %v6102
        %v6104 = vrot.slane %v6099, 4
        %v6106 = vshrl.u32 %v5890, 16
        %v6108 = vrot.slane %v6106, 7
        %v6109 = vshll.u32 %v5890, 16
        %v6111 = vor.u32 %v6108, %v6109
        %v6112 = vrot.slane %v6108, 4
        %v6114 = vshrl.u32 %v5891, 16
        %v6116 = vrot.slane %v6114, 7
        %v6117 = vshll.u32 %v5891, 16
        %v6119 = vor.u32 %v6116, %v6117
        %v6120 = vsel %vm5900, %v6112, %v6119
        %v6121 = vrot.slane %v6116, 4
        %v6123 = vshrl.u32 %v5892, 16
        %v6125 = vrot.slane %v6123, 7
        %v6126 = vshll.u32 %v5892, 16
        %v6128 = vor.u32 %v6125, %v6126
        %v6129 = vrot.slane %v6125, 4
        %v6131 = vshrl.u32 %v5893, 16
        %v6133 = vrot.slane %v6131, 7
        %v6134 = vshll.u32 %v5893, 16
        %v6136 = vor.u32 %v6133, %v6134
        %v6137 = vsel %vm5900, %v6129, %v6136
        %v6138 = vrot.slane %v6133, 4
        %v6140 = vshrl.u32 %v5894, 16
        %v6142 = vrot.slane %v6140, 7
        %v6143 = vshll.u32 %v5894, 16
        %v6145 = vor.u32 %v6142, %v6143
        %v6146 = vrot.slane %v6142, 4
        %v6148 = vshrl.u32 %v5895, 16
        %v6150 = vrot.slane %v6148, 7
        %v6151 = vshll.u32 %v5895, 16
        %v6153 = vor.u32 %v6150, %v6151
        %v6154 = vsel %vm5900, %v6146, %v6153
        %v6155 = vrot.slane %v6150, 4
        %v6157 = vshrl.u32 %v5896, 16
        %v6159 = vrot.slane %v6157, 7
        %v6160 = vshll.u32 %v5896, 16
        %v6162 = vor.u32 %v6159, %v6160
        %v6163 = vrot.slane %v6159, 4
        %v6165 = vshrl.u32 %v5897, 16
        %v6167 = vrot.slane %v6165, 7
        %v6168 = vshll.u32 %v5897, 16
        %v6170 = vor.u32 %v6167, %v6168
        %v6171 = vsel %vm5900, %v6163, %v6170
        %v6172 = vrot.slane %v6167, 4
        %s6221 = scalar_lea.vmem %s569, 12 [#allocation19]
        %vm6222 = vcmask 1043456
        %vm6223 = vsmask.f32 7938
        %vm6224 = vmand %vm6222, %vm6223
        %v6225 = vld [vmem:[%s6221] sm:$0xf]
        %v6226 = vsel %vm6224, %v5907, %v6225
        %6227 = vst [vmem:[%s6221] sm:$0xf] %v6226
        %6228 = vst [vmem:[%s6221 + $0x4] sm:$0xf] %v5916
        %vm6229 = vcmask 1040384
        %vm6230 = vmand %vm6229, %vm5898
        %v6231 = vld [vmem:[%s6221 + $0x8] sm:$0x1]
        %v6232 = vsel %vm6230, %v5917, %v6231
        %6233 = vst [vmem:[%s6221 + $0x8] sm:$0x1] %v6232
        %v6234 = vld [vmem:[%s6221 + $0xc] sm:$0xf]
        %v6235 = vsel %vm6224, %v5924, %v6234
        %6236 = vst [vmem:[%s6221 + $0xc] sm:$0xf] %v6235
        %6237 = vst [vmem:[%s6221 + $0x10] sm:$0xf] %v5933
        %v6238 = vld [vmem:[%s6221 + $0x14] sm:$0x1]
        %v6239 = vsel %vm6230, %v5934, %v6238
        %6240 = vst [vmem:[%s6221 + $0x14] sm:$0x1] %v6239
        %v6241 = vld [vmem:[%s6221 + $0x18] sm:$0xf]
        %v6242 = vsel %vm6224, %v5941, %v6241
        %6243 = vst [vmem:[%s6221 + $0x18] sm:$0xf] %v6242
        %6244 = vst [vmem:[%s6221 + $0x1c] sm:$0xf] %v5950
        %v6245 = vld [vmem:[%s6221 + $0x20] sm:$0x1]
        %v6246 = vsel %vm6230, %v5951, %v6245
        %6247 = vst [vmem:[%s6221 + $0x20] sm:$0x1] %v6246
        %v6248 = vld [vmem:[%s6221 + $0x24] sm:$0xf]
        %v6249 = vsel %vm6224, %v5958, %v6248
        %6250 = vst [vmem:[%s6221 + $0x24] sm:$0xf] %v6249
        %6251 = vst [vmem:[%s6221 + $0x28] sm:$0xf] %v5967
        %v6252 = vld [vmem:[%s6221 + $0x2c] sm:$0x1]
        %v6253 = vsel %vm6230, %v5968, %v6252
        %6254 = vst [vmem:[%s6221 + $0x2c] sm:$0x1] %v6253
        %v6255 = vld [vmem:[%s6221 + $0x30] sm:$0xf]
        %v6256 = vsel %vm6224, %v5975, %v6255
        %6257 = vst [vmem:[%s6221 + $0x30] sm:$0xf] %v6256
        %6258 = vst [vmem:[%s6221 + $0x34] sm:$0xf] %v5984
        %v6259 = vld [vmem:[%s6221 + $0x38] sm:$0x1]
        %v6260 = vsel %vm6230, %v5985, %v6259
        %6261 = vst [vmem:[%s6221 + $0x38] sm:$0x1] %v6260
        %v6262 = vld [vmem:[%s6221 + $0x3c] sm:$0xf]
        %v6263 = vsel %vm6224, %v5992, %v6262
        %6264 = vst [vmem:[%s6221 + $0x3c] sm:$0xf] %v6263
        %6265 = vst [vmem:[%s6221 + $0x40] sm:$0xf] %v6001
        %v6266 = vld [vmem:[%s6221 + $0x44] sm:$0x1]
        %v6267 = vsel %vm6230, %v6002, %v6266
        %6268 = vst [vmem:[%s6221 + $0x44] sm:$0x1] %v6267
        %v6269 = vld [vmem:[%s6221 + $0x48] sm:$0xf]
        %v6270 = vsel %vm6224, %v6009, %v6269
        %6271 = vst [vmem:[%s6221 + $0x48] sm:$0xf] %v6270
        %6272 = vst [vmem:[%s6221 + $0x4c] sm:$0xf] %v6018
        %v6273 = vld [vmem:[%s6221 + $0x50] sm:$0x1]
        %v6274 = vsel %vm6230, %v6019, %v6273
        %6275 = vst [vmem:[%s6221 + $0x50] sm:$0x1] %v6274
        %v6276 = vld [vmem:[%s6221 + $0x54] sm:$0xf]
        %v6277 = vsel %vm6224, %v6026, %v6276
        %6278 = vst [vmem:[%s6221 + $0x54] sm:$0xf] %v6277
        %6279 = vst [vmem:[%s6221 + $0x58] sm:$0xf] %v6035
        %v6280 = vld [vmem:[%s6221 + $0x5c] sm:$0x1]
        %v6281 = vsel %vm6230, %v6036, %v6280
        %6282 = vst [vmem:[%s6221 + $0x5c] sm:$0x1] %v6281
        %v6283 = vld [vmem:[%s6221 + $0x60] sm:$0xf]
        %v6284 = vsel %vm6224, %v6043, %v6283
        %6285 = vst [vmem:[%s6221 + $0x60] sm:$0xf] %v6284
        %6286 = vst [vmem:[%s6221 + $0x64] sm:$0xf] %v6052
        %v6287 = vld [vmem:[%s6221 + $0x68] sm:$0x1]
        %v6288 = vsel %vm6230, %v6053, %v6287
        %6289 = vst [vmem:[%s6221 + $0x68] sm:$0x1] %v6288
        %v6290 = vld [vmem:[%s6221 + $0x6c] sm:$0xf]
        %v6291 = vsel %vm6224, %v6060, %v6290
        %6292 = vst [vmem:[%s6221 + $0x6c] sm:$0xf] %v6291
        %6293 = vst [vmem:[%s6221 + $0x70] sm:$0xf] %v6069
        %v6294 = vld [vmem:[%s6221 + $0x74] sm:$0x1]
        %v6295 = vsel %vm6230, %v6070, %v6294
        %6296 = vst [vmem:[%s6221 + $0x74] sm:$0x1] %v6295
        %v6297 = vld [vmem:[%s6221 + $0x78] sm:$0xf]
        %v6298 = vsel %vm6224, %v6077, %v6297
        %6299 = vst [vmem:[%s6221 + $0x78] sm:$0xf] %v6298
        %6300 = vst [vmem:[%s6221 + $0x7c] sm:$0xf] %v6086
        %v6301 = vld [vmem:[%s6221 + $0x80] sm:$0x1]
        %v6302 = vsel %vm6230, %v6087, %v6301
        %6303 = vst [vmem:[%s6221 + $0x80] sm:$0x1] %v6302
        %v6304 = vld [vmem:[%s6221 + $0x84] sm:$0xf]
        %v6305 = vsel %vm6224, %v6094, %v6304
        %6306 = vst [vmem:[%s6221 + $0x84] sm:$0xf] %v6305
        %6307 = vst [vmem:[%s6221 + $0x88] sm:$0xf] %v6103
        %v6308 = vld [vmem:[%s6221 + $0x8c] sm:$0x1]
        %v6309 = vsel %vm6230, %v6104, %v6308
        %6310 = vst [vmem:[%s6221 + $0x8c] sm:$0x1] %v6309
        %v6311 = vld [vmem:[%s6221 + $0x90] sm:$0xf]
        %v6312 = vsel %vm6224, %v6111, %v6311
        %6313 = vst [vmem:[%s6221 + $0x90] sm:$0xf] %v6312
        %6314 = vst [vmem:[%s6221 + $0x94] sm:$0xf] %v6120
        %v6315 = vld [vmem:[%s6221 + $0x98] sm:$0x1]
        %v6316 = vsel %vm6230, %v6121, %v6315
        %6317 = vst [vmem:[%s6221 + $0x98] sm:$0x1] %v6316
        %v6318 = vld [vmem:[%s6221 + $0x9c] sm:$0xf]
        %v6319 = vsel %vm6224, %v6128, %v6318
        %6320 = vst [vmem:[%s6221 + $0x9c] sm:$0xf] %v6319
        %6321 = vst [vmem:[%s6221 + $0xa0] sm:$0xf] %v6137
        %v6322 = vld [vmem:[%s6221 + $0xa4] sm:$0x1]
        %v6323 = vsel %vm6230, %v6138, %v6322
        %6324 = vst [vmem:[%s6221 + $0xa4] sm:$0x1] %v6323
        %v6325 = vld [vmem:[%s6221 + $0xa8] sm:$0xf]
        %v6326 = vsel %vm6224, %v6145, %v6325
        %6327 = vst [vmem:[%s6221 + $0xa8] sm:$0xf] %v6326
        %6328 = vst [vmem:[%s6221 + $0xac] sm:$0xf] %v6154
        %v6329 = vld [vmem:[%s6221 + $0xb0] sm:$0x1]
        %v6330 = vsel %vm6230, %v6155, %v6329
        %6331 = vst [vmem:[%s6221 + $0xb0] sm:$0x1] %v6330
        %v6332 = vld [vmem:[%s6221 + $0xb4] sm:$0xf]
        %v6333 = vsel %vm6224, %v6162, %v6332
        %6334 = vst [vmem:[%s6221 + $0xb4] sm:$0xf] %v6333
        %6335 = vst [vmem:[%s6221 + $0xb8] sm:$0xf] %v6171
        %v6336 = vld [vmem:[%s6221 + $0xbc] sm:$0x1]
        %v6337 = vsel %vm6230, %v6172, %v6336
        %6338 = vst [vmem:[%s6221 + $0xbc] sm:$0x1] %v6337
        %s6339 = sand.u32 %s274, 1
        %s6340 = scalar_lea.sflag [#allocation4], %s6339
        %s6341 = sand.u32 %s274, 1
        %s6342 = smul.addr %s6341, 216
        %s6343 = scalar_lea.vmem [#allocation19], %s6342
        // Predicated region
        $region101: #{forward_jit.2} parent=59 // pred_check
          %p6344 = pneg %p284
        $region102: #{forward_jit.2} parent=59 // pred_check_branch
          %6346 = sbr.rel (%p6344) target = $region104
        $region103: #{forward_jit.2} parent=59 // pred_region
          %s6348 = ssub.s32 3456, 3456
          %6349 = vsyncadd %s6340, %s6348
          %s6350 = smul.addr %s36, 54
          %s6351 = smul.addr %s6350, 64
          %s6352 = scalar_lea.hbm %s10, %s6351
          %s6353 = sshll.u32 %s6343, 4
          %s6354 = int_to_ptr.vmem [resolvable:$true] %s6353
          %6359 = dma.vmem_to_hbm [thread:$0]  %s6354, 3456, %s6352, %s6340, 64, 64, 4
        $region104: #{forward_jit.2} parent=59 // pred_fallthru
          _
      $region60: #{forward_jit.2} parent=5 // pred_fallthru
        _
      %p6360 = scmp.le.s32.totalorder 2, %s31
      // Predicated region
      $region105: #{forward_jit.2} parent=5 // pred_check
        %p6361 = pneg %p6360
      $region106: #{forward_jit.2} parent=5 // pred_check_branch
        %6363 = sbr.rel (%p6361) target = $region108
      $region107: #{forward_jit.2} parent=5 // pred_region
        %s6364 = ssub.s32 %s31, 2
        // Predicated region
        $region109: #{forward_jit.2} parent=107 // pred_check
          %p6365 = pneg %p290
        $region110: #{forward_jit.2} parent=107 // pred_check_branch
          %6367 = sbr.rel (%p6365) target = $region112
        $region111: #{forward_jit.2} parent=107 // pred_region
          %s6368 = sand.u32 %s275, 1
          %s6369 = scalar_lea.sflag [#allocation4], %s6368
          %s6370 = sand.u32 %s275, 1
          %s6371 = smul.addr %s6370, 216
          %s6372 = scalar_lea.vmem [#allocation19], %s6371
          %6373 = dma.done %s6369, 3456
        $region112: #{forward_jit.2} parent=107 // pred_fallthru
          _
      $region108: #{forward_jit.2} parent=5 // pred_fallthru
        _
    $region6: #{forward_jit.2} parent=1 // loop_footer
      %s35 = sadd.s32 1, %s31
    $region7: #{forward_jit.2} parent=1 // loop_footer_branch
      %30 = sbr.rel target = $region3
    $region8: #{forward_jit.2} parent=1 // loop_exit
      _
    %6374 = vsyncpa [#allocation3], 1
    %s6375 = scalar_lea.sflag [#allocation3], 1
    %6376 = vsyncpa %s6375, 1
    %6377 = vsyncpa [#allocation6], 1
    %s6378 = scalar_lea.sflag [#allocation6], 1
    %6379 = vsyncpa %s6378, 1
    %6380 = vsyncpa [#allocation9], 1
    %s6381 = scalar_lea.sflag [#allocation9], 1
    %6382 = vsyncpa %s6381, 1
    %6383 = vsyncpa [#allocation12], 1
    %6384 = vsyncpa [#allocation15], 1
    %6385 = vsyncpa [#allocation18], 1
    %6386 = vsyncpa [#allocation4], 1
    %s6387 = scalar_lea.sflag [#allocation4], 1
    %6388 = vsyncpa %s6387, 1

</llo_original>
